<compile_context>
chip_gen: v7x
topology: tpu7x:2x2x1
jax: 0.10.0
libtpu: 0.0.40
codegen_flags: <defaults>
</compile_context>

<pallas_src>
import jax
import jax.numpy as jnp
from jax.experimental import pallas as pl
from jax.experimental.pallas import tpu as pltpu

# --- Model dimensions implied by ConvMLP.__init__ (fc expects 16*30*30 -> input is 32x32) ---
C_OUT = 16
K = 3
H_IN = W_IN = 32
H_OUT = W_OUT = H_IN - K + 1          # 30
FLAT = C_OUT * H_OUT * W_OUT          # 14400
P_IN = H_IN * W_IN                    # 1024 flattened input pixels (8*128 aligned)
P_PAD = P_IN + 128                    # shift headroom (max tap shift = 2*32 + 2 = 66)
K_FC = C_OUT * P_IN                   # 16384 padded contraction length
N_CLASSES = 10


def fused_kernel(x_ref, wc_ref, bc_ref, wfc_ref, bfc_ref, o_ref, slab_ref, xpad_ref):
    """One batch tile: conv (VPU, shifted flattened rows) -> lane-dense VMEM slab -> FC (MXU).

    x_ref:    (TB, 1024)   f32  flattened 32x32 input per sample
    wc_ref:   (16, 9)      f32  SMEM, conv filters (row c = flattened 3x3)
    bc_ref:   (16,)        f32  SMEM, conv bias
    wfc_ref:  (16384, 10)  f32  re-laid-out, zero-padded FC weight (VMEM-resident)
    bfc_ref:  (1, 10)      f32  FC bias
    o_ref:    (TB, 10)     f32  logits
    slab_ref: (TB, 16384)  f32  VMEM scratch: per-channel conv maps, lane dense
    xpad_ref: (TB, 1152)   f32  VMEM scratch: input + 128 zero lanes of shift headroom
    """
    tb = x_ref.shape[0]

    # Zero-padded copy of the input rows so every shifted 1024-wide slice stays in bounds.
    xpad_ref[:, :P_IN] = x_ref[...]
    xpad_ref[:, P_IN:] = jnp.zeros((tb, P_PAD - P_IN), jnp.float32)
    xp = xpad_ref[...]                                   # (TB, 1152)

    # conv: out[b,c,h,w] = bc[c] + sum_{dh,dw} wc[c,dh,dw] * x[b,h+dh,w+dw].
    # In flattened pixel coords p = h*32 + w this is a sum of 9 statically shifted
    # copies of the row.  Entries with w >= 30 or h >= 30 are junk but finite and are
    # multiplied by zeros in wfc_ref, so they contribute exactly 0.
    for c in range(C_OUT):
        acc = jnp.full((tb, P_IN), bc_ref[c], dtype=jnp.float32)
        for dh in range(K):
            for dw in range(K):
                s = dh * W_IN + dw
                acc = acc + wc_ref[c, dh * K + dw] * xp[:, s:s + P_IN]
        # 128-aligned, unmasked lane-dense stores into the activation slab.
        slab_ref[:, c * P_IN:(c + 1) * P_IN] = acc

    # Single MXU contraction over all 16 channels at once, plus FC bias.
    o_ref[...] = (
        jnp.dot(slab_ref[...], wfc_ref[...], preferred_element_type=jnp.float32)
        + bfc_ref[...]
    )


def prepare_params(w_conv, b_conv, w_fc, b_fc):
    """One-time parameter re-layout (PyTorch shapes in, kernel layout out).

    Done once at model-load time so the forward pass never transposes/reshapes the
    576 KB FC weight.  w_fc[n, c*900 + h*30 + w] -> w2[c*1024 + h*32 + w, n], zero at
    the padded (invalid) positions.  No algebraic folding: conv math stays in-kernel.
    """
    wc2 = w_conv.reshape(C_OUT, K * K).astype(jnp.float32)               # (16, 9)
    bc = b_conv.astype(jnp.float32)                                      # (16,)
    wf = w_fc.reshape(N_CLASSES, C_OUT, H_OUT, W_OUT).astype(jnp.float32)
    w2 = jnp.zeros((C_OUT, H_IN, W_IN, N_CLASSES), jnp.float32)
    w2 = w2.at[:, :H_OUT, :W_OUT, :].set(jnp.transpose(wf, (1, 2, 3, 0)))
    w2 = w2.reshape(K_FC, N_CLASSES)                                     # (16384, 10)
    bfc2 = b_fc.reshape(1, N_CLASSES).astype(jnp.float32)                # (1, 10)
    return wc2, bc, w2, bfc2


@jax.jit
def conv_mlp_forward(x, wc2, bc, w2, bfc2):
    """x: (B, 1, 32, 32) NCHW; params from prepare_params.  Returns (B, 10) logits."""
    B = x.shape[0]
    x2 = x.reshape(B, P_IN)            # free row-major reshape of the NCHW input

    # 8 rows per grid step: full sublane groups, conv accumulator stays well under the
    # 64-vreg budget.  Partial tail blocks are fine: garbage rows only affect their own
    # (discarded) output rows.
    TB = B if B < 8 else 8
    grid = (pl.cdiv(B, TB),)

    return pl.pallas_call(
        fused_kernel,
        out_shape=jax.ShapeDtypeStruct((B, N_CLASSES), jnp.float32),
        grid=grid,
        in_specs=[
            pl.BlockSpec((TB, P_IN), lambda i: (i, 0)),
            pl.BlockSpec((C_OUT, K * K), lambda i: (0, 0),
                         memory_space=pltpu.MemorySpace.SMEM),
            pl.BlockSpec((C_OUT,), lambda i: (0,),
                         memory_space=pltpu.MemorySpace.SMEM),
            # Constant block index -> fetched once, stays VMEM-resident across steps.
            pl.BlockSpec((K_FC, N_CLASSES), lambda i: (0, 0)),
            pl.BlockSpec((1, N_CLASSES), lambda i: (0, 0)),
        ],
        out_specs=pl.BlockSpec((TB, N_CLASSES), lambda i: (i, 0)),
        scratch_shapes=[
            pltpu.VMEM((TB, K_FC), jnp.float32),     # activation slab
            pltpu.VMEM((TB, P_PAD), jnp.float32),    # zero-padded input rows
        ],
        compiler_params=pltpu.CompilerParams(
            dimension_semantics=("parallel",),
            # FC weight is ~8.4 MB once lane-padded in VMEM (x2 buffers); total ~18 MB.
            # 32 MiB fits v6e/v7x defaults and is raised explicitly for v5e (16 MiB default).
            vmem_limit_bytes=32 * 1024 * 1024,
        ),
    )(x2, wc2, bc, w2, bfc2)


def reference_forward(x, w_conv, b_conv, w_fc, b_fc):
    y = jax.lax.conv_general_dilated(
        x, w_conv, window_strides=(1, 1), padding="VALID",
        dimension_numbers=("NCHW", "OIHW", "NCHW"))
    y = y + b_conv.reshape(1, C_OUT, 1, 1)
    y = y.reshape(x.shape[0], FLAT)
    return y @ w_fc.T + b_fc


if __name__ == "__main__":
    key = jax.random.PRNGKey(0)
    kx, kw1, kb1, kw2, kb2 = jax.random.split(key, 5)

    B = 2
    x = jax.random.normal(kx, (B, 1, H_IN, W_IN), dtype=jnp.float32)

    # Deterministic synthetic parameters in PyTorch shapes.
    w_conv = jax.random.normal(kw1, (C_OUT, 1, K, K), dtype=jnp.float32) * 0.1
    b_conv = jax.random.normal(kb1, (C_OUT,), dtype=jnp.float32) * 0.1
    w_fc = jax.random.normal(kw2, (N_CLASSES, FLAT), dtype=jnp.float32) * 0.01
    b_fc = jax.random.normal(kb2, (N_CLASSES,), dtype=jnp.float32) * 0.01

    # One-time parameter re-layout (not part of the per-step hot path).
    wc2, bc, w2, bfc2 = prepare_params(w_conv, b_conv, w_fc, b_fc)

    out = conv_mlp_forward(x, wc2, bc, w2, bfc2)
    out = jax.block_until_ready(out)

    ref = reference_forward(x, w_conv, b_conv, w_fc, b_fc)
    assert out.shape == (B, N_CLASSES), out.shape
    assert jnp.allclose(out, ref, rtol=2e-3, atol=2e-3), (
        f"max abs err = {jnp.max(jnp.abs(out - ref))}")

    print("KERNEL_OK")
</pallas_src>

<mosaic_0001>
module attributes {stable_mosaic.version = 11 : i64} {
  func.func @fused_kernel(%arg0: i32, %arg1: memref<2x1024xf32, #tpu.memory_space<vmem>>, %arg2: memref<16x9xf32, #tpu.memory_space<smem>>, %arg3: memref<16xf32, #tpu.memory_space<smem>>, %arg4: memref<16384x10xf32, #tpu.memory_space<vmem>>, %arg5: memref<1x10xf32, #tpu.memory_space<vmem>>, %arg6: memref<2x10xf32, #tpu.memory_space<vmem>>, %arg7: memref<2x16384xf32, #tpu.memory_space<vmem>>, %arg8: memref<2x1152xf32, #tpu.memory_space<vmem>>) attributes {dimension_semantics = [#tpu.dimension_semantics<parallel>], iteration_bounds = array<i64: 1>, scalar_prefetch = 0 : i64, scratch_operands = 2 : i64, tpu.core_type = #tpu.core_type<tc>, window_params = [{transform_indices = @transform_0, window_bounds = array<i64: 2, 1024>}, {transform_indices = @transform_1, window_bounds = array<i64: 16, 9>}, {transform_indices = @transform_2, window_bounds = array<i64: 16>}, {pipeline_mode = #tpu.pipeline_mode<synchronous>, transform_indices = @transform_3, window_bounds = array<i64: 16384, 10>}, {pipeline_mode = #tpu.pipeline_mode<synchronous>, transform_indices = @transform_4, window_bounds = array<i64: 1, 10>}, {transform_indices = @transform_5, window_bounds = array<i64: 2, 10>}]} {
    %c0 = arith.constant 0 : index
    %c0_0 = arith.constant 0 : index
    %0 = vector.load %arg1[%c0, %c0_0] : memref<2x1024xf32, #tpu.memory_space<vmem>>, vector<2x1024xf32>
    %c0_1 = arith.constant 0 : index
    %c0_2 = arith.constant 0 : index
    %1 = vector.load %arg8[%c0_1, %c0_2] : memref<2x1152xf32, #tpu.memory_space<vmem>>, vector<2x1024xf32>
    tpu.vector_store %arg8[%c0_1, %c0_2], %0 {strides = array<i32>} : memref<2x1152xf32, #tpu.memory_space<vmem>>, vector<2x1024xf32>,
    %cst = arith.constant 0.000000e+00 : f32
    %2 = vector.broadcast %cst : f32 to vector<2x128xf32>
    %c0_3 = arith.constant 0 : index
    %c1024 = arith.constant 1024 : index
    %3 = vector.load %arg8[%c0_3, %c1024] : memref<2x1152xf32, #tpu.memory_space<vmem>>, vector<2x128xf32>
    tpu.vector_store %arg8[%c0_3, %c1024], %2 {strides = array<i32>} : memref<2x1152xf32, #tpu.memory_space<vmem>>, vector<2x128xf32>,
    %c0_4 = arith.constant 0 : index
    %c0_5 = arith.constant 0 : index
    %4 = vector.load %arg8[%c0_4, %c0_5] : memref<2x1152xf32, #tpu.memory_space<vmem>>, vector<2x1152xf32>
    %c0_6 = arith.constant 0 : index
    %5 = memref.load %arg3[%c0_6] : memref<16xf32, #tpu.memory_space<smem>>
    %6 = vector.broadcast %5 : f32 to vector<2x1024xf32>
    %c0_7 = arith.constant 0 : index
    %c0_8 = arith.constant 0 : index
    %7 = memref.load %arg2[%c0_7, %c0_8] : memref<16x9xf32, #tpu.memory_space<smem>>
    %8 = vector.extract_strided_slice %4 {offsets = [0, 0], sizes = [2, 1024], strides = [1, 1]} : vector<2x1152xf32> to vector<2x1024xf32>
    %9 = vector.broadcast %7 : f32 to vector<2x1024xf32>
    %10 = arith.mulf %9, %8 : vector<2x1024xf32>
    %11 = arith.addf %6, %10 : vector<2x1024xf32>
    %c0_9 = arith.constant 0 : index
    %c1 = arith.constant 1 : index
    %12 = memref.load %arg2[%c0_9, %c1] : memref<16x9xf32, #tpu.memory_space<smem>>
    %13 = vector.extract_strided_slice %4 {offsets = [0, 1], sizes = [2, 1024], strides = [1, 1]} : vector<2x1152xf32> to vector<2x1024xf32>
    %14 = vector.broadcast %12 : f32 to vector<2x1024xf32>
    %15 = arith.mulf %14, %13 : vector<2x1024xf32>
    %16 = arith.addf %11, %15 : vector<2x1024xf32>
    %c0_10 = arith.constant 0 : index
    %c2 = arith.constant 2 : index
    %17 = memref.load %arg2[%c0_10, %c2] : memref<16x9xf32, #tpu.memory_space<smem>>
    %18 = vector.extract_strided_slice %4 {offsets = [0, 2], sizes = [2, 1024], strides = [1, 1]} : vector<2x1152xf32> to vector<2x1024xf32>
    %19 = vector.broadcast %17 : f32 to vector<2x1024xf32>
    %20 = arith.mulf %19, %18 : vector<2x1024xf32>
    %21 = arith.addf %16, %20 : vector<2x1024xf32>
    %c0_11 = arith.constant 0 : index
    %c3 = arith.constant 3 : index
    %22 = memref.load %arg2[%c0_11, %c3] : memref<16x9xf32, #tpu.memory_space<smem>>
    %23 = vector.extract_strided_slice %4 {offsets = [0, 32], sizes = [2, 1024], strides = [1, 1]} : vector<2x1152xf32> to vector<2x1024xf32>
    %24 = vector.broadcast %22 : f32 to vector<2x1024xf32>
    %25 = arith.mulf %24, %23 : vector<2x1024xf32>
    %26 = arith.addf %21, %25 : vector<2x1024xf32>
    %c0_12 = arith.constant 0 : index
    %c4 = arith.constant 4 : index
    %27 = memref.load %arg2[%c0_12, %c4] : memref<16x9xf32, #tpu.memory_space<smem>>
    %28 = vector.extract_strided_slice %4 {offsets = [0, 33], sizes = [2, 1024], strides = [1, 1]} : vector<2x1152xf32> to vector<2x1024xf32>
    %29 = vector.broadcast %27 : f32 to vector<2x1024xf32>
    %30 = arith.mulf %29, %28 : vector<2x1024xf32>
    %31 = arith.addf %26, %30 : vector<2x1024xf32>
    %c0_13 = arith.constant 0 : index
    %c5 = arith.constant 5 : index
    %32 = memref.load %arg2[%c0_13, %c5] : memref<16x9xf32, #tpu.memory_space<smem>>
    %33 = vector.extract_strided_slice %4 {offsets = [0, 34], sizes = [2, 1024], strides = [1, 1]} : vector<2x1152xf32> to vector<2x1024xf32>
    %34 = vector.broadcast %32 : f32 to vector<2x1024xf32>
    %35 = arith.mulf %34, %33 : vector<2x1024xf32>
    %36 = arith.addf %31, %35 : vector<2x1024xf32>
    %c0_14 = arith.constant 0 : index
    %c6 = arith.constant 6 : index
    %37 = memref.load %arg2[%c0_14, %c6] : memref<16x9xf32, #tpu.memory_space<smem>>
    %38 = vector.extract_strided_slice %4 {offsets = [0, 64], sizes = [2, 1024], strides = [1, 1]} : vector<2x1152xf32> to vector<2x1024xf32>
    %39 = vector.broadcast %37 : f32 to vector<2x1024xf32>
    %40 = arith.mulf %39, %38 : vector<2x1024xf32>
    %41 = arith.addf %36, %40 : vector<2x1024xf32>
    %c0_15 = arith.constant 0 : index
    %c7 = arith.constant 7 : index
    %42 = memref.load %arg2[%c0_15, %c7] : memref<16x9xf32, #tpu.memory_space<smem>>
    %43 = vector.extract_strided_slice %4 {offsets = [0, 65], sizes = [2, 1024], strides = [1, 1]} : vector<2x1152xf32> to vector<2x1024xf32>
    %44 = vector.broadcast %42 : f32 to vector<2x1024xf32>
    %45 = arith.mulf %44, %43 : vector<2x1024xf32>
    %46 = arith.addf %41, %45 : vector<2x1024xf32>
    %c0_16 = arith.constant 0 : index
    %c8 = arith.constant 8 : index
    %47 = memref.load %arg2[%c0_16, %c8] : memref<16x9xf32, #tpu.memory_space<smem>>
    %48 = vector.extract_strided_slice %4 {offsets = [0, 66], sizes = [2, 1024], strides = [1, 1]} : vector<2x1152xf32> to vector<2x1024xf32>
    %49 = vector.broadcast %47 : f32 to vector<2x1024xf32>
    %50 = arith.mulf %49, %48 : vector<2x1024xf32>
    %51 = arith.addf %46, %50 : vector<2x1024xf32>
    %c0_17 = arith.constant 0 : index
    %c0_18 = arith.constant 0 : index
    %52 = vector.load %arg7[%c0_17, %c0_18] : memref<2x16384xf32, #tpu.memory_space<vmem>>, vector<2x1024xf32>
    tpu.vector_store %arg7[%c0_17, %c0_18], %51 {strides = array<i32>} : memref<2x16384xf32, #tpu.memory_space<vmem>>, vector<2x1024xf32>,
    %c1_19 = arith.constant 1 : index
    %53 = memref.load %arg3[%c1_19] : memref<16xf32, #tpu.memory_space<smem>>
    %54 = vector.broadcast %53 : f32 to vector<2x1024xf32>
    %c1_20 = arith.constant 1 : index
    %c0_21 = arith.constant 0 : index
    %55 = memref.load %arg2[%c1_20, %c0_21] : memref<16x9xf32, #tpu.memory_space<smem>>
    %56 = vector.extract_strided_slice %4 {offsets = [0, 0], sizes = [2, 1024], strides = [1, 1]} : vector<2x1152xf32> to vector<2x1024xf32>
    %57 = vector.broadcast %55 : f32 to vector<2x1024xf32>
    %58 = arith.mulf %57, %56 : vector<2x1024xf32>
    %59 = arith.addf %54, %58 : vector<2x1024xf32>
    %c1_22 = arith.constant 1 : index
    %c1_23 = arith.constant 1 : index
    %60 = memref.load %arg2[%c1_22, %c1_23] : memref<16x9xf32, #tpu.memory_space<smem>>
    %61 = vector.extract_strided_slice %4 {offsets = [0, 1], sizes = [2, 1024], strides = [1, 1]} : vector<2x1152xf32> to vector<2x1024xf32>
    %62 = vector.broadcast %60 : f32 to vector<2x1024xf32>
    %63 = arith.mulf %62, %61 : vector<2x1024xf32>
    %64 = arith.addf %59, %63 : vector<2x1024xf32>
    %c1_24 = arith.constant 1 : index
    %c2_25 = arith.constant 2 : index
    %65 = memref.load %arg2[%c1_24, %c2_25] : memref<16x9xf32, #tpu.memory_space<smem>>
    %66 = vector.extract_strided_slice %4 {offsets = [0, 2], sizes = [2, 1024], strides = [1, 1]} : vector<2x1152xf32> to vector<2x1024xf32>
    %67 = vector.broadcast %65 : f32 to vector<2x1024xf32>
    %68 = arith.mulf %67, %66 : vector<2x1024xf32>
    %69 = arith.addf %64, %68 : vector<2x1024xf32>
    %c1_26 = arith.constant 1 : index
    %c3_27 = arith.constant 3 : index
    %70 = memref.load %arg2[%c1_26, %c3_27] : memref<16x9xf32, #tpu.memory_space<smem>>
    %71 = vector.extract_strided_slice %4 {offsets = [0, 32], sizes = [2, 1024], strides = [1, 1]} : vector<2x1152xf32> to vector<2x1024xf32>
    %72 = vector.broadcast %70 : f32 to vector<2x1024xf32>
    %73 = arith.mulf %72, %71 : vector<2x1024xf32>
    %74 = arith.addf %69, %73 : vector<2x1024xf32>
    %c1_28 = arith.constant 1 : index
    %c4_29 = arith.constant 4 : index
    %75 = memref.load %arg2[%c1_28, %c4_29] : memref<16x9xf32, #tpu.memory_space<smem>>
    %76 = vector.extract_strided_slice %4 {offsets = [0, 33], sizes = [2, 1024], strides = [1, 1]} : vector<2x1152xf32> to vector<2x1024xf32>
    %77 = vector.broadcast %75 : f32 to vector<2x1024xf32>
    %78 = arith.mulf %77, %76 : vector<2x1024xf32>
    %79 = arith.addf %74, %78 : vector<2x1024xf32>
    %c1_30 = arith.constant 1 : index
    %c5_31 = arith.constant 5 : index
    %80 = memref.load %arg2[%c1_30, %c5_31] : memref<16x9xf32, #tpu.memory_space<smem>>
    %81 = vector.extract_strided_slice %4 {offsets = [0, 34], sizes = [2, 1024], strides = [1, 1]} : vector<2x1152xf32> to vector<2x1024xf32>
    %82 = vector.broadcast %80 : f32 to vector<2x1024xf32>
    %83 = arith.mulf %82, %81 : vector<2x1024xf32>
    %84 = arith.addf %79, %83 : vector<2x1024xf32>
    %c1_32 = arith.constant 1 : index
    %c6_33 = arith.constant 6 : index
    %85 = memref.load %arg2[%c1_32, %c6_33] : memref<16x9xf32, #tpu.memory_space<smem>>
    %86 = vector.extract_strided_slice %4 {offsets = [0, 64], sizes = [2, 1024], strides = [1, 1]} : vector<2x1152xf32> to vector<2x1024xf32>
    %87 = vector.broadcast %85 : f32 to vector<2x1024xf32>
    %88 = arith.mulf %87, %86 : vector<2x1024xf32>
    %89 = arith.addf %84, %88 : vector<2x1024xf32>
    %c1_34 = arith.constant 1 : index
    %c7_35 = arith.constant 7 : index
    %90 = memref.load %arg2[%c1_34, %c7_35] : memref<16x9xf32, #tpu.memory_space<smem>>
    %91 = vector.extract_strided_slice %4 {offsets = [0, 65], sizes = [2, 1024], strides = [1, 1]} : vector<2x1152xf32> to vector<2x1024xf32>
    %92 = vector.broadcast %90 : f32 to vector<2x1024xf32>
    %93 = arith.mulf %92, %91 : vector<2x1024xf32>
    %94 = arith.addf %89, %93 : vector<2x1024xf32>
    %c1_36 = arith.constant 1 : index
    %c8_37 = arith.constant 8 : index
    %95 = memref.load %arg2[%c1_36, %c8_37] : memref<16x9xf32, #tpu.memory_space<smem>>
    %96 = vector.extract_strided_slice %4 {offsets = [0, 66], sizes = [2, 1024], strides = [1, 1]} : vector<2x1152xf32> to vector<2x1024xf32>
    %97 = vector.broadcast %95 : f32 to vector<2x1024xf32>
    %98 = arith.mulf %97, %96 : vector<2x1024xf32>
    %99 = arith.addf %94, %98 : vector<2x1024xf32>
    %c0_38 = arith.constant 0 : index
    %c1024_39 = arith.constant 1024 : index
    %100 = vector.load %arg7[%c0_38, %c1024_39] : memref<2x16384xf32, #tpu.memory_space<vmem>>, vector<2x1024xf32>
    tpu.vector_store %arg7[%c0_38, %c1024_39], %99 {strides = array<i32>} : memref<2x16384xf32, #tpu.memory_space<vmem>>, vector<2x1024xf32>,
    %c2_40 = arith.constant 2 : index
    %101 = memref.load %arg3[%c2_40] : memref<16xf32, #tpu.memory_space<smem>>
    %102 = vector.broadcast %101 : f32 to vector<2x1024xf32>
    %c2_41 = arith.constant 2 : index
    %c0_42 = arith.constant 0 : index
    %103 = memref.load %arg2[%c2_41, %c0_42] : memref<16x9xf32, #tpu.memory_space<smem>>
    %104 = vector.extract_strided_slice %4 {offsets = [0, 0], sizes = [2, 1024], strides = [1, 1]} : vector<2x1152xf32> to vector<2x1024xf32>
    %105 = vector.broadcast %103 : f32 to vector<2x1024xf32>
    %106 = arith.mulf %105, %104 : vector<2x1024xf32>
    %107 = arith.addf %102, %106 : vector<2x1024xf32>
    %c2_43 = arith.constant 2 : index
    %c1_44 = arith.constant 1 : index
    %108 = memref.load %arg2[%c2_43, %c1_44] : memref<16x9xf32, #tpu.memory_space<smem>>
    %109 = vector.extract_strided_slice %4 {offsets = [0, 1], sizes = [2, 1024], strides = [1, 1]} : vector<2x1152xf32> to vector<2x1024xf32>
    %110 = vector.broadcast %108 : f32 to vector<2x1024xf32>
    %111 = arith.mulf %110, %109 : vector<2x1024xf32>
    %112 = arith.addf %107, %111 : vector<2x1024xf32>
    %c2_45 = arith.constant 2 : index
    %c2_46 = arith.constant 2 : index
    %113 = memref.load %arg2[%c2_45, %c2_46] : memref<16x9xf32, #tpu.memory_space<smem>>
    %114 = vector.extract_strided_slice %4 {offsets = [0, 2], sizes = [2, 1024], strides = [1, 1]} : vector<2x1152xf32> to vector<2x1024xf32>
    %115 = vector.broadcast %113 : f32 to vector<2x1024xf32>
    %116 = arith.mulf %115, %114 : vector<2x1024xf32>
    %117 = arith.addf %112, %116 : vector<2x1024xf32>
    %c2_47 = arith.constant 2 : index
    %c3_48 = arith.constant 3 : index
    %118 = memref.load %arg2[%c2_47, %c3_48] : memref<16x9xf32, #tpu.memory_space<smem>>
    %119 = vector.extract_strided_slice %4 {offsets = [0, 32], sizes = [2, 1024], strides = [1, 1]} : vector<2x1152xf32> to vector<2x1024xf32>
    %120 = vector.broadcast %118 : f32 to vector<2x1024xf32>
    %121 = arith.mulf %120, %119 : vector<2x1024xf32>
    %122 = arith.addf %117, %121 : vector<2x1024xf32>
    %c2_49 = arith.constant 2 : index
    %c4_50 = arith.constant 4 : index
    %123 = memref.load %arg2[%c2_49, %c4_50] : memref<16x9xf32, #tpu.memory_space<smem>>
    %124 = vector.extract_strided_slice %4 {offsets = [0, 33], sizes = [2, 1024], strides = [1, 1]} : vector<2x1152xf32> to vector<2x1024xf32>
    %125 = vector.broadcast %123 : f32 to vector<2x1024xf32>
    %126 = arith.mulf %125, %124 : vector<2x1024xf32>
    %127 = arith.addf %122, %126 : vector<2x1024xf32>
    %c2_51 = arith.constant 2 : index
    %c5_52 = arith.constant 5 : index
    %128 = memref.load %arg2[%c2_51, %c5_52] : memref<16x9xf32, #tpu.memory_space<smem>>
    %129 = vector.extract_strided_slice %4 {offsets = [0, 34], sizes = [2, 1024], strides = [1, 1]} : vector<2x1152xf32> to vector<2x1024xf32>
    %130 = vector.broadcast %128 : f32 to vector<2x1024xf32>
    %131 = arith.mulf %130, %129 : vector<2x1024xf32>
    %132 = arith.addf %127, %131 : vector<2x1024xf32>
    %c2_53 = arith.constant 2 : index
    %c6_54 = arith.constant 6 : index
    %133 = memref.load %arg2[%c2_53, %c6_54] : memref<16x9xf32, #tpu.memory_space<smem>>
    %134 = vector.extract_strided_slice %4 {offsets = [0, 64], sizes = [2, 1024], strides = [1, 1]} : vector<2x1152xf32> to vector<2x1024xf32>
    %135 = vector.broadcast %133 : f32 to vector<2x1024xf32>
    %136 = arith.mulf %135, %134 : vector<2x1024xf32>
    %137 = arith.addf %132, %136 : vector<2x1024xf32>
    %c2_55 = arith.constant 2 : index
    %c7_56 = arith.constant 7 : index
    %138 = memref.load %arg2[%c2_55, %c7_56] : memref<16x9xf32, #tpu.memory_space<smem>>
    %139 = vector.extract_strided_slice %4 {offsets = [0, 65], sizes = [2, 1024], strides = [1, 1]} : vector<2x1152xf32> to vector<2x1024xf32>
    %140 = vector.broadcast %138 : f32 to vector<2x1024xf32>
    %141 = arith.mulf %140, %139 : vector<2x1024xf32>
    %142 = arith.addf %137, %141 : vector<2x1024xf32>
    %c2_57 = arith.constant 2 : index
    %c8_58 = arith.constant 8 : index
    %143 = memref.load %arg2[%c2_57, %c8_58] : memref<16x9xf32, #tpu.memory_space<smem>>
    %144 = vector.extract_strided_slice %4 {offsets = [0, 66], sizes = [2, 1024], strides = [1, 1]} : vector<2x1152xf32> to vector<2x1024xf32>
    %145 = vector.broadcast %143 : f32 to vector<2x1024xf32>
    %146 = arith.mulf %145, %144 : vector<2x1024xf32>
    %147 = arith.addf %142, %146 : vector<2x1024xf32>
    %c0_59 = arith.constant 0 : index
    %c2048 = arith.constant 2048 : index
    %148 = vector.load %arg7[%c0_59, %c2048] : memref<2x16384xf32, #tpu.memory_space<vmem>>, vector<2x1024xf32>
    tpu.vector_store %arg7[%c0_59, %c2048], %147 {strides = array<i32>} : memref<2x16384xf32, #tpu.memory_space<vmem>>, vector<2x1024xf32>,
    %c3_60 = arith.constant 3 : index
    %149 = memref.load %arg3[%c3_60] : memref<16xf32, #tpu.memory_space<smem>>
    %150 = vector.broadcast %149 : f32 to vector<2x1024xf32>
    %c3_61 = arith.constant 3 : index
    %c0_62 = arith.constant 0 : index
    %151 = memref.load %arg2[%c3_61, %c0_62] : memref<16x9xf32, #tpu.memory_space<smem>>
    %152 = vector.extract_strided_slice %4 {offsets = [0, 0], sizes = [2, 1024], strides = [1, 1]} : vector<2x1152xf32> to vector<2x1024xf32>
    %153 = vector.broadcast %151 : f32 to vector<2x1024xf32>
    %154 = arith.mulf %153, %152 : vector<2x1024xf32>
    %155 = arith.addf %150, %154 : vector<2x1024xf32>
    %c3_63 = arith.constant 3 : index
    %c1_64 = arith.constant 1 : index
    %156 = memref.load %arg2[%c3_63, %c1_64] : memref<16x9xf32, #tpu.memory_space<smem>>
    %157 = vector.extract_strided_slice %4 {offsets = [0, 1], sizes = [2, 1024], strides = [1, 1]} : vector<2x1152xf32> to vector<2x1024xf32>
    %158 = vector.broadcast %156 : f32 to vector<2x1024xf32>
    %159 = arith.mulf %158, %157 : vector<2x1024xf32>
    %160 = arith.addf %155, %159 : vector<2x1024xf32>
    %c3_65 = arith.constant 3 : index
    %c2_66 = arith.constant 2 : index
    %161 = memref.load %arg2[%c3_65, %c2_66] : memref<16x9xf32, #tpu.memory_space<smem>>
    %162 = vector.extract_strided_slice %4 {offsets = [0, 2], sizes = [2, 1024], strides = [1, 1]} : vector<2x1152xf32> to vector<2x1024xf32>
    %163 = vector.broadcast %161 : f32 to vector<2x1024xf32>
    %164 = arith.mulf %163, %162 : vector<2x1024xf32>
    %165 = arith.addf %160, %164 : vector<2x1024xf32>
    %c3_67 = arith.constant 3 : index
    %c3_68 = arith.constant 3 : index
    %166 = memref.load %arg2[%c3_67, %c3_68] : memref<16x9xf32, #tpu.memory_space<smem>>
    %167 = vector.extract_strided_slice %4 {offsets = [0, 32], sizes = [2, 1024], strides = [1, 1]} : vector<2x1152xf32> to vector<2x1024xf32>
    %168 = vector.broadcast %166 : f32 to vector<2x1024xf32>
    %169 = arith.mulf %168, %167 : vector<2x1024xf32>
    %170 = arith.addf %165, %169 : vector<2x1024xf32>
    %c3_69 = arith.constant 3 : index
    %c4_70 = arith.constant 4 : index
    %171 = memref.load %arg2[%c3_69, %c4_70] : memref<16x9xf32, #tpu.memory_space<smem>>
    %172 = vector.extract_strided_slice %4 {offsets = [0, 33], sizes = [2, 1024], strides = [1, 1]} : vector<2x1152xf32> to vector<2x1024xf32>
    %173 = vector.broadcast %171 : f32 to vector<2x1024xf32>
    %174 = arith.mulf %173, %172 : vector<2x1024xf32>
    %175 = arith.addf %170, %174 : vector<2x1024xf32>
    %c3_71 = arith.constant 3 : index
    %c5_72 = arith.constant 5 : index
    %176 = memref.load %arg2[%c3_71, %c5_72] : memref<16x9xf32, #tpu.memory_space<smem>>
    %177 = vector.extract_strided_slice %4 {offsets = [0, 34], sizes = [2, 1024], strides = [1, 1]} : vector<2x1152xf32> to vector<2x1024xf32>
    %178 = vector.broadcast %176 : f32 to vector<2x1024xf32>
    %179 = arith.mulf %178, %177 : vector<2x1024xf32>
    %180 = arith.addf %175, %179 : vector<2x1024xf32>
    %c3_73 = arith.constant 3 : index
    %c6_74 = arith.constant 6 : index
    %181 = memref.load %arg2[%c3_73, %c6_74] : memref<16x9xf32, #tpu.memory_space<smem>>
    %182 = vector.extract_strided_slice %4 {offsets = [0, 64], sizes = [2, 1024], strides = [1, 1]} : vector<2x1152xf32> to vector<2x1024xf32>
    %183 = vector.broadcast %181 : f32 to vector<2x1024xf32>
    %184 = arith.mulf %183, %182 : vector<2x1024xf32>
    %185 = arith.addf %180, %184 : vector<2x1024xf32>
    %c3_75 = arith.constant 3 : index
    %c7_76 = arith.constant 7 : index
    %186 = memref.load %arg2[%c3_75, %c7_76] : memref<16x9xf32, #tpu.memory_space<smem>>
    %187 = vector.extract_strided_slice %4 {offsets = [0, 65], sizes = [2, 1024], strides = [1, 1]} : vector<2x1152xf32> to vector<2x1024xf32>
    %188 = vector.broadcast %186 : f32 to vector<2x1024xf32>
    %189 = arith.mulf %188, %187 : vector<2x1024xf32>
    %190 = arith.addf %185, %189 : vector<2x1024xf32>
    %c3_77 = arith.constant 3 : index
    %c8_78 = arith.constant 8 : index
    %191 = memref.load %arg2[%c3_77, %c8_78] : memref<16x9xf32, #tpu.memory_space<smem>>
    %192 = vector.extract_strided_slice %4 {offsets = [0, 66], sizes = [2, 1024], strides = [1, 1]} : vector<2x1152xf32> to vector<2x1024xf32>
    %193 = vector.broadcast %191 : f32 to vector<2x1024xf32>
    %194 = arith.mulf %193, %192 : vector<2x1024xf32>
    %195 = arith.addf %190, %194 : vector<2x1024xf32>
    %c0_79 = arith.constant 0 : index
    %c3072 = arith.constant 3072 : index
    %196 = vector.load %arg7[%c0_79, %c3072] : memref<2x16384xf32, #tpu.memory_space<vmem>>, vector<2x1024xf32>
    tpu.vector_store %arg7[%c0_79, %c3072], %195 {strides = array<i32>} : memref<2x16384xf32, #tpu.memory_space<vmem>>, vector<2x1024xf32>,
    %c4_80 = arith.constant 4 : index
    %197 = memref.load %arg3[%c4_80] : memref<16xf32, #tpu.memory_space<smem>>
    %198 = vector.broadcast %197 : f32 to vector<2x1024xf32>
    %c4_81 = arith.constant 4 : index
    %c0_82 = arith.constant 0 : index
    %199 = memref.load %arg2[%c4_81, %c0_82] : memref<16x9xf32, #tpu.memory_space<smem>>
    %200 = vector.extract_strided_slice %4 {offsets = [0, 0], sizes = [2, 1024], strides = [1, 1]} : vector<2x1152xf32> to vector<2x1024xf32>
    %201 = vector.broadcast %199 : f32 to vector<2x1024xf32>
    %202 = arith.mulf %201, %200 : vector<2x1024xf32>
    %203 = arith.addf %198, %202 : vector<2x1024xf32>
    %c4_83 = arith.constant 4 : index
    %c1_84 = arith.constant 1 : index
    %204 = memref.load %arg2[%c4_83, %c1_84] : memref<16x9xf32, #tpu.memory_space<smem>>
    %205 = vector.extract_strided_slice %4 {offsets = [0, 1], sizes = [2, 1024], strides = [1, 1]} : vector<2x1152xf32> to vector<2x1024xf32>
    %206 = vector.broadcast %204 : f32 to vector<2x1024xf32>
    %207 = arith.mulf %206, %205 : vector<2x1024xf32>
    %208 = arith.addf %203, %207 : vector<2x1024xf32>
    %c4_85 = arith.constant 4 : index
    %c2_86 = arith.constant 2 : index
    %209 = memref.load %arg2[%c4_85, %c2_86] : memref<16x9xf32, #tpu.memory_space<smem>>
    %210 = vector.extract_strided_slice %4 {offsets = [0, 2], sizes = [2, 1024], strides = [1, 1]} : vector<2x1152xf32> to vector<2x1024xf32>
    %211 = vector.broadcast %209 : f32 to vector<2x1024xf32>
    %212 = arith.mulf %211, %210 : vector<2x1024xf32>
    %213 = arith.addf %208, %212 : vector<2x1024xf32>
    %c4_87 = arith.constant 4 : index
    %c3_88 = arith.constant 3 : index
    %214 = memref.load %arg2[%c4_87, %c3_88] : memref<16x9xf32, #tpu.memory_space<smem>>
    %215 = vector.extract_strided_slice %4 {offsets = [0, 32], sizes = [2, 1024], strides = [1, 1]} : vector<2x1152xf32> to vector<2x1024xf32>
    %216 = vector.broadcast %214 : f32 to vector<2x1024xf32>
    %217 = arith.mulf %216, %215 : vector<2x1024xf32>
    %218 = arith.addf %213, %217 : vector<2x1024xf32>
    %c4_89 = arith.constant 4 : index
    %c4_90 = arith.constant 4 : index
    %219 = memref.load %arg2[%c4_89, %c4_90] : memref<16x9xf32, #tpu.memory_space<smem>>
    %220 = vector.extract_strided_slice %4 {offsets = [0, 33], sizes = [2, 1024], strides = [1, 1]} : vector<2x1152xf32> to vector<2x1024xf32>
    %221 = vector.broadcast %219 : f32 to vector<2x1024xf32>
    %222 = arith.mulf %221, %220 : vector<2x1024xf32>
    %223 = arith.addf %218, %222 : vector<2x1024xf32>
    %c4_91 = arith.constant 4 : index
    %c5_92 = arith.constant 5 : index
    %224 = memref.load %arg2[%c4_91, %c5_92] : memref<16x9xf32, #tpu.memory_space<smem>>
    %225 = vector.extract_strided_slice %4 {offsets = [0, 34], sizes = [2, 1024], strides = [1, 1]} : vector<2x1152xf32> to vector<2x1024xf32>
    %226 = vector.broadcast %224 : f32 to vector<2x1024xf32>
    %227 = arith.mulf %226, %225 : vector<2x1024xf32>
    %228 = arith.addf %223, %227 : vector<2x1024xf32>
    %c4_93 = arith.constant 4 : index
    %c6_94 = arith.constant 6 : index
    %229 = memref.load %arg2[%c4_93, %c6_94] : memref<16x9xf32, #tpu.memory_space<smem>>
    %230 = vector.extract_strided_slice %4 {offsets = [0, 64], sizes = [2, 1024], strides = [1, 1]} : vector<2x1152xf32> to vector<2x1024xf32>
    %231 = vector.broadcast %229 : f32 to vector<2x1024xf32>
    %232 = arith.mulf %231, %230 : vector<2x1024xf32>
    %233 = arith.addf %228, %232 : vector<2x1024xf32>
    %c4_95 = arith.constant 4 : index
    %c7_96 = arith.constant 7 : index
    %234 = memref.load %arg2[%c4_95, %c7_96] : memref<16x9xf32, #tpu.memory_space<smem>>
    %235 = vector.extract_strided_slice %4 {offsets = [0, 65], sizes = [2, 1024], strides = [1, 1]} : vector<2x1152xf32> to vector<2x1024xf32>
    %236 = vector.broadcast %234 : f32 to vector<2x1024xf32>
    %237 = arith.mulf %236, %235 : vector<2x1024xf32>
    %238 = arith.addf %233, %237 : vector<2x1024xf32>
    %c4_97 = arith.constant 4 : index
    %c8_98 = arith.constant 8 : index
    %239 = memref.load %arg2[%c4_97, %c8_98] : memref<16x9xf32, #tpu.memory_space<smem>>
    %240 = vector.extract_strided_slice %4 {offsets = [0, 66], sizes = [2, 1024], strides = [1, 1]} : vector<2x1152xf32> to vector<2x1024xf32>
    %241 = vector.broadcast %239 : f32 to vector<2x1024xf32>
    %242 = arith.mulf %241, %240 : vector<2x1024xf32>
    %243 = arith.addf %238, %242 : vector<2x1024xf32>
    %c0_99 = arith.constant 0 : index
    %c4096 = arith.constant 4096 : index
    %244 = vector.load %arg7[%c0_99, %c4096] : memref<2x16384xf32, #tpu.memory_space<vmem>>, vector<2x1024xf32>
    tpu.vector_store %arg7[%c0_99, %c4096], %243 {strides = array<i32>} : memref<2x16384xf32, #tpu.memory_space<vmem>>, vector<2x1024xf32>,
    %c5_100 = arith.constant 5 : index
    %245 = memref.load %arg3[%c5_100] : memref<16xf32, #tpu.memory_space<smem>>
    %246 = vector.broadcast %245 : f32 to vector<2x1024xf32>
    %c5_101 = arith.constant 5 : index
    %c0_102 = arith.constant 0 : index
    %247 = memref.load %arg2[%c5_101, %c0_102] : memref<16x9xf32, #tpu.memory_space<smem>>
    %248 = vector.extract_strided_slice %4 {offsets = [0, 0], sizes = [2, 1024], strides = [1, 1]} : vector<2x1152xf32> to vector<2x1024xf32>
    %249 = vector.broadcast %247 : f32 to vector<2x1024xf32>
    %250 = arith.mulf %249, %248 : vector<2x1024xf32>
    %251 = arith.addf %246, %250 : vector<2x1024xf32>
    %c5_103 = arith.constant 5 : index
    %c1_104 = arith.constant 1 : index
    %252 = memref.load %arg2[%c5_103, %c1_104] : memref<16x9xf32, #tpu.memory_space<smem>>
    %253 = vector.extract_strided_slice %4 {offsets = [0, 1], sizes = [2, 1024], strides = [1, 1]} : vector<2x1152xf32> to vector<2x1024xf32>
    %254 = vector.broadcast %252 : f32 to vector<2x1024xf32>
    %255 = arith.mulf %254, %253 : vector<2x1024xf32>
    %256 = arith.addf %251, %255 : vector<2x1024xf32>
    %c5_105 = arith.constant 5 : index
    %c2_106 = arith.constant 2 : index
    %257 = memref.load %arg2[%c5_105, %c2_106] : memref<16x9xf32, #tpu.memory_space<smem>>
    %258 = vector.extract_strided_slice %4 {offsets = [0, 2], sizes = [2, 1024], strides = [1, 1]} : vector<2x1152xf32> to vector<2x1024xf32>
    %259 = vector.broadcast %257 : f32 to vector<2x1024xf32>
    %260 = arith.mulf %259, %258 : vector<2x1024xf32>
    %261 = arith.addf %256, %260 : vector<2x1024xf32>
    %c5_107 = arith.constant 5 : index
    %c3_108 = arith.constant 3 : index
    %262 = memref.load %arg2[%c5_107, %c3_108] : memref<16x9xf32, #tpu.memory_space<smem>>
    %263 = vector.extract_strided_slice %4 {offsets = [0, 32], sizes = [2, 1024], strides = [1, 1]} : vector<2x1152xf32> to vector<2x1024xf32>
    %264 = vector.broadcast %262 : f32 to vector<2x1024xf32>
    %265 = arith.mulf %264, %263 : vector<2x1024xf32>
    %266 = arith.addf %261, %265 : vector<2x1024xf32>
    %c5_109 = arith.constant 5 : index
    %c4_110 = arith.constant 4 : index
    %267 = memref.load %arg2[%c5_109, %c4_110] : memref<16x9xf32, #tpu.memory_space<smem>>
    %268 = vector.extract_strided_slice %4 {offsets = [0, 33], sizes = [2, 1024], strides = [1, 1]} : vector<2x1152xf32> to vector<2x1024xf32>
    %269 = vector.broadcast %267 : f32 to vector<2x1024xf32>
    %270 = arith.mulf %269, %268 : vector<2x1024xf32>
    %271 = arith.addf %266, %270 : vector<2x1024xf32>
    %c5_111 = arith.constant 5 : index
    %c5_112 = arith.constant 5 : index
    %272 = memref.load %arg2[%c5_111, %c5_112] : memref<16x9xf32, #tpu.memory_space<smem>>
    %273 = vector.extract_strided_slice %4 {offsets = [0, 34], sizes = [2, 1024], strides = [1, 1]} : vector<2x1152xf32> to vector<2x1024xf32>
    %274 = vector.broadcast %272 : f32 to vector<2x1024xf32>
    %275 = arith.mulf %274, %273 : vector<2x1024xf32>
    %276 = arith.addf %271, %275 : vector<2x1024xf32>
    %c5_113 = arith.constant 5 : index
    %c6_114 = arith.constant 6 : index
    %277 = memref.load %arg2[%c5_113, %c6_114] : memref<16x9xf32, #tpu.memory_space<smem>>
    %278 = vector.extract_strided_slice %4 {offsets = [0, 64], sizes = [2, 1024], strides = [1, 1]} : vector<2x1152xf32> to vector<2x1024xf32>
    %279 = vector.broadcast %277 : f32 to vector<2x1024xf32>
    %280 = arith.mulf %279, %278 : vector<2x1024xf32>
    %281 = arith.addf %276, %280 : vector<2x1024xf32>
    %c5_115 = arith.constant 5 : index
    %c7_116 = arith.constant 7 : index
    %282 = memref.load %arg2[%c5_115, %c7_116] : memref<16x9xf32, #tpu.memory_space<smem>>
    %283 = vector.extract_strided_slice %4 {offsets = [0, 65], sizes = [2, 1024], strides = [1, 1]} : vector<2x1152xf32> to vector<2x1024xf32>
    %284 = vector.broadcast %282 : f32 to vector<2x1024xf32>
    %285 = arith.mulf %284, %283 : vector<2x1024xf32>
    %286 = arith.addf %281, %285 : vector<2x1024xf32>
    %c5_117 = arith.constant 5 : index
    %c8_118 = arith.constant 8 : index
    %287 = memref.load %arg2[%c5_117, %c8_118] : memref<16x9xf32, #tpu.memory_space<smem>>
    %288 = vector.extract_strided_slice %4 {offsets = [0, 66], sizes = [2, 1024], strides = [1, 1]} : vector<2x1152xf32> to vector<2x1024xf32>
    %289 = vector.broadcast %287 : f32 to vector<2x1024xf32>
    %290 = arith.mulf %289, %288 : vector<2x1024xf32>
    %291 = arith.addf %286, %290 : vector<2x1024xf32>
    %c0_119 = arith.constant 0 : index
    %c5120 = arith.constant 5120 : index
    %292 = vector.load %arg7[%c0_119, %c5120] : memref<2x16384xf32, #tpu.memory_space<vmem>>, vector<2x1024xf32>
    tpu.vector_store %arg7[%c0_119, %c5120], %291 {strides = array<i32>} : memref<2x16384xf32, #tpu.memory_space<vmem>>, vector<2x1024xf32>,
    %c6_120 = arith.constant 6 : index
    %293 = memref.load %arg3[%c6_120] : memref<16xf32, #tpu.memory_space<smem>>
    %294 = vector.broadcast %293 : f32 to vector<2x1024xf32>
    %c6_121 = arith.constant 6 : index
    %c0_122 = arith.constant 0 : index
    %295 = memref.load %arg2[%c6_121, %c0_122] : memref<16x9xf32, #tpu.memory_space<smem>>
    %296 = vector.extract_strided_slice %4 {offsets = [0, 0], sizes = [2, 1024], strides = [1, 1]} : vector<2x1152xf32> to vector<2x1024xf32>
    %297 = vector.broadcast %295 : f32 to vector<2x1024xf32>
    %298 = arith.mulf %297, %296 : vector<2x1024xf32>
    %299 = arith.addf %294, %298 : vector<2x1024xf32>
    %c6_123 = arith.constant 6 : index
    %c1_124 = arith.constant 1 : index
    %300 = memref.load %arg2[%c6_123, %c1_124] : memref<16x9xf32, #tpu.memory_space<smem>>
    %301 = vector.extract_strided_slice %4 {offsets = [0, 1], sizes = [2, 1024], strides = [1, 1]} : vector<2x1152xf32> to vector<2x1024xf32>
    %302 = vector.broadcast %300 : f32 to vector<2x1024xf32>
    %303 = arith.mulf %302, %301 : vector<2x1024xf32>
    %304 = arith.addf %299, %303 : vector<2x1024xf32>
    %c6_125 = arith.constant 6 : index
    %c2_126 = arith.constant 2 : index
    %305 = memref.load %arg2[%c6_125, %c2_126] : memref<16x9xf32, #tpu.memory_space<smem>>
    %306 = vector.extract_strided_slice %4 {offsets = [0, 2], sizes = [2, 1024], strides = [1, 1]} : vector<2x1152xf32> to vector<2x1024xf32>
    %307 = vector.broadcast %305 : f32 to vector<2x1024xf32>
    %308 = arith.mulf %307, %306 : vector<2x1024xf32>
    %309 = arith.addf %304, %308 : vector<2x1024xf32>
    %c6_127 = arith.constant 6 : index
    %c3_128 = arith.constant 3 : index
    %310 = memref.load %arg2[%c6_127, %c3_128] : memref<16x9xf32, #tpu.memory_space<smem>>
    %311 = vector.extract_strided_slice %4 {offsets = [0, 32], sizes = [2, 1024], strides = [1, 1]} : vector<2x1152xf32> to vector<2x1024xf32>
    %312 = vector.broadcast %310 : f32 to vector<2x1024xf32>
    %313 = arith.mulf %312, %311 : vector<2x1024xf32>
    %314 = arith.addf %309, %313 : vector<2x1024xf32>
    %c6_129 = arith.constant 6 : index
    %c4_130 = arith.constant 4 : index
    %315 = memref.load %arg2[%c6_129, %c4_130] : memref<16x9xf32, #tpu.memory_space<smem>>
    %316 = vector.extract_strided_slice %4 {offsets = [0, 33], sizes = [2, 1024], strides = [1, 1]} : vector<2x1152xf32> to vector<2x1024xf32>
    %317 = vector.broadcast %315 : f32 to vector<2x1024xf32>
    %318 = arith.mulf %317, %316 : vector<2x1024xf32>
    %319 = arith.addf %314, %318 : vector<2x1024xf32>
    %c6_131 = arith.constant 6 : index
    %c5_132 = arith.constant 5 : index
    %320 = memref.load %arg2[%c6_131, %c5_132] : memref<16x9xf32, #tpu.memory_space<smem>>
    %321 = vector.extract_strided_slice %4 {offsets = [0, 34], sizes = [2, 1024], strides = [1, 1]} : vector<2x1152xf32> to vector<2x1024xf32>
    %322 = vector.broadcast %320 : f32 to vector<2x1024xf32>
    %323 = arith.mulf %322, %321 : vector<2x1024xf32>
    %324 = arith.addf %319, %323 : vector<2x1024xf32>
    %c6_133 = arith.constant 6 : index
    %c6_134 = arith.constant 6 : index
    %325 = memref.load %arg2[%c6_133, %c6_134] : memref<16x9xf32, #tpu.memory_space<smem>>
    %326 = vector.extract_strided_slice %4 {offsets = [0, 64], sizes = [2, 1024], strides = [1, 1]} : vector<2x1152xf32> to vector<2x1024xf32>
    %327 = vector.broadcast %325 : f32 to vector<2x1024xf32>
    %328 = arith.mulf %327, %326 : vector<2x1024xf32>
    %329 = arith.addf %324, %328 : vector<2x1024xf32>
    %c6_135 = arith.constant 6 : index
    %c7_136 = arith.constant 7 : index
    %330 = memref.load %arg2[%c6_135, %c7_136] : memref<16x9xf32, #tpu.memory_space<smem>>
    %331 = vector.extract_strided_slice %4 {offsets = [0, 65], sizes = [2, 1024], strides = [1, 1]} : vector<2x1152xf32> to vector<2x1024xf32>
    %332 = vector.broadcast %330 : f32 to vector<2x1024xf32>
    %333 = arith.mulf %332, %331 : vector<2x1024xf32>
    %334 = arith.addf %329, %333 : vector<2x1024xf32>
    %c6_137 = arith.constant 6 : index
    %c8_138 = arith.constant 8 : index
    %335 = memref.load %arg2[%c6_137, %c8_138] : memref<16x9xf32, #tpu.memory_space<smem>>
    %336 = vector.extract_strided_slice %4 {offsets = [0, 66], sizes = [2, 1024], strides = [1, 1]} : vector<2x1152xf32> to vector<2x1024xf32>
    %337 = vector.broadcast %335 : f32 to vector<2x1024xf32>
    %338 = arith.mulf %337, %336 : vector<2x1024xf32>
    %339 = arith.addf %334, %338 : vector<2x1024xf32>
    %c0_139 = arith.constant 0 : index
    %c6144 = arith.constant 6144 : index
    %340 = vector.load %arg7[%c0_139, %c6144] : memref<2x16384xf32, #tpu.memory_space<vmem>>, vector<2x1024xf32>
    tpu.vector_store %arg7[%c0_139, %c6144], %339 {strides = array<i32>} : memref<2x16384xf32, #tpu.memory_space<vmem>>, vector<2x1024xf32>,
    %c7_140 = arith.constant 7 : index
    %341 = memref.load %arg3[%c7_140] : memref<16xf32, #tpu.memory_space<smem>>
    %342 = vector.broadcast %341 : f32 to vector<2x1024xf32>
    %c7_141 = arith.constant 7 : index
    %c0_142 = arith.constant 0 : index
    %343 = memref.load %arg2[%c7_141, %c0_142] : memref<16x9xf32, #tpu.memory_space<smem>>
    %344 = vector.extract_strided_slice %4 {offsets = [0, 0], sizes = [2, 1024], strides = [1, 1]} : vector<2x1152xf32> to vector<2x1024xf32>
    %345 = vector.broadcast %343 : f32 to vector<2x1024xf32>
    %346 = arith.mulf %345, %344 : vector<2x1024xf32>
    %347 = arith.addf %342, %346 : vector<2x1024xf32>
    %c7_143 = arith.constant 7 : index
    %c1_144 = arith.constant 1 : index
    %348 = memref.load %arg2[%c7_143, %c1_144] : memref<16x9xf32, #tpu.memory_space<smem>>
    %349 = vector.extract_strided_slice %4 {offsets = [0, 1], sizes = [2, 1024], strides = [1, 1]} : vector<2x1152xf32> to vector<2x1024xf32>
    %350 = vector.broadcast %348 : f32 to vector<2x1024xf32>
    %351 = arith.mulf %350, %349 : vector<2x1024xf32>
    %352 = arith.addf %347, %351 : vector<2x1024xf32>
    %c7_145 = arith.constant 7 : index
    %c2_146 = arith.constant 2 : index
    %353 = memref.load %arg2[%c7_145, %c2_146] : memref<16x9xf32, #tpu.memory_space<smem>>
    %354 = vector.extract_strided_slice %4 {offsets = [0, 2], sizes = [2, 1024], strides = [1, 1]} : vector<2x1152xf32> to vector<2x1024xf32>
    %355 = vector.broadcast %353 : f32 to vector<2x1024xf32>
    %356 = arith.mulf %355, %354 : vector<2x1024xf32>
    %357 = arith.addf %352, %356 : vector<2x1024xf32>
    %c7_147 = arith.constant 7 : index
    %c3_148 = arith.constant 3 : index
    %358 = memref.load %arg2[%c7_147, %c3_148] : memref<16x9xf32, #tpu.memory_space<smem>>
    %359 = vector.extract_strided_slice %4 {offsets = [0, 32], sizes = [2, 1024], strides = [1, 1]} : vector<2x1152xf32> to vector<2x1024xf32>
    %360 = vector.broadcast %358 : f32 to vector<2x1024xf32>
    %361 = arith.mulf %360, %359 : vector<2x1024xf32>
    %362 = arith.addf %357, %361 : vector<2x1024xf32>
    %c7_149 = arith.constant 7 : index
    %c4_150 = arith.constant 4 : index
    %363 = memref.load %arg2[%c7_149, %c4_150] : memref<16x9xf32, #tpu.memory_space<smem>>
    %364 = vector.extract_strided_slice %4 {offsets = [0, 33], sizes = [2, 1024], strides = [1, 1]} : vector<2x1152xf32> to vector<2x1024xf32>
    %365 = vector.broadcast %363 : f32 to vector<2x1024xf32>
    %366 = arith.mulf %365, %364 : vector<2x1024xf32>
    %367 = arith.addf %362, %366 : vector<2x1024xf32>
    %c7_151 = arith.constant 7 : index
    %c5_152 = arith.constant 5 : index
    %368 = memref.load %arg2[%c7_151, %c5_152] : memref<16x9xf32, #tpu.memory_space<smem>>
    %369 = vector.extract_strided_slice %4 {offsets = [0, 34], sizes = [2, 1024], strides = [1, 1]} : vector<2x1152xf32> to vector<2x1024xf32>
    %370 = vector.broadcast %368 : f32 to vector<2x1024xf32>
    %371 = arith.mulf %370, %369 : vector<2x1024xf32>
    %372 = arith.addf %367, %371 : vector<2x1024xf32>
    %c7_153 = arith.constant 7 : index
    %c6_154 = arith.constant 6 : index
    %373 = memref.load %arg2[%c7_153, %c6_154] : memref<16x9xf32, #tpu.memory_space<smem>>
    %374 = vector.extract_strided_slice %4 {offsets = [0, 64], sizes = [2, 1024], strides = [1, 1]} : vector<2x1152xf32> to vector<2x1024xf32>
    %375 = vector.broadcast %373 : f32 to vector<2x1024xf32>
    %376 = arith.mulf %375, %374 : vector<2x1024xf32>
    %377 = arith.addf %372, %376 : vector<2x1024xf32>
    %c7_155 = arith.constant 7 : index
    %c7_156 = arith.constant 7 : index
    %378 = memref.load %arg2[%c7_155, %c7_156] : memref<16x9xf32, #tpu.memory_space<smem>>
    %379 = vector.extract_strided_slice %4 {offsets = [0, 65], sizes = [2, 1024], strides = [1, 1]} : vector<2x1152xf32> to vector<2x1024xf32>
    %380 = vector.broadcast %378 : f32 to vector<2x1024xf32>
    %381 = arith.mulf %380, %379 : vector<2x1024xf32>
    %382 = arith.addf %377, %381 : vector<2x1024xf32>
    %c7_157 = arith.constant 7 : index
    %c8_158 = arith.constant 8 : index
    %383 = memref.load %arg2[%c7_157, %c8_158] : memref<16x9xf32, #tpu.memory_space<smem>>
    %384 = vector.extract_strided_slice %4 {offsets = [0, 66], sizes = [2, 1024], strides = [1, 1]} : vector<2x1152xf32> to vector<2x1024xf32>
    %385 = vector.broadcast %383 : f32 to vector<2x1024xf32>
    %386 = arith.mulf %385, %384 : vector<2x1024xf32>
    %387 = arith.addf %382, %386 : vector<2x1024xf32>
    %c0_159 = arith.constant 0 : index
    %c7168 = arith.constant 7168 : index
    %388 = vector.load %arg7[%c0_159, %c7168] : memref<2x16384xf32, #tpu.memory_space<vmem>>, vector<2x1024xf32>
    tpu.vector_store %arg7[%c0_159, %c7168], %387 {strides = array<i32>} : memref<2x16384xf32, #tpu.memory_space<vmem>>, vector<2x1024xf32>,
    %c8_160 = arith.constant 8 : index
    %389 = memref.load %arg3[%c8_160] : memref<16xf32, #tpu.memory_space<smem>>
    %390 = vector.broadcast %389 : f32 to vector<2x1024xf32>
    %c8_161 = arith.constant 8 : index
    %c0_162 = arith.constant 0 : index
    %391 = memref.load %arg2[%c8_161, %c0_162] : memref<16x9xf32, #tpu.memory_space<smem>>
    %392 = vector.extract_strided_slice %4 {offsets = [0, 0], sizes = [2, 1024], strides = [1, 1]} : vector<2x1152xf32> to vector<2x1024xf32>
    %393 = vector.broadcast %391 : f32 to vector<2x1024xf32>
    %394 = arith.mulf %393, %392 : vector<2x1024xf32>
    %395 = arith.addf %390, %394 : vector<2x1024xf32>
    %c8_163 = arith.constant 8 : index
    %c1_164 = arith.constant 1 : index
    %396 = memref.load %arg2[%c8_163, %c1_164] : memref<16x9xf32, #tpu.memory_space<smem>>
    %397 = vector.extract_strided_slice %4 {offsets = [0, 1], sizes = [2, 1024], strides = [1, 1]} : vector<2x1152xf32> to vector<2x1024xf32>
    %398 = vector.broadcast %396 : f32 to vector<2x1024xf32>
    %399 = arith.mulf %398, %397 : vector<2x1024xf32>
    %400 = arith.addf %395, %399 : vector<2x1024xf32>
    %c8_165 = arith.constant 8 : index
    %c2_166 = arith.constant 2 : index
    %401 = memref.load %arg2[%c8_165, %c2_166] : memref<16x9xf32, #tpu.memory_space<smem>>
    %402 = vector.extract_strided_slice %4 {offsets = [0, 2], sizes = [2, 1024], strides = [1, 1]} : vector<2x1152xf32> to vector<2x1024xf32>
    %403 = vector.broadcast %401 : f32 to vector<2x1024xf32>
    %404 = arith.mulf %403, %402 : vector<2x1024xf32>
    %405 = arith.addf %400, %404 : vector<2x1024xf32>
    %c8_167 = arith.constant 8 : index
    %c3_168 = arith.constant 3 : index
    %406 = memref.load %arg2[%c8_167, %c3_168] : memref<16x9xf32, #tpu.memory_space<smem>>
    %407 = vector.extract_strided_slice %4 {offsets = [0, 32], sizes = [2, 1024], strides = [1, 1]} : vector<2x1152xf32> to vector<2x1024xf32>
    %408 = vector.broadcast %406 : f32 to vector<2x1024xf32>
    %409 = arith.mulf %408, %407 : vector<2x1024xf32>
    %410 = arith.addf %405, %409 : vector<2x1024xf32>
    %c8_169 = arith.constant 8 : index
    %c4_170 = arith.constant 4 : index
    %411 = memref.load %arg2[%c8_169, %c4_170] : memref<16x9xf32, #tpu.memory_space<smem>>
    %412 = vector.extract_strided_slice %4 {offsets = [0, 33], sizes = [2, 1024], strides = [1, 1]} : vector<2x1152xf32> to vector<2x1024xf32>
    %413 = vector.broadcast %411 : f32 to vector<2x1024xf32>
    %414 = arith.mulf %413, %412 : vector<2x1024xf32>
    %415 = arith.addf %410, %414 : vector<2x1024xf32>
    %c8_171 = arith.constant 8 : index
    %c5_172 = arith.constant 5 : index
    %416 = memref.load %arg2[%c8_171, %c5_172] : memref<16x9xf32, #tpu.memory_space<smem>>
    %417 = vector.extract_strided_slice %4 {offsets = [0, 34], sizes = [2, 1024], strides = [1, 1]} : vector<2x1152xf32> to vector<2x1024xf32>
    %418 = vector.broadcast %416 : f32 to vector<2x1024xf32>
    %419 = arith.mulf %418, %417 : vector<2x1024xf32>
    %420 = arith.addf %415, %419 : vector<2x1024xf32>
    %c8_173 = arith.constant 8 : index
    %c6_174 = arith.constant 6 : index
    %421 = memref.load %arg2[%c8_173, %c6_174] : memref<16x9xf32, #tpu.memory_space<smem>>
    %422 = vector.extract_strided_slice %4 {offsets = [0, 64], sizes = [2, 1024], strides = [1, 1]} : vector<2x1152xf32> to vector<2x1024xf32>
    %423 = vector.broadcast %421 : f32 to vector<2x1024xf32>
    %424 = arith.mulf %423, %422 : vector<2x1024xf32>
    %425 = arith.addf %420, %424 : vector<2x1024xf32>
    %c8_175 = arith.constant 8 : index
    %c7_176 = arith.constant 7 : index
    %426 = memref.load %arg2[%c8_175, %c7_176] : memref<16x9xf32, #tpu.memory_space<smem>>
    %427 = vector.extract_strided_slice %4 {offsets = [0, 65], sizes = [2, 1024], strides = [1, 1]} : vector<2x1152xf32> to vector<2x1024xf32>
    %428 = vector.broadcast %426 : f32 to vector<2x1024xf32>
    %429 = arith.mulf %428, %427 : vector<2x1024xf32>
    %430 = arith.addf %425, %429 : vector<2x1024xf32>
    %c8_177 = arith.constant 8 : index
    %c8_178 = arith.constant 8 : index
    %431 = memref.load %arg2[%c8_177, %c8_178] : memref<16x9xf32, #tpu.memory_space<smem>>
    %432 = vector.extract_strided_slice %4 {offsets = [0, 66], sizes = [2, 1024], strides = [1, 1]} : vector<2x1152xf32> to vector<2x1024xf32>
    %433 = vector.broadcast %431 : f32 to vector<2x1024xf32>
    %434 = arith.mulf %433, %432 : vector<2x1024xf32>
    %435 = arith.addf %430, %434 : vector<2x1024xf32>
    %c0_179 = arith.constant 0 : index
    %c8192 = arith.constant 8192 : index
    %436 = vector.load %arg7[%c0_179, %c8192] : memref<2x16384xf32, #tpu.memory_space<vmem>>, vector<2x1024xf32>
    tpu.vector_store %arg7[%c0_179, %c8192], %435 {strides = array<i32>} : memref<2x16384xf32, #tpu.memory_space<vmem>>, vector<2x1024xf32>,
    %c9 = arith.constant 9 : index
    %437 = memref.load %arg3[%c9] : memref<16xf32, #tpu.memory_space<smem>>
    %438 = vector.broadcast %437 : f32 to vector<2x1024xf32>
    %c9_180 = arith.constant 9 : index
    %c0_181 = arith.constant 0 : index
    %439 = memref.load %arg2[%c9_180, %c0_181] : memref<16x9xf32, #tpu.memory_space<smem>>
    %440 = vector.extract_strided_slice %4 {offsets = [0, 0], sizes = [2, 1024], strides = [1, 1]} : vector<2x1152xf32> to vector<2x1024xf32>
    %441 = vector.broadcast %439 : f32 to vector<2x1024xf32>
    %442 = arith.mulf %441, %440 : vector<2x1024xf32>
    %443 = arith.addf %438, %442 : vector<2x1024xf32>
    %c9_182 = arith.constant 9 : index
    %c1_183 = arith.constant 1 : index
    %444 = memref.load %arg2[%c9_182, %c1_183] : memref<16x9xf32, #tpu.memory_space<smem>>
    %445 = vector.extract_strided_slice %4 {offsets = [0, 1], sizes = [2, 1024], strides = [1, 1]} : vector<2x1152xf32> to vector<2x1024xf32>
    %446 = vector.broadcast %444 : f32 to vector<2x1024xf32>
    %447 = arith.mulf %446, %445 : vector<2x1024xf32>
    %448 = arith.addf %443, %447 : vector<2x1024xf32>
    %c9_184 = arith.constant 9 : index
    %c2_185 = arith.constant 2 : index
    %449 = memref.load %arg2[%c9_184, %c2_185] : memref<16x9xf32, #tpu.memory_space<smem>>
    %450 = vector.extract_strided_slice %4 {offsets = [0, 2], sizes = [2, 1024], strides = [1, 1]} : vector<2x1152xf32> to vector<2x1024xf32>
    %451 = vector.broadcast %449 : f32 to vector<2x1024xf32>
    %452 = arith.mulf %451, %450 : vector<2x1024xf32>
    %453 = arith.addf %448, %452 : vector<2x1024xf32>
    %c9_186 = arith.constant 9 : index
    %c3_187 = arith.constant 3 : index
    %454 = memref.load %arg2[%c9_186, %c3_187] : memref<16x9xf32, #tpu.memory_space<smem>>
    %455 = vector.extract_strided_slice %4 {offsets = [0, 32], sizes = [2, 1024], strides = [1, 1]} : vector<2x1152xf32> to vector<2x1024xf32>
    %456 = vector.broadcast %454 : f32 to vector<2x1024xf32>
    %457 = arith.mulf %456, %455 : vector<2x1024xf32>
    %458 = arith.addf %453, %457 : vector<2x1024xf32>
    %c9_188 = arith.constant 9 : index
    %c4_189 = arith.constant 4 : index
    %459 = memref.load %arg2[%c9_188, %c4_189] : memref<16x9xf32, #tpu.memory_space<smem>>
    %460 = vector.extract_strided_slice %4 {offsets = [0, 33], sizes = [2, 1024], strides = [1, 1]} : vector<2x1152xf32> to vector<2x1024xf32>
    %461 = vector.broadcast %459 : f32 to vector<2x1024xf32>
    %462 = arith.mulf %461, %460 : vector<2x1024xf32>
    %463 = arith.addf %458, %462 : vector<2x1024xf32>
    %c9_190 = arith.constant 9 : index
    %c5_191 = arith.constant 5 : index
    %464 = memref.load %arg2[%c9_190, %c5_191] : memref<16x9xf32, #tpu.memory_space<smem>>
    %465 = vector.extract_strided_slice %4 {offsets = [0, 34], sizes = [2, 1024], strides = [1, 1]} : vector<2x1152xf32> to vector<2x1024xf32>
    %466 = vector.broadcast %464 : f32 to vector<2x1024xf32>
    %467 = arith.mulf %466, %465 : vector<2x1024xf32>
    %468 = arith.addf %463, %467 : vector<2x1024xf32>
    %c9_192 = arith.constant 9 : index
    %c6_193 = arith.constant 6 : index
    %469 = memref.load %arg2[%c9_192, %c6_193] : memref<16x9xf32, #tpu.memory_space<smem>>
    %470 = vector.extract_strided_slice %4 {offsets = [0, 64], sizes = [2, 1024], strides = [1, 1]} : vector<2x1152xf32> to vector<2x1024xf32>
    %471 = vector.broadcast %469 : f32 to vector<2x1024xf32>
    %472 = arith.mulf %471, %470 : vector<2x1024xf32>
    %473 = arith.addf %468, %472 : vector<2x1024xf32>
    %c9_194 = arith.constant 9 : index
    %c7_195 = arith.constant 7 : index
    %474 = memref.load %arg2[%c9_194, %c7_195] : memref<16x9xf32, #tpu.memory_space<smem>>
    %475 = vector.extract_strided_slice %4 {offsets = [0, 65], sizes = [2, 1024], strides = [1, 1]} : vector<2x1152xf32> to vector<2x1024xf32>
    %476 = vector.broadcast %474 : f32 to vector<2x1024xf32>
    %477 = arith.mulf %476, %475 : vector<2x1024xf32>
    %478 = arith.addf %473, %477 : vector<2x1024xf32>
    %c9_196 = arith.constant 9 : index
    %c8_197 = arith.constant 8 : index
    %479 = memref.load %arg2[%c9_196, %c8_197] : memref<16x9xf32, #tpu.memory_space<smem>>
    %480 = vector.extract_strided_slice %4 {offsets = [0, 66], sizes = [2, 1024], strides = [1, 1]} : vector<2x1152xf32> to vector<2x1024xf32>
    %481 = vector.broadcast %479 : f32 to vector<2x1024xf32>
    %482 = arith.mulf %481, %480 : vector<2x1024xf32>
    %483 = arith.addf %478, %482 : vector<2x1024xf32>
    %c0_198 = arith.constant 0 : index
    %c9216 = arith.constant 9216 : index
    %484 = vector.load %arg7[%c0_198, %c9216] : memref<2x16384xf32, #tpu.memory_space<vmem>>, vector<2x1024xf32>
    tpu.vector_store %arg7[%c0_198, %c9216], %483 {strides = array<i32>} : memref<2x16384xf32, #tpu.memory_space<vmem>>, vector<2x1024xf32>,
    %c10 = arith.constant 10 : index
    %485 = memref.load %arg3[%c10] : memref<16xf32, #tpu.memory_space<smem>>
    %486 = vector.broadcast %485 : f32 to vector<2x1024xf32>
    %c10_199 = arith.constant 10 : index
    %c0_200 = arith.constant 0 : index
    %487 = memref.load %arg2[%c10_199, %c0_200] : memref<16x9xf32, #tpu.memory_space<smem>>
    %488 = vector.extract_strided_slice %4 {offsets = [0, 0], sizes = [2, 1024], strides = [1, 1]} : vector<2x1152xf32> to vector<2x1024xf32>
    %489 = vector.broadcast %487 : f32 to vector<2x1024xf32>
    %490 = arith.mulf %489, %488 : vector<2x1024xf32>
    %491 = arith.addf %486, %490 : vector<2x1024xf32>
    %c10_201 = arith.constant 10 : index
    %c1_202 = arith.constant 1 : index
    %492 = memref.load %arg2[%c10_201, %c1_202] : memref<16x9xf32, #tpu.memory_space<smem>>
    %493 = vector.extract_strided_slice %4 {offsets = [0, 1], sizes = [2, 1024], strides = [1, 1]} : vector<2x1152xf32> to vector<2x1024xf32>
    %494 = vector.broadcast %492 : f32 to vector<2x1024xf32>
    %495 = arith.mulf %494, %493 : vector<2x1024xf32>
    %496 = arith.addf %491, %495 : vector<2x1024xf32>
    %c10_203 = arith.constant 10 : index
    %c2_204 = arith.constant 2 : index
    %497 = memref.load %arg2[%c10_203, %c2_204] : memref<16x9xf32, #tpu.memory_space<smem>>
    %498 = vector.extract_strided_slice %4 {offsets = [0, 2], sizes = [2, 1024], strides = [1, 1]} : vector<2x1152xf32> to vector<2x1024xf32>
    %499 = vector.broadcast %497 : f32 to vector<2x1024xf32>
    %500 = arith.mulf %499, %498 : vector<2x1024xf32>
    %501 = arith.addf %496, %500 : vector<2x1024xf32>
    %c10_205 = arith.constant 10 : index
    %c3_206 = arith.constant 3 : index
    %502 = memref.load %arg2[%c10_205, %c3_206] : memref<16x9xf32, #tpu.memory_space<smem>>
    %503 = vector.extract_strided_slice %4 {offsets = [0, 32], sizes = [2, 1024], strides = [1, 1]} : vector<2x1152xf32> to vector<2x1024xf32>
    %504 = vector.broadcast %502 : f32 to vector<2x1024xf32>
    %505 = arith.mulf %504, %503 : vector<2x1024xf32>
    %506 = arith.addf %501, %505 : vector<2x1024xf32>
    %c10_207 = arith.constant 10 : index
    %c4_208 = arith.constant 4 : index
    %507 = memref.load %arg2[%c10_207, %c4_208] : memref<16x9xf32, #tpu.memory_space<smem>>
    %508 = vector.extract_strided_slice %4 {offsets = [0, 33], sizes = [2, 1024], strides = [1, 1]} : vector<2x1152xf32> to vector<2x1024xf32>
    %509 = vector.broadcast %507 : f32 to vector<2x1024xf32>
    %510 = arith.mulf %509, %508 : vector<2x1024xf32>
    %511 = arith.addf %506, %510 : vector<2x1024xf32>
    %c10_209 = arith.constant 10 : index
    %c5_210 = arith.constant 5 : index
    %512 = memref.load %arg2[%c10_209, %c5_210] : memref<16x9xf32, #tpu.memory_space<smem>>
    %513 = vector.extract_strided_slice %4 {offsets = [0, 34], sizes = [2, 1024], strides = [1, 1]} : vector<2x1152xf32> to vector<2x1024xf32>
    %514 = vector.broadcast %512 : f32 to vector<2x1024xf32>
    %515 = arith.mulf %514, %513 : vector<2x1024xf32>
    %516 = arith.addf %511, %515 : vector<2x1024xf32>
    %c10_211 = arith.constant 10 : index
    %c6_212 = arith.constant 6 : index
    %517 = memref.load %arg2[%c10_211, %c6_212] : memref<16x9xf32, #tpu.memory_space<smem>>
    %518 = vector.extract_strided_slice %4 {offsets = [0, 64], sizes = [2, 1024], strides = [1, 1]} : vector<2x1152xf32> to vector<2x1024xf32>
    %519 = vector.broadcast %517 : f32 to vector<2x1024xf32>
    %520 = arith.mulf %519, %518 : vector<2x1024xf32>
    %521 = arith.addf %516, %520 : vector<2x1024xf32>
    %c10_213 = arith.constant 10 : index
    %c7_214 = arith.constant 7 : index
    %522 = memref.load %arg2[%c10_213, %c7_214] : memref<16x9xf32, #tpu.memory_space<smem>>
    %523 = vector.extract_strided_slice %4 {offsets = [0, 65], sizes = [2, 1024], strides = [1, 1]} : vector<2x1152xf32> to vector<2x1024xf32>
    %524 = vector.broadcast %522 : f32 to vector<2x1024xf32>
    %525 = arith.mulf %524, %523 : vector<2x1024xf32>
    %526 = arith.addf %521, %525 : vector<2x1024xf32>
    %c10_215 = arith.constant 10 : index
    %c8_216 = arith.constant 8 : index
    %527 = memref.load %arg2[%c10_215, %c8_216] : memref<16x9xf32, #tpu.memory_space<smem>>
    %528 = vector.extract_strided_slice %4 {offsets = [0, 66], sizes = [2, 1024], strides = [1, 1]} : vector<2x1152xf32> to vector<2x1024xf32>
    %529 = vector.broadcast %527 : f32 to vector<2x1024xf32>
    %530 = arith.mulf %529, %528 : vector<2x1024xf32>
    %531 = arith.addf %526, %530 : vector<2x1024xf32>
    %c0_217 = arith.constant 0 : index
    %c10240 = arith.constant 10240 : index
    %532 = vector.load %arg7[%c0_217, %c10240] : memref<2x16384xf32, #tpu.memory_space<vmem>>, vector<2x1024xf32>
    tpu.vector_store %arg7[%c0_217, %c10240], %531 {strides = array<i32>} : memref<2x16384xf32, #tpu.memory_space<vmem>>, vector<2x1024xf32>,
    %c11 = arith.constant 11 : index
    %533 = memref.load %arg3[%c11] : memref<16xf32, #tpu.memory_space<smem>>
    %534 = vector.broadcast %533 : f32 to vector<2x1024xf32>
    %c11_218 = arith.constant 11 : index
    %c0_219 = arith.constant 0 : index
    %535 = memref.load %arg2[%c11_218, %c0_219] : memref<16x9xf32, #tpu.memory_space<smem>>
    %536 = vector.extract_strided_slice %4 {offsets = [0, 0], sizes = [2, 1024], strides = [1, 1]} : vector<2x1152xf32> to vector<2x1024xf32>
    %537 = vector.broadcast %535 : f32 to vector<2x1024xf32>
    %538 = arith.mulf %537, %536 : vector<2x1024xf32>
    %539 = arith.addf %534, %538 : vector<2x1024xf32>
    %c11_220 = arith.constant 11 : index
    %c1_221 = arith.constant 1 : index
    %540 = memref.load %arg2[%c11_220, %c1_221] : memref<16x9xf32, #tpu.memory_space<smem>>
    %541 = vector.extract_strided_slice %4 {offsets = [0, 1], sizes = [2, 1024], strides = [1, 1]} : vector<2x1152xf32> to vector<2x1024xf32>
    %542 = vector.broadcast %540 : f32 to vector<2x1024xf32>
    %543 = arith.mulf %542, %541 : vector<2x1024xf32>
    %544 = arith.addf %539, %543 : vector<2x1024xf32>
    %c11_222 = arith.constant 11 : index
    %c2_223 = arith.constant 2 : index
    %545 = memref.load %arg2[%c11_222, %c2_223] : memref<16x9xf32, #tpu.memory_space<smem>>
    %546 = vector.extract_strided_slice %4 {offsets = [0, 2], sizes = [2, 1024], strides = [1, 1]} : vector<2x1152xf32> to vector<2x1024xf32>
    %547 = vector.broadcast %545 : f32 to vector<2x1024xf32>
    %548 = arith.mulf %547, %546 : vector<2x1024xf32>
    %549 = arith.addf %544, %548 : vector<2x1024xf32>
    %c11_224 = arith.constant 11 : index
    %c3_225 = arith.constant 3 : index
    %550 = memref.load %arg2[%c11_224, %c3_225] : memref<16x9xf32, #tpu.memory_space<smem>>
    %551 = vector.extract_strided_slice %4 {offsets = [0, 32], sizes = [2, 1024], strides = [1, 1]} : vector<2x1152xf32> to vector<2x1024xf32>
    %552 = vector.broadcast %550 : f32 to vector<2x1024xf32>
    %553 = arith.mulf %552, %551 : vector<2x1024xf32>
    %554 = arith.addf %549, %553 : vector<2x1024xf32>
    %c11_226 = arith.constant 11 : index
    %c4_227 = arith.constant 4 : index
    %555 = memref.load %arg2[%c11_226, %c4_227] : memref<16x9xf32, #tpu.memory_space<smem>>
    %556 = vector.extract_strided_slice %4 {offsets = [0, 33], sizes = [2, 1024], strides = [1, 1]} : vector<2x1152xf32> to vector<2x1024xf32>
    %557 = vector.broadcast %555 : f32 to vector<2x1024xf32>
    %558 = arith.mulf %557, %556 : vector<2x1024xf32>
    %559 = arith.addf %554, %558 : vector<2x1024xf32>
    %c11_228 = arith.constant 11 : index
    %c5_229 = arith.constant 5 : index
    %560 = memref.load %arg2[%c11_228, %c5_229] : memref<16x9xf32, #tpu.memory_space<smem>>
    %561 = vector.extract_strided_slice %4 {offsets = [0, 34], sizes = [2, 1024], strides = [1, 1]} : vector<2x1152xf32> to vector<2x1024xf32>
    %562 = vector.broadcast %560 : f32 to vector<2x1024xf32>
    %563 = arith.mulf %562, %561 : vector<2x1024xf32>
    %564 = arith.addf %559, %563 : vector<2x1024xf32>
    %c11_230 = arith.constant 11 : index
    %c6_231 = arith.constant 6 : index
    %565 = memref.load %arg2[%c11_230, %c6_231] : memref<16x9xf32, #tpu.memory_space<smem>>
    %566 = vector.extract_strided_slice %4 {offsets = [0, 64], sizes = [2, 1024], strides = [1, 1]} : vector<2x1152xf32> to vector<2x1024xf32>
    %567 = vector.broadcast %565 : f32 to vector<2x1024xf32>
    %568 = arith.mulf %567, %566 : vector<2x1024xf32>
    %569 = arith.addf %564, %568 : vector<2x1024xf32>
    %c11_232 = arith.constant 11 : index
    %c7_233 = arith.constant 7 : index
    %570 = memref.load %arg2[%c11_232, %c7_233] : memref<16x9xf32, #tpu.memory_space<smem>>
    %571 = vector.extract_strided_slice %4 {offsets = [0, 65], sizes = [2, 1024], strides = [1, 1]} : vector<2x1152xf32> to vector<2x1024xf32>
    %572 = vector.broadcast %570 : f32 to vector<2x1024xf32>
    %573 = arith.mulf %572, %571 : vector<2x1024xf32>
    %574 = arith.addf %569, %573 : vector<2x1024xf32>
    %c11_234 = arith.constant 11 : index
    %c8_235 = arith.constant 8 : index
    %575 = memref.load %arg2[%c11_234, %c8_235] : memref<16x9xf32, #tpu.memory_space<smem>>
    %576 = vector.extract_strided_slice %4 {offsets = [0, 66], sizes = [2, 1024], strides = [1, 1]} : vector<2x1152xf32> to vector<2x1024xf32>
    %577 = vector.broadcast %575 : f32 to vector<2x1024xf32>
    %578 = arith.mulf %577, %576 : vector<2x1024xf32>
    %579 = arith.addf %574, %578 : vector<2x1024xf32>
    %c0_236 = arith.constant 0 : index
    %c11264 = arith.constant 11264 : index
    %580 = vector.load %arg7[%c0_236, %c11264] : memref<2x16384xf32, #tpu.memory_space<vmem>>, vector<2x1024xf32>
    tpu.vector_store %arg7[%c0_236, %c11264], %579 {strides = array<i32>} : memref<2x16384xf32, #tpu.memory_space<vmem>>, vector<2x1024xf32>,
    %c12 = arith.constant 12 : index
    %581 = memref.load %arg3[%c12] : memref<16xf32, #tpu.memory_space<smem>>
    %582 = vector.broadcast %581 : f32 to vector<2x1024xf32>
    %c12_237 = arith.constant 12 : index
    %c0_238 = arith.constant 0 : index
    %583 = memref.load %arg2[%c12_237, %c0_238] : memref<16x9xf32, #tpu.memory_space<smem>>
    %584 = vector.extract_strided_slice %4 {offsets = [0, 0], sizes = [2, 1024], strides = [1, 1]} : vector<2x1152xf32> to vector<2x1024xf32>
    %585 = vector.broadcast %583 : f32 to vector<2x1024xf32>
    %586 = arith.mulf %585, %584 : vector<2x1024xf32>
    %587 = arith.addf %582, %586 : vector<2x1024xf32>
    %c12_239 = arith.constant 12 : index
    %c1_240 = arith.constant 1 : index
    %588 = memref.load %arg2[%c12_239, %c1_240] : memref<16x9xf32, #tpu.memory_space<smem>>
    %589 = vector.extract_strided_slice %4 {offsets = [0, 1], sizes = [2, 1024], strides = [1, 1]} : vector<2x1152xf32> to vector<2x1024xf32>
    %590 = vector.broadcast %588 : f32 to vector<2x1024xf32>
    %591 = arith.mulf %590, %589 : vector<2x1024xf32>
    %592 = arith.addf %587, %591 : vector<2x1024xf32>
    %c12_241 = arith.constant 12 : index
    %c2_242 = arith.constant 2 : index
    %593 = memref.load %arg2[%c12_241, %c2_242] : memref<16x9xf32, #tpu.memory_space<smem>>
    %594 = vector.extract_strided_slice %4 {offsets = [0, 2], sizes = [2, 1024], strides = [1, 1]} : vector<2x1152xf32> to vector<2x1024xf32>
    %595 = vector.broadcast %593 : f32 to vector<2x1024xf32>
    %596 = arith.mulf %595, %594 : vector<2x1024xf32>
    %597 = arith.addf %592, %596 : vector<2x1024xf32>
    %c12_243 = arith.constant 12 : index
    %c3_244 = arith.constant 3 : index
    %598 = memref.load %arg2[%c12_243, %c3_244] : memref<16x9xf32, #tpu.memory_space<smem>>
    %599 = vector.extract_strided_slice %4 {offsets = [0, 32], sizes = [2, 1024], strides = [1, 1]} : vector<2x1152xf32> to vector<2x1024xf32>
    %600 = vector.broadcast %598 : f32 to vector<2x1024xf32>
    %601 = arith.mulf %600, %599 : vector<2x1024xf32>
    %602 = arith.addf %597, %601 : vector<2x1024xf32>
    %c12_245 = arith.constant 12 : index
    %c4_246 = arith.constant 4 : index
    %603 = memref.load %arg2[%c12_245, %c4_246] : memref<16x9xf32, #tpu.memory_space<smem>>
    %604 = vector.extract_strided_slice %4 {offsets = [0, 33], sizes = [2, 1024], strides = [1, 1]} : vector<2x1152xf32> to vector<2x1024xf32>
    %605 = vector.broadcast %603 : f32 to vector<2x1024xf32>
    %606 = arith.mulf %605, %604 : vector<2x1024xf32>
    %607 = arith.addf %602, %606 : vector<2x1024xf32>
    %c12_247 = arith.constant 12 : index
    %c5_248 = arith.constant 5 : index
    %608 = memref.load %arg2[%c12_247, %c5_248] : memref<16x9xf32, #tpu.memory_space<smem>>
    %609 = vector.extract_strided_slice %4 {offsets = [0, 34], sizes = [2, 1024], strides = [1, 1]} : vector<2x1152xf32> to vector<2x1024xf32>
    %610 = vector.broadcast %608 : f32 to vector<2x1024xf32>
    %611 = arith.mulf %610, %609 : vector<2x1024xf32>
    %612 = arith.addf %607, %611 : vector<2x1024xf32>
    %c12_249 = arith.constant 12 : index
    %c6_250 = arith.constant 6 : index
    %613 = memref.load %arg2[%c12_249, %c6_250] : memref<16x9xf32, #tpu.memory_space<smem>>
    %614 = vector.extract_strided_slice %4 {offsets = [0, 64], sizes = [2, 1024], strides = [1, 1]} : vector<2x1152xf32> to vector<2x1024xf32>
    %615 = vector.broadcast %613 : f32 to vector<2x1024xf32>
    %616 = arith.mulf %615, %614 : vector<2x1024xf32>
    %617 = arith.addf %612, %616 : vector<2x1024xf32>
    %c12_251 = arith.constant 12 : index
    %c7_252 = arith.constant 7 : index
    %618 = memref.load %arg2[%c12_251, %c7_252] : memref<16x9xf32, #tpu.memory_space<smem>>
    %619 = vector.extract_strided_slice %4 {offsets = [0, 65], sizes = [2, 1024], strides = [1, 1]} : vector<2x1152xf32> to vector<2x1024xf32>
    %620 = vector.broadcast %618 : f32 to vector<2x1024xf32>
    %621 = arith.mulf %620, %619 : vector<2x1024xf32>
    %622 = arith.addf %617, %621 : vector<2x1024xf32>
    %c12_253 = arith.constant 12 : index
    %c8_254 = arith.constant 8 : index
    %623 = memref.load %arg2[%c12_253, %c8_254] : memref<16x9xf32, #tpu.memory_space<smem>>
    %624 = vector.extract_strided_slice %4 {offsets = [0, 66], sizes = [2, 1024], strides = [1, 1]} : vector<2x1152xf32> to vector<2x1024xf32>
    %625 = vector.broadcast %623 : f32 to vector<2x1024xf32>
    %626 = arith.mulf %625, %624 : vector<2x1024xf32>
    %627 = arith.addf %622, %626 : vector<2x1024xf32>
    %c0_255 = arith.constant 0 : index
    %c12288 = arith.constant 12288 : index
    %628 = vector.load %arg7[%c0_255, %c12288] : memref<2x16384xf32, #tpu.memory_space<vmem>>, vector<2x1024xf32>
    tpu.vector_store %arg7[%c0_255, %c12288], %627 {strides = array<i32>} : memref<2x16384xf32, #tpu.memory_space<vmem>>, vector<2x1024xf32>,
    %c13 = arith.constant 13 : index
    %629 = memref.load %arg3[%c13] : memref<16xf32, #tpu.memory_space<smem>>
    %630 = vector.broadcast %629 : f32 to vector<2x1024xf32>
    %c13_256 = arith.constant 13 : index
    %c0_257 = arith.constant 0 : index
    %631 = memref.load %arg2[%c13_256, %c0_257] : memref<16x9xf32, #tpu.memory_space<smem>>
    %632 = vector.extract_strided_slice %4 {offsets = [0, 0], sizes = [2, 1024], strides = [1, 1]} : vector<2x1152xf32> to vector<2x1024xf32>
    %633 = vector.broadcast %631 : f32 to vector<2x1024xf32>
    %634 = arith.mulf %633, %632 : vector<2x1024xf32>
    %635 = arith.addf %630, %634 : vector<2x1024xf32>
    %c13_258 = arith.constant 13 : index
    %c1_259 = arith.constant 1 : index
    %636 = memref.load %arg2[%c13_258, %c1_259] : memref<16x9xf32, #tpu.memory_space<smem>>
    %637 = vector.extract_strided_slice %4 {offsets = [0, 1], sizes = [2, 1024], strides = [1, 1]} : vector<2x1152xf32> to vector<2x1024xf32>
    %638 = vector.broadcast %636 : f32 to vector<2x1024xf32>
    %639 = arith.mulf %638, %637 : vector<2x1024xf32>
    %640 = arith.addf %635, %639 : vector<2x1024xf32>
    %c13_260 = arith.constant 13 : index
    %c2_261 = arith.constant 2 : index
    %641 = memref.load %arg2[%c13_260, %c2_261] : memref<16x9xf32, #tpu.memory_space<smem>>
    %642 = vector.extract_strided_slice %4 {offsets = [0, 2], sizes = [2, 1024], strides = [1, 1]} : vector<2x1152xf32> to vector<2x1024xf32>
    %643 = vector.broadcast %641 : f32 to vector<2x1024xf32>
    %644 = arith.mulf %643, %642 : vector<2x1024xf32>
    %645 = arith.addf %640, %644 : vector<2x1024xf32>
    %c13_262 = arith.constant 13 : index
    %c3_263 = arith.constant 3 : index
    %646 = memref.load %arg2[%c13_262, %c3_263] : memref<16x9xf32, #tpu.memory_space<smem>>
    %647 = vector.extract_strided_slice %4 {offsets = [0, 32], sizes = [2, 1024], strides = [1, 1]} : vector<2x1152xf32> to vector<2x1024xf32>
    %648 = vector.broadcast %646 : f32 to vector<2x1024xf32>
    %649 = arith.mulf %648, %647 : vector<2x1024xf32>
    %650 = arith.addf %645, %649 : vector<2x1024xf32>
    %c13_264 = arith.constant 13 : index
    %c4_265 = arith.constant 4 : index
    %651 = memref.load %arg2[%c13_264, %c4_265] : memref<16x9xf32, #tpu.memory_space<smem>>
    %652 = vector.extract_strided_slice %4 {offsets = [0, 33], sizes = [2, 1024], strides = [1, 1]} : vector<2x1152xf32> to vector<2x1024xf32>
    %653 = vector.broadcast %651 : f32 to vector<2x1024xf32>
    %654 = arith.mulf %653, %652 : vector<2x1024xf32>
    %655 = arith.addf %650, %654 : vector<2x1024xf32>
    %c13_266 = arith.constant 13 : index
    %c5_267 = arith.constant 5 : index
    %656 = memref.load %arg2[%c13_266, %c5_267] : memref<16x9xf32, #tpu.memory_space<smem>>
    %657 = vector.extract_strided_slice %4 {offsets = [0, 34], sizes = [2, 1024], strides = [1, 1]} : vector<2x1152xf32> to vector<2x1024xf32>
    %658 = vector.broadcast %656 : f32 to vector<2x1024xf32>
    %659 = arith.mulf %658, %657 : vector<2x1024xf32>
    %660 = arith.addf %655, %659 : vector<2x1024xf32>
    %c13_268 = arith.constant 13 : index
    %c6_269 = arith.constant 6 : index
    %661 = memref.load %arg2[%c13_268, %c6_269] : memref<16x9xf32, #tpu.memory_space<smem>>
    %662 = vector.extract_strided_slice %4 {offsets = [0, 64], sizes = [2, 1024], strides = [1, 1]} : vector<2x1152xf32> to vector<2x1024xf32>
    %663 = vector.broadcast %661 : f32 to vector<2x1024xf32>
    %664 = arith.mulf %663, %662 : vector<2x1024xf32>
    %665 = arith.addf %660, %664 : vector<2x1024xf32>
    %c13_270 = arith.constant 13 : index
    %c7_271 = arith.constant 7 : index
    %666 = memref.load %arg2[%c13_270, %c7_271] : memref<16x9xf32, #tpu.memory_space<smem>>
    %667 = vector.extract_strided_slice %4 {offsets = [0, 65], sizes = [2, 1024], strides = [1, 1]} : vector<2x1152xf32> to vector<2x1024xf32>
    %668 = vector.broadcast %666 : f32 to vector<2x1024xf32>
    %669 = arith.mulf %668, %667 : vector<2x1024xf32>
    %670 = arith.addf %665, %669 : vector<2x1024xf32>
    %c13_272 = arith.constant 13 : index
    %c8_273 = arith.constant 8 : index
    %671 = memref.load %arg2[%c13_272, %c8_273] : memref<16x9xf32, #tpu.memory_space<smem>>
    %672 = vector.extract_strided_slice %4 {offsets = [0, 66], sizes = [2, 1024], strides = [1, 1]} : vector<2x1152xf32> to vector<2x1024xf32>
    %673 = vector.broadcast %671 : f32 to vector<2x1024xf32>
    %674 = arith.mulf %673, %672 : vector<2x1024xf32>
    %675 = arith.addf %670, %674 : vector<2x1024xf32>
    %c0_274 = arith.constant 0 : index
    %c13312 = arith.constant 13312 : index
    %676 = vector.load %arg7[%c0_274, %c13312] : memref<2x16384xf32, #tpu.memory_space<vmem>>, vector<2x1024xf32>
    tpu.vector_store %arg7[%c0_274, %c13312], %675 {strides = array<i32>} : memref<2x16384xf32, #tpu.memory_space<vmem>>, vector<2x1024xf32>,
    %c14 = arith.constant 14 : index
    %677 = memref.load %arg3[%c14] : memref<16xf32, #tpu.memory_space<smem>>
    %678 = vector.broadcast %677 : f32 to vector<2x1024xf32>
    %c14_275 = arith.constant 14 : index
    %c0_276 = arith.constant 0 : index
    %679 = memref.load %arg2[%c14_275, %c0_276] : memref<16x9xf32, #tpu.memory_space<smem>>
    %680 = vector.extract_strided_slice %4 {offsets = [0, 0], sizes = [2, 1024], strides = [1, 1]} : vector<2x1152xf32> to vector<2x1024xf32>
    %681 = vector.broadcast %679 : f32 to vector<2x1024xf32>
    %682 = arith.mulf %681, %680 : vector<2x1024xf32>
    %683 = arith.addf %678, %682 : vector<2x1024xf32>
    %c14_277 = arith.constant 14 : index
    %c1_278 = arith.constant 1 : index
    %684 = memref.load %arg2[%c14_277, %c1_278] : memref<16x9xf32, #tpu.memory_space<smem>>
    %685 = vector.extract_strided_slice %4 {offsets = [0, 1], sizes = [2, 1024], strides = [1, 1]} : vector<2x1152xf32> to vector<2x1024xf32>
    %686 = vector.broadcast %684 : f32 to vector<2x1024xf32>
    %687 = arith.mulf %686, %685 : vector<2x1024xf32>
    %688 = arith.addf %683, %687 : vector<2x1024xf32>
    %c14_279 = arith.constant 14 : index
    %c2_280 = arith.constant 2 : index
    %689 = memref.load %arg2[%c14_279, %c2_280] : memref<16x9xf32, #tpu.memory_space<smem>>
    %690 = vector.extract_strided_slice %4 {offsets = [0, 2], sizes = [2, 1024], strides = [1, 1]} : vector<2x1152xf32> to vector<2x1024xf32>
    %691 = vector.broadcast %689 : f32 to vector<2x1024xf32>
    %692 = arith.mulf %691, %690 : vector<2x1024xf32>
    %693 = arith.addf %688, %692 : vector<2x1024xf32>
    %c14_281 = arith.constant 14 : index
    %c3_282 = arith.constant 3 : index
    %694 = memref.load %arg2[%c14_281, %c3_282] : memref<16x9xf32, #tpu.memory_space<smem>>
    %695 = vector.extract_strided_slice %4 {offsets = [0, 32], sizes = [2, 1024], strides = [1, 1]} : vector<2x1152xf32> to vector<2x1024xf32>
    %696 = vector.broadcast %694 : f32 to vector<2x1024xf32>
    %697 = arith.mulf %696, %695 : vector<2x1024xf32>
    %698 = arith.addf %693, %697 : vector<2x1024xf32>
    %c14_283 = arith.constant 14 : index
    %c4_284 = arith.constant 4 : index
    %699 = memref.load %arg2[%c14_283, %c4_284] : memref<16x9xf32, #tpu.memory_space<smem>>
    %700 = vector.extract_strided_slice %4 {offsets = [0, 33], sizes = [2, 1024], strides = [1, 1]} : vector<2x1152xf32> to vector<2x1024xf32>
    %701 = vector.broadcast %699 : f32 to vector<2x1024xf32>
    %702 = arith.mulf %701, %700 : vector<2x1024xf32>
    %703 = arith.addf %698, %702 : vector<2x1024xf32>
    %c14_285 = arith.constant 14 : index
    %c5_286 = arith.constant 5 : index
    %704 = memref.load %arg2[%c14_285, %c5_286] : memref<16x9xf32, #tpu.memory_space<smem>>
    %705 = vector.extract_strided_slice %4 {offsets = [0, 34], sizes = [2, 1024], strides = [1, 1]} : vector<2x1152xf32> to vector<2x1024xf32>
    %706 = vector.broadcast %704 : f32 to vector<2x1024xf32>
    %707 = arith.mulf %706, %705 : vector<2x1024xf32>
    %708 = arith.addf %703, %707 : vector<2x1024xf32>
    %c14_287 = arith.constant 14 : index
    %c6_288 = arith.constant 6 : index
    %709 = memref.load %arg2[%c14_287, %c6_288] : memref<16x9xf32, #tpu.memory_space<smem>>
    %710 = vector.extract_strided_slice %4 {offsets = [0, 64], sizes = [2, 1024], strides = [1, 1]} : vector<2x1152xf32> to vector<2x1024xf32>
    %711 = vector.broadcast %709 : f32 to vector<2x1024xf32>
    %712 = arith.mulf %711, %710 : vector<2x1024xf32>
    %713 = arith.addf %708, %712 : vector<2x1024xf32>
    %c14_289 = arith.constant 14 : index
    %c7_290 = arith.constant 7 : index
    %714 = memref.load %arg2[%c14_289, %c7_290] : memref<16x9xf32, #tpu.memory_space<smem>>
    %715 = vector.extract_strided_slice %4 {offsets = [0, 65], sizes = [2, 1024], strides = [1, 1]} : vector<2x1152xf32> to vector<2x1024xf32>
    %716 = vector.broadcast %714 : f32 to vector<2x1024xf32>
    %717 = arith.mulf %716, %715 : vector<2x1024xf32>
    %718 = arith.addf %713, %717 : vector<2x1024xf32>
    %c14_291 = arith.constant 14 : index
    %c8_292 = arith.constant 8 : index
    %719 = memref.load %arg2[%c14_291, %c8_292] : memref<16x9xf32, #tpu.memory_space<smem>>
    %720 = vector.extract_strided_slice %4 {offsets = [0, 66], sizes = [2, 1024], strides = [1, 1]} : vector<2x1152xf32> to vector<2x1024xf32>
    %721 = vector.broadcast %719 : f32 to vector<2x1024xf32>
    %722 = arith.mulf %721, %720 : vector<2x1024xf32>
    %723 = arith.addf %718, %722 : vector<2x1024xf32>
    %c0_293 = arith.constant 0 : index
    %c14336 = arith.constant 14336 : index
    %724 = vector.load %arg7[%c0_293, %c14336] : memref<2x16384xf32, #tpu.memory_space<vmem>>, vector<2x1024xf32>
    tpu.vector_store %arg7[%c0_293, %c14336], %723 {strides = array<i32>} : memref<2x16384xf32, #tpu.memory_space<vmem>>, vector<2x1024xf32>,
    %c15 = arith.constant 15 : index
    %725 = memref.load %arg3[%c15] : memref<16xf32, #tpu.memory_space<smem>>
    %726 = vector.broadcast %725 : f32 to vector<2x1024xf32>
    %c15_294 = arith.constant 15 : index
    %c0_295 = arith.constant 0 : index
    %727 = memref.load %arg2[%c15_294, %c0_295] : memref<16x9xf32, #tpu.memory_space<smem>>
    %728 = vector.extract_strided_slice %4 {offsets = [0, 0], sizes = [2, 1024], strides = [1, 1]} : vector<2x1152xf32> to vector<2x1024xf32>
    %729 = vector.broadcast %727 : f32 to vector<2x1024xf32>
    %730 = arith.mulf %729, %728 : vector<2x1024xf32>
    %731 = arith.addf %726, %730 : vector<2x1024xf32>
    %c15_296 = arith.constant 15 : index
    %c1_297 = arith.constant 1 : index
    %732 = memref.load %arg2[%c15_296, %c1_297] : memref<16x9xf32, #tpu.memory_space<smem>>
    %733 = vector.extract_strided_slice %4 {offsets = [0, 1], sizes = [2, 1024], strides = [1, 1]} : vector<2x1152xf32> to vector<2x1024xf32>
    %734 = vector.broadcast %732 : f32 to vector<2x1024xf32>
    %735 = arith.mulf %734, %733 : vector<2x1024xf32>
    %736 = arith.addf %731, %735 : vector<2x1024xf32>
    %c15_298 = arith.constant 15 : index
    %c2_299 = arith.constant 2 : index
    %737 = memref.load %arg2[%c15_298, %c2_299] : memref<16x9xf32, #tpu.memory_space<smem>>
    %738 = vector.extract_strided_slice %4 {offsets = [0, 2], sizes = [2, 1024], strides = [1, 1]} : vector<2x1152xf32> to vector<2x1024xf32>
    %739 = vector.broadcast %737 : f32 to vector<2x1024xf32>
    %740 = arith.mulf %739, %738 : vector<2x1024xf32>
    %741 = arith.addf %736, %740 : vector<2x1024xf32>
    %c15_300 = arith.constant 15 : index
    %c3_301 = arith.constant 3 : index
    %742 = memref.load %arg2[%c15_300, %c3_301] : memref<16x9xf32, #tpu.memory_space<smem>>
    %743 = vector.extract_strided_slice %4 {offsets = [0, 32], sizes = [2, 1024], strides = [1, 1]} : vector<2x1152xf32> to vector<2x1024xf32>
    %744 = vector.broadcast %742 : f32 to vector<2x1024xf32>
    %745 = arith.mulf %744, %743 : vector<2x1024xf32>
    %746 = arith.addf %741, %745 : vector<2x1024xf32>
    %c15_302 = arith.constant 15 : index
    %c4_303 = arith.constant 4 : index
    %747 = memref.load %arg2[%c15_302, %c4_303] : memref<16x9xf32, #tpu.memory_space<smem>>
    %748 = vector.extract_strided_slice %4 {offsets = [0, 33], sizes = [2, 1024], strides = [1, 1]} : vector<2x1152xf32> to vector<2x1024xf32>
    %749 = vector.broadcast %747 : f32 to vector<2x1024xf32>
    %750 = arith.mulf %749, %748 : vector<2x1024xf32>
    %751 = arith.addf %746, %750 : vector<2x1024xf32>
    %c15_304 = arith.constant 15 : index
    %c5_305 = arith.constant 5 : index
    %752 = memref.load %arg2[%c15_304, %c5_305] : memref<16x9xf32, #tpu.memory_space<smem>>
    %753 = vector.extract_strided_slice %4 {offsets = [0, 34], sizes = [2, 1024], strides = [1, 1]} : vector<2x1152xf32> to vector<2x1024xf32>
    %754 = vector.broadcast %752 : f32 to vector<2x1024xf32>
    %755 = arith.mulf %754, %753 : vector<2x1024xf32>
    %756 = arith.addf %751, %755 : vector<2x1024xf32>
    %c15_306 = arith.constant 15 : index
    %c6_307 = arith.constant 6 : index
    %757 = memref.load %arg2[%c15_306, %c6_307] : memref<16x9xf32, #tpu.memory_space<smem>>
    %758 = vector.extract_strided_slice %4 {offsets = [0, 64], sizes = [2, 1024], strides = [1, 1]} : vector<2x1152xf32> to vector<2x1024xf32>
    %759 = vector.broadcast %757 : f32 to vector<2x1024xf32>
    %760 = arith.mulf %759, %758 : vector<2x1024xf32>
    %761 = arith.addf %756, %760 : vector<2x1024xf32>
    %c15_308 = arith.constant 15 : index
    %c7_309 = arith.constant 7 : index
    %762 = memref.load %arg2[%c15_308, %c7_309] : memref<16x9xf32, #tpu.memory_space<smem>>
    %763 = vector.extract_strided_slice %4 {offsets = [0, 65], sizes = [2, 1024], strides = [1, 1]} : vector<2x1152xf32> to vector<2x1024xf32>
    %764 = vector.broadcast %762 : f32 to vector<2x1024xf32>
    %765 = arith.mulf %764, %763 : vector<2x1024xf32>
    %766 = arith.addf %761, %765 : vector<2x1024xf32>
    %c15_310 = arith.constant 15 : index
    %c8_311 = arith.constant 8 : index
    %767 = memref.load %arg2[%c15_310, %c8_311] : memref<16x9xf32, #tpu.memory_space<smem>>
    %768 = vector.extract_strided_slice %4 {offsets = [0, 66], sizes = [2, 1024], strides = [1, 1]} : vector<2x1152xf32> to vector<2x1024xf32>
    %769 = vector.broadcast %767 : f32 to vector<2x1024xf32>
    %770 = arith.mulf %769, %768 : vector<2x1024xf32>
    %771 = arith.addf %766, %770 : vector<2x1024xf32>
    %c0_312 = arith.constant 0 : index
    %c15360 = arith.constant 15360 : index
    %772 = vector.load %arg7[%c0_312, %c15360] : memref<2x16384xf32, #tpu.memory_space<vmem>>, vector<2x1024xf32>
    tpu.vector_store %arg7[%c0_312, %c15360], %771 {strides = array<i32>} : memref<2x16384xf32, #tpu.memory_space<vmem>>, vector<2x1024xf32>,
    %c0_313 = arith.constant 0 : index
    %c0_314 = arith.constant 0 : index
    %773 = vector.load %arg7[%c0_313, %c0_314] : memref<2x16384xf32, #tpu.memory_space<vmem>>, vector<2x16384xf32>
    %c0_315 = arith.constant 0 : index
    %c0_316 = arith.constant 0 : index
    %774 = vector.load %arg4[%c0_315, %c0_316] : memref<16384x10xf32, #tpu.memory_space<vmem>>, vector<16384x10xf32>
    %cst_317 = arith.constant dense<0.000000e+00> : vector<2x10xf32>
    %775 = tpu.matmul %773, %774, %cst_317 {dimension_numbers = #tpu.dot_dimension_numbers<[1], [0], [0], [1], [0, 0, 1, 1], [], []>} : vector<2x16384xf32>, vector<16384x10xf32>, vector<2x10xf32> -> vector<2x10xf32>
    %c0_318 = arith.constant 0 : index
    %c0_319 = arith.constant 0 : index
    %776 = vector.load %arg5[%c0_318, %c0_319] : memref<1x10xf32, #tpu.memory_space<vmem>>, vector<1x10xf32>
    %777 = vector.broadcast %776 : vector<1x10xf32> to vector<2x10xf32>
    %778 = arith.addf %775, %777 : vector<2x10xf32>
    %c0_320 = arith.constant 0 : index
    %c0_321 = arith.constant 0 : index
    %779 = vector.load %arg6[%c0_320, %c0_321] : memref<2x10xf32, #tpu.memory_space<vmem>>, vector<2x10xf32>
    tpu.vector_store %arg6[%c0_320, %c0_321], %778 {strides = array<i32>} : memref<2x10xf32, #tpu.memory_space<vmem>>, vector<2x10xf32>,
    return
  }
  func.func @transform_0(%arg0: i32) -> (i32, i32) {
    %c0_i32 = arith.constant 0 : i32
    %c0_i32_0 = arith.constant 0 : i32
    return %arg0, %c0_i32 : i32, i32
  }
  func.func @transform_1(%arg0: i32) -> (i32, i32) {
    %c0_i32 = arith.constant 0 : i32
    %c0_i32_0 = arith.constant 0 : i32
    %c0_i32_1 = arith.constant 0 : i32
    return %c0_i32, %c0_i32_0 : i32, i32
  }
  func.func @transform_2(%arg0: i32) -> i32 {
    %c0_i32 = arith.constant 0 : i32
    %c0_i32_0 = arith.constant 0 : i32
    return %c0_i32 : i32
  }
  func.func @transform_3(%arg0: i32) -> (i32, i32) {
    %c0_i32 = arith.constant 0 : i32
    %c0_i32_0 = arith.constant 0 : i32
    %c0_i32_1 = arith.constant 0 : i32
    return %c0_i32, %c0_i32_0 : i32, i32
  }
  func.func @transform_4(%arg0: i32) -> (i32, i32) {
    %c0_i32 = arith.constant 0 : i32
    %c0_i32_0 = arith.constant 0 : i32
    %c0_i32_1 = arith.constant 0 : i32
    return %c0_i32, %c0_i32_0 : i32, i32
  }
  func.func @transform_5(%arg0: i32) -> (i32, i32) {
    %c0_i32 = arith.constant 0 : i32
    %c0_i32_0 = arith.constant 0 : i32
    return %arg0, %c0_i32 : i32, i32
  }
}

</mosaic_0001>

<llo_original>
// kernel: conv_mlp_forward.1
$region0: #{conv_mlp_forward.1}
  #allocation0 [shape = 'u32[]', space=smem, size = 0x4, offset = 0x4, fixed_abs, tag = 'smem constant byte address 0x4 - core index']
  #allocation1 [shape = 'u32[144,128]{1,0:T(1,128)}', space=vmem, size = 0x12000, scoped, tag = 'internal scratch']
  #allocation2 [shape = 'f32[2,16384]{1,0:T(2,128)}', space=vmem, size = 0x20000, scoped, tag = 'scratch operand']
  #allocation3 [shape = 'f32[2,1152]{1,0:T(2,128)}', space=vmem, size = 0x2400, scoped, tag = 'scratch operand']
  %s0 = inlined_call_operand.vmem [shape: f32[2,1024], index: 0, kind: input, shape index: {}]
  %s1 = inlined_call_operand.vmem [shape: f32[16,9], index: 1, kind: input, shape index: {}]
  %s2 = inlined_call_operand.vmem [shape: f32[16], index: 2, kind: input, shape index: {}]
  %s3 = inlined_call_operand.vmem [shape: f32[16384,10], index: 3, kind: input, shape index: {}]
  %s4 = inlined_call_operand.vmem [shape: f32[1,10], index: 4, kind: input, shape index: {}]
  %s5 = inlined_call_operand.hbm [shape: f32[2,10], index: 5, kind: output, shape index: {}]
  %s6 = sld [smem:[#allocation0]]
  $region38: #{conv_mlp_forward.1} parent=0
    _
  %s8 = ssub.s32 1, %s6
  %s9 = scalar_select 0, %s8, %s6
  $region1: #{conv_mlp_forward.1} parent=0
    #allocation4 [shape = 'u8[8192]{0}', space=smem, size = 0x2000, scoped, tag = 'input window, operand 1, single buffered']
    #allocation5 [shape = 's32[1]{0}', space=sflag, size = 0x4, scoped, tag = 'scoped memory for conv_mlp_forward.1']
    #allocation6 [shape = 's32[1]{0}', space=sflag, size = 0x4, scoped, tag = 'scoped memory for conv_mlp_forward.1']
    #allocation7 [shape = 'u8[512]{0}', space=smem, size = 0x200, scoped, tag = 'input window, operand 2, single buffered']
    #allocation8 [shape = 's32[1]{0}', space=sflag, size = 0x4, scoped, tag = 'scoped memory for conv_mlp_forward.1']
    #allocation9 [shape = 'u8[1024]{0}', space=vmem, size = 0x400, scoped, tag = 'output window, operand 0, single buffered']
    %10 = vsyncpa [#allocation6], 0
    %11 = vsyncpa [#allocation8], 0
    %12 = vsyncpa [#allocation5], 0
    // Predicated region
    $region2: #{conv_mlp_forward.1} parent=1 // pred_check
      _
    $region3: #{conv_mlp_forward.1} parent=1 // pred_check_branch
      %14 = sbr.rel (0) target = $region5
    $region4: #{conv_mlp_forward.1} parent=1 // pred_region
      _
    $region5: #{conv_mlp_forward.1} parent=1 // pred_fallthru
      _
    // Predicated region
    $region6: #{conv_mlp_forward.1} parent=1 // pred_check
      _
    $region7: #{conv_mlp_forward.1} parent=1 // pred_check_branch
      %16 = sbr.rel (0) target = $region9
    $region8: #{conv_mlp_forward.1} parent=1 // pred_region
      %s18 = ssub.s32 256, 256
      %19 = vsyncadd [#allocation6], %s18
      %s20 = sshll.u32 %s1, 4
      %s21 = int_to_ptr.vmem [resolvable:$true] %s20
      %26 = dma.vmem_to_smem %s21, 256, [#allocation4], [#allocation6], 128, 128, 8
    $region9: #{conv_mlp_forward.1} parent=1 // pred_fallthru
      _
    // Predicated region
    $region10: #{conv_mlp_forward.1} parent=1 // pred_check
      _
    $region11: #{conv_mlp_forward.1} parent=1 // pred_check_branch
      %28 = sbr.rel (0) target = $region13
    $region12: #{conv_mlp_forward.1} parent=1 // pred_region
      %s30 = ssub.s32 16, 16
      %31 = vsyncadd [#allocation8], %s30
      %s33 = sshll.u32 %s2, 4
      %s34 = int_to_ptr.vmem [resolvable:$true] %s33
      %36 = dma.vmem_to_smem %s34, 16, [#allocation7], [#allocation8]
    $region13: #{conv_mlp_forward.1} parent=1 // pred_fallthru
      _
    // Predicated region
    $region14: #{conv_mlp_forward.1} parent=1 // pred_check
      _
    $region15: #{conv_mlp_forward.1} parent=1 // pred_check_branch
      %38 = sbr.rel (0) target = $region17
    $region16: #{conv_mlp_forward.1} parent=1 // pred_region
      _
    $region17: #{conv_mlp_forward.1} parent=1 // pred_fallthru
      _
    // Predicated region
    $region18: #{conv_mlp_forward.1} parent=1 // pred_check
      _
    $region19: #{conv_mlp_forward.1} parent=1 // pred_check_branch
      %40 = sbr.rel (0) target = $region21
    $region20: #{conv_mlp_forward.1} parent=1 // pred_region
      _
    $region21: #{conv_mlp_forward.1} parent=1 // pred_fallthru
      _
    // Predicated region
    $region22: #{conv_mlp_forward.1} parent=1 // pred_check
      _
    $region23: #{conv_mlp_forward.1} parent=1 // pred_check_branch
      %42 = sbr.rel (0) target = $region25
    $region24: #{conv_mlp_forward.1} parent=1 // pred_region
      %43 = dma.done [#allocation6], 256
    $region25: #{conv_mlp_forward.1} parent=1 // pred_fallthru
      _
    // Predicated region
    $region26: #{conv_mlp_forward.1} parent=1 // pred_check
      _
    $region27: #{conv_mlp_forward.1} parent=1 // pred_check_branch
      %45 = sbr.rel (0) target = $region29
    $region28: #{conv_mlp_forward.1} parent=1 // pred_region
      %46 = dma.done [#allocation8], 16
    $region29: #{conv_mlp_forward.1} parent=1 // pred_fallthru
      _
    %47 = sfence
    %v48 = vld [vmem:[%s0] sm:$0xff]
    %v49 = vld [vmem:[%s0 + $0x8] sm:$0xff]
    %50 = vst [vmem:[#allocation3] sm:$0xff] %v48
    %51 = vst [vmem:[#allocation3 + $0x8] sm:$0xff] %v49
    %52 = vst [vmem:[#allocation3 + $0x10] sm:$0x3] 0.0
    %v53 = vld [vmem:[#allocation3] sm:$0xff]
    %v54 = vld [vmem:[#allocation3 + $0x8] sm:$0xff]
    %v55 = vld [vmem:[#allocation3 + $0x10] sm:$0x3]
    %s56 = sld [smem:[#allocation7]]
    %v57 = vstv %s56
    %s58 = sld [smem:[#allocation4]]
    %v59 = vstv %s58
    %v60 = vmul.f32 %v59, %v53
    %v61 = vmul.f32 %v59, %v54
    %v62 = vadd.f32 %v57, %v60
    %v63 = vadd.f32 %v57, %v61
    %s64 = sld [smem:[#allocation4 + $0x1]]
    %v65 = vstv %s64
    %v66 = vmul.f32 %v65, %v53
    %v67 = vmul.f32 %v65, %v54
    %v68 = vmul.f32 %v65, %v55
    %72 = vrot.lane.b32.xlu0 %v66, 127
    %v73 = vpop.permute.xlu0 %72
    %74 = vrot.lane.b32.xlu0 %v67, 127
    %v75 = vpop.permute.xlu0 %74
    %76 = vrot.lane.b32.xlu0 %v68, 127
    %v77 = vpop.permute.xlu0 %76
    %v78 = vrot.slane %v73, 2
    %v79 = vrot.slane %v75, 2
    %v80 = vrot.slane %v77, 2
    %vm81 = vcmask 1045504
    %v82 = vsel %vm81, %v78, %v79
    %vm83 = vcmask 1039360
    %v84 = vsel %vm83, %v73, %v82
    %v85 = vsel %vm81, %v79, %v80
    %v86 = vsel %vm83, %v75, %v85
    %v89 = vadd.f32 %v62, %v84
    %v90 = vadd.f32 %v63, %v86
    %s91 = sld [smem:[#allocation4 + $0x2]]
    %v92 = vstv %s91
    %v93 = vmul.f32 %v92, %v53
    %v94 = vmul.f32 %v92, %v54
    %v95 = vmul.f32 %v92, %v55
    %99 = vrot.lane.b32.xlu0 %v93, 126
    %v100 = vpop.permute.xlu0 %99
    %101 = vrot.lane.b32.xlu0 %v94, 126
    %v102 = vpop.permute.xlu0 %101
    %103 = vrot.lane.b32.xlu0 %v95, 126
    %v104 = vpop.permute.xlu0 %103
    %v105 = vrot.slane %v100, 2
    %v106 = vrot.slane %v102, 2
    %v107 = vrot.slane %v104, 2
    %v108 = vsel %vm81, %v105, %v106
    %vm109 = vcmask 1031168
    %v110 = vsel %vm109, %v100, %v108
    %v111 = vsel %vm81, %v106, %v107
    %v112 = vsel %vm109, %v102, %v111
    %v115 = vadd.f32 %v89, %v110
    %v116 = vadd.f32 %v90, %v112
    %s117 = sld [smem:[#allocation4 + $0x3]]
    %v118 = vstv %s117
    %v119 = vmul.f32 %v118, %v53
    %v120 = vmul.f32 %v118, %v54
    %v121 = vmul.f32 %v118, %v55
    %125 = vrot.lane.b32.xlu0 %v119, 96
    %v126 = vpop.permute.xlu0 %125
    %127 = vrot.lane.b32.xlu0 %v120, 96
    %v128 = vpop.permute.xlu0 %127
    %129 = vrot.lane.b32.xlu0 %v121, 96
    %v130 = vpop.permute.xlu0 %129
    %v131 = vrot.slane %v126, 2
    %v132 = vrot.slane %v128, 2
    %v133 = vrot.slane %v130, 2
    %v134 = vsel %vm81, %v131, %v132
    %vm135 = vcmask 785408
    %v136 = vsel %vm135, %v126, %v134
    %v137 = vsel %vm81, %v132, %v133
    %v138 = vsel %vm135, %v128, %v137
    %v141 = vadd.f32 %v115, %v136
    %v142 = vadd.f32 %v116, %v138
    %s143 = sld [smem:[#allocation4 + $0x4]]
    %v144 = vstv %s143
    %v145 = vmul.f32 %v144, %v53
    %v146 = vmul.f32 %v144, %v54
    %v147 = vmul.f32 %v144, %v55
    %151 = vrot.lane.b32.xlu0 %v145, 95
    %v152 = vpop.permute.xlu0 %151
    %153 = vrot.lane.b32.xlu0 %v146, 95
    %v154 = vpop.permute.xlu0 %153
    %155 = vrot.lane.b32.xlu0 %v147, 95
    %v156 = vpop.permute.xlu0 %155
    %v157 = vrot.slane %v152, 2
    %v158 = vrot.slane %v154, 2
    %v159 = vrot.slane %v156, 2
    %v160 = vsel %vm81, %v157, %v158
    %vm161 = vcmask 777216
    %v162 = vsel %vm161, %v152, %v160
    %v163 = vsel %vm81, %v158, %v159
    %v164 = vsel %vm161, %v154, %v163
    %v167 = vadd.f32 %v141, %v162
    %v168 = vadd.f32 %v142, %v164
    %s169 = sld [smem:[#allocation4 + $0x5]]
    %v170 = vstv %s169
    %v171 = vmul.f32 %v170, %v53
    %v172 = vmul.f32 %v170, %v54
    %v173 = vmul.f32 %v170, %v55
    %177 = vrot.lane.b32.xlu0 %v171, 94
    %v178 = vpop.permute.xlu0 %177
    %179 = vrot.lane.b32.xlu0 %v172, 94
    %v180 = vpop.permute.xlu0 %179
    %181 = vrot.lane.b32.xlu0 %v173, 94
    %v182 = vpop.permute.xlu0 %181
    %v183 = vrot.slane %v178, 2
    %v184 = vrot.slane %v180, 2
    %v185 = vrot.slane %v182, 2
    %v186 = vsel %vm81, %v183, %v184
    %vm187 = vcmask 769024
    %v188 = vsel %vm187, %v178, %v186
    %v189 = vsel %vm81, %v184, %v185
    %v190 = vsel %vm187, %v180, %v189
    %v193 = vadd.f32 %v167, %v188
    %v194 = vadd.f32 %v168, %v190
    %s195 = sld [smem:[#allocation4 + $0x6]]
    %v196 = vstv %s195
    %v197 = vmul.f32 %v196, %v53
    %v198 = vmul.f32 %v196, %v54
    %v199 = vmul.f32 %v196, %v55
    %203 = vrot.lane.b32.xlu0 %v197, 64
    %v204 = vpop.permute.xlu0 %203
    %205 = vrot.lane.b32.xlu0 %v198, 64
    %v206 = vpop.permute.xlu0 %205
    %207 = vrot.lane.b32.xlu0 %v199, 64
    %v208 = vpop.permute.xlu0 %207
    %v209 = vrot.slane %v204, 2
    %v210 = vrot.slane %v206, 2
    %v211 = vrot.slane %v208, 2
    %v212 = vsel %vm81, %v209, %v210
    %vm213 = vcmask 523264
    %v214 = vsel %vm213, %v204, %v212
    %v215 = vsel %vm81, %v210, %v211
    %v216 = vsel %vm213, %v206, %v215
    %v219 = vadd.f32 %v193, %v214
    %v220 = vadd.f32 %v194, %v216
    %s221 = sld [smem:[#allocation4 + $0x7]]
    %v222 = vstv %s221
    %v223 = vmul.f32 %v222, %v53
    %v224 = vmul.f32 %v222, %v54
    %v225 = vmul.f32 %v222, %v55
    %229 = vrot.lane.b32.xlu0 %v223, 63
    %v230 = vpop.permute.xlu0 %229
    %231 = vrot.lane.b32.xlu0 %v224, 63
    %v232 = vpop.permute.xlu0 %231
    %233 = vrot.lane.b32.xlu0 %v225, 63
    %v234 = vpop.permute.xlu0 %233
    %v235 = vrot.slane %v230, 2
    %v236 = vrot.slane %v232, 2
    %v237 = vrot.slane %v234, 2
    %v238 = vsel %vm81, %v235, %v236
    %vm239 = vcmask 515072
    %v240 = vsel %vm239, %v230, %v238
    %v241 = vsel %vm81, %v236, %v237
    %v242 = vsel %vm239, %v232, %v241
    %v245 = vadd.f32 %v219, %v240
    %v246 = vadd.f32 %v220, %v242
    %s247 = sld [smem:[#allocation4 + $0x8]]
    %v248 = vstv %s247
    %v249 = vmul.f32 %v248, %v53
    %v250 = vmul.f32 %v248, %v54
    %v251 = vmul.f32 %v248, %v55
    %255 = vrot.lane.b32.xlu0 %v249, 62
    %v256 = vpop.permute.xlu0 %255
    %257 = vrot.lane.b32.xlu0 %v250, 62
    %v258 = vpop.permute.xlu0 %257
    %259 = vrot.lane.b32.xlu0 %v251, 62
    %v260 = vpop.permute.xlu0 %259
    %v261 = vrot.slane %v256, 2
    %v262 = vrot.slane %v258, 2
    %v263 = vrot.slane %v260, 2
    %v264 = vsel %vm81, %v261, %v262
    %vm265 = vcmask 506880
    %v266 = vsel %vm265, %v256, %v264
    %v267 = vsel %vm81, %v262, %v263
    %v268 = vsel %vm265, %v258, %v267
    %v271 = vadd.f32 %v245, %v266
    %v272 = vadd.f32 %v246, %v268
    %273 = vst [vmem:[#allocation2] sm:$0xff] %v271
    %274 = vst [vmem:[#allocation2 + $0x8] sm:$0xff] %v272
    %s275 = sld [smem:[#allocation7 + $0x1]]
    %v276 = vstv %s275
    %s277 = sld [smem:[#allocation4 + $0x80]]
    %v278 = vstv %s277
    %v279 = vmul.f32 %v278, %v53
    %v280 = vmul.f32 %v278, %v54
    %v281 = vadd.f32 %v276, %v279
    %v282 = vadd.f32 %v276, %v280
    %s283 = sld [smem:[#allocation4 + $0x81]]
    %v284 = vstv %s283
    %v285 = vmul.f32 %v284, %v53
    %v286 = vmul.f32 %v284, %v54
    %v287 = vmul.f32 %v284, %v55
    %291 = vrot.lane.b32.xlu0 %v285, 127
    %v292 = vpop.permute.xlu0 %291
    %293 = vrot.lane.b32.xlu0 %v286, 127
    %v294 = vpop.permute.xlu0 %293
    %295 = vrot.lane.b32.xlu0 %v287, 127
    %v296 = vpop.permute.xlu0 %295
    %v297 = vrot.slane %v292, 2
    %v298 = vrot.slane %v294, 2
    %v299 = vrot.slane %v296, 2
    %v300 = vsel %vm81, %v297, %v298
    %v301 = vsel %vm83, %v292, %v300
    %v302 = vsel %vm81, %v298, %v299
    %v303 = vsel %vm83, %v294, %v302
    %v306 = vadd.f32 %v281, %v301
    %v307 = vadd.f32 %v282, %v303
    %s308 = sld [smem:[#allocation4 + $0x82]]
    %v309 = vstv %s308
    %v310 = vmul.f32 %v309, %v53
    %v311 = vmul.f32 %v309, %v54
    %v312 = vmul.f32 %v309, %v55
    %316 = vrot.lane.b32.xlu0 %v310, 126
    %v317 = vpop.permute.xlu0 %316
    %318 = vrot.lane.b32.xlu0 %v311, 126
    %v319 = vpop.permute.xlu0 %318
    %320 = vrot.lane.b32.xlu0 %v312, 126
    %v321 = vpop.permute.xlu0 %320
    %v322 = vrot.slane %v317, 2
    %v323 = vrot.slane %v319, 2
    %v324 = vrot.slane %v321, 2
    %v325 = vsel %vm81, %v322, %v323
    %v326 = vsel %vm109, %v317, %v325
    %v327 = vsel %vm81, %v323, %v324
    %v328 = vsel %vm109, %v319, %v327
    %v331 = vadd.f32 %v306, %v326
    %v332 = vadd.f32 %v307, %v328
    %s333 = sld [smem:[#allocation4 + $0x83]]
    %v334 = vstv %s333
    %v335 = vmul.f32 %v334, %v53
    %v336 = vmul.f32 %v334, %v54
    %v337 = vmul.f32 %v334, %v55
    %341 = vrot.lane.b32.xlu0 %v335, 96
    %v342 = vpop.permute.xlu0 %341
    %343 = vrot.lane.b32.xlu0 %v336, 96
    %v344 = vpop.permute.xlu0 %343
    %345 = vrot.lane.b32.xlu0 %v337, 96
    %v346 = vpop.permute.xlu0 %345
    %v347 = vrot.slane %v342, 2
    %v348 = vrot.slane %v344, 2
    %v349 = vrot.slane %v346, 2
    %v350 = vsel %vm81, %v347, %v348
    %v351 = vsel %vm135, %v342, %v350
    %v352 = vsel %vm81, %v348, %v349
    %v353 = vsel %vm135, %v344, %v352
    %v356 = vadd.f32 %v331, %v351
    %v357 = vadd.f32 %v332, %v353
    %s358 = sld [smem:[#allocation4 + $0x84]]
    %v359 = vstv %s358
    %v360 = vmul.f32 %v359, %v53
    %v361 = vmul.f32 %v359, %v54
    %v362 = vmul.f32 %v359, %v55
    %366 = vrot.lane.b32.xlu0 %v360, 95
    %v367 = vpop.permute.xlu0 %366
    %368 = vrot.lane.b32.xlu0 %v361, 95
    %v369 = vpop.permute.xlu0 %368
    %370 = vrot.lane.b32.xlu0 %v362, 95
    %v371 = vpop.permute.xlu0 %370
    %v372 = vrot.slane %v367, 2
    %v373 = vrot.slane %v369, 2
    %v374 = vrot.slane %v371, 2
    %v375 = vsel %vm81, %v372, %v373
    %v376 = vsel %vm161, %v367, %v375
    %v377 = vsel %vm81, %v373, %v374
    %v378 = vsel %vm161, %v369, %v377
    %v381 = vadd.f32 %v356, %v376
    %v382 = vadd.f32 %v357, %v378
    %s383 = sld [smem:[#allocation4 + $0x85]]
    %v384 = vstv %s383
    %v385 = vmul.f32 %v384, %v53
    %v386 = vmul.f32 %v384, %v54
    %v387 = vmul.f32 %v384, %v55
    %391 = vrot.lane.b32.xlu0 %v385, 94
    %v392 = vpop.permute.xlu0 %391
    %393 = vrot.lane.b32.xlu0 %v386, 94
    %v394 = vpop.permute.xlu0 %393
    %395 = vrot.lane.b32.xlu0 %v387, 94
    %v396 = vpop.permute.xlu0 %395
    %v397 = vrot.slane %v392, 2
    %v398 = vrot.slane %v394, 2
    %v399 = vrot.slane %v396, 2
    %v400 = vsel %vm81, %v397, %v398
    %v401 = vsel %vm187, %v392, %v400
    %v402 = vsel %vm81, %v398, %v399
    %v403 = vsel %vm187, %v394, %v402
    %v406 = vadd.f32 %v381, %v401
    %v407 = vadd.f32 %v382, %v403
    %s408 = sld [smem:[#allocation4 + $0x86]]
    %v409 = vstv %s408
    %v410 = vmul.f32 %v409, %v53
    %v411 = vmul.f32 %v409, %v54
    %v412 = vmul.f32 %v409, %v55
    %416 = vrot.lane.b32.xlu0 %v410, 64
    %v417 = vpop.permute.xlu0 %416
    %418 = vrot.lane.b32.xlu0 %v411, 64
    %v419 = vpop.permute.xlu0 %418
    %420 = vrot.lane.b32.xlu0 %v412, 64
    %v421 = vpop.permute.xlu0 %420
    %v422 = vrot.slane %v417, 2
    %v423 = vrot.slane %v419, 2
    %v424 = vrot.slane %v421, 2
    %v425 = vsel %vm81, %v422, %v423
    %v426 = vsel %vm213, %v417, %v425
    %v427 = vsel %vm81, %v423, %v424
    %v428 = vsel %vm213, %v419, %v427
    %v431 = vadd.f32 %v406, %v426
    %v432 = vadd.f32 %v407, %v428
    %s433 = sld [smem:[#allocation4 + $0x87]]
    %v434 = vstv %s433
    %v435 = vmul.f32 %v434, %v53
    %v436 = vmul.f32 %v434, %v54
    %v437 = vmul.f32 %v434, %v55
    %441 = vrot.lane.b32.xlu0 %v435, 63
    %v442 = vpop.permute.xlu0 %441
    %443 = vrot.lane.b32.xlu0 %v436, 63
    %v444 = vpop.permute.xlu0 %443
    %445 = vrot.lane.b32.xlu0 %v437, 63
    %v446 = vpop.permute.xlu0 %445
    %v447 = vrot.slane %v442, 2
    %v448 = vrot.slane %v444, 2
    %v449 = vrot.slane %v446, 2
    %v450 = vsel %vm81, %v447, %v448
    %v451 = vsel %vm239, %v442, %v450
    %v452 = vsel %vm81, %v448, %v449
    %v453 = vsel %vm239, %v444, %v452
    %v456 = vadd.f32 %v431, %v451
    %v457 = vadd.f32 %v432, %v453
    %s458 = sld [smem:[#allocation4 + $0x88]]
    %v459 = vstv %s458
    %v460 = vmul.f32 %v459, %v53
    %v461 = vmul.f32 %v459, %v54
    %v462 = vmul.f32 %v459, %v55
    %466 = vrot.lane.b32.xlu0 %v460, 62
    %v467 = vpop.permute.xlu0 %466
    %468 = vrot.lane.b32.xlu0 %v461, 62
    %v469 = vpop.permute.xlu0 %468
    %470 = vrot.lane.b32.xlu0 %v462, 62
    %v471 = vpop.permute.xlu0 %470
    %v472 = vrot.slane %v467, 2
    %v473 = vrot.slane %v469, 2
    %v474 = vrot.slane %v471, 2
    %v475 = vsel %vm81, %v472, %v473
    %v476 = vsel %vm265, %v467, %v475
    %v477 = vsel %vm81, %v473, %v474
    %v478 = vsel %vm265, %v469, %v477
    %v481 = vadd.f32 %v456, %v476
    %v482 = vadd.f32 %v457, %v478
    %483 = vst [vmem:[#allocation2 + $0x10] sm:$0xff] %v481
    %484 = vst [vmem:[#allocation2 + $0x18] sm:$0xff] %v482
    %s485 = sld [smem:[#allocation7 + $0x2]]
    %v486 = vstv %s485
    %s487 = sld [smem:[#allocation4 + $0x100]]
    %v488 = vstv %s487
    %v489 = vmul.f32 %v488, %v53
    %v490 = vmul.f32 %v488, %v54
    %v491 = vadd.f32 %v486, %v489
    %v492 = vadd.f32 %v486, %v490
    %s493 = sld [smem:[#allocation4 + $0x101]]
    %v494 = vstv %s493
    %v495 = vmul.f32 %v494, %v53
    %v496 = vmul.f32 %v494, %v54
    %v497 = vmul.f32 %v494, %v55
    %501 = vrot.lane.b32.xlu0 %v495, 127
    %v502 = vpop.permute.xlu0 %501
    %503 = vrot.lane.b32.xlu0 %v496, 127
    %v504 = vpop.permute.xlu0 %503
    %505 = vrot.lane.b32.xlu0 %v497, 127
    %v506 = vpop.permute.xlu0 %505
    %v507 = vrot.slane %v502, 2
    %v508 = vrot.slane %v504, 2
    %v509 = vrot.slane %v506, 2
    %v510 = vsel %vm81, %v507, %v508
    %v511 = vsel %vm83, %v502, %v510
    %v512 = vsel %vm81, %v508, %v509
    %v513 = vsel %vm83, %v504, %v512
    %v516 = vadd.f32 %v491, %v511
    %v517 = vadd.f32 %v492, %v513
    %s518 = sld [smem:[#allocation4 + $0x102]]
    %v519 = vstv %s518
    %v520 = vmul.f32 %v519, %v53
    %v521 = vmul.f32 %v519, %v54
    %v522 = vmul.f32 %v519, %v55
    %526 = vrot.lane.b32.xlu0 %v520, 126
    %v527 = vpop.permute.xlu0 %526
    %528 = vrot.lane.b32.xlu0 %v521, 126
    %v529 = vpop.permute.xlu0 %528
    %530 = vrot.lane.b32.xlu0 %v522, 126
    %v531 = vpop.permute.xlu0 %530
    %v532 = vrot.slane %v527, 2
    %v533 = vrot.slane %v529, 2
    %v534 = vrot.slane %v531, 2
    %v535 = vsel %vm81, %v532, %v533
    %v536 = vsel %vm109, %v527, %v535
    %v537 = vsel %vm81, %v533, %v534
    %v538 = vsel %vm109, %v529, %v537
    %v541 = vadd.f32 %v516, %v536
    %v542 = vadd.f32 %v517, %v538
    %s543 = sld [smem:[#allocation4 + $0x103]]
    %v544 = vstv %s543
    %v545 = vmul.f32 %v544, %v53
    %v546 = vmul.f32 %v544, %v54
    %v547 = vmul.f32 %v544, %v55
    %551 = vrot.lane.b32.xlu0 %v545, 96
    %v552 = vpop.permute.xlu0 %551
    %553 = vrot.lane.b32.xlu0 %v546, 96
    %v554 = vpop.permute.xlu0 %553
    %555 = vrot.lane.b32.xlu0 %v547, 96
    %v556 = vpop.permute.xlu0 %555
    %v557 = vrot.slane %v552, 2
    %v558 = vrot.slane %v554, 2
    %v559 = vrot.slane %v556, 2
    %v560 = vsel %vm81, %v557, %v558
    %v561 = vsel %vm135, %v552, %v560
    %v562 = vsel %vm81, %v558, %v559
    %v563 = vsel %vm135, %v554, %v562
    %v566 = vadd.f32 %v541, %v561
    %v567 = vadd.f32 %v542, %v563
    %s568 = sld [smem:[#allocation4 + $0x104]]
    %v569 = vstv %s568
    %v570 = vmul.f32 %v569, %v53
    %v571 = vmul.f32 %v569, %v54
    %v572 = vmul.f32 %v569, %v55
    %576 = vrot.lane.b32.xlu0 %v570, 95
    %v577 = vpop.permute.xlu0 %576
    %578 = vrot.lane.b32.xlu0 %v571, 95
    %v579 = vpop.permute.xlu0 %578
    %580 = vrot.lane.b32.xlu0 %v572, 95
    %v581 = vpop.permute.xlu0 %580
    %v582 = vrot.slane %v577, 2
    %v583 = vrot.slane %v579, 2
    %v584 = vrot.slane %v581, 2
    %v585 = vsel %vm81, %v582, %v583
    %v586 = vsel %vm161, %v577, %v585
    %v587 = vsel %vm81, %v583, %v584
    %v588 = vsel %vm161, %v579, %v587
    %v591 = vadd.f32 %v566, %v586
    %v592 = vadd.f32 %v567, %v588
    %s593 = sld [smem:[#allocation4 + $0x105]]
    %v594 = vstv %s593
    %v595 = vmul.f32 %v594, %v53
    %v596 = vmul.f32 %v594, %v54
    %v597 = vmul.f32 %v594, %v55
    %601 = vrot.lane.b32.xlu0 %v595, 94
    %v602 = vpop.permute.xlu0 %601
    %603 = vrot.lane.b32.xlu0 %v596, 94
    %v604 = vpop.permute.xlu0 %603
    %605 = vrot.lane.b32.xlu0 %v597, 94
    %v606 = vpop.permute.xlu0 %605
    %v607 = vrot.slane %v602, 2
    %v608 = vrot.slane %v604, 2
    %v609 = vrot.slane %v606, 2
    %v610 = vsel %vm81, %v607, %v608
    %v611 = vsel %vm187, %v602, %v610
    %v612 = vsel %vm81, %v608, %v609
    %v613 = vsel %vm187, %v604, %v612
    %v616 = vadd.f32 %v591, %v611
    %v617 = vadd.f32 %v592, %v613
    %s618 = sld [smem:[#allocation4 + $0x106]]
    %v619 = vstv %s618
    %v620 = vmul.f32 %v619, %v53
    %v621 = vmul.f32 %v619, %v54
    %v622 = vmul.f32 %v619, %v55
    %626 = vrot.lane.b32.xlu0 %v620, 64
    %v627 = vpop.permute.xlu0 %626
    %628 = vrot.lane.b32.xlu0 %v621, 64
    %v629 = vpop.permute.xlu0 %628
    %630 = vrot.lane.b32.xlu0 %v622, 64
    %v631 = vpop.permute.xlu0 %630
    %v632 = vrot.slane %v627, 2
    %v633 = vrot.slane %v629, 2
    %v634 = vrot.slane %v631, 2
    %v635 = vsel %vm81, %v632, %v633
    %v636 = vsel %vm213, %v627, %v635
    %v637 = vsel %vm81, %v633, %v634
    %v638 = vsel %vm213, %v629, %v637
    %v641 = vadd.f32 %v616, %v636
    %v642 = vadd.f32 %v617, %v638
    %s643 = sld [smem:[#allocation4 + $0x107]]
    %v644 = vstv %s643
    %v645 = vmul.f32 %v644, %v53
    %v646 = vmul.f32 %v644, %v54
    %v647 = vmul.f32 %v644, %v55
    %651 = vrot.lane.b32.xlu0 %v645, 63
    %v652 = vpop.permute.xlu0 %651
    %653 = vrot.lane.b32.xlu0 %v646, 63
    %v654 = vpop.permute.xlu0 %653
    %655 = vrot.lane.b32.xlu0 %v647, 63
    %v656 = vpop.permute.xlu0 %655
    %v657 = vrot.slane %v652, 2
    %v658 = vrot.slane %v654, 2
    %v659 = vrot.slane %v656, 2
    %v660 = vsel %vm81, %v657, %v658
    %v661 = vsel %vm239, %v652, %v660
    %v662 = vsel %vm81, %v658, %v659
    %v663 = vsel %vm239, %v654, %v662
    %v666 = vadd.f32 %v641, %v661
    %v667 = vadd.f32 %v642, %v663
    %s668 = sld [smem:[#allocation4 + $0x108]]
    %v669 = vstv %s668
    %v670 = vmul.f32 %v669, %v53
    %v671 = vmul.f32 %v669, %v54
    %v672 = vmul.f32 %v669, %v55
    %676 = vrot.lane.b32.xlu0 %v670, 62
    %v677 = vpop.permute.xlu0 %676
    %678 = vrot.lane.b32.xlu0 %v671, 62
    %v679 = vpop.permute.xlu0 %678
    %680 = vrot.lane.b32.xlu0 %v672, 62
    %v681 = vpop.permute.xlu0 %680
    %v682 = vrot.slane %v677, 2
    %v683 = vrot.slane %v679, 2
    %v684 = vrot.slane %v681, 2
    %v685 = vsel %vm81, %v682, %v683
    %v686 = vsel %vm265, %v677, %v685
    %v687 = vsel %vm81, %v683, %v684
    %v688 = vsel %vm265, %v679, %v687
    %v691 = vadd.f32 %v666, %v686
    %v692 = vadd.f32 %v667, %v688
    %693 = vst [vmem:[#allocation2 + $0x20] sm:$0xff] %v691
    %694 = vst [vmem:[#allocation2 + $0x28] sm:$0xff] %v692
    %s695 = sld [smem:[#allocation7 + $0x3]]
    %v696 = vstv %s695
    %s697 = sld [smem:[#allocation4 + $0x180]]
    %v698 = vstv %s697
    %v699 = vmul.f32 %v698, %v53
    %v700 = vmul.f32 %v698, %v54
    %v701 = vadd.f32 %v696, %v699
    %v702 = vadd.f32 %v696, %v700
    %s703 = sld [smem:[#allocation4 + $0x181]]
    %v704 = vstv %s703
    %v705 = vmul.f32 %v704, %v53
    %v706 = vmul.f32 %v704, %v54
    %v707 = vmul.f32 %v704, %v55
    %711 = vrot.lane.b32.xlu0 %v705, 127
    %v712 = vpop.permute.xlu0 %711
    %713 = vrot.lane.b32.xlu0 %v706, 127
    %v714 = vpop.permute.xlu0 %713
    %715 = vrot.lane.b32.xlu0 %v707, 127
    %v716 = vpop.permute.xlu0 %715
    %v717 = vrot.slane %v712, 2
    %v718 = vrot.slane %v714, 2
    %v719 = vrot.slane %v716, 2
    %v720 = vsel %vm81, %v717, %v718
    %v721 = vsel %vm83, %v712, %v720
    %v722 = vsel %vm81, %v718, %v719
    %v723 = vsel %vm83, %v714, %v722
    %v726 = vadd.f32 %v701, %v721
    %v727 = vadd.f32 %v702, %v723
    %s728 = sld [smem:[#allocation4 + $0x182]]
    %v729 = vstv %s728
    %v730 = vmul.f32 %v729, %v53
    %v731 = vmul.f32 %v729, %v54
    %v732 = vmul.f32 %v729, %v55
    %736 = vrot.lane.b32.xlu0 %v730, 126
    %v737 = vpop.permute.xlu0 %736
    %738 = vrot.lane.b32.xlu0 %v731, 126
    %v739 = vpop.permute.xlu0 %738
    %740 = vrot.lane.b32.xlu0 %v732, 126
    %v741 = vpop.permute.xlu0 %740
    %v742 = vrot.slane %v737, 2
    %v743 = vrot.slane %v739, 2
    %v744 = vrot.slane %v741, 2
    %v745 = vsel %vm81, %v742, %v743
    %v746 = vsel %vm109, %v737, %v745
    %v747 = vsel %vm81, %v743, %v744
    %v748 = vsel %vm109, %v739, %v747
    %v751 = vadd.f32 %v726, %v746
    %v752 = vadd.f32 %v727, %v748
    %s753 = sld [smem:[#allocation4 + $0x183]]
    %v754 = vstv %s753
    %v755 = vmul.f32 %v754, %v53
    %v756 = vmul.f32 %v754, %v54
    %v757 = vmul.f32 %v754, %v55
    %761 = vrot.lane.b32.xlu0 %v755, 96
    %v762 = vpop.permute.xlu0 %761
    %763 = vrot.lane.b32.xlu0 %v756, 96
    %v764 = vpop.permute.xlu0 %763
    %765 = vrot.lane.b32.xlu0 %v757, 96
    %v766 = vpop.permute.xlu0 %765
    %v767 = vrot.slane %v762, 2
    %v768 = vrot.slane %v764, 2
    %v769 = vrot.slane %v766, 2
    %v770 = vsel %vm81, %v767, %v768
    %v771 = vsel %vm135, %v762, %v770
    %v772 = vsel %vm81, %v768, %v769
    %v773 = vsel %vm135, %v764, %v772
    %v776 = vadd.f32 %v751, %v771
    %v777 = vadd.f32 %v752, %v773
    %s778 = sld [smem:[#allocation4 + $0x184]]
    %v779 = vstv %s778
    %v780 = vmul.f32 %v779, %v53
    %v781 = vmul.f32 %v779, %v54
    %v782 = vmul.f32 %v779, %v55
    %786 = vrot.lane.b32.xlu0 %v780, 95
    %v787 = vpop.permute.xlu0 %786
    %788 = vrot.lane.b32.xlu0 %v781, 95
    %v789 = vpop.permute.xlu0 %788
    %790 = vrot.lane.b32.xlu0 %v782, 95
    %v791 = vpop.permute.xlu0 %790
    %v792 = vrot.slane %v787, 2
    %v793 = vrot.slane %v789, 2
    %v794 = vrot.slane %v791, 2
    %v795 = vsel %vm81, %v792, %v793
    %v796 = vsel %vm161, %v787, %v795
    %v797 = vsel %vm81, %v793, %v794
    %v798 = vsel %vm161, %v789, %v797
    %v801 = vadd.f32 %v776, %v796
    %v802 = vadd.f32 %v777, %v798
    %s803 = sld [smem:[#allocation4 + $0x185]]
    %v804 = vstv %s803
    %v805 = vmul.f32 %v804, %v53
    %v806 = vmul.f32 %v804, %v54
    %v807 = vmul.f32 %v804, %v55
    %811 = vrot.lane.b32.xlu0 %v805, 94
    %v812 = vpop.permute.xlu0 %811
    %813 = vrot.lane.b32.xlu0 %v806, 94
    %v814 = vpop.permute.xlu0 %813
    %815 = vrot.lane.b32.xlu0 %v807, 94
    %v816 = vpop.permute.xlu0 %815
    %v817 = vrot.slane %v812, 2
    %v818 = vrot.slane %v814, 2
    %v819 = vrot.slane %v816, 2
    %v820 = vsel %vm81, %v817, %v818
    %v821 = vsel %vm187, %v812, %v820
    %v822 = vsel %vm81, %v818, %v819
    %v823 = vsel %vm187, %v814, %v822
    %v826 = vadd.f32 %v801, %v821
    %v827 = vadd.f32 %v802, %v823
    %s828 = sld [smem:[#allocation4 + $0x186]]
    %v829 = vstv %s828
    %v830 = vmul.f32 %v829, %v53
    %v831 = vmul.f32 %v829, %v54
    %v832 = vmul.f32 %v829, %v55
    %836 = vrot.lane.b32.xlu0 %v830, 64
    %v837 = vpop.permute.xlu0 %836
    %838 = vrot.lane.b32.xlu0 %v831, 64
    %v839 = vpop.permute.xlu0 %838
    %840 = vrot.lane.b32.xlu0 %v832, 64
    %v841 = vpop.permute.xlu0 %840
    %v842 = vrot.slane %v837, 2
    %v843 = vrot.slane %v839, 2
    %v844 = vrot.slane %v841, 2
    %v845 = vsel %vm81, %v842, %v843
    %v846 = vsel %vm213, %v837, %v845
    %v847 = vsel %vm81, %v843, %v844
    %v848 = vsel %vm213, %v839, %v847
    %v851 = vadd.f32 %v826, %v846
    %v852 = vadd.f32 %v827, %v848
    %s853 = sld [smem:[#allocation4 + $0x187]]
    %v854 = vstv %s853
    %v855 = vmul.f32 %v854, %v53
    %v856 = vmul.f32 %v854, %v54
    %v857 = vmul.f32 %v854, %v55
    %861 = vrot.lane.b32.xlu0 %v855, 63
    %v862 = vpop.permute.xlu0 %861
    %863 = vrot.lane.b32.xlu0 %v856, 63
    %v864 = vpop.permute.xlu0 %863
    %865 = vrot.lane.b32.xlu0 %v857, 63
    %v866 = vpop.permute.xlu0 %865
    %v867 = vrot.slane %v862, 2
    %v868 = vrot.slane %v864, 2
    %v869 = vrot.slane %v866, 2
    %v870 = vsel %vm81, %v867, %v868
    %v871 = vsel %vm239, %v862, %v870
    %v872 = vsel %vm81, %v868, %v869
    %v873 = vsel %vm239, %v864, %v872
    %v876 = vadd.f32 %v851, %v871
    %v877 = vadd.f32 %v852, %v873
    %s878 = sld [smem:[#allocation4 + $0x188]]
    %v879 = vstv %s878
    %v880 = vmul.f32 %v879, %v53
    %v881 = vmul.f32 %v879, %v54
    %v882 = vmul.f32 %v879, %v55
    %886 = vrot.lane.b32.xlu0 %v880, 62
    %v887 = vpop.permute.xlu0 %886
    %888 = vrot.lane.b32.xlu0 %v881, 62
    %v889 = vpop.permute.xlu0 %888
    %890 = vrot.lane.b32.xlu0 %v882, 62
    %v891 = vpop.permute.xlu0 %890
    %v892 = vrot.slane %v887, 2
    %v893 = vrot.slane %v889, 2
    %v894 = vrot.slane %v891, 2
    %v895 = vsel %vm81, %v892, %v893
    %v896 = vsel %vm265, %v887, %v895
    %v897 = vsel %vm81, %v893, %v894
    %v898 = vsel %vm265, %v889, %v897
    %v901 = vadd.f32 %v876, %v896
    %v902 = vadd.f32 %v877, %v898
    %903 = vst [vmem:[#allocation2 + $0x30] sm:$0xff] %v901
    %904 = vst [vmem:[#allocation2 + $0x38] sm:$0xff] %v902
    %s905 = sld [smem:[#allocation7 + $0x4]]
    %v906 = vstv %s905
    %s907 = sld [smem:[#allocation4 + $0x200]]
    %v908 = vstv %s907
    %v909 = vmul.f32 %v908, %v53
    %v910 = vmul.f32 %v908, %v54
    %v911 = vadd.f32 %v906, %v909
    %v912 = vadd.f32 %v906, %v910
    %s913 = sld [smem:[#allocation4 + $0x201]]
    %v914 = vstv %s913
    %v915 = vmul.f32 %v914, %v53
    %v916 = vmul.f32 %v914, %v54
    %v917 = vmul.f32 %v914, %v55
    %921 = vrot.lane.b32.xlu0 %v915, 127
    %v922 = vpop.permute.xlu0 %921
    %923 = vrot.lane.b32.xlu0 %v916, 127
    %v924 = vpop.permute.xlu0 %923
    %925 = vrot.lane.b32.xlu0 %v917, 127
    %v926 = vpop.permute.xlu0 %925
    %v927 = vrot.slane %v922, 2
    %v928 = vrot.slane %v924, 2
    %v929 = vrot.slane %v926, 2
    %v930 = vsel %vm81, %v927, %v928
    %v931 = vsel %vm83, %v922, %v930
    %v932 = vsel %vm81, %v928, %v929
    %v933 = vsel %vm83, %v924, %v932
    %v936 = vadd.f32 %v911, %v931
    %v937 = vadd.f32 %v912, %v933
    %s938 = sld [smem:[#allocation4 + $0x202]]
    %v939 = vstv %s938
    %v940 = vmul.f32 %v939, %v53
    %v941 = vmul.f32 %v939, %v54
    %v942 = vmul.f32 %v939, %v55
    %946 = vrot.lane.b32.xlu0 %v940, 126
    %v947 = vpop.permute.xlu0 %946
    %948 = vrot.lane.b32.xlu0 %v941, 126
    %v949 = vpop.permute.xlu0 %948
    %950 = vrot.lane.b32.xlu0 %v942, 126
    %v951 = vpop.permute.xlu0 %950
    %v952 = vrot.slane %v947, 2
    %v953 = vrot.slane %v949, 2
    %v954 = vrot.slane %v951, 2
    %v955 = vsel %vm81, %v952, %v953
    %v956 = vsel %vm109, %v947, %v955
    %v957 = vsel %vm81, %v953, %v954
    %v958 = vsel %vm109, %v949, %v957
    %v961 = vadd.f32 %v936, %v956
    %v962 = vadd.f32 %v937, %v958
    %s963 = sld [smem:[#allocation4 + $0x203]]
    %v964 = vstv %s963
    %v965 = vmul.f32 %v964, %v53
    %v966 = vmul.f32 %v964, %v54
    %v967 = vmul.f32 %v964, %v55
    %971 = vrot.lane.b32.xlu0 %v965, 96
    %v972 = vpop.permute.xlu0 %971
    %973 = vrot.lane.b32.xlu0 %v966, 96
    %v974 = vpop.permute.xlu0 %973
    %975 = vrot.lane.b32.xlu0 %v967, 96
    %v976 = vpop.permute.xlu0 %975
    %v977 = vrot.slane %v972, 2
    %v978 = vrot.slane %v974, 2
    %v979 = vrot.slane %v976, 2
    %v980 = vsel %vm81, %v977, %v978
    %v981 = vsel %vm135, %v972, %v980
    %v982 = vsel %vm81, %v978, %v979
    %v983 = vsel %vm135, %v974, %v982
    %v986 = vadd.f32 %v961, %v981
    %v987 = vadd.f32 %v962, %v983
    %s988 = sld [smem:[#allocation4 + $0x204]]
    %v989 = vstv %s988
    %v990 = vmul.f32 %v989, %v53
    %v991 = vmul.f32 %v989, %v54
    %v992 = vmul.f32 %v989, %v55
    %996 = vrot.lane.b32.xlu0 %v990, 95
    %v997 = vpop.permute.xlu0 %996
    %998 = vrot.lane.b32.xlu0 %v991, 95
    %v999 = vpop.permute.xlu0 %998
    %1000 = vrot.lane.b32.xlu0 %v992, 95
    %v1001 = vpop.permute.xlu0 %1000
    %v1002 = vrot.slane %v997, 2
    %v1003 = vrot.slane %v999, 2
    %v1004 = vrot.slane %v1001, 2
    %v1005 = vsel %vm81, %v1002, %v1003
    %v1006 = vsel %vm161, %v997, %v1005
    %v1007 = vsel %vm81, %v1003, %v1004
    %v1008 = vsel %vm161, %v999, %v1007
    %v1011 = vadd.f32 %v986, %v1006
    %v1012 = vadd.f32 %v987, %v1008
    %s1013 = sld [smem:[#allocation4 + $0x205]]
    %v1014 = vstv %s1013
    %v1015 = vmul.f32 %v1014, %v53
    %v1016 = vmul.f32 %v1014, %v54
    %v1017 = vmul.f32 %v1014, %v55
    %1021 = vrot.lane.b32.xlu0 %v1015, 94
    %v1022 = vpop.permute.xlu0 %1021
    %1023 = vrot.lane.b32.xlu0 %v1016, 94
    %v1024 = vpop.permute.xlu0 %1023
    %1025 = vrot.lane.b32.xlu0 %v1017, 94
    %v1026 = vpop.permute.xlu0 %1025
    %v1027 = vrot.slane %v1022, 2
    %v1028 = vrot.slane %v1024, 2
    %v1029 = vrot.slane %v1026, 2
    %v1030 = vsel %vm81, %v1027, %v1028
    %v1031 = vsel %vm187, %v1022, %v1030
    %v1032 = vsel %vm81, %v1028, %v1029
    %v1033 = vsel %vm187, %v1024, %v1032
    %v1036 = vadd.f32 %v1011, %v1031
    %v1037 = vadd.f32 %v1012, %v1033
    %s1038 = sld [smem:[#allocation4 + $0x206]]
    %v1039 = vstv %s1038
    %v1040 = vmul.f32 %v1039, %v53
    %v1041 = vmul.f32 %v1039, %v54
    %v1042 = vmul.f32 %v1039, %v55
    %1046 = vrot.lane.b32.xlu0 %v1040, 64
    %v1047 = vpop.permute.xlu0 %1046
    %1048 = vrot.lane.b32.xlu0 %v1041, 64
    %v1049 = vpop.permute.xlu0 %1048
    %1050 = vrot.lane.b32.xlu0 %v1042, 64
    %v1051 = vpop.permute.xlu0 %1050
    %v1052 = vrot.slane %v1047, 2
    %v1053 = vrot.slane %v1049, 2
    %v1054 = vrot.slane %v1051, 2
    %v1055 = vsel %vm81, %v1052, %v1053
    %v1056 = vsel %vm213, %v1047, %v1055
    %v1057 = vsel %vm81, %v1053, %v1054
    %v1058 = vsel %vm213, %v1049, %v1057
    %v1061 = vadd.f32 %v1036, %v1056
    %v1062 = vadd.f32 %v1037, %v1058
    %s1063 = sld [smem:[#allocation4 + $0x207]]
    %v1064 = vstv %s1063
    %v1065 = vmul.f32 %v1064, %v53
    %v1066 = vmul.f32 %v1064, %v54
    %v1067 = vmul.f32 %v1064, %v55
    %1071 = vrot.lane.b32.xlu0 %v1065, 63
    %v1072 = vpop.permute.xlu0 %1071
    %1073 = vrot.lane.b32.xlu0 %v1066, 63
    %v1074 = vpop.permute.xlu0 %1073
    %1075 = vrot.lane.b32.xlu0 %v1067, 63
    %v1076 = vpop.permute.xlu0 %1075
    %v1077 = vrot.slane %v1072, 2
    %v1078 = vrot.slane %v1074, 2
    %v1079 = vrot.slane %v1076, 2
    %v1080 = vsel %vm81, %v1077, %v1078
    %v1081 = vsel %vm239, %v1072, %v1080
    %v1082 = vsel %vm81, %v1078, %v1079
    %v1083 = vsel %vm239, %v1074, %v1082
    %v1086 = vadd.f32 %v1061, %v1081
    %v1087 = vadd.f32 %v1062, %v1083
    %s1088 = sld [smem:[#allocation4 + $0x208]]
    %v1089 = vstv %s1088
    %v1090 = vmul.f32 %v1089, %v53
    %v1091 = vmul.f32 %v1089, %v54
    %v1092 = vmul.f32 %v1089, %v55
    %1096 = vrot.lane.b32.xlu0 %v1090, 62
    %v1097 = vpop.permute.xlu0 %1096
    %1098 = vrot.lane.b32.xlu0 %v1091, 62
    %v1099 = vpop.permute.xlu0 %1098
    %1100 = vrot.lane.b32.xlu0 %v1092, 62
    %v1101 = vpop.permute.xlu0 %1100
    %v1102 = vrot.slane %v1097, 2
    %v1103 = vrot.slane %v1099, 2
    %v1104 = vrot.slane %v1101, 2
    %v1105 = vsel %vm81, %v1102, %v1103
    %v1106 = vsel %vm265, %v1097, %v1105
    %v1107 = vsel %vm81, %v1103, %v1104
    %v1108 = vsel %vm265, %v1099, %v1107
    %v1111 = vadd.f32 %v1086, %v1106
    %v1112 = vadd.f32 %v1087, %v1108
    %1113 = vst [vmem:[#allocation2 + $0x40] sm:$0xff] %v1111
    %1114 = vst [vmem:[#allocation2 + $0x48] sm:$0xff] %v1112
    %s1115 = sld [smem:[#allocation7 + $0x5]]
    %v1116 = vstv %s1115
    %s1117 = sld [smem:[#allocation4 + $0x280]]
    %v1118 = vstv %s1117
    %v1119 = vmul.f32 %v1118, %v53
    %v1120 = vmul.f32 %v1118, %v54
    %v1121 = vadd.f32 %v1116, %v1119
    %v1122 = vadd.f32 %v1116, %v1120
    %s1123 = sld [smem:[#allocation4 + $0x281]]
    %v1124 = vstv %s1123
    %v1125 = vmul.f32 %v1124, %v53
    %v1126 = vmul.f32 %v1124, %v54
    %v1127 = vmul.f32 %v1124, %v55
    %1131 = vrot.lane.b32.xlu0 %v1125, 127
    %v1132 = vpop.permute.xlu0 %1131
    %1133 = vrot.lane.b32.xlu0 %v1126, 127
    %v1134 = vpop.permute.xlu0 %1133
    %1135 = vrot.lane.b32.xlu0 %v1127, 127
    %v1136 = vpop.permute.xlu0 %1135
    %v1137 = vrot.slane %v1132, 2
    %v1138 = vrot.slane %v1134, 2
    %v1139 = vrot.slane %v1136, 2
    %v1140 = vsel %vm81, %v1137, %v1138
    %v1141 = vsel %vm83, %v1132, %v1140
    %v1142 = vsel %vm81, %v1138, %v1139
    %v1143 = vsel %vm83, %v1134, %v1142
    %v1146 = vadd.f32 %v1121, %v1141
    %v1147 = vadd.f32 %v1122, %v1143
    %s1148 = sld [smem:[#allocation4 + $0x282]]
    %v1149 = vstv %s1148
    %v1150 = vmul.f32 %v1149, %v53
    %v1151 = vmul.f32 %v1149, %v54
    %v1152 = vmul.f32 %v1149, %v55
    %1156 = vrot.lane.b32.xlu0 %v1150, 126
    %v1157 = vpop.permute.xlu0 %1156
    %1158 = vrot.lane.b32.xlu0 %v1151, 126
    %v1159 = vpop.permute.xlu0 %1158
    %1160 = vrot.lane.b32.xlu0 %v1152, 126
    %v1161 = vpop.permute.xlu0 %1160
    %v1162 = vrot.slane %v1157, 2
    %v1163 = vrot.slane %v1159, 2
    %v1164 = vrot.slane %v1161, 2
    %v1165 = vsel %vm81, %v1162, %v1163
    %v1166 = vsel %vm109, %v1157, %v1165
    %v1167 = vsel %vm81, %v1163, %v1164
    %v1168 = vsel %vm109, %v1159, %v1167
    %v1171 = vadd.f32 %v1146, %v1166
    %v1172 = vadd.f32 %v1147, %v1168
    %s1173 = sld [smem:[#allocation4 + $0x283]]
    %v1174 = vstv %s1173
    %v1175 = vmul.f32 %v1174, %v53
    %v1176 = vmul.f32 %v1174, %v54
    %v1177 = vmul.f32 %v1174, %v55
    %1181 = vrot.lane.b32.xlu0 %v1175, 96
    %v1182 = vpop.permute.xlu0 %1181
    %1183 = vrot.lane.b32.xlu0 %v1176, 96
    %v1184 = vpop.permute.xlu0 %1183
    %1185 = vrot.lane.b32.xlu0 %v1177, 96
    %v1186 = vpop.permute.xlu0 %1185
    %v1187 = vrot.slane %v1182, 2
    %v1188 = vrot.slane %v1184, 2
    %v1189 = vrot.slane %v1186, 2
    %v1190 = vsel %vm81, %v1187, %v1188
    %v1191 = vsel %vm135, %v1182, %v1190
    %v1192 = vsel %vm81, %v1188, %v1189
    %v1193 = vsel %vm135, %v1184, %v1192
    %v1196 = vadd.f32 %v1171, %v1191
    %v1197 = vadd.f32 %v1172, %v1193
    %s1198 = sld [smem:[#allocation4 + $0x284]]
    %v1199 = vstv %s1198
    %v1200 = vmul.f32 %v1199, %v53
    %v1201 = vmul.f32 %v1199, %v54
    %v1202 = vmul.f32 %v1199, %v55
    %1206 = vrot.lane.b32.xlu0 %v1200, 95
    %v1207 = vpop.permute.xlu0 %1206
    %1208 = vrot.lane.b32.xlu0 %v1201, 95
    %v1209 = vpop.permute.xlu0 %1208
    %1210 = vrot.lane.b32.xlu0 %v1202, 95
    %v1211 = vpop.permute.xlu0 %1210
    %v1212 = vrot.slane %v1207, 2
    %v1213 = vrot.slane %v1209, 2
    %v1214 = vrot.slane %v1211, 2
    %v1215 = vsel %vm81, %v1212, %v1213
    %v1216 = vsel %vm161, %v1207, %v1215
    %v1217 = vsel %vm81, %v1213, %v1214
    %v1218 = vsel %vm161, %v1209, %v1217
    %v1221 = vadd.f32 %v1196, %v1216
    %v1222 = vadd.f32 %v1197, %v1218
    %s1223 = sld [smem:[#allocation4 + $0x285]]
    %v1224 = vstv %s1223
    %v1225 = vmul.f32 %v1224, %v53
    %v1226 = vmul.f32 %v1224, %v54
    %v1227 = vmul.f32 %v1224, %v55
    %1231 = vrot.lane.b32.xlu0 %v1225, 94
    %v1232 = vpop.permute.xlu0 %1231
    %1233 = vrot.lane.b32.xlu0 %v1226, 94
    %v1234 = vpop.permute.xlu0 %1233
    %1235 = vrot.lane.b32.xlu0 %v1227, 94
    %v1236 = vpop.permute.xlu0 %1235
    %v1237 = vrot.slane %v1232, 2
    %v1238 = vrot.slane %v1234, 2
    %v1239 = vrot.slane %v1236, 2
    %v1240 = vsel %vm81, %v1237, %v1238
    %v1241 = vsel %vm187, %v1232, %v1240
    %v1242 = vsel %vm81, %v1238, %v1239
    %v1243 = vsel %vm187, %v1234, %v1242
    %v1246 = vadd.f32 %v1221, %v1241
    %v1247 = vadd.f32 %v1222, %v1243
    %s1248 = sld [smem:[#allocation4 + $0x286]]
    %v1249 = vstv %s1248
    %v1250 = vmul.f32 %v1249, %v53
    %v1251 = vmul.f32 %v1249, %v54
    %v1252 = vmul.f32 %v1249, %v55
    %1256 = vrot.lane.b32.xlu0 %v1250, 64
    %v1257 = vpop.permute.xlu0 %1256
    %1258 = vrot.lane.b32.xlu0 %v1251, 64
    %v1259 = vpop.permute.xlu0 %1258
    %1260 = vrot.lane.b32.xlu0 %v1252, 64
    %v1261 = vpop.permute.xlu0 %1260
    %v1262 = vrot.slane %v1257, 2
    %v1263 = vrot.slane %v1259, 2
    %v1264 = vrot.slane %v1261, 2
    %v1265 = vsel %vm81, %v1262, %v1263
    %v1266 = vsel %vm213, %v1257, %v1265
    %v1267 = vsel %vm81, %v1263, %v1264
    %v1268 = vsel %vm213, %v1259, %v1267
    %v1271 = vadd.f32 %v1246, %v1266
    %v1272 = vadd.f32 %v1247, %v1268
    %s1273 = sld [smem:[#allocation4 + $0x287]]
    %v1274 = vstv %s1273
    %v1275 = vmul.f32 %v1274, %v53
    %v1276 = vmul.f32 %v1274, %v54
    %v1277 = vmul.f32 %v1274, %v55
    %1281 = vrot.lane.b32.xlu0 %v1275, 63
    %v1282 = vpop.permute.xlu0 %1281
    %1283 = vrot.lane.b32.xlu0 %v1276, 63
    %v1284 = vpop.permute.xlu0 %1283
    %1285 = vrot.lane.b32.xlu0 %v1277, 63
    %v1286 = vpop.permute.xlu0 %1285
    %v1287 = vrot.slane %v1282, 2
    %v1288 = vrot.slane %v1284, 2
    %v1289 = vrot.slane %v1286, 2
    %v1290 = vsel %vm81, %v1287, %v1288
    %v1291 = vsel %vm239, %v1282, %v1290
    %v1292 = vsel %vm81, %v1288, %v1289
    %v1293 = vsel %vm239, %v1284, %v1292
    %v1296 = vadd.f32 %v1271, %v1291
    %v1297 = vadd.f32 %v1272, %v1293
    %s1298 = sld [smem:[#allocation4 + $0x288]]
    %v1299 = vstv %s1298
    %v1300 = vmul.f32 %v1299, %v53
    %v1301 = vmul.f32 %v1299, %v54
    %v1302 = vmul.f32 %v1299, %v55
    %1306 = vrot.lane.b32.xlu0 %v1300, 62
    %v1307 = vpop.permute.xlu0 %1306
    %1308 = vrot.lane.b32.xlu0 %v1301, 62
    %v1309 = vpop.permute.xlu0 %1308
    %1310 = vrot.lane.b32.xlu0 %v1302, 62
    %v1311 = vpop.permute.xlu0 %1310
    %v1312 = vrot.slane %v1307, 2
    %v1313 = vrot.slane %v1309, 2
    %v1314 = vrot.slane %v1311, 2
    %v1315 = vsel %vm81, %v1312, %v1313
    %v1316 = vsel %vm265, %v1307, %v1315
    %v1317 = vsel %vm81, %v1313, %v1314
    %v1318 = vsel %vm265, %v1309, %v1317
    %v1321 = vadd.f32 %v1296, %v1316
    %v1322 = vadd.f32 %v1297, %v1318
    %1323 = vst [vmem:[#allocation2 + $0x50] sm:$0xff] %v1321
    %1324 = vst [vmem:[#allocation2 + $0x58] sm:$0xff] %v1322
    %s1325 = sld [smem:[#allocation7 + $0x6]]
    %v1326 = vstv %s1325
    %s1327 = sld [smem:[#allocation4 + $0x300]]
    %v1328 = vstv %s1327
    %v1329 = vmul.f32 %v1328, %v53
    %v1330 = vmul.f32 %v1328, %v54
    %v1331 = vadd.f32 %v1326, %v1329
    %v1332 = vadd.f32 %v1326, %v1330
    %s1333 = sld [smem:[#allocation4 + $0x301]]
    %v1334 = vstv %s1333
    %v1335 = vmul.f32 %v1334, %v53
    %v1336 = vmul.f32 %v1334, %v54
    %v1337 = vmul.f32 %v1334, %v55
    %1341 = vrot.lane.b32.xlu0 %v1335, 127
    %v1342 = vpop.permute.xlu0 %1341
    %1343 = vrot.lane.b32.xlu0 %v1336, 127
    %v1344 = vpop.permute.xlu0 %1343
    %1345 = vrot.lane.b32.xlu0 %v1337, 127
    %v1346 = vpop.permute.xlu0 %1345
    %v1347 = vrot.slane %v1342, 2
    %v1348 = vrot.slane %v1344, 2
    %v1349 = vrot.slane %v1346, 2
    %v1350 = vsel %vm81, %v1347, %v1348
    %v1351 = vsel %vm83, %v1342, %v1350
    %v1352 = vsel %vm81, %v1348, %v1349
    %v1353 = vsel %vm83, %v1344, %v1352
    %v1356 = vadd.f32 %v1331, %v1351
    %v1357 = vadd.f32 %v1332, %v1353
    %s1358 = sld [smem:[#allocation4 + $0x302]]
    %v1359 = vstv %s1358
    %v1360 = vmul.f32 %v1359, %v53
    %v1361 = vmul.f32 %v1359, %v54
    %v1362 = vmul.f32 %v1359, %v55
    %1366 = vrot.lane.b32.xlu0 %v1360, 126
    %v1367 = vpop.permute.xlu0 %1366
    %1368 = vrot.lane.b32.xlu0 %v1361, 126
    %v1369 = vpop.permute.xlu0 %1368
    %1370 = vrot.lane.b32.xlu0 %v1362, 126
    %v1371 = vpop.permute.xlu0 %1370
    %v1372 = vrot.slane %v1367, 2
    %v1373 = vrot.slane %v1369, 2
    %v1374 = vrot.slane %v1371, 2
    %v1375 = vsel %vm81, %v1372, %v1373
    %v1376 = vsel %vm109, %v1367, %v1375
    %v1377 = vsel %vm81, %v1373, %v1374
    %v1378 = vsel %vm109, %v1369, %v1377
    %v1381 = vadd.f32 %v1356, %v1376
    %v1382 = vadd.f32 %v1357, %v1378
    %s1383 = sld [smem:[#allocation4 + $0x303]]
    %v1384 = vstv %s1383
    %v1385 = vmul.f32 %v1384, %v53
    %v1386 = vmul.f32 %v1384, %v54
    %v1387 = vmul.f32 %v1384, %v55
    %1391 = vrot.lane.b32.xlu0 %v1385, 96
    %v1392 = vpop.permute.xlu0 %1391
    %1393 = vrot.lane.b32.xlu0 %v1386, 96
    %v1394 = vpop.permute.xlu0 %1393
    %1395 = vrot.lane.b32.xlu0 %v1387, 96
    %v1396 = vpop.permute.xlu0 %1395
    %v1397 = vrot.slane %v1392, 2
    %v1398 = vrot.slane %v1394, 2
    %v1399 = vrot.slane %v1396, 2
    %v1400 = vsel %vm81, %v1397, %v1398
    %v1401 = vsel %vm135, %v1392, %v1400
    %v1402 = vsel %vm81, %v1398, %v1399
    %v1403 = vsel %vm135, %v1394, %v1402
    %v1406 = vadd.f32 %v1381, %v1401
    %v1407 = vadd.f32 %v1382, %v1403
    %s1408 = sld [smem:[#allocation4 + $0x304]]
    %v1409 = vstv %s1408
    %v1410 = vmul.f32 %v1409, %v53
    %v1411 = vmul.f32 %v1409, %v54
    %v1412 = vmul.f32 %v1409, %v55
    %1416 = vrot.lane.b32.xlu0 %v1410, 95
    %v1417 = vpop.permute.xlu0 %1416
    %1418 = vrot.lane.b32.xlu0 %v1411, 95
    %v1419 = vpop.permute.xlu0 %1418
    %1420 = vrot.lane.b32.xlu0 %v1412, 95
    %v1421 = vpop.permute.xlu0 %1420
    %v1422 = vrot.slane %v1417, 2
    %v1423 = vrot.slane %v1419, 2
    %v1424 = vrot.slane %v1421, 2
    %v1425 = vsel %vm81, %v1422, %v1423
    %v1426 = vsel %vm161, %v1417, %v1425
    %v1427 = vsel %vm81, %v1423, %v1424
    %v1428 = vsel %vm161, %v1419, %v1427
    %v1431 = vadd.f32 %v1406, %v1426
    %v1432 = vadd.f32 %v1407, %v1428
    %s1433 = sld [smem:[#allocation4 + $0x305]]
    %v1434 = vstv %s1433
    %v1435 = vmul.f32 %v1434, %v53
    %v1436 = vmul.f32 %v1434, %v54
    %v1437 = vmul.f32 %v1434, %v55
    %1441 = vrot.lane.b32.xlu0 %v1435, 94
    %v1442 = vpop.permute.xlu0 %1441
    %1443 = vrot.lane.b32.xlu0 %v1436, 94
    %v1444 = vpop.permute.xlu0 %1443
    %1445 = vrot.lane.b32.xlu0 %v1437, 94
    %v1446 = vpop.permute.xlu0 %1445
    %v1447 = vrot.slane %v1442, 2
    %v1448 = vrot.slane %v1444, 2
    %v1449 = vrot.slane %v1446, 2
    %v1450 = vsel %vm81, %v1447, %v1448
    %v1451 = vsel %vm187, %v1442, %v1450
    %v1452 = vsel %vm81, %v1448, %v1449
    %v1453 = vsel %vm187, %v1444, %v1452
    %v1456 = vadd.f32 %v1431, %v1451
    %v1457 = vadd.f32 %v1432, %v1453
    %s1458 = sld [smem:[#allocation4 + $0x306]]
    %v1459 = vstv %s1458
    %v1460 = vmul.f32 %v1459, %v53
    %v1461 = vmul.f32 %v1459, %v54
    %v1462 = vmul.f32 %v1459, %v55
    %1466 = vrot.lane.b32.xlu0 %v1460, 64
    %v1467 = vpop.permute.xlu0 %1466
    %1468 = vrot.lane.b32.xlu0 %v1461, 64
    %v1469 = vpop.permute.xlu0 %1468
    %1470 = vrot.lane.b32.xlu0 %v1462, 64
    %v1471 = vpop.permute.xlu0 %1470
    %v1472 = vrot.slane %v1467, 2
    %v1473 = vrot.slane %v1469, 2
    %v1474 = vrot.slane %v1471, 2
    %v1475 = vsel %vm81, %v1472, %v1473
    %v1476 = vsel %vm213, %v1467, %v1475
    %v1477 = vsel %vm81, %v1473, %v1474
    %v1478 = vsel %vm213, %v1469, %v1477
    %v1481 = vadd.f32 %v1456, %v1476
    %v1482 = vadd.f32 %v1457, %v1478
    %s1483 = sld [smem:[#allocation4 + $0x307]]
    %v1484 = vstv %s1483
    %v1485 = vmul.f32 %v1484, %v53
    %v1486 = vmul.f32 %v1484, %v54
    %v1487 = vmul.f32 %v1484, %v55
    %1491 = vrot.lane.b32.xlu0 %v1485, 63
    %v1492 = vpop.permute.xlu0 %1491
    %1493 = vrot.lane.b32.xlu0 %v1486, 63
    %v1494 = vpop.permute.xlu0 %1493
    %1495 = vrot.lane.b32.xlu0 %v1487, 63
    %v1496 = vpop.permute.xlu0 %1495
    %v1497 = vrot.slane %v1492, 2
    %v1498 = vrot.slane %v1494, 2
    %v1499 = vrot.slane %v1496, 2
    %v1500 = vsel %vm81, %v1497, %v1498
    %v1501 = vsel %vm239, %v1492, %v1500
    %v1502 = vsel %vm81, %v1498, %v1499
    %v1503 = vsel %vm239, %v1494, %v1502
    %v1506 = vadd.f32 %v1481, %v1501
    %v1507 = vadd.f32 %v1482, %v1503
    %s1508 = sld [smem:[#allocation4 + $0x308]]
    %v1509 = vstv %s1508
    %v1510 = vmul.f32 %v1509, %v53
    %v1511 = vmul.f32 %v1509, %v54
    %v1512 = vmul.f32 %v1509, %v55
    %1516 = vrot.lane.b32.xlu0 %v1510, 62
    %v1517 = vpop.permute.xlu0 %1516
    %1518 = vrot.lane.b32.xlu0 %v1511, 62
    %v1519 = vpop.permute.xlu0 %1518
    %1520 = vrot.lane.b32.xlu0 %v1512, 62
    %v1521 = vpop.permute.xlu0 %1520
    %v1522 = vrot.slane %v1517, 2
    %v1523 = vrot.slane %v1519, 2
    %v1524 = vrot.slane %v1521, 2
    %v1525 = vsel %vm81, %v1522, %v1523
    %v1526 = vsel %vm265, %v1517, %v1525
    %v1527 = vsel %vm81, %v1523, %v1524
    %v1528 = vsel %vm265, %v1519, %v1527
    %v1531 = vadd.f32 %v1506, %v1526
    %v1532 = vadd.f32 %v1507, %v1528
    %1533 = vst [vmem:[#allocation2 + $0x60] sm:$0xff] %v1531
    %1534 = vst [vmem:[#allocation2 + $0x68] sm:$0xff] %v1532
    %s1535 = sld [smem:[#allocation7 + $0x7]]
    %v1536 = vstv %s1535
    %s1537 = sld [smem:[#allocation4 + $0x380]]
    %v1538 = vstv %s1537
    %v1539 = vmul.f32 %v1538, %v53
    %v1540 = vmul.f32 %v1538, %v54
    %v1541 = vadd.f32 %v1536, %v1539
    %v1542 = vadd.f32 %v1536, %v1540
    %s1543 = sld [smem:[#allocation4 + $0x381]]
    %v1544 = vstv %s1543
    %v1545 = vmul.f32 %v1544, %v53
    %v1546 = vmul.f32 %v1544, %v54
    %v1547 = vmul.f32 %v1544, %v55
    %1551 = vrot.lane.b32.xlu0 %v1545, 127
    %v1552 = vpop.permute.xlu0 %1551
    %1553 = vrot.lane.b32.xlu0 %v1546, 127
    %v1554 = vpop.permute.xlu0 %1553
    %1555 = vrot.lane.b32.xlu0 %v1547, 127
    %v1556 = vpop.permute.xlu0 %1555
    %v1557 = vrot.slane %v1552, 2
    %v1558 = vrot.slane %v1554, 2
    %v1559 = vrot.slane %v1556, 2
    %v1560 = vsel %vm81, %v1557, %v1558
    %v1561 = vsel %vm83, %v1552, %v1560
    %v1562 = vsel %vm81, %v1558, %v1559
    %v1563 = vsel %vm83, %v1554, %v1562
    %v1566 = vadd.f32 %v1541, %v1561
    %v1567 = vadd.f32 %v1542, %v1563
    %s1568 = sld [smem:[#allocation4 + $0x382]]
    %v1569 = vstv %s1568
    %v1570 = vmul.f32 %v1569, %v53
    %v1571 = vmul.f32 %v1569, %v54
    %v1572 = vmul.f32 %v1569, %v55
    %1576 = vrot.lane.b32.xlu0 %v1570, 126
    %v1577 = vpop.permute.xlu0 %1576
    %1578 = vrot.lane.b32.xlu0 %v1571, 126
    %v1579 = vpop.permute.xlu0 %1578
    %1580 = vrot.lane.b32.xlu0 %v1572, 126
    %v1581 = vpop.permute.xlu0 %1580
    %v1582 = vrot.slane %v1577, 2
    %v1583 = vrot.slane %v1579, 2
    %v1584 = vrot.slane %v1581, 2
    %v1585 = vsel %vm81, %v1582, %v1583
    %v1586 = vsel %vm109, %v1577, %v1585
    %v1587 = vsel %vm81, %v1583, %v1584
    %v1588 = vsel %vm109, %v1579, %v1587
    %v1591 = vadd.f32 %v1566, %v1586
    %v1592 = vadd.f32 %v1567, %v1588
    %s1593 = sld [smem:[#allocation4 + $0x383]]
    %v1594 = vstv %s1593
    %v1595 = vmul.f32 %v1594, %v53
    %v1596 = vmul.f32 %v1594, %v54
    %v1597 = vmul.f32 %v1594, %v55
    %1601 = vrot.lane.b32.xlu0 %v1595, 96
    %v1602 = vpop.permute.xlu0 %1601
    %1603 = vrot.lane.b32.xlu0 %v1596, 96
    %v1604 = vpop.permute.xlu0 %1603
    %1605 = vrot.lane.b32.xlu0 %v1597, 96
    %v1606 = vpop.permute.xlu0 %1605
    %v1607 = vrot.slane %v1602, 2
    %v1608 = vrot.slane %v1604, 2
    %v1609 = vrot.slane %v1606, 2
    %v1610 = vsel %vm81, %v1607, %v1608
    %v1611 = vsel %vm135, %v1602, %v1610
    %v1612 = vsel %vm81, %v1608, %v1609
    %v1613 = vsel %vm135, %v1604, %v1612
    %v1616 = vadd.f32 %v1591, %v1611
    %v1617 = vadd.f32 %v1592, %v1613
    %s1618 = sld [smem:[#allocation4 + $0x384]]
    %v1619 = vstv %s1618
    %v1620 = vmul.f32 %v1619, %v53
    %v1621 = vmul.f32 %v1619, %v54
    %v1622 = vmul.f32 %v1619, %v55
    %1626 = vrot.lane.b32.xlu0 %v1620, 95
    %v1627 = vpop.permute.xlu0 %1626
    %1628 = vrot.lane.b32.xlu0 %v1621, 95
    %v1629 = vpop.permute.xlu0 %1628
    %1630 = vrot.lane.b32.xlu0 %v1622, 95
    %v1631 = vpop.permute.xlu0 %1630
    %v1632 = vrot.slane %v1627, 2
    %v1633 = vrot.slane %v1629, 2
    %v1634 = vrot.slane %v1631, 2
    %v1635 = vsel %vm81, %v1632, %v1633
    %v1636 = vsel %vm161, %v1627, %v1635
    %v1637 = vsel %vm81, %v1633, %v1634
    %v1638 = vsel %vm161, %v1629, %v1637
    %v1641 = vadd.f32 %v1616, %v1636
    %v1642 = vadd.f32 %v1617, %v1638
    %s1643 = sld [smem:[#allocation4 + $0x385]]
    %v1644 = vstv %s1643
    %v1645 = vmul.f32 %v1644, %v53
    %v1646 = vmul.f32 %v1644, %v54
    %v1647 = vmul.f32 %v1644, %v55
    %1651 = vrot.lane.b32.xlu0 %v1645, 94
    %v1652 = vpop.permute.xlu0 %1651
    %1653 = vrot.lane.b32.xlu0 %v1646, 94
    %v1654 = vpop.permute.xlu0 %1653
    %1655 = vrot.lane.b32.xlu0 %v1647, 94
    %v1656 = vpop.permute.xlu0 %1655
    %v1657 = vrot.slane %v1652, 2
    %v1658 = vrot.slane %v1654, 2
    %v1659 = vrot.slane %v1656, 2
    %v1660 = vsel %vm81, %v1657, %v1658
    %v1661 = vsel %vm187, %v1652, %v1660
    %v1662 = vsel %vm81, %v1658, %v1659
    %v1663 = vsel %vm187, %v1654, %v1662
    %v1666 = vadd.f32 %v1641, %v1661
    %v1667 = vadd.f32 %v1642, %v1663
    %s1668 = sld [smem:[#allocation4 + $0x386]]
    %v1669 = vstv %s1668
    %v1670 = vmul.f32 %v1669, %v53
    %v1671 = vmul.f32 %v1669, %v54
    %v1672 = vmul.f32 %v1669, %v55
    %1676 = vrot.lane.b32.xlu0 %v1670, 64
    %v1677 = vpop.permute.xlu0 %1676
    %1678 = vrot.lane.b32.xlu0 %v1671, 64
    %v1679 = vpop.permute.xlu0 %1678
    %1680 = vrot.lane.b32.xlu0 %v1672, 64
    %v1681 = vpop.permute.xlu0 %1680
    %v1682 = vrot.slane %v1677, 2
    %v1683 = vrot.slane %v1679, 2
    %v1684 = vrot.slane %v1681, 2
    %v1685 = vsel %vm81, %v1682, %v1683
    %v1686 = vsel %vm213, %v1677, %v1685
    %v1687 = vsel %vm81, %v1683, %v1684
    %v1688 = vsel %vm213, %v1679, %v1687
    %v1691 = vadd.f32 %v1666, %v1686
    %v1692 = vadd.f32 %v1667, %v1688
    %s1693 = sld [smem:[#allocation4 + $0x387]]
    %v1694 = vstv %s1693
    %v1695 = vmul.f32 %v1694, %v53
    %v1696 = vmul.f32 %v1694, %v54
    %v1697 = vmul.f32 %v1694, %v55
    %1701 = vrot.lane.b32.xlu0 %v1695, 63
    %v1702 = vpop.permute.xlu0 %1701
    %1703 = vrot.lane.b32.xlu0 %v1696, 63
    %v1704 = vpop.permute.xlu0 %1703
    %1705 = vrot.lane.b32.xlu0 %v1697, 63
    %v1706 = vpop.permute.xlu0 %1705
    %v1707 = vrot.slane %v1702, 2
    %v1708 = vrot.slane %v1704, 2
    %v1709 = vrot.slane %v1706, 2
    %v1710 = vsel %vm81, %v1707, %v1708
    %v1711 = vsel %vm239, %v1702, %v1710
    %v1712 = vsel %vm81, %v1708, %v1709
    %v1713 = vsel %vm239, %v1704, %v1712
    %v1716 = vadd.f32 %v1691, %v1711
    %v1717 = vadd.f32 %v1692, %v1713
    %s1718 = sld [smem:[#allocation4 + $0x388]]
    %v1719 = vstv %s1718
    %v1720 = vmul.f32 %v1719, %v53
    %v1721 = vmul.f32 %v1719, %v54
    %v1722 = vmul.f32 %v1719, %v55
    %1726 = vrot.lane.b32.xlu0 %v1720, 62
    %v1727 = vpop.permute.xlu0 %1726
    %1728 = vrot.lane.b32.xlu0 %v1721, 62
    %v1729 = vpop.permute.xlu0 %1728
    %1730 = vrot.lane.b32.xlu0 %v1722, 62
    %v1731 = vpop.permute.xlu0 %1730
    %v1732 = vrot.slane %v1727, 2
    %v1733 = vrot.slane %v1729, 2
    %v1734 = vrot.slane %v1731, 2
    %v1735 = vsel %vm81, %v1732, %v1733
    %v1736 = vsel %vm265, %v1727, %v1735
    %v1737 = vsel %vm81, %v1733, %v1734
    %v1738 = vsel %vm265, %v1729, %v1737
    %v1741 = vadd.f32 %v1716, %v1736
    %v1742 = vadd.f32 %v1717, %v1738
    %1743 = vst [vmem:[#allocation2 + $0x70] sm:$0xff] %v1741
    %1744 = vst [vmem:[#allocation2 + $0x78] sm:$0xff] %v1742
    %s1745 = sld [smem:[#allocation7 + $0x8]]
    %v1746 = vstv %s1745
    %s1747 = sld [smem:[#allocation4 + $0x400]]
    %v1748 = vstv %s1747
    %v1749 = vmul.f32 %v1748, %v53
    %v1750 = vmul.f32 %v1748, %v54
    %v1751 = vadd.f32 %v1746, %v1749
    %v1752 = vadd.f32 %v1746, %v1750
    %s1753 = sld [smem:[#allocation4 + $0x401]]
    %v1754 = vstv %s1753
    %v1755 = vmul.f32 %v1754, %v53
    %v1756 = vmul.f32 %v1754, %v54
    %v1757 = vmul.f32 %v1754, %v55
    %1761 = vrot.lane.b32.xlu0 %v1755, 127
    %v1762 = vpop.permute.xlu0 %1761
    %1763 = vrot.lane.b32.xlu0 %v1756, 127
    %v1764 = vpop.permute.xlu0 %1763
    %1765 = vrot.lane.b32.xlu0 %v1757, 127
    %v1766 = vpop.permute.xlu0 %1765
    %v1767 = vrot.slane %v1762, 2
    %v1768 = vrot.slane %v1764, 2
    %v1769 = vrot.slane %v1766, 2
    %v1770 = vsel %vm81, %v1767, %v1768
    %v1771 = vsel %vm83, %v1762, %v1770
    %v1772 = vsel %vm81, %v1768, %v1769
    %v1773 = vsel %vm83, %v1764, %v1772
    %v1776 = vadd.f32 %v1751, %v1771
    %v1777 = vadd.f32 %v1752, %v1773
    %s1778 = sld [smem:[#allocation4 + $0x402]]
    %v1779 = vstv %s1778
    %v1780 = vmul.f32 %v1779, %v53
    %v1781 = vmul.f32 %v1779, %v54
    %v1782 = vmul.f32 %v1779, %v55
    %1786 = vrot.lane.b32.xlu0 %v1780, 126
    %v1787 = vpop.permute.xlu0 %1786
    %1788 = vrot.lane.b32.xlu0 %v1781, 126
    %v1789 = vpop.permute.xlu0 %1788
    %1790 = vrot.lane.b32.xlu0 %v1782, 126
    %v1791 = vpop.permute.xlu0 %1790
    %v1792 = vrot.slane %v1787, 2
    %v1793 = vrot.slane %v1789, 2
    %v1794 = vrot.slane %v1791, 2
    %v1795 = vsel %vm81, %v1792, %v1793
    %v1796 = vsel %vm109, %v1787, %v1795
    %v1797 = vsel %vm81, %v1793, %v1794
    %v1798 = vsel %vm109, %v1789, %v1797
    %v1801 = vadd.f32 %v1776, %v1796
    %v1802 = vadd.f32 %v1777, %v1798
    %s1803 = sld [smem:[#allocation4 + $0x403]]
    %v1804 = vstv %s1803
    %v1805 = vmul.f32 %v1804, %v53
    %v1806 = vmul.f32 %v1804, %v54
    %v1807 = vmul.f32 %v1804, %v55
    %1811 = vrot.lane.b32.xlu0 %v1805, 96
    %v1812 = vpop.permute.xlu0 %1811
    %1813 = vrot.lane.b32.xlu0 %v1806, 96
    %v1814 = vpop.permute.xlu0 %1813
    %1815 = vrot.lane.b32.xlu0 %v1807, 96
    %v1816 = vpop.permute.xlu0 %1815
    %v1817 = vrot.slane %v1812, 2
    %v1818 = vrot.slane %v1814, 2
    %v1819 = vrot.slane %v1816, 2
    %v1820 = vsel %vm81, %v1817, %v1818
    %v1821 = vsel %vm135, %v1812, %v1820
    %v1822 = vsel %vm81, %v1818, %v1819
    %v1823 = vsel %vm135, %v1814, %v1822
    %v1826 = vadd.f32 %v1801, %v1821
    %v1827 = vadd.f32 %v1802, %v1823
    %s1828 = sld [smem:[#allocation4 + $0x404]]
    %v1829 = vstv %s1828
    %v1830 = vmul.f32 %v1829, %v53
    %v1831 = vmul.f32 %v1829, %v54
    %v1832 = vmul.f32 %v1829, %v55
    %1836 = vrot.lane.b32.xlu0 %v1830, 95
    %v1837 = vpop.permute.xlu0 %1836
    %1838 = vrot.lane.b32.xlu0 %v1831, 95
    %v1839 = vpop.permute.xlu0 %1838
    %1840 = vrot.lane.b32.xlu0 %v1832, 95
    %v1841 = vpop.permute.xlu0 %1840
    %v1842 = vrot.slane %v1837, 2
    %v1843 = vrot.slane %v1839, 2
    %v1844 = vrot.slane %v1841, 2
    %v1845 = vsel %vm81, %v1842, %v1843
    %v1846 = vsel %vm161, %v1837, %v1845
    %v1847 = vsel %vm81, %v1843, %v1844
    %v1848 = vsel %vm161, %v1839, %v1847
    %v1851 = vadd.f32 %v1826, %v1846
    %v1852 = vadd.f32 %v1827, %v1848
    %s1853 = sld [smem:[#allocation4 + $0x405]]
    %v1854 = vstv %s1853
    %v1855 = vmul.f32 %v1854, %v53
    %v1856 = vmul.f32 %v1854, %v54
    %v1857 = vmul.f32 %v1854, %v55
    %1861 = vrot.lane.b32.xlu0 %v1855, 94
    %v1862 = vpop.permute.xlu0 %1861
    %1863 = vrot.lane.b32.xlu0 %v1856, 94
    %v1864 = vpop.permute.xlu0 %1863
    %1865 = vrot.lane.b32.xlu0 %v1857, 94
    %v1866 = vpop.permute.xlu0 %1865
    %v1867 = vrot.slane %v1862, 2
    %v1868 = vrot.slane %v1864, 2
    %v1869 = vrot.slane %v1866, 2
    %v1870 = vsel %vm81, %v1867, %v1868
    %v1871 = vsel %vm187, %v1862, %v1870
    %v1872 = vsel %vm81, %v1868, %v1869
    %v1873 = vsel %vm187, %v1864, %v1872
    %v1876 = vadd.f32 %v1851, %v1871
    %v1877 = vadd.f32 %v1852, %v1873
    %s1878 = sld [smem:[#allocation4 + $0x406]]
    %v1879 = vstv %s1878
    %v1880 = vmul.f32 %v1879, %v53
    %v1881 = vmul.f32 %v1879, %v54
    %v1882 = vmul.f32 %v1879, %v55
    %1886 = vrot.lane.b32.xlu0 %v1880, 64
    %v1887 = vpop.permute.xlu0 %1886
    %1888 = vrot.lane.b32.xlu0 %v1881, 64
    %v1889 = vpop.permute.xlu0 %1888
    %1890 = vrot.lane.b32.xlu0 %v1882, 64
    %v1891 = vpop.permute.xlu0 %1890
    %v1892 = vrot.slane %v1887, 2
    %v1893 = vrot.slane %v1889, 2
    %v1894 = vrot.slane %v1891, 2
    %v1895 = vsel %vm81, %v1892, %v1893
    %v1896 = vsel %vm213, %v1887, %v1895
    %v1897 = vsel %vm81, %v1893, %v1894
    %v1898 = vsel %vm213, %v1889, %v1897
    %v1901 = vadd.f32 %v1876, %v1896
    %v1902 = vadd.f32 %v1877, %v1898
    %s1903 = sld [smem:[#allocation4 + $0x407]]
    %v1904 = vstv %s1903
    %v1905 = vmul.f32 %v1904, %v53
    %v1906 = vmul.f32 %v1904, %v54
    %v1907 = vmul.f32 %v1904, %v55
    %1911 = vrot.lane.b32.xlu0 %v1905, 63
    %v1912 = vpop.permute.xlu0 %1911
    %1913 = vrot.lane.b32.xlu0 %v1906, 63
    %v1914 = vpop.permute.xlu0 %1913
    %1915 = vrot.lane.b32.xlu0 %v1907, 63
    %v1916 = vpop.permute.xlu0 %1915
    %v1917 = vrot.slane %v1912, 2
    %v1918 = vrot.slane %v1914, 2
    %v1919 = vrot.slane %v1916, 2
    %v1920 = vsel %vm81, %v1917, %v1918
    %v1921 = vsel %vm239, %v1912, %v1920
    %v1922 = vsel %vm81, %v1918, %v1919
    %v1923 = vsel %vm239, %v1914, %v1922
    %v1926 = vadd.f32 %v1901, %v1921
    %v1927 = vadd.f32 %v1902, %v1923
    %s1928 = sld [smem:[#allocation4 + $0x408]]
    %v1929 = vstv %s1928
    %v1930 = vmul.f32 %v1929, %v53
    %v1931 = vmul.f32 %v1929, %v54
    %v1932 = vmul.f32 %v1929, %v55
    %1936 = vrot.lane.b32.xlu0 %v1930, 62
    %v1937 = vpop.permute.xlu0 %1936
    %1938 = vrot.lane.b32.xlu0 %v1931, 62
    %v1939 = vpop.permute.xlu0 %1938
    %1940 = vrot.lane.b32.xlu0 %v1932, 62
    %v1941 = vpop.permute.xlu0 %1940
    %v1942 = vrot.slane %v1937, 2
    %v1943 = vrot.slane %v1939, 2
    %v1944 = vrot.slane %v1941, 2
    %v1945 = vsel %vm81, %v1942, %v1943
    %v1946 = vsel %vm265, %v1937, %v1945
    %v1947 = vsel %vm81, %v1943, %v1944
    %v1948 = vsel %vm265, %v1939, %v1947
    %v1951 = vadd.f32 %v1926, %v1946
    %v1952 = vadd.f32 %v1927, %v1948
    %1953 = vst [vmem:[#allocation2 + $0x80] sm:$0xff] %v1951
    %1954 = vst [vmem:[#allocation2 + $0x88] sm:$0xff] %v1952
    %s1955 = sld [smem:[#allocation7 + $0x9]]
    %v1956 = vstv %s1955
    %s1957 = sld [smem:[#allocation4 + $0x480]]
    %v1958 = vstv %s1957
    %v1959 = vmul.f32 %v1958, %v53
    %v1960 = vmul.f32 %v1958, %v54
    %v1961 = vadd.f32 %v1956, %v1959
    %v1962 = vadd.f32 %v1956, %v1960
    %s1963 = sld [smem:[#allocation4 + $0x481]]
    %v1964 = vstv %s1963
    %v1965 = vmul.f32 %v1964, %v53
    %v1966 = vmul.f32 %v1964, %v54
    %v1967 = vmul.f32 %v1964, %v55
    %1971 = vrot.lane.b32.xlu0 %v1965, 127
    %v1972 = vpop.permute.xlu0 %1971
    %1973 = vrot.lane.b32.xlu0 %v1966, 127
    %v1974 = vpop.permute.xlu0 %1973
    %1975 = vrot.lane.b32.xlu0 %v1967, 127
    %v1976 = vpop.permute.xlu0 %1975
    %v1977 = vrot.slane %v1972, 2
    %v1978 = vrot.slane %v1974, 2
    %v1979 = vrot.slane %v1976, 2
    %v1980 = vsel %vm81, %v1977, %v1978
    %v1981 = vsel %vm83, %v1972, %v1980
    %v1982 = vsel %vm81, %v1978, %v1979
    %v1983 = vsel %vm83, %v1974, %v1982
    %v1986 = vadd.f32 %v1961, %v1981
    %v1987 = vadd.f32 %v1962, %v1983
    %s1988 = sld [smem:[#allocation4 + $0x482]]
    %v1989 = vstv %s1988
    %v1990 = vmul.f32 %v1989, %v53
    %v1991 = vmul.f32 %v1989, %v54
    %v1992 = vmul.f32 %v1989, %v55
    %1996 = vrot.lane.b32.xlu0 %v1990, 126
    %v1997 = vpop.permute.xlu0 %1996
    %1998 = vrot.lane.b32.xlu0 %v1991, 126
    %v1999 = vpop.permute.xlu0 %1998
    %2000 = vrot.lane.b32.xlu0 %v1992, 126
    %v2001 = vpop.permute.xlu0 %2000
    %v2002 = vrot.slane %v1997, 2
    %v2003 = vrot.slane %v1999, 2
    %v2004 = vrot.slane %v2001, 2
    %v2005 = vsel %vm81, %v2002, %v2003
    %v2006 = vsel %vm109, %v1997, %v2005
    %v2007 = vsel %vm81, %v2003, %v2004
    %v2008 = vsel %vm109, %v1999, %v2007
    %v2011 = vadd.f32 %v1986, %v2006
    %v2012 = vadd.f32 %v1987, %v2008
    %s2013 = sld [smem:[#allocation4 + $0x483]]
    %v2014 = vstv %s2013
    %v2015 = vmul.f32 %v2014, %v53
    %v2016 = vmul.f32 %v2014, %v54
    %v2017 = vmul.f32 %v2014, %v55
    %2021 = vrot.lane.b32.xlu0 %v2015, 96
    %v2022 = vpop.permute.xlu0 %2021
    %2023 = vrot.lane.b32.xlu0 %v2016, 96
    %v2024 = vpop.permute.xlu0 %2023
    %2025 = vrot.lane.b32.xlu0 %v2017, 96
    %v2026 = vpop.permute.xlu0 %2025
    %v2027 = vrot.slane %v2022, 2
    %v2028 = vrot.slane %v2024, 2
    %v2029 = vrot.slane %v2026, 2
    %v2030 = vsel %vm81, %v2027, %v2028
    %v2031 = vsel %vm135, %v2022, %v2030
    %v2032 = vsel %vm81, %v2028, %v2029
    %v2033 = vsel %vm135, %v2024, %v2032
    %v2036 = vadd.f32 %v2011, %v2031
    %v2037 = vadd.f32 %v2012, %v2033
    %s2038 = sld [smem:[#allocation4 + $0x484]]
    %v2039 = vstv %s2038
    %v2040 = vmul.f32 %v2039, %v53
    %v2041 = vmul.f32 %v2039, %v54
    %v2042 = vmul.f32 %v2039, %v55
    %2046 = vrot.lane.b32.xlu0 %v2040, 95
    %v2047 = vpop.permute.xlu0 %2046
    %2048 = vrot.lane.b32.xlu0 %v2041, 95
    %v2049 = vpop.permute.xlu0 %2048
    %2050 = vrot.lane.b32.xlu0 %v2042, 95
    %v2051 = vpop.permute.xlu0 %2050
    %v2052 = vrot.slane %v2047, 2
    %v2053 = vrot.slane %v2049, 2
    %v2054 = vrot.slane %v2051, 2
    %v2055 = vsel %vm81, %v2052, %v2053
    %v2056 = vsel %vm161, %v2047, %v2055
    %v2057 = vsel %vm81, %v2053, %v2054
    %v2058 = vsel %vm161, %v2049, %v2057
    %v2061 = vadd.f32 %v2036, %v2056
    %v2062 = vadd.f32 %v2037, %v2058
    %s2063 = sld [smem:[#allocation4 + $0x485]]
    %v2064 = vstv %s2063
    %v2065 = vmul.f32 %v2064, %v53
    %v2066 = vmul.f32 %v2064, %v54
    %v2067 = vmul.f32 %v2064, %v55
    %2071 = vrot.lane.b32.xlu0 %v2065, 94
    %v2072 = vpop.permute.xlu0 %2071
    %2073 = vrot.lane.b32.xlu0 %v2066, 94
    %v2074 = vpop.permute.xlu0 %2073
    %2075 = vrot.lane.b32.xlu0 %v2067, 94
    %v2076 = vpop.permute.xlu0 %2075
    %v2077 = vrot.slane %v2072, 2
    %v2078 = vrot.slane %v2074, 2
    %v2079 = vrot.slane %v2076, 2
    %v2080 = vsel %vm81, %v2077, %v2078
    %v2081 = vsel %vm187, %v2072, %v2080
    %v2082 = vsel %vm81, %v2078, %v2079
    %v2083 = vsel %vm187, %v2074, %v2082
    %v2086 = vadd.f32 %v2061, %v2081
    %v2087 = vadd.f32 %v2062, %v2083
    %s2088 = sld [smem:[#allocation4 + $0x486]]
    %v2089 = vstv %s2088
    %v2090 = vmul.f32 %v2089, %v53
    %v2091 = vmul.f32 %v2089, %v54
    %v2092 = vmul.f32 %v2089, %v55
    %2096 = vrot.lane.b32.xlu0 %v2090, 64
    %v2097 = vpop.permute.xlu0 %2096
    %2098 = vrot.lane.b32.xlu0 %v2091, 64
    %v2099 = vpop.permute.xlu0 %2098
    %2100 = vrot.lane.b32.xlu0 %v2092, 64
    %v2101 = vpop.permute.xlu0 %2100
    %v2102 = vrot.slane %v2097, 2
    %v2103 = vrot.slane %v2099, 2
    %v2104 = vrot.slane %v2101, 2
    %v2105 = vsel %vm81, %v2102, %v2103
    %v2106 = vsel %vm213, %v2097, %v2105
    %v2107 = vsel %vm81, %v2103, %v2104
    %v2108 = vsel %vm213, %v2099, %v2107
    %v2111 = vadd.f32 %v2086, %v2106
    %v2112 = vadd.f32 %v2087, %v2108
    %s2113 = sld [smem:[#allocation4 + $0x487]]
    %v2114 = vstv %s2113
    %v2115 = vmul.f32 %v2114, %v53
    %v2116 = vmul.f32 %v2114, %v54
    %v2117 = vmul.f32 %v2114, %v55
    %2121 = vrot.lane.b32.xlu0 %v2115, 63
    %v2122 = vpop.permute.xlu0 %2121
    %2123 = vrot.lane.b32.xlu0 %v2116, 63
    %v2124 = vpop.permute.xlu0 %2123
    %2125 = vrot.lane.b32.xlu0 %v2117, 63
    %v2126 = vpop.permute.xlu0 %2125
    %v2127 = vrot.slane %v2122, 2
    %v2128 = vrot.slane %v2124, 2
    %v2129 = vrot.slane %v2126, 2
    %v2130 = vsel %vm81, %v2127, %v2128
    %v2131 = vsel %vm239, %v2122, %v2130
    %v2132 = vsel %vm81, %v2128, %v2129
    %v2133 = vsel %vm239, %v2124, %v2132
    %v2136 = vadd.f32 %v2111, %v2131
    %v2137 = vadd.f32 %v2112, %v2133
    %s2138 = sld [smem:[#allocation4 + $0x488]]
    %v2139 = vstv %s2138
    %v2140 = vmul.f32 %v2139, %v53
    %v2141 = vmul.f32 %v2139, %v54
    %v2142 = vmul.f32 %v2139, %v55
    %2146 = vrot.lane.b32.xlu0 %v2140, 62
    %v2147 = vpop.permute.xlu0 %2146
    %2148 = vrot.lane.b32.xlu0 %v2141, 62
    %v2149 = vpop.permute.xlu0 %2148
    %2150 = vrot.lane.b32.xlu0 %v2142, 62
    %v2151 = vpop.permute.xlu0 %2150
    %v2152 = vrot.slane %v2147, 2
    %v2153 = vrot.slane %v2149, 2
    %v2154 = vrot.slane %v2151, 2
    %v2155 = vsel %vm81, %v2152, %v2153
    %v2156 = vsel %vm265, %v2147, %v2155
    %v2157 = vsel %vm81, %v2153, %v2154
    %v2158 = vsel %vm265, %v2149, %v2157
    %v2161 = vadd.f32 %v2136, %v2156
    %v2162 = vadd.f32 %v2137, %v2158
    %2163 = vst [vmem:[#allocation2 + $0x90] sm:$0xff] %v2161
    %2164 = vst [vmem:[#allocation2 + $0x98] sm:$0xff] %v2162
    %s2165 = sld [smem:[#allocation7 + $0xa]]
    %v2166 = vstv %s2165
    %s2167 = sld [smem:[#allocation4 + $0x500]]
    %v2168 = vstv %s2167
    %v2169 = vmul.f32 %v2168, %v53
    %v2170 = vmul.f32 %v2168, %v54
    %v2171 = vadd.f32 %v2166, %v2169
    %v2172 = vadd.f32 %v2166, %v2170
    %s2173 = sld [smem:[#allocation4 + $0x501]]
    %v2174 = vstv %s2173
    %v2175 = vmul.f32 %v2174, %v53
    %v2176 = vmul.f32 %v2174, %v54
    %v2177 = vmul.f32 %v2174, %v55
    %2181 = vrot.lane.b32.xlu0 %v2175, 127
    %v2182 = vpop.permute.xlu0 %2181
    %2183 = vrot.lane.b32.xlu0 %v2176, 127
    %v2184 = vpop.permute.xlu0 %2183
    %2185 = vrot.lane.b32.xlu0 %v2177, 127
    %v2186 = vpop.permute.xlu0 %2185
    %v2187 = vrot.slane %v2182, 2
    %v2188 = vrot.slane %v2184, 2
    %v2189 = vrot.slane %v2186, 2
    %v2190 = vsel %vm81, %v2187, %v2188
    %v2191 = vsel %vm83, %v2182, %v2190
    %v2192 = vsel %vm81, %v2188, %v2189
    %v2193 = vsel %vm83, %v2184, %v2192
    %v2196 = vadd.f32 %v2171, %v2191
    %v2197 = vadd.f32 %v2172, %v2193
    %s2198 = sld [smem:[#allocation4 + $0x502]]
    %v2199 = vstv %s2198
    %v2200 = vmul.f32 %v2199, %v53
    %v2201 = vmul.f32 %v2199, %v54
    %v2202 = vmul.f32 %v2199, %v55
    %2206 = vrot.lane.b32.xlu0 %v2200, 126
    %v2207 = vpop.permute.xlu0 %2206
    %2208 = vrot.lane.b32.xlu0 %v2201, 126
    %v2209 = vpop.permute.xlu0 %2208
    %2210 = vrot.lane.b32.xlu0 %v2202, 126
    %v2211 = vpop.permute.xlu0 %2210
    %v2212 = vrot.slane %v2207, 2
    %v2213 = vrot.slane %v2209, 2
    %v2214 = vrot.slane %v2211, 2
    %v2215 = vsel %vm81, %v2212, %v2213
    %v2216 = vsel %vm109, %v2207, %v2215
    %v2217 = vsel %vm81, %v2213, %v2214
    %v2218 = vsel %vm109, %v2209, %v2217
    %v2221 = vadd.f32 %v2196, %v2216
    %v2222 = vadd.f32 %v2197, %v2218
    %s2223 = sld [smem:[#allocation4 + $0x503]]
    %v2224 = vstv %s2223
    %v2225 = vmul.f32 %v2224, %v53
    %v2226 = vmul.f32 %v2224, %v54
    %v2227 = vmul.f32 %v2224, %v55
    %2231 = vrot.lane.b32.xlu0 %v2225, 96
    %v2232 = vpop.permute.xlu0 %2231
    %2233 = vrot.lane.b32.xlu0 %v2226, 96
    %v2234 = vpop.permute.xlu0 %2233
    %2235 = vrot.lane.b32.xlu0 %v2227, 96
    %v2236 = vpop.permute.xlu0 %2235
    %v2237 = vrot.slane %v2232, 2
    %v2238 = vrot.slane %v2234, 2
    %v2239 = vrot.slane %v2236, 2
    %v2240 = vsel %vm81, %v2237, %v2238
    %v2241 = vsel %vm135, %v2232, %v2240
    %v2242 = vsel %vm81, %v2238, %v2239
    %v2243 = vsel %vm135, %v2234, %v2242
    %v2246 = vadd.f32 %v2221, %v2241
    %v2247 = vadd.f32 %v2222, %v2243
    %s2248 = sld [smem:[#allocation4 + $0x504]]
    %v2249 = vstv %s2248
    %v2250 = vmul.f32 %v2249, %v53
    %v2251 = vmul.f32 %v2249, %v54
    %v2252 = vmul.f32 %v2249, %v55
    %2256 = vrot.lane.b32.xlu0 %v2250, 95
    %v2257 = vpop.permute.xlu0 %2256
    %2258 = vrot.lane.b32.xlu0 %v2251, 95
    %v2259 = vpop.permute.xlu0 %2258
    %2260 = vrot.lane.b32.xlu0 %v2252, 95
    %v2261 = vpop.permute.xlu0 %2260
    %v2262 = vrot.slane %v2257, 2
    %v2263 = vrot.slane %v2259, 2
    %v2264 = vrot.slane %v2261, 2
    %v2265 = vsel %vm81, %v2262, %v2263
    %v2266 = vsel %vm161, %v2257, %v2265
    %v2267 = vsel %vm81, %v2263, %v2264
    %v2268 = vsel %vm161, %v2259, %v2267
    %v2271 = vadd.f32 %v2246, %v2266
    %v2272 = vadd.f32 %v2247, %v2268
    %s2273 = sld [smem:[#allocation4 + $0x505]]
    %v2274 = vstv %s2273
    %v2275 = vmul.f32 %v2274, %v53
    %v2276 = vmul.f32 %v2274, %v54
    %v2277 = vmul.f32 %v2274, %v55
    %2281 = vrot.lane.b32.xlu0 %v2275, 94
    %v2282 = vpop.permute.xlu0 %2281
    %2283 = vrot.lane.b32.xlu0 %v2276, 94
    %v2284 = vpop.permute.xlu0 %2283
    %2285 = vrot.lane.b32.xlu0 %v2277, 94
    %v2286 = vpop.permute.xlu0 %2285
    %v2287 = vrot.slane %v2282, 2
    %v2288 = vrot.slane %v2284, 2
    %v2289 = vrot.slane %v2286, 2
    %v2290 = vsel %vm81, %v2287, %v2288
    %v2291 = vsel %vm187, %v2282, %v2290
    %v2292 = vsel %vm81, %v2288, %v2289
    %v2293 = vsel %vm187, %v2284, %v2292
    %v2296 = vadd.f32 %v2271, %v2291
    %v2297 = vadd.f32 %v2272, %v2293
    %s2298 = sld [smem:[#allocation4 + $0x506]]
    %v2299 = vstv %s2298
    %v2300 = vmul.f32 %v2299, %v53
    %v2301 = vmul.f32 %v2299, %v54
    %v2302 = vmul.f32 %v2299, %v55
    %2306 = vrot.lane.b32.xlu0 %v2300, 64
    %v2307 = vpop.permute.xlu0 %2306
    %2308 = vrot.lane.b32.xlu0 %v2301, 64
    %v2309 = vpop.permute.xlu0 %2308
    %2310 = vrot.lane.b32.xlu0 %v2302, 64
    %v2311 = vpop.permute.xlu0 %2310
    %v2312 = vrot.slane %v2307, 2
    %v2313 = vrot.slane %v2309, 2
    %v2314 = vrot.slane %v2311, 2
    %v2315 = vsel %vm81, %v2312, %v2313
    %v2316 = vsel %vm213, %v2307, %v2315
    %v2317 = vsel %vm81, %v2313, %v2314
    %v2318 = vsel %vm213, %v2309, %v2317
    %v2321 = vadd.f32 %v2296, %v2316
    %v2322 = vadd.f32 %v2297, %v2318
    %s2323 = sld [smem:[#allocation4 + $0x507]]
    %v2324 = vstv %s2323
    %v2325 = vmul.f32 %v2324, %v53
    %v2326 = vmul.f32 %v2324, %v54
    %v2327 = vmul.f32 %v2324, %v55
    %2331 = vrot.lane.b32.xlu0 %v2325, 63
    %v2332 = vpop.permute.xlu0 %2331
    %2333 = vrot.lane.b32.xlu0 %v2326, 63
    %v2334 = vpop.permute.xlu0 %2333
    %2335 = vrot.lane.b32.xlu0 %v2327, 63
    %v2336 = vpop.permute.xlu0 %2335
    %v2337 = vrot.slane %v2332, 2
    %v2338 = vrot.slane %v2334, 2
    %v2339 = vrot.slane %v2336, 2
    %v2340 = vsel %vm81, %v2337, %v2338
    %v2341 = vsel %vm239, %v2332, %v2340
    %v2342 = vsel %vm81, %v2338, %v2339
    %v2343 = vsel %vm239, %v2334, %v2342
    %v2346 = vadd.f32 %v2321, %v2341
    %v2347 = vadd.f32 %v2322, %v2343
    %s2348 = sld [smem:[#allocation4 + $0x508]]
    %v2349 = vstv %s2348
    %v2350 = vmul.f32 %v2349, %v53
    %v2351 = vmul.f32 %v2349, %v54
    %v2352 = vmul.f32 %v2349, %v55
    %2356 = vrot.lane.b32.xlu0 %v2350, 62
    %v2357 = vpop.permute.xlu0 %2356
    %2358 = vrot.lane.b32.xlu0 %v2351, 62
    %v2359 = vpop.permute.xlu0 %2358
    %2360 = vrot.lane.b32.xlu0 %v2352, 62
    %v2361 = vpop.permute.xlu0 %2360
    %v2362 = vrot.slane %v2357, 2
    %v2363 = vrot.slane %v2359, 2
    %v2364 = vrot.slane %v2361, 2
    %v2365 = vsel %vm81, %v2362, %v2363
    %v2366 = vsel %vm265, %v2357, %v2365
    %v2367 = vsel %vm81, %v2363, %v2364
    %v2368 = vsel %vm265, %v2359, %v2367
    %v2371 = vadd.f32 %v2346, %v2366
    %v2372 = vadd.f32 %v2347, %v2368
    %2373 = vst [vmem:[#allocation2 + $0xa0] sm:$0xff] %v2371
    %2374 = vst [vmem:[#allocation2 + $0xa8] sm:$0xff] %v2372
    %s2375 = sld [smem:[#allocation7 + $0xb]]
    %v2376 = vstv %s2375
    %s2377 = sld [smem:[#allocation4 + $0x580]]
    %v2378 = vstv %s2377
    %v2379 = vmul.f32 %v2378, %v53
    %v2380 = vmul.f32 %v2378, %v54
    %v2381 = vadd.f32 %v2376, %v2379
    %v2382 = vadd.f32 %v2376, %v2380
    %s2383 = sld [smem:[#allocation4 + $0x581]]
    %v2384 = vstv %s2383
    %v2385 = vmul.f32 %v2384, %v53
    %v2386 = vmul.f32 %v2384, %v54
    %v2387 = vmul.f32 %v2384, %v55
    %2391 = vrot.lane.b32.xlu0 %v2385, 127
    %v2392 = vpop.permute.xlu0 %2391
    %2393 = vrot.lane.b32.xlu0 %v2386, 127
    %v2394 = vpop.permute.xlu0 %2393
    %2395 = vrot.lane.b32.xlu0 %v2387, 127
    %v2396 = vpop.permute.xlu0 %2395
    %v2397 = vrot.slane %v2392, 2
    %v2398 = vrot.slane %v2394, 2
    %v2399 = vrot.slane %v2396, 2
    %v2400 = vsel %vm81, %v2397, %v2398
    %v2401 = vsel %vm83, %v2392, %v2400
    %v2402 = vsel %vm81, %v2398, %v2399
    %v2403 = vsel %vm83, %v2394, %v2402
    %v2406 = vadd.f32 %v2381, %v2401
    %v2407 = vadd.f32 %v2382, %v2403
    %s2408 = sld [smem:[#allocation4 + $0x582]]
    %v2409 = vstv %s2408
    %v2410 = vmul.f32 %v2409, %v53
    %v2411 = vmul.f32 %v2409, %v54
    %v2412 = vmul.f32 %v2409, %v55
    %2416 = vrot.lane.b32.xlu0 %v2410, 126
    %v2417 = vpop.permute.xlu0 %2416
    %2418 = vrot.lane.b32.xlu0 %v2411, 126
    %v2419 = vpop.permute.xlu0 %2418
    %2420 = vrot.lane.b32.xlu0 %v2412, 126
    %v2421 = vpop.permute.xlu0 %2420
    %v2422 = vrot.slane %v2417, 2
    %v2423 = vrot.slane %v2419, 2
    %v2424 = vrot.slane %v2421, 2
    %v2425 = vsel %vm81, %v2422, %v2423
    %v2426 = vsel %vm109, %v2417, %v2425
    %v2427 = vsel %vm81, %v2423, %v2424
    %v2428 = vsel %vm109, %v2419, %v2427
    %v2431 = vadd.f32 %v2406, %v2426
    %v2432 = vadd.f32 %v2407, %v2428
    %s2433 = sld [smem:[#allocation4 + $0x583]]
    %v2434 = vstv %s2433
    %v2435 = vmul.f32 %v2434, %v53
    %v2436 = vmul.f32 %v2434, %v54
    %v2437 = vmul.f32 %v2434, %v55
    %2441 = vrot.lane.b32.xlu0 %v2435, 96
    %v2442 = vpop.permute.xlu0 %2441
    %2443 = vrot.lane.b32.xlu0 %v2436, 96
    %v2444 = vpop.permute.xlu0 %2443
    %2445 = vrot.lane.b32.xlu0 %v2437, 96
    %v2446 = vpop.permute.xlu0 %2445
    %v2447 = vrot.slane %v2442, 2
    %v2448 = vrot.slane %v2444, 2
    %v2449 = vrot.slane %v2446, 2
    %v2450 = vsel %vm81, %v2447, %v2448
    %v2451 = vsel %vm135, %v2442, %v2450
    %v2452 = vsel %vm81, %v2448, %v2449
    %v2453 = vsel %vm135, %v2444, %v2452
    %v2456 = vadd.f32 %v2431, %v2451
    %v2457 = vadd.f32 %v2432, %v2453
    %s2458 = sld [smem:[#allocation4 + $0x584]]
    %v2459 = vstv %s2458
    %v2460 = vmul.f32 %v2459, %v53
    %v2461 = vmul.f32 %v2459, %v54
    %v2462 = vmul.f32 %v2459, %v55
    %2466 = vrot.lane.b32.xlu0 %v2460, 95
    %v2467 = vpop.permute.xlu0 %2466
    %2468 = vrot.lane.b32.xlu0 %v2461, 95
    %v2469 = vpop.permute.xlu0 %2468
    %2470 = vrot.lane.b32.xlu0 %v2462, 95
    %v2471 = vpop.permute.xlu0 %2470
    %v2472 = vrot.slane %v2467, 2
    %v2473 = vrot.slane %v2469, 2
    %v2474 = vrot.slane %v2471, 2
    %v2475 = vsel %vm81, %v2472, %v2473
    %v2476 = vsel %vm161, %v2467, %v2475
    %v2477 = vsel %vm81, %v2473, %v2474
    %v2478 = vsel %vm161, %v2469, %v2477
    %v2481 = vadd.f32 %v2456, %v2476
    %v2482 = vadd.f32 %v2457, %v2478
    %s2483 = sld [smem:[#allocation4 + $0x585]]
    %v2484 = vstv %s2483
    %v2485 = vmul.f32 %v2484, %v53
    %v2486 = vmul.f32 %v2484, %v54
    %v2487 = vmul.f32 %v2484, %v55
    %2491 = vrot.lane.b32.xlu0 %v2485, 94
    %v2492 = vpop.permute.xlu0 %2491
    %2493 = vrot.lane.b32.xlu0 %v2486, 94
    %v2494 = vpop.permute.xlu0 %2493
    %2495 = vrot.lane.b32.xlu0 %v2487, 94
    %v2496 = vpop.permute.xlu0 %2495
    %v2497 = vrot.slane %v2492, 2
    %v2498 = vrot.slane %v2494, 2
    %v2499 = vrot.slane %v2496, 2
    %v2500 = vsel %vm81, %v2497, %v2498
    %v2501 = vsel %vm187, %v2492, %v2500
    %v2502 = vsel %vm81, %v2498, %v2499
    %v2503 = vsel %vm187, %v2494, %v2502
    %v2506 = vadd.f32 %v2481, %v2501
    %v2507 = vadd.f32 %v2482, %v2503
    %s2508 = sld [smem:[#allocation4 + $0x586]]
    %v2509 = vstv %s2508
    %v2510 = vmul.f32 %v2509, %v53
    %v2511 = vmul.f32 %v2509, %v54
    %v2512 = vmul.f32 %v2509, %v55
    %2516 = vrot.lane.b32.xlu0 %v2510, 64
    %v2517 = vpop.permute.xlu0 %2516
    %2518 = vrot.lane.b32.xlu0 %v2511, 64
    %v2519 = vpop.permute.xlu0 %2518
    %2520 = vrot.lane.b32.xlu0 %v2512, 64
    %v2521 = vpop.permute.xlu0 %2520
    %v2522 = vrot.slane %v2517, 2
    %v2523 = vrot.slane %v2519, 2
    %v2524 = vrot.slane %v2521, 2
    %v2525 = vsel %vm81, %v2522, %v2523
    %v2526 = vsel %vm213, %v2517, %v2525
    %v2527 = vsel %vm81, %v2523, %v2524
    %v2528 = vsel %vm213, %v2519, %v2527
    %v2531 = vadd.f32 %v2506, %v2526
    %v2532 = vadd.f32 %v2507, %v2528
    %s2533 = sld [smem:[#allocation4 + $0x587]]
    %v2534 = vstv %s2533
    %v2535 = vmul.f32 %v2534, %v53
    %v2536 = vmul.f32 %v2534, %v54
    %v2537 = vmul.f32 %v2534, %v55
    %2541 = vrot.lane.b32.xlu0 %v2535, 63
    %v2542 = vpop.permute.xlu0 %2541
    %2543 = vrot.lane.b32.xlu0 %v2536, 63
    %v2544 = vpop.permute.xlu0 %2543
    %2545 = vrot.lane.b32.xlu0 %v2537, 63
    %v2546 = vpop.permute.xlu0 %2545
    %v2547 = vrot.slane %v2542, 2
    %v2548 = vrot.slane %v2544, 2
    %v2549 = vrot.slane %v2546, 2
    %v2550 = vsel %vm81, %v2547, %v2548
    %v2551 = vsel %vm239, %v2542, %v2550
    %v2552 = vsel %vm81, %v2548, %v2549
    %v2553 = vsel %vm239, %v2544, %v2552
    %v2556 = vadd.f32 %v2531, %v2551
    %v2557 = vadd.f32 %v2532, %v2553
    %s2558 = sld [smem:[#allocation4 + $0x588]]
    %v2559 = vstv %s2558
    %v2560 = vmul.f32 %v2559, %v53
    %v2561 = vmul.f32 %v2559, %v54
    %v2562 = vmul.f32 %v2559, %v55
    %2566 = vrot.lane.b32.xlu0 %v2560, 62
    %v2567 = vpop.permute.xlu0 %2566
    %2568 = vrot.lane.b32.xlu0 %v2561, 62
    %v2569 = vpop.permute.xlu0 %2568
    %2570 = vrot.lane.b32.xlu0 %v2562, 62
    %v2571 = vpop.permute.xlu0 %2570
    %v2572 = vrot.slane %v2567, 2
    %v2573 = vrot.slane %v2569, 2
    %v2574 = vrot.slane %v2571, 2
    %v2575 = vsel %vm81, %v2572, %v2573
    %v2576 = vsel %vm265, %v2567, %v2575
    %v2577 = vsel %vm81, %v2573, %v2574
    %v2578 = vsel %vm265, %v2569, %v2577
    %v2581 = vadd.f32 %v2556, %v2576
    %v2582 = vadd.f32 %v2557, %v2578
    %2583 = vst [vmem:[#allocation2 + $0xb0] sm:$0xff] %v2581
    %2584 = vst [vmem:[#allocation2 + $0xb8] sm:$0xff] %v2582
    %s2585 = sld [smem:[#allocation7 + $0xc]]
    %v2586 = vstv %s2585
    %s2587 = sld [smem:[#allocation4 + $0x600]]
    %v2588 = vstv %s2587
    %v2589 = vmul.f32 %v2588, %v53
    %v2590 = vmul.f32 %v2588, %v54
    %v2591 = vadd.f32 %v2586, %v2589
    %v2592 = vadd.f32 %v2586, %v2590
    %s2593 = sld [smem:[#allocation4 + $0x601]]
    %v2594 = vstv %s2593
    %v2595 = vmul.f32 %v2594, %v53
    %v2596 = vmul.f32 %v2594, %v54
    %v2597 = vmul.f32 %v2594, %v55
    %2601 = vrot.lane.b32.xlu0 %v2595, 127
    %v2602 = vpop.permute.xlu0 %2601
    %2603 = vrot.lane.b32.xlu0 %v2596, 127
    %v2604 = vpop.permute.xlu0 %2603
    %2605 = vrot.lane.b32.xlu0 %v2597, 127
    %v2606 = vpop.permute.xlu0 %2605
    %v2607 = vrot.slane %v2602, 2
    %v2608 = vrot.slane %v2604, 2
    %v2609 = vrot.slane %v2606, 2
    %v2610 = vsel %vm81, %v2607, %v2608
    %v2611 = vsel %vm83, %v2602, %v2610
    %v2612 = vsel %vm81, %v2608, %v2609
    %v2613 = vsel %vm83, %v2604, %v2612
    %v2616 = vadd.f32 %v2591, %v2611
    %v2617 = vadd.f32 %v2592, %v2613
    %s2618 = sld [smem:[#allocation4 + $0x602]]
    %v2619 = vstv %s2618
    %v2620 = vmul.f32 %v2619, %v53
    %v2621 = vmul.f32 %v2619, %v54
    %v2622 = vmul.f32 %v2619, %v55
    %2626 = vrot.lane.b32.xlu0 %v2620, 126
    %v2627 = vpop.permute.xlu0 %2626
    %2628 = vrot.lane.b32.xlu0 %v2621, 126
    %v2629 = vpop.permute.xlu0 %2628
    %2630 = vrot.lane.b32.xlu0 %v2622, 126
    %v2631 = vpop.permute.xlu0 %2630
    %v2632 = vrot.slane %v2627, 2
    %v2633 = vrot.slane %v2629, 2
    %v2634 = vrot.slane %v2631, 2
    %v2635 = vsel %vm81, %v2632, %v2633
    %v2636 = vsel %vm109, %v2627, %v2635
    %v2637 = vsel %vm81, %v2633, %v2634
    %v2638 = vsel %vm109, %v2629, %v2637
    %v2641 = vadd.f32 %v2616, %v2636
    %v2642 = vadd.f32 %v2617, %v2638
    %s2643 = sld [smem:[#allocation4 + $0x603]]
    %v2644 = vstv %s2643
    %v2645 = vmul.f32 %v2644, %v53
    %v2646 = vmul.f32 %v2644, %v54
    %v2647 = vmul.f32 %v2644, %v55
    %2651 = vrot.lane.b32.xlu0 %v2645, 96
    %v2652 = vpop.permute.xlu0 %2651
    %2653 = vrot.lane.b32.xlu0 %v2646, 96
    %v2654 = vpop.permute.xlu0 %2653
    %2655 = vrot.lane.b32.xlu0 %v2647, 96
    %v2656 = vpop.permute.xlu0 %2655
    %v2657 = vrot.slane %v2652, 2
    %v2658 = vrot.slane %v2654, 2
    %v2659 = vrot.slane %v2656, 2
    %v2660 = vsel %vm81, %v2657, %v2658
    %v2661 = vsel %vm135, %v2652, %v2660
    %v2662 = vsel %vm81, %v2658, %v2659
    %v2663 = vsel %vm135, %v2654, %v2662
    %v2666 = vadd.f32 %v2641, %v2661
    %v2667 = vadd.f32 %v2642, %v2663
    %s2668 = sld [smem:[#allocation4 + $0x604]]
    %v2669 = vstv %s2668
    %v2670 = vmul.f32 %v2669, %v53
    %v2671 = vmul.f32 %v2669, %v54
    %v2672 = vmul.f32 %v2669, %v55
    %2676 = vrot.lane.b32.xlu0 %v2670, 95
    %v2677 = vpop.permute.xlu0 %2676
    %2678 = vrot.lane.b32.xlu0 %v2671, 95
    %v2679 = vpop.permute.xlu0 %2678
    %2680 = vrot.lane.b32.xlu0 %v2672, 95
    %v2681 = vpop.permute.xlu0 %2680
    %v2682 = vrot.slane %v2677, 2
    %v2683 = vrot.slane %v2679, 2
    %v2684 = vrot.slane %v2681, 2
    %v2685 = vsel %vm81, %v2682, %v2683
    %v2686 = vsel %vm161, %v2677, %v2685
    %v2687 = vsel %vm81, %v2683, %v2684
    %v2688 = vsel %vm161, %v2679, %v2687
    %v2691 = vadd.f32 %v2666, %v2686
    %v2692 = vadd.f32 %v2667, %v2688
    %s2693 = sld [smem:[#allocation4 + $0x605]]
    %v2694 = vstv %s2693
    %v2695 = vmul.f32 %v2694, %v53
    %v2696 = vmul.f32 %v2694, %v54
    %v2697 = vmul.f32 %v2694, %v55
    %2701 = vrot.lane.b32.xlu0 %v2695, 94
    %v2702 = vpop.permute.xlu0 %2701
    %2703 = vrot.lane.b32.xlu0 %v2696, 94
    %v2704 = vpop.permute.xlu0 %2703
    %2705 = vrot.lane.b32.xlu0 %v2697, 94
    %v2706 = vpop.permute.xlu0 %2705
    %v2707 = vrot.slane %v2702, 2
    %v2708 = vrot.slane %v2704, 2
    %v2709 = vrot.slane %v2706, 2
    %v2710 = vsel %vm81, %v2707, %v2708
    %v2711 = vsel %vm187, %v2702, %v2710
    %v2712 = vsel %vm81, %v2708, %v2709
    %v2713 = vsel %vm187, %v2704, %v2712
    %v2716 = vadd.f32 %v2691, %v2711
    %v2717 = vadd.f32 %v2692, %v2713
    %s2718 = sld [smem:[#allocation4 + $0x606]]
    %v2719 = vstv %s2718
    %v2720 = vmul.f32 %v2719, %v53
    %v2721 = vmul.f32 %v2719, %v54
    %v2722 = vmul.f32 %v2719, %v55
    %2726 = vrot.lane.b32.xlu0 %v2720, 64
    %v2727 = vpop.permute.xlu0 %2726
    %2728 = vrot.lane.b32.xlu0 %v2721, 64
    %v2729 = vpop.permute.xlu0 %2728
    %2730 = vrot.lane.b32.xlu0 %v2722, 64
    %v2731 = vpop.permute.xlu0 %2730
    %v2732 = vrot.slane %v2727, 2
    %v2733 = vrot.slane %v2729, 2
    %v2734 = vrot.slane %v2731, 2
    %v2735 = vsel %vm81, %v2732, %v2733
    %v2736 = vsel %vm213, %v2727, %v2735
    %v2737 = vsel %vm81, %v2733, %v2734
    %v2738 = vsel %vm213, %v2729, %v2737
    %v2741 = vadd.f32 %v2716, %v2736
    %v2742 = vadd.f32 %v2717, %v2738
    %s2743 = sld [smem:[#allocation4 + $0x607]]
    %v2744 = vstv %s2743
    %v2745 = vmul.f32 %v2744, %v53
    %v2746 = vmul.f32 %v2744, %v54
    %v2747 = vmul.f32 %v2744, %v55
    %2751 = vrot.lane.b32.xlu0 %v2745, 63
    %v2752 = vpop.permute.xlu0 %2751
    %2753 = vrot.lane.b32.xlu0 %v2746, 63
    %v2754 = vpop.permute.xlu0 %2753
    %2755 = vrot.lane.b32.xlu0 %v2747, 63
    %v2756 = vpop.permute.xlu0 %2755
    %v2757 = vrot.slane %v2752, 2
    %v2758 = vrot.slane %v2754, 2
    %v2759 = vrot.slane %v2756, 2
    %v2760 = vsel %vm81, %v2757, %v2758
    %v2761 = vsel %vm239, %v2752, %v2760
    %v2762 = vsel %vm81, %v2758, %v2759
    %v2763 = vsel %vm239, %v2754, %v2762
    %v2766 = vadd.f32 %v2741, %v2761
    %v2767 = vadd.f32 %v2742, %v2763
    %s2768 = sld [smem:[#allocation4 + $0x608]]
    %v2769 = vstv %s2768
    %v2770 = vmul.f32 %v2769, %v53
    %v2771 = vmul.f32 %v2769, %v54
    %v2772 = vmul.f32 %v2769, %v55
    %2776 = vrot.lane.b32.xlu0 %v2770, 62
    %v2777 = vpop.permute.xlu0 %2776
    %2778 = vrot.lane.b32.xlu0 %v2771, 62
    %v2779 = vpop.permute.xlu0 %2778
    %2780 = vrot.lane.b32.xlu0 %v2772, 62
    %v2781 = vpop.permute.xlu0 %2780
    %v2782 = vrot.slane %v2777, 2
    %v2783 = vrot.slane %v2779, 2
    %v2784 = vrot.slane %v2781, 2
    %v2785 = vsel %vm81, %v2782, %v2783
    %v2786 = vsel %vm265, %v2777, %v2785
    %v2787 = vsel %vm81, %v2783, %v2784
    %v2788 = vsel %vm265, %v2779, %v2787
    %v2791 = vadd.f32 %v2766, %v2786
    %v2792 = vadd.f32 %v2767, %v2788
    %2793 = vst [vmem:[#allocation2 + $0xc0] sm:$0xff] %v2791
    %2794 = vst [vmem:[#allocation2 + $0xc8] sm:$0xff] %v2792
    %s2795 = sld [smem:[#allocation7 + $0xd]]
    %v2796 = vstv %s2795
    %s2797 = sld [smem:[#allocation4 + $0x680]]
    %v2798 = vstv %s2797
    %v2799 = vmul.f32 %v2798, %v53
    %v2800 = vmul.f32 %v2798, %v54
    %v2801 = vadd.f32 %v2796, %v2799
    %v2802 = vadd.f32 %v2796, %v2800
    %s2803 = sld [smem:[#allocation4 + $0x681]]
    %v2804 = vstv %s2803
    %v2805 = vmul.f32 %v2804, %v53
    %v2806 = vmul.f32 %v2804, %v54
    %v2807 = vmul.f32 %v2804, %v55
    %2811 = vrot.lane.b32.xlu0 %v2805, 127
    %v2812 = vpop.permute.xlu0 %2811
    %2813 = vrot.lane.b32.xlu0 %v2806, 127
    %v2814 = vpop.permute.xlu0 %2813
    %2815 = vrot.lane.b32.xlu0 %v2807, 127
    %v2816 = vpop.permute.xlu0 %2815
    %v2817 = vrot.slane %v2812, 2
    %v2818 = vrot.slane %v2814, 2
    %v2819 = vrot.slane %v2816, 2
    %v2820 = vsel %vm81, %v2817, %v2818
    %v2821 = vsel %vm83, %v2812, %v2820
    %v2822 = vsel %vm81, %v2818, %v2819
    %v2823 = vsel %vm83, %v2814, %v2822
    %v2826 = vadd.f32 %v2801, %v2821
    %v2827 = vadd.f32 %v2802, %v2823
    %s2828 = sld [smem:[#allocation4 + $0x682]]
    %v2829 = vstv %s2828
    %v2830 = vmul.f32 %v2829, %v53
    %v2831 = vmul.f32 %v2829, %v54
    %v2832 = vmul.f32 %v2829, %v55
    %2836 = vrot.lane.b32.xlu0 %v2830, 126
    %v2837 = vpop.permute.xlu0 %2836
    %2838 = vrot.lane.b32.xlu0 %v2831, 126
    %v2839 = vpop.permute.xlu0 %2838
    %2840 = vrot.lane.b32.xlu0 %v2832, 126
    %v2841 = vpop.permute.xlu0 %2840
    %v2842 = vrot.slane %v2837, 2
    %v2843 = vrot.slane %v2839, 2
    %v2844 = vrot.slane %v2841, 2
    %v2845 = vsel %vm81, %v2842, %v2843
    %v2846 = vsel %vm109, %v2837, %v2845
    %v2847 = vsel %vm81, %v2843, %v2844
    %v2848 = vsel %vm109, %v2839, %v2847
    %v2851 = vadd.f32 %v2826, %v2846
    %v2852 = vadd.f32 %v2827, %v2848
    %s2853 = sld [smem:[#allocation4 + $0x683]]
    %v2854 = vstv %s2853
    %v2855 = vmul.f32 %v2854, %v53
    %v2856 = vmul.f32 %v2854, %v54
    %v2857 = vmul.f32 %v2854, %v55
    %2861 = vrot.lane.b32.xlu0 %v2855, 96
    %v2862 = vpop.permute.xlu0 %2861
    %2863 = vrot.lane.b32.xlu0 %v2856, 96
    %v2864 = vpop.permute.xlu0 %2863
    %2865 = vrot.lane.b32.xlu0 %v2857, 96
    %v2866 = vpop.permute.xlu0 %2865
    %v2867 = vrot.slane %v2862, 2
    %v2868 = vrot.slane %v2864, 2
    %v2869 = vrot.slane %v2866, 2
    %v2870 = vsel %vm81, %v2867, %v2868
    %v2871 = vsel %vm135, %v2862, %v2870
    %v2872 = vsel %vm81, %v2868, %v2869
    %v2873 = vsel %vm135, %v2864, %v2872
    %v2876 = vadd.f32 %v2851, %v2871
    %v2877 = vadd.f32 %v2852, %v2873
    %s2878 = sld [smem:[#allocation4 + $0x684]]
    %v2879 = vstv %s2878
    %v2880 = vmul.f32 %v2879, %v53
    %v2881 = vmul.f32 %v2879, %v54
    %v2882 = vmul.f32 %v2879, %v55
    %2886 = vrot.lane.b32.xlu0 %v2880, 95
    %v2887 = vpop.permute.xlu0 %2886
    %2888 = vrot.lane.b32.xlu0 %v2881, 95
    %v2889 = vpop.permute.xlu0 %2888
    %2890 = vrot.lane.b32.xlu0 %v2882, 95
    %v2891 = vpop.permute.xlu0 %2890
    %v2892 = vrot.slane %v2887, 2
    %v2893 = vrot.slane %v2889, 2
    %v2894 = vrot.slane %v2891, 2
    %v2895 = vsel %vm81, %v2892, %v2893
    %v2896 = vsel %vm161, %v2887, %v2895
    %v2897 = vsel %vm81, %v2893, %v2894
    %v2898 = vsel %vm161, %v2889, %v2897
    %v2901 = vadd.f32 %v2876, %v2896
    %v2902 = vadd.f32 %v2877, %v2898
    %s2903 = sld [smem:[#allocation4 + $0x685]]
    %v2904 = vstv %s2903
    %v2905 = vmul.f32 %v2904, %v53
    %v2906 = vmul.f32 %v2904, %v54
    %v2907 = vmul.f32 %v2904, %v55
    %2911 = vrot.lane.b32.xlu0 %v2905, 94
    %v2912 = vpop.permute.xlu0 %2911
    %2913 = vrot.lane.b32.xlu0 %v2906, 94
    %v2914 = vpop.permute.xlu0 %2913
    %2915 = vrot.lane.b32.xlu0 %v2907, 94
    %v2916 = vpop.permute.xlu0 %2915
    %v2917 = vrot.slane %v2912, 2
    %v2918 = vrot.slane %v2914, 2
    %v2919 = vrot.slane %v2916, 2
    %v2920 = vsel %vm81, %v2917, %v2918
    %v2921 = vsel %vm187, %v2912, %v2920
    %v2922 = vsel %vm81, %v2918, %v2919
    %v2923 = vsel %vm187, %v2914, %v2922
    %v2926 = vadd.f32 %v2901, %v2921
    %v2927 = vadd.f32 %v2902, %v2923
    %s2928 = sld [smem:[#allocation4 + $0x686]]
    %v2929 = vstv %s2928
    %v2930 = vmul.f32 %v2929, %v53
    %v2931 = vmul.f32 %v2929, %v54
    %v2932 = vmul.f32 %v2929, %v55
    %2936 = vrot.lane.b32.xlu0 %v2930, 64
    %v2937 = vpop.permute.xlu0 %2936
    %2938 = vrot.lane.b32.xlu0 %v2931, 64
    %v2939 = vpop.permute.xlu0 %2938
    %2940 = vrot.lane.b32.xlu0 %v2932, 64
    %v2941 = vpop.permute.xlu0 %2940
    %v2942 = vrot.slane %v2937, 2
    %v2943 = vrot.slane %v2939, 2
    %v2944 = vrot.slane %v2941, 2
    %v2945 = vsel %vm81, %v2942, %v2943
    %v2946 = vsel %vm213, %v2937, %v2945
    %v2947 = vsel %vm81, %v2943, %v2944
    %v2948 = vsel %vm213, %v2939, %v2947
    %v2951 = vadd.f32 %v2926, %v2946
    %v2952 = vadd.f32 %v2927, %v2948
    %s2953 = sld [smem:[#allocation4 + $0x687]]
    %v2954 = vstv %s2953
    %v2955 = vmul.f32 %v2954, %v53
    %v2956 = vmul.f32 %v2954, %v54
    %v2957 = vmul.f32 %v2954, %v55
    %2961 = vrot.lane.b32.xlu0 %v2955, 63
    %v2962 = vpop.permute.xlu0 %2961
    %2963 = vrot.lane.b32.xlu0 %v2956, 63
    %v2964 = vpop.permute.xlu0 %2963
    %2965 = vrot.lane.b32.xlu0 %v2957, 63
    %v2966 = vpop.permute.xlu0 %2965
    %v2967 = vrot.slane %v2962, 2
    %v2968 = vrot.slane %v2964, 2
    %v2969 = vrot.slane %v2966, 2
    %v2970 = vsel %vm81, %v2967, %v2968
    %v2971 = vsel %vm239, %v2962, %v2970
    %v2972 = vsel %vm81, %v2968, %v2969
    %v2973 = vsel %vm239, %v2964, %v2972
    %v2976 = vadd.f32 %v2951, %v2971
    %v2977 = vadd.f32 %v2952, %v2973
    %s2978 = sld [smem:[#allocation4 + $0x688]]
    %v2979 = vstv %s2978
    %v2980 = vmul.f32 %v2979, %v53
    %v2981 = vmul.f32 %v2979, %v54
    %v2982 = vmul.f32 %v2979, %v55
    %2986 = vrot.lane.b32.xlu0 %v2980, 62
    %v2987 = vpop.permute.xlu0 %2986
    %2988 = vrot.lane.b32.xlu0 %v2981, 62
    %v2989 = vpop.permute.xlu0 %2988
    %2990 = vrot.lane.b32.xlu0 %v2982, 62
    %v2991 = vpop.permute.xlu0 %2990
    %v2992 = vrot.slane %v2987, 2
    %v2993 = vrot.slane %v2989, 2
    %v2994 = vrot.slane %v2991, 2
    %v2995 = vsel %vm81, %v2992, %v2993
    %v2996 = vsel %vm265, %v2987, %v2995
    %v2997 = vsel %vm81, %v2993, %v2994
    %v2998 = vsel %vm265, %v2989, %v2997
    %v3001 = vadd.f32 %v2976, %v2996
    %v3002 = vadd.f32 %v2977, %v2998
    %3003 = vst [vmem:[#allocation2 + $0xd0] sm:$0xff] %v3001
    %3004 = vst [vmem:[#allocation2 + $0xd8] sm:$0xff] %v3002
    %s3005 = sld [smem:[#allocation7 + $0xe]]
    %v3006 = vstv %s3005
    %s3007 = sld [smem:[#allocation4 + $0x700]]
    %v3008 = vstv %s3007
    %v3009 = vmul.f32 %v3008, %v53
    %v3010 = vmul.f32 %v3008, %v54
    %v3011 = vadd.f32 %v3006, %v3009
    %v3012 = vadd.f32 %v3006, %v3010
    %s3013 = sld [smem:[#allocation4 + $0x701]]
    %v3014 = vstv %s3013
    %v3015 = vmul.f32 %v3014, %v53
    %v3016 = vmul.f32 %v3014, %v54
    %v3017 = vmul.f32 %v3014, %v55
    %3021 = vrot.lane.b32.xlu0 %v3015, 127
    %v3022 = vpop.permute.xlu0 %3021
    %3023 = vrot.lane.b32.xlu0 %v3016, 127
    %v3024 = vpop.permute.xlu0 %3023
    %3025 = vrot.lane.b32.xlu0 %v3017, 127
    %v3026 = vpop.permute.xlu0 %3025
    %v3027 = vrot.slane %v3022, 2
    %v3028 = vrot.slane %v3024, 2
    %v3029 = vrot.slane %v3026, 2
    %v3030 = vsel %vm81, %v3027, %v3028
    %v3031 = vsel %vm83, %v3022, %v3030
    %v3032 = vsel %vm81, %v3028, %v3029
    %v3033 = vsel %vm83, %v3024, %v3032
    %v3036 = vadd.f32 %v3011, %v3031
    %v3037 = vadd.f32 %v3012, %v3033
    %s3038 = sld [smem:[#allocation4 + $0x702]]
    %v3039 = vstv %s3038
    %v3040 = vmul.f32 %v3039, %v53
    %v3041 = vmul.f32 %v3039, %v54
    %v3042 = vmul.f32 %v3039, %v55
    %3046 = vrot.lane.b32.xlu0 %v3040, 126
    %v3047 = vpop.permute.xlu0 %3046
    %3048 = vrot.lane.b32.xlu0 %v3041, 126
    %v3049 = vpop.permute.xlu0 %3048
    %3050 = vrot.lane.b32.xlu0 %v3042, 126
    %v3051 = vpop.permute.xlu0 %3050
    %v3052 = vrot.slane %v3047, 2
    %v3053 = vrot.slane %v3049, 2
    %v3054 = vrot.slane %v3051, 2
    %v3055 = vsel %vm81, %v3052, %v3053
    %v3056 = vsel %vm109, %v3047, %v3055
    %v3057 = vsel %vm81, %v3053, %v3054
    %v3058 = vsel %vm109, %v3049, %v3057
    %v3061 = vadd.f32 %v3036, %v3056
    %v3062 = vadd.f32 %v3037, %v3058
    %s3063 = sld [smem:[#allocation4 + $0x703]]
    %v3064 = vstv %s3063
    %v3065 = vmul.f32 %v3064, %v53
    %v3066 = vmul.f32 %v3064, %v54
    %v3067 = vmul.f32 %v3064, %v55
    %3071 = vrot.lane.b32.xlu0 %v3065, 96
    %v3072 = vpop.permute.xlu0 %3071
    %3073 = vrot.lane.b32.xlu0 %v3066, 96
    %v3074 = vpop.permute.xlu0 %3073
    %3075 = vrot.lane.b32.xlu0 %v3067, 96
    %v3076 = vpop.permute.xlu0 %3075
    %v3077 = vrot.slane %v3072, 2
    %v3078 = vrot.slane %v3074, 2
    %v3079 = vrot.slane %v3076, 2
    %v3080 = vsel %vm81, %v3077, %v3078
    %v3081 = vsel %vm135, %v3072, %v3080
    %v3082 = vsel %vm81, %v3078, %v3079
    %v3083 = vsel %vm135, %v3074, %v3082
    %v3086 = vadd.f32 %v3061, %v3081
    %v3087 = vadd.f32 %v3062, %v3083
    %s3088 = sld [smem:[#allocation4 + $0x704]]
    %v3089 = vstv %s3088
    %v3090 = vmul.f32 %v3089, %v53
    %v3091 = vmul.f32 %v3089, %v54
    %v3092 = vmul.f32 %v3089, %v55
    %3096 = vrot.lane.b32.xlu0 %v3090, 95
    %v3097 = vpop.permute.xlu0 %3096
    %3098 = vrot.lane.b32.xlu0 %v3091, 95
    %v3099 = vpop.permute.xlu0 %3098
    %3100 = vrot.lane.b32.xlu0 %v3092, 95
    %v3101 = vpop.permute.xlu0 %3100
    %v3102 = vrot.slane %v3097, 2
    %v3103 = vrot.slane %v3099, 2
    %v3104 = vrot.slane %v3101, 2
    %v3105 = vsel %vm81, %v3102, %v3103
    %v3106 = vsel %vm161, %v3097, %v3105
    %v3107 = vsel %vm81, %v3103, %v3104
    %v3108 = vsel %vm161, %v3099, %v3107
    %v3111 = vadd.f32 %v3086, %v3106
    %v3112 = vadd.f32 %v3087, %v3108
    %s3113 = sld [smem:[#allocation4 + $0x705]]
    %v3114 = vstv %s3113
    %v3115 = vmul.f32 %v3114, %v53
    %v3116 = vmul.f32 %v3114, %v54
    %v3117 = vmul.f32 %v3114, %v55
    %3121 = vrot.lane.b32.xlu0 %v3115, 94
    %v3122 = vpop.permute.xlu0 %3121
    %3123 = vrot.lane.b32.xlu0 %v3116, 94
    %v3124 = vpop.permute.xlu0 %3123
    %3125 = vrot.lane.b32.xlu0 %v3117, 94
    %v3126 = vpop.permute.xlu0 %3125
    %v3127 = vrot.slane %v3122, 2
    %v3128 = vrot.slane %v3124, 2
    %v3129 = vrot.slane %v3126, 2
    %v3130 = vsel %vm81, %v3127, %v3128
    %v3131 = vsel %vm187, %v3122, %v3130
    %v3132 = vsel %vm81, %v3128, %v3129
    %v3133 = vsel %vm187, %v3124, %v3132
    %v3136 = vadd.f32 %v3111, %v3131
    %v3137 = vadd.f32 %v3112, %v3133
    %s3138 = sld [smem:[#allocation4 + $0x706]]
    %v3139 = vstv %s3138
    %v3140 = vmul.f32 %v3139, %v53
    %v3141 = vmul.f32 %v3139, %v54
    %v3142 = vmul.f32 %v3139, %v55
    %3146 = vrot.lane.b32.xlu0 %v3140, 64
    %v3147 = vpop.permute.xlu0 %3146
    %3148 = vrot.lane.b32.xlu0 %v3141, 64
    %v3149 = vpop.permute.xlu0 %3148
    %3150 = vrot.lane.b32.xlu0 %v3142, 64
    %v3151 = vpop.permute.xlu0 %3150
    %v3152 = vrot.slane %v3147, 2
    %v3153 = vrot.slane %v3149, 2
    %v3154 = vrot.slane %v3151, 2
    %v3155 = vsel %vm81, %v3152, %v3153
    %v3156 = vsel %vm213, %v3147, %v3155
    %v3157 = vsel %vm81, %v3153, %v3154
    %v3158 = vsel %vm213, %v3149, %v3157
    %v3161 = vadd.f32 %v3136, %v3156
    %v3162 = vadd.f32 %v3137, %v3158
    %s3163 = sld [smem:[#allocation4 + $0x707]]
    %v3164 = vstv %s3163
    %v3165 = vmul.f32 %v3164, %v53
    %v3166 = vmul.f32 %v3164, %v54
    %v3167 = vmul.f32 %v3164, %v55
    %3171 = vrot.lane.b32.xlu0 %v3165, 63
    %v3172 = vpop.permute.xlu0 %3171
    %3173 = vrot.lane.b32.xlu0 %v3166, 63
    %v3174 = vpop.permute.xlu0 %3173
    %3175 = vrot.lane.b32.xlu0 %v3167, 63
    %v3176 = vpop.permute.xlu0 %3175
    %v3177 = vrot.slane %v3172, 2
    %v3178 = vrot.slane %v3174, 2
    %v3179 = vrot.slane %v3176, 2
    %v3180 = vsel %vm81, %v3177, %v3178
    %v3181 = vsel %vm239, %v3172, %v3180
    %v3182 = vsel %vm81, %v3178, %v3179
    %v3183 = vsel %vm239, %v3174, %v3182
    %v3186 = vadd.f32 %v3161, %v3181
    %v3187 = vadd.f32 %v3162, %v3183
    %s3188 = sld [smem:[#allocation4 + $0x708]]
    %v3189 = vstv %s3188
    %v3190 = vmul.f32 %v3189, %v53
    %v3191 = vmul.f32 %v3189, %v54
    %v3192 = vmul.f32 %v3189, %v55
    %3196 = vrot.lane.b32.xlu0 %v3190, 62
    %v3197 = vpop.permute.xlu0 %3196
    %3198 = vrot.lane.b32.xlu0 %v3191, 62
    %v3199 = vpop.permute.xlu0 %3198
    %3200 = vrot.lane.b32.xlu0 %v3192, 62
    %v3201 = vpop.permute.xlu0 %3200
    %v3202 = vrot.slane %v3197, 2
    %v3203 = vrot.slane %v3199, 2
    %v3204 = vrot.slane %v3201, 2
    %v3205 = vsel %vm81, %v3202, %v3203
    %v3206 = vsel %vm265, %v3197, %v3205
    %v3207 = vsel %vm81, %v3203, %v3204
    %v3208 = vsel %vm265, %v3199, %v3207
    %v3211 = vadd.f32 %v3186, %v3206
    %v3212 = vadd.f32 %v3187, %v3208
    %3213 = vst [vmem:[#allocation2 + $0xe0] sm:$0xff] %v3211
    %3214 = vst [vmem:[#allocation2 + $0xe8] sm:$0xff] %v3212
    %s3215 = sld [smem:[#allocation7 + $0xf]]
    %v3216 = vstv %s3215
    %s3217 = sld [smem:[#allocation4 + $0x780]]
    %v3218 = vstv %s3217
    %v3219 = vmul.f32 %v3218, %v53
    %v3220 = vmul.f32 %v3218, %v54
    %v3221 = vadd.f32 %v3216, %v3219
    %v3222 = vadd.f32 %v3216, %v3220
    %s3223 = sld [smem:[#allocation4 + $0x781]]
    %v3224 = vstv %s3223
    %v3225 = vmul.f32 %v3224, %v53
    %v3226 = vmul.f32 %v3224, %v54
    %v3227 = vmul.f32 %v3224, %v55
    %3231 = vrot.lane.b32.xlu0 %v3225, 127
    %v3232 = vpop.permute.xlu0 %3231
    %3233 = vrot.lane.b32.xlu0 %v3226, 127
    %v3234 = vpop.permute.xlu0 %3233
    %3235 = vrot.lane.b32.xlu0 %v3227, 127
    %v3236 = vpop.permute.xlu0 %3235
    %v3237 = vrot.slane %v3232, 2
    %v3238 = vrot.slane %v3234, 2
    %v3239 = vrot.slane %v3236, 2
    %v3240 = vsel %vm81, %v3237, %v3238
    %v3241 = vsel %vm83, %v3232, %v3240
    %v3242 = vsel %vm81, %v3238, %v3239
    %v3243 = vsel %vm83, %v3234, %v3242
    %v3246 = vadd.f32 %v3221, %v3241
    %v3247 = vadd.f32 %v3222, %v3243
    %s3248 = sld [smem:[#allocation4 + $0x782]]
    %v3249 = vstv %s3248
    %v3250 = vmul.f32 %v3249, %v53
    %v3251 = vmul.f32 %v3249, %v54
    %v3252 = vmul.f32 %v3249, %v55
    %3256 = vrot.lane.b32.xlu0 %v3250, 126
    %v3257 = vpop.permute.xlu0 %3256
    %3258 = vrot.lane.b32.xlu0 %v3251, 126
    %v3259 = vpop.permute.xlu0 %3258
    %3260 = vrot.lane.b32.xlu0 %v3252, 126
    %v3261 = vpop.permute.xlu0 %3260
    %v3262 = vrot.slane %v3257, 2
    %v3263 = vrot.slane %v3259, 2
    %v3264 = vrot.slane %v3261, 2
    %v3265 = vsel %vm81, %v3262, %v3263
    %v3266 = vsel %vm109, %v3257, %v3265
    %v3267 = vsel %vm81, %v3263, %v3264
    %v3268 = vsel %vm109, %v3259, %v3267
    %v3271 = vadd.f32 %v3246, %v3266
    %v3272 = vadd.f32 %v3247, %v3268
    %s3273 = sld [smem:[#allocation4 + $0x783]]
    %v3274 = vstv %s3273
    %v3275 = vmul.f32 %v3274, %v53
    %v3276 = vmul.f32 %v3274, %v54
    %v3277 = vmul.f32 %v3274, %v55
    %3281 = vrot.lane.b32.xlu0 %v3275, 96
    %v3282 = vpop.permute.xlu0 %3281
    %3283 = vrot.lane.b32.xlu0 %v3276, 96
    %v3284 = vpop.permute.xlu0 %3283
    %3285 = vrot.lane.b32.xlu0 %v3277, 96
    %v3286 = vpop.permute.xlu0 %3285
    %v3287 = vrot.slane %v3282, 2
    %v3288 = vrot.slane %v3284, 2
    %v3289 = vrot.slane %v3286, 2
    %v3290 = vsel %vm81, %v3287, %v3288
    %v3291 = vsel %vm135, %v3282, %v3290
    %v3292 = vsel %vm81, %v3288, %v3289
    %v3293 = vsel %vm135, %v3284, %v3292
    %v3296 = vadd.f32 %v3271, %v3291
    %v3297 = vadd.f32 %v3272, %v3293
    %s3298 = sld [smem:[#allocation4 + $0x784]]
    %v3299 = vstv %s3298
    %v3300 = vmul.f32 %v3299, %v53
    %v3301 = vmul.f32 %v3299, %v54
    %v3302 = vmul.f32 %v3299, %v55
    %3306 = vrot.lane.b32.xlu0 %v3300, 95
    %v3307 = vpop.permute.xlu0 %3306
    %3308 = vrot.lane.b32.xlu0 %v3301, 95
    %v3309 = vpop.permute.xlu0 %3308
    %3310 = vrot.lane.b32.xlu0 %v3302, 95
    %v3311 = vpop.permute.xlu0 %3310
    %v3312 = vrot.slane %v3307, 2
    %v3313 = vrot.slane %v3309, 2
    %v3314 = vrot.slane %v3311, 2
    %v3315 = vsel %vm81, %v3312, %v3313
    %v3316 = vsel %vm161, %v3307, %v3315
    %v3317 = vsel %vm81, %v3313, %v3314
    %v3318 = vsel %vm161, %v3309, %v3317
    %v3321 = vadd.f32 %v3296, %v3316
    %v3322 = vadd.f32 %v3297, %v3318
    %s3323 = sld [smem:[#allocation4 + $0x785]]
    %v3324 = vstv %s3323
    %v3325 = vmul.f32 %v3324, %v53
    %v3326 = vmul.f32 %v3324, %v54
    %v3327 = vmul.f32 %v3324, %v55
    %3331 = vrot.lane.b32.xlu0 %v3325, 94
    %v3332 = vpop.permute.xlu0 %3331
    %3333 = vrot.lane.b32.xlu0 %v3326, 94
    %v3334 = vpop.permute.xlu0 %3333
    %3335 = vrot.lane.b32.xlu0 %v3327, 94
    %v3336 = vpop.permute.xlu0 %3335
    %v3337 = vrot.slane %v3332, 2
    %v3338 = vrot.slane %v3334, 2
    %v3339 = vrot.slane %v3336, 2
    %v3340 = vsel %vm81, %v3337, %v3338
    %v3341 = vsel %vm187, %v3332, %v3340
    %v3342 = vsel %vm81, %v3338, %v3339
    %v3343 = vsel %vm187, %v3334, %v3342
    %v3346 = vadd.f32 %v3321, %v3341
    %v3347 = vadd.f32 %v3322, %v3343
    %s3348 = sld [smem:[#allocation4 + $0x786]]
    %v3349 = vstv %s3348
    %v3350 = vmul.f32 %v3349, %v53
    %v3351 = vmul.f32 %v3349, %v54
    %v3352 = vmul.f32 %v3349, %v55
    %3356 = vrot.lane.b32.xlu0 %v3350, 64
    %v3357 = vpop.permute.xlu0 %3356
    %3358 = vrot.lane.b32.xlu0 %v3351, 64
    %v3359 = vpop.permute.xlu0 %3358
    %3360 = vrot.lane.b32.xlu0 %v3352, 64
    %v3361 = vpop.permute.xlu0 %3360
    %v3362 = vrot.slane %v3357, 2
    %v3363 = vrot.slane %v3359, 2
    %v3364 = vrot.slane %v3361, 2
    %v3365 = vsel %vm81, %v3362, %v3363
    %v3366 = vsel %vm213, %v3357, %v3365
    %v3367 = vsel %vm81, %v3363, %v3364
    %v3368 = vsel %vm213, %v3359, %v3367
    %v3371 = vadd.f32 %v3346, %v3366
    %v3372 = vadd.f32 %v3347, %v3368
    %s3373 = sld [smem:[#allocation4 + $0x787]]
    %v3374 = vstv %s3373
    %v3375 = vmul.f32 %v3374, %v53
    %v3376 = vmul.f32 %v3374, %v54
    %v3377 = vmul.f32 %v3374, %v55
    %3381 = vrot.lane.b32.xlu0 %v3375, 63
    %v3382 = vpop.permute.xlu0 %3381
    %3383 = vrot.lane.b32.xlu0 %v3376, 63
    %v3384 = vpop.permute.xlu0 %3383
    %3385 = vrot.lane.b32.xlu0 %v3377, 63
    %v3386 = vpop.permute.xlu0 %3385
    %v3387 = vrot.slane %v3382, 2
    %v3388 = vrot.slane %v3384, 2
    %v3389 = vrot.slane %v3386, 2
    %v3390 = vsel %vm81, %v3387, %v3388
    %v3391 = vsel %vm239, %v3382, %v3390
    %v3392 = vsel %vm81, %v3388, %v3389
    %v3393 = vsel %vm239, %v3384, %v3392
    %v3396 = vadd.f32 %v3371, %v3391
    %v3397 = vadd.f32 %v3372, %v3393
    %s3398 = sld [smem:[#allocation4 + $0x788]]
    %v3399 = vstv %s3398
    %v3400 = vmul.f32 %v3399, %v53
    %v3401 = vmul.f32 %v3399, %v54
    %v3402 = vmul.f32 %v3399, %v55
    %3406 = vrot.lane.b32.xlu0 %v3400, 62
    %v3407 = vpop.permute.xlu0 %3406
    %3408 = vrot.lane.b32.xlu0 %v3401, 62
    %v3409 = vpop.permute.xlu0 %3408
    %3410 = vrot.lane.b32.xlu0 %v3402, 62
    %v3411 = vpop.permute.xlu0 %3410
    %v3412 = vrot.slane %v3407, 2
    %v3413 = vrot.slane %v3409, 2
    %v3414 = vrot.slane %v3411, 2
    %v3415 = vsel %vm81, %v3412, %v3413
    %v3416 = vsel %vm265, %v3407, %v3415
    %v3417 = vsel %vm81, %v3413, %v3414
    %v3418 = vsel %vm265, %v3409, %v3417
    %v3421 = vadd.f32 %v3396, %v3416
    %v3422 = vadd.f32 %v3397, %v3418
    %3423 = vst [vmem:[#allocation2 + $0xf0] sm:$0xff] %v3421
    %3424 = vst [vmem:[#allocation2 + $0xf8] sm:$0xff] %v3422
    %v3425 = vld [vmem:[#allocation2] sm:$0xff]
    %v3426 = vld [vmem:[#allocation2 + $0x8] sm:$0xff]
    %v3427 = vld [vmem:[#allocation2 + $0x10] sm:$0xff]
    %v3428 = vld [vmem:[#allocation2 + $0x18] sm:$0xff]
    %v3429 = vld [vmem:[#allocation2 + $0x20] sm:$0xff]
    %v3430 = vld [vmem:[#allocation2 + $0x28] sm:$0xff]
    %v3431 = vld [vmem:[#allocation2 + $0x30] sm:$0xff]
    %v3432 = vld [vmem:[#allocation2 + $0x38] sm:$0xff]
    %v3433 = vld [vmem:[#allocation2 + $0x40] sm:$0xff]
    %v3434 = vld [vmem:[#allocation2 + $0x48] sm:$0xff]
    %v3435 = vld [vmem:[#allocation2 + $0x50] sm:$0xff]
    %v3436 = vld [vmem:[#allocation2 + $0x58] sm:$0xff]
    %v3437 = vld [vmem:[#allocation2 + $0x60] sm:$0xff]
    %v3438 = vld [vmem:[#allocation2 + $0x68] sm:$0xff]
    %v3439 = vld [vmem:[#allocation2 + $0x70] sm:$0xff]
    %v3440 = vld [vmem:[#allocation2 + $0x78] sm:$0xff]
    %v3441 = vld [vmem:[#allocation2 + $0x80] sm:$0xff]
    %v3442 = vld [vmem:[#allocation2 + $0x88] sm:$0xff]
    %v3443 = vld [vmem:[#allocation2 + $0x90] sm:$0xff]
    %v3444 = vld [vmem:[#allocation2 + $0x98] sm:$0xff]
    %v3445 = vld [vmem:[#allocation2 + $0xa0] sm:$0xff]
    %v3446 = vld [vmem:[#allocation2 + $0xa8] sm:$0xff]
    %v3447 = vld [vmem:[#allocation2 + $0xb0] sm:$0xff]
    %v3448 = vld [vmem:[#allocation2 + $0xb8] sm:$0xff]
    %v3449 = vld [vmem:[#allocation2 + $0xc0] sm:$0xff]
    %v3450 = vld [vmem:[#allocation2 + $0xc8] sm:$0xff]
    %v3451 = vld [vmem:[#allocation2 + $0xd0] sm:$0xff]
    %v3452 = vld [vmem:[#allocation2 + $0xd8] sm:$0xff]
    %v3453 = vld [vmem:[#allocation2 + $0xe0] sm:$0xff]
    %v3454 = vld [vmem:[#allocation2 + $0xe8] sm:$0xff]
    %v3455 = vld [vmem:[#allocation2 + $0xf0] sm:$0xff]
    %v3456 = vld [vmem:[#allocation2 + $0xf8] sm:$0xff]
    %v3457 = vld [vmem:[%s3] sm:$0xff]
    %v3458 = vld [vmem:[%s3 + $0x8] sm:$0xff]
    %v3459 = vld [vmem:[%s3 + $0x10] sm:$0xff]
    %v3460 = vld [vmem:[%s3 + $0x18] sm:$0xff]
    %v3461 = vld [vmem:[%s3 + $0x20] sm:$0xff]
    %v3462 = vld [vmem:[%s3 + $0x28] sm:$0xff]
    %v3463 = vld [vmem:[%s3 + $0x30] sm:$0xff]
    %v3464 = vld [vmem:[%s3 + $0x38] sm:$0xff]
    %v3465 = vld [vmem:[%s3 + $0x40] sm:$0xff]
    %v3466 = vld [vmem:[%s3 + $0x48] sm:$0xff]
    %v3467 = vld [vmem:[%s3 + $0x50] sm:$0xff]
    %v3468 = vld [vmem:[%s3 + $0x58] sm:$0xff]
    %v3469 = vld [vmem:[%s3 + $0x60] sm:$0xff]
    %v3470 = vld [vmem:[%s3 + $0x68] sm:$0xff]
    %v3471 = vld [vmem:[%s3 + $0x70] sm:$0xff]
    %v3472 = vld [vmem:[%s3 + $0x78] sm:$0xff]
    %v3473 = vld [vmem:[%s3 + $0x80] sm:$0xff]
    %v3474 = vld [vmem:[%s3 + $0x88] sm:$0xff]
    %v3475 = vld [vmem:[%s3 + $0x90] sm:$0xff]
    %v3476 = vld [vmem:[%s3 + $0x98] sm:$0xff]
    %v3477 = vld [vmem:[%s3 + $0xa0] sm:$0xff]
    %v3478 = vld [vmem:[%s3 + $0xa8] sm:$0xff]
    %v3479 = vld [vmem:[%s3 + $0xb0] sm:$0xff]
    %v3480 = vld [vmem:[%s3 + $0xb8] sm:$0xff]
    %v3481 = vld [vmem:[%s3 + $0xc0] sm:$0xff]
    %v3482 = vld [vmem:[%s3 + $0xc8] sm:$0xff]
    %v3483 = vld [vmem:[%s3 + $0xd0] sm:$0xff]
    %v3484 = vld [vmem:[%s3 + $0xd8] sm:$0xff]
    %v3485 = vld [vmem:[%s3 + $0xe0] sm:$0xff]
    %v3486 = vld [vmem:[%s3 + $0xe8] sm:$0xff]
    %v3487 = vld [vmem:[%s3 + $0xf0] sm:$0xff]
    %v3488 = vld [vmem:[%s3 + $0xf8] sm:$0xff]
    %v3489 = vld [vmem:[%s3 + $0x100] sm:$0xff]
    %v3490 = vld [vmem:[%s3 + $0x108] sm:$0xff]
    %v3491 = vld [vmem:[%s3 + $0x110] sm:$0xff]
    %v3492 = vld [vmem:[%s3 + $0x118] sm:$0xff]
    %v3493 = vld [vmem:[%s3 + $0x120] sm:$0xff]
    %v3494 = vld [vmem:[%s3 + $0x128] sm:$0xff]
    %v3495 = vld [vmem:[%s3 + $0x130] sm:$0xff]
    %v3496 = vld [vmem:[%s3 + $0x138] sm:$0xff]
    %v3497 = vld [vmem:[%s3 + $0x140] sm:$0xff]
    %v3498 = vld [vmem:[%s3 + $0x148] sm:$0xff]
    %v3499 = vld [vmem:[%s3 + $0x150] sm:$0xff]
    %v3500 = vld [vmem:[%s3 + $0x158] sm:$0xff]
    %v3501 = vld [vmem:[%s3 + $0x160] sm:$0xff]
    %v3502 = vld [vmem:[%s3 + $0x168] sm:$0xff]
    %v3503 = vld [vmem:[%s3 + $0x170] sm:$0xff]
    %v3504 = vld [vmem:[%s3 + $0x178] sm:$0xff]
    %v3505 = vld [vmem:[%s3 + $0x180] sm:$0xff]
    %v3506 = vld [vmem:[%s3 + $0x188] sm:$0xff]
    %v3507 = vld [vmem:[%s3 + $0x190] sm:$0xff]
    %v3508 = vld [vmem:[%s3 + $0x198] sm:$0xff]
    %v3509 = vld [vmem:[%s3 + $0x1a0] sm:$0xff]
    %v3510 = vld [vmem:[%s3 + $0x1a8] sm:$0xff]
    %v3511 = vld [vmem:[%s3 + $0x1b0] sm:$0xff]
    %v3512 = vld [vmem:[%s3 + $0x1b8] sm:$0xff]
    %v3513 = vld [vmem:[%s3 + $0x1c0] sm:$0xff]
    %v3514 = vld [vmem:[%s3 + $0x1c8] sm:$0xff]
    %v3515 = vld [vmem:[%s3 + $0x1d0] sm:$0xff]
    %v3516 = vld [vmem:[%s3 + $0x1d8] sm:$0xff]
    %v3517 = vld [vmem:[%s3 + $0x1e0] sm:$0xff]
    %v3518 = vld [vmem:[%s3 + $0x1e8] sm:$0xff]
    %v3519 = vld [vmem:[%s3 + $0x1f0] sm:$0xff]
    %v3520 = vld [vmem:[%s3 + $0x1f8] sm:$0xff]
    %v3521 = vld [vmem:[%s3 + $0x200] sm:$0xff]
    %v3522 = vld [vmem:[%s3 + $0x208] sm:$0xff]
    %v3523 = vld [vmem:[%s3 + $0x210] sm:$0xff]
    %v3524 = vld [vmem:[%s3 + $0x218] sm:$0xff]
    %v3525 = vld [vmem:[%s3 + $0x220] sm:$0xff]
    %v3526 = vld [vmem:[%s3 + $0x228] sm:$0xff]
    %v3527 = vld [vmem:[%s3 + $0x230] sm:$0xff]
    %v3528 = vld [vmem:[%s3 + $0x238] sm:$0xff]
    %v3529 = vld [vmem:[%s3 + $0x240] sm:$0xff]
    %v3530 = vld [vmem:[%s3 + $0x248] sm:$0xff]
    %v3531 = vld [vmem:[%s3 + $0x250] sm:$0xff]
    %v3532 = vld [vmem:[%s3 + $0x258] sm:$0xff]
    %v3533 = vld [vmem:[%s3 + $0x260] sm:$0xff]
    %v3534 = vld [vmem:[%s3 + $0x268] sm:$0xff]
    %v3535 = vld [vmem:[%s3 + $0x270] sm:$0xff]
    %v3536 = vld [vmem:[%s3 + $0x278] sm:$0xff]
    %v3537 = vld [vmem:[%s3 + $0x280] sm:$0xff]
    %v3538 = vld [vmem:[%s3 + $0x288] sm:$0xff]
    %v3539 = vld [vmem:[%s3 + $0x290] sm:$0xff]
    %v3540 = vld [vmem:[%s3 + $0x298] sm:$0xff]
    %v3541 = vld [vmem:[%s3 + $0x2a0] sm:$0xff]
    %v3542 = vld [vmem:[%s3 + $0x2a8] sm:$0xff]
    %v3543 = vld [vmem:[%s3 + $0x2b0] sm:$0xff]
    %v3544 = vld [vmem:[%s3 + $0x2b8] sm:$0xff]
    %v3545 = vld [vmem:[%s3 + $0x2c0] sm:$0xff]
    %v3546 = vld [vmem:[%s3 + $0x2c8] sm:$0xff]
    %v3547 = vld [vmem:[%s3 + $0x2d0] sm:$0xff]
    %v3548 = vld [vmem:[%s3 + $0x2d8] sm:$0xff]
    %v3549 = vld [vmem:[%s3 + $0x2e0] sm:$0xff]
    %v3550 = vld [vmem:[%s3 + $0x2e8] sm:$0xff]
    %v3551 = vld [vmem:[%s3 + $0x2f0] sm:$0xff]
    %v3552 = vld [vmem:[%s3 + $0x2f8] sm:$0xff]
    %v3553 = vld [vmem:[%s3 + $0x300] sm:$0xff]
    %v3554 = vld [vmem:[%s3 + $0x308] sm:$0xff]
    %v3555 = vld [vmem:[%s3 + $0x310] sm:$0xff]
    %v3556 = vld [vmem:[%s3 + $0x318] sm:$0xff]
    %v3557 = vld [vmem:[%s3 + $0x320] sm:$0xff]
    %v3558 = vld [vmem:[%s3 + $0x328] sm:$0xff]
    %v3559 = vld [vmem:[%s3 + $0x330] sm:$0xff]
    %v3560 = vld [vmem:[%s3 + $0x338] sm:$0xff]
    %v3561 = vld [vmem:[%s3 + $0x340] sm:$0xff]
    %v3562 = vld [vmem:[%s3 + $0x348] sm:$0xff]
    %v3563 = vld [vmem:[%s3 + $0x350] sm:$0xff]
    %v3564 = vld [vmem:[%s3 + $0x358] sm:$0xff]
    %v3565 = vld [vmem:[%s3 + $0x360] sm:$0xff]
    %v3566 = vld [vmem:[%s3 + $0x368] sm:$0xff]
    %v3567 = vld [vmem:[%s3 + $0x370] sm:$0xff]
    %v3568 = vld [vmem:[%s3 + $0x378] sm:$0xff]
    %v3569 = vld [vmem:[%s3 + $0x380] sm:$0xff]
    %v3570 = vld [vmem:[%s3 + $0x388] sm:$0xff]
    %v3571 = vld [vmem:[%s3 + $0x390] sm:$0xff]
    %v3572 = vld [vmem:[%s3 + $0x398] sm:$0xff]
    %v3573 = vld [vmem:[%s3 + $0x3a0] sm:$0xff]
    %v3574 = vld [vmem:[%s3 + $0x3a8] sm:$0xff]
    %v3575 = vld [vmem:[%s3 + $0x3b0] sm:$0xff]
    %v3576 = vld [vmem:[%s3 + $0x3b8] sm:$0xff]
    %v3577 = vld [vmem:[%s3 + $0x3c0] sm:$0xff]
    %v3578 = vld [vmem:[%s3 + $0x3c8] sm:$0xff]
    %v3579 = vld [vmem:[%s3 + $0x3d0] sm:$0xff]
    %v3580 = vld [vmem:[%s3 + $0x3d8] sm:$0xff]
    %v3581 = vld [vmem:[%s3 + $0x3e0] sm:$0xff]
    %v3582 = vld [vmem:[%s3 + $0x3e8] sm:$0xff]
    %v3583 = vld [vmem:[%s3 + $0x3f0] sm:$0xff]
    %v3584 = vld [vmem:[%s3 + $0x3f8] sm:$0xff]
    %v3585 = vld [vmem:[%s3 + $0x400] sm:$0xff]
    %v3586 = vld [vmem:[%s3 + $0x408] sm:$0xff]
    %v3587 = vld [vmem:[%s3 + $0x410] sm:$0xff]
    %v3588 = vld [vmem:[%s3 + $0x418] sm:$0xff]
    %v3589 = vld [vmem:[%s3 + $0x420] sm:$0xff]
    %v3590 = vld [vmem:[%s3 + $0x428] sm:$0xff]
    %v3591 = vld [vmem:[%s3 + $0x430] sm:$0xff]
    %v3592 = vld [vmem:[%s3 + $0x438] sm:$0xff]
    %v3593 = vld [vmem:[%s3 + $0x440] sm:$0xff]
    %v3594 = vld [vmem:[%s3 + $0x448] sm:$0xff]
    %v3595 = vld [vmem:[%s3 + $0x450] sm:$0xff]
    %v3596 = vld [vmem:[%s3 + $0x458] sm:$0xff]
    %v3597 = vld [vmem:[%s3 + $0x460] sm:$0xff]
    %v3598 = vld [vmem:[%s3 + $0x468] sm:$0xff]
    %v3599 = vld [vmem:[%s3 + $0x470] sm:$0xff]
    %v3600 = vld [vmem:[%s3 + $0x478] sm:$0xff]
    %v3601 = vld [vmem:[%s3 + $0x480] sm:$0xff]
    %v3602 = vld [vmem:[%s3 + $0x488] sm:$0xff]
    %v3603 = vld [vmem:[%s3 + $0x490] sm:$0xff]
    %v3604 = vld [vmem:[%s3 + $0x498] sm:$0xff]
    %v3605 = vld [vmem:[%s3 + $0x4a0] sm:$0xff]
    %v3606 = vld [vmem:[%s3 + $0x4a8] sm:$0xff]
    %v3607 = vld [vmem:[%s3 + $0x4b0] sm:$0xff]
    %v3608 = vld [vmem:[%s3 + $0x4b8] sm:$0xff]
    %v3609 = vld [vmem:[%s3 + $0x4c0] sm:$0xff]
    %v3610 = vld [vmem:[%s3 + $0x4c8] sm:$0xff]
    %v3611 = vld [vmem:[%s3 + $0x4d0] sm:$0xff]
    %v3612 = vld [vmem:[%s3 + $0x4d8] sm:$0xff]
    %v3613 = vld [vmem:[%s3 + $0x4e0] sm:$0xff]
    %v3614 = vld [vmem:[%s3 + $0x4e8] sm:$0xff]
    %v3615 = vld [vmem:[%s3 + $0x4f0] sm:$0xff]
    %v3616 = vld [vmem:[%s3 + $0x4f8] sm:$0xff]
    %v3617 = vld [vmem:[%s3 + $0x500] sm:$0xff]
    %v3618 = vld [vmem:[%s3 + $0x508] sm:$0xff]
    %v3619 = vld [vmem:[%s3 + $0x510] sm:$0xff]
    %v3620 = vld [vmem:[%s3 + $0x518] sm:$0xff]
    %v3621 = vld [vmem:[%s3 + $0x520] sm:$0xff]
    %v3622 = vld [vmem:[%s3 + $0x528] sm:$0xff]
    %v3623 = vld [vmem:[%s3 + $0x530] sm:$0xff]
    %v3624 = vld [vmem:[%s3 + $0x538] sm:$0xff]
    %v3625 = vld [vmem:[%s3 + $0x540] sm:$0xff]
    %v3626 = vld [vmem:[%s3 + $0x548] sm:$0xff]
    %v3627 = vld [vmem:[%s3 + $0x550] sm:$0xff]
    %v3628 = vld [vmem:[%s3 + $0x558] sm:$0xff]
    %v3629 = vld [vmem:[%s3 + $0x560] sm:$0xff]
    %v3630 = vld [vmem:[%s3 + $0x568] sm:$0xff]
    %v3631 = vld [vmem:[%s3 + $0x570] sm:$0xff]
    %v3632 = vld [vmem:[%s3 + $0x578] sm:$0xff]
    %v3633 = vld [vmem:[%s3 + $0x580] sm:$0xff]
    %v3634 = vld [vmem:[%s3 + $0x588] sm:$0xff]
    %v3635 = vld [vmem:[%s3 + $0x590] sm:$0xff]
    %v3636 = vld [vmem:[%s3 + $0x598] sm:$0xff]
    %v3637 = vld [vmem:[%s3 + $0x5a0] sm:$0xff]
    %v3638 = vld [vmem:[%s3 + $0x5a8] sm:$0xff]
    %v3639 = vld [vmem:[%s3 + $0x5b0] sm:$0xff]
    %v3640 = vld [vmem:[%s3 + $0x5b8] sm:$0xff]
    %v3641 = vld [vmem:[%s3 + $0x5c0] sm:$0xff]
    %v3642 = vld [vmem:[%s3 + $0x5c8] sm:$0xff]
    %v3643 = vld [vmem:[%s3 + $0x5d0] sm:$0xff]
    %v3644 = vld [vmem:[%s3 + $0x5d8] sm:$0xff]
    %v3645 = vld [vmem:[%s3 + $0x5e0] sm:$0xff]
    %v3646 = vld [vmem:[%s3 + $0x5e8] sm:$0xff]
    %v3647 = vld [vmem:[%s3 + $0x5f0] sm:$0xff]
    %v3648 = vld [vmem:[%s3 + $0x5f8] sm:$0xff]
    %v3649 = vld [vmem:[%s3 + $0x600] sm:$0xff]
    %v3650 = vld [vmem:[%s3 + $0x608] sm:$0xff]
    %v3651 = vld [vmem:[%s3 + $0x610] sm:$0xff]
    %v3652 = vld [vmem:[%s3 + $0x618] sm:$0xff]
    %v3653 = vld [vmem:[%s3 + $0x620] sm:$0xff]
    %v3654 = vld [vmem:[%s3 + $0x628] sm:$0xff]
    %v3655 = vld [vmem:[%s3 + $0x630] sm:$0xff]
    %v3656 = vld [vmem:[%s3 + $0x638] sm:$0xff]
    %v3657 = vld [vmem:[%s3 + $0x640] sm:$0xff]
    %v3658 = vld [vmem:[%s3 + $0x648] sm:$0xff]
    %v3659 = vld [vmem:[%s3 + $0x650] sm:$0xff]
    %v3660 = vld [vmem:[%s3 + $0x658] sm:$0xff]
    %v3661 = vld [vmem:[%s3 + $0x660] sm:$0xff]
    %v3662 = vld [vmem:[%s3 + $0x668] sm:$0xff]
    %v3663 = vld [vmem:[%s3 + $0x670] sm:$0xff]
    %v3664 = vld [vmem:[%s3 + $0x678] sm:$0xff]
    %v3665 = vld [vmem:[%s3 + $0x680] sm:$0xff]
    %v3666 = vld [vmem:[%s3 + $0x688] sm:$0xff]
    %v3667 = vld [vmem:[%s3 + $0x690] sm:$0xff]
    %v3668 = vld [vmem:[%s3 + $0x698] sm:$0xff]
    %v3669 = vld [vmem:[%s3 + $0x6a0] sm:$0xff]
    %v3670 = vld [vmem:[%s3 + $0x6a8] sm:$0xff]
    %v3671 = vld [vmem:[%s3 + $0x6b0] sm:$0xff]
    %v3672 = vld [vmem:[%s3 + $0x6b8] sm:$0xff]
    %v3673 = vld [vmem:[%s3 + $0x6c0] sm:$0xff]
    %v3674 = vld [vmem:[%s3 + $0x6c8] sm:$0xff]
    %v3675 = vld [vmem:[%s3 + $0x6d0] sm:$0xff]
    %v3676 = vld [vmem:[%s3 + $0x6d8] sm:$0xff]
    %v3677 = vld [vmem:[%s3 + $0x6e0] sm:$0xff]
    %v3678 = vld [vmem:[%s3 + $0x6e8] sm:$0xff]
    %v3679 = vld [vmem:[%s3 + $0x6f0] sm:$0xff]
    %v3680 = vld [vmem:[%s3 + $0x6f8] sm:$0xff]
    %v3681 = vld [vmem:[%s3 + $0x700] sm:$0xff]
    %v3682 = vld [vmem:[%s3 + $0x708] sm:$0xff]
    %v3683 = vld [vmem:[%s3 + $0x710] sm:$0xff]
    %v3684 = vld [vmem:[%s3 + $0x718] sm:$0xff]
    %v3685 = vld [vmem:[%s3 + $0x720] sm:$0xff]
    %v3686 = vld [vmem:[%s3 + $0x728] sm:$0xff]
    %v3687 = vld [vmem:[%s3 + $0x730] sm:$0xff]
    %v3688 = vld [vmem:[%s3 + $0x738] sm:$0xff]
    %v3689 = vld [vmem:[%s3 + $0x740] sm:$0xff]
    %v3690 = vld [vmem:[%s3 + $0x748] sm:$0xff]
    %v3691 = vld [vmem:[%s3 + $0x750] sm:$0xff]
    %v3692 = vld [vmem:[%s3 + $0x758] sm:$0xff]
    %v3693 = vld [vmem:[%s3 + $0x760] sm:$0xff]
    %v3694 = vld [vmem:[%s3 + $0x768] sm:$0xff]
    %v3695 = vld [vmem:[%s3 + $0x770] sm:$0xff]
    %v3696 = vld [vmem:[%s3 + $0x778] sm:$0xff]
    %v3697 = vld [vmem:[%s3 + $0x780] sm:$0xff]
    %v3698 = vld [vmem:[%s3 + $0x788] sm:$0xff]
    %v3699 = vld [vmem:[%s3 + $0x790] sm:$0xff]
    %v3700 = vld [vmem:[%s3 + $0x798] sm:$0xff]
    %v3701 = vld [vmem:[%s3 + $0x7a0] sm:$0xff]
    %v3702 = vld [vmem:[%s3 + $0x7a8] sm:$0xff]
    %v3703 = vld [vmem:[%s3 + $0x7b0] sm:$0xff]
    %v3704 = vld [vmem:[%s3 + $0x7b8] sm:$0xff]
    %v3705 = vld [vmem:[%s3 + $0x7c0] sm:$0xff]
    %v3706 = vld [vmem:[%s3 + $0x7c8] sm:$0xff]
    %v3707 = vld [vmem:[%s3 + $0x7d0] sm:$0xff]
    %v3708 = vld [vmem:[%s3 + $0x7d8] sm:$0xff]
    %v3709 = vld [vmem:[%s3 + $0x7e0] sm:$0xff]
    %v3710 = vld [vmem:[%s3 + $0x7e8] sm:$0xff]
    %v3711 = vld [vmem:[%s3 + $0x7f0] sm:$0xff]
    %v3712 = vld [vmem:[%s3 + $0x7f8] sm:$0xff]
    %v3713 = vld [vmem:[%s3 + $0x800] sm:$0xff]
    %v3714 = vld [vmem:[%s3 + $0x808] sm:$0xff]
    %v3715 = vld [vmem:[%s3 + $0x810] sm:$0xff]
    %v3716 = vld [vmem:[%s3 + $0x818] sm:$0xff]
    %v3717 = vld [vmem:[%s3 + $0x820] sm:$0xff]
    %v3718 = vld [vmem:[%s3 + $0x828] sm:$0xff]
    %v3719 = vld [vmem:[%s3 + $0x830] sm:$0xff]
    %v3720 = vld [vmem:[%s3 + $0x838] sm:$0xff]
    %v3721 = vld [vmem:[%s3 + $0x840] sm:$0xff]
    %v3722 = vld [vmem:[%s3 + $0x848] sm:$0xff]
    %v3723 = vld [vmem:[%s3 + $0x850] sm:$0xff]
    %v3724 = vld [vmem:[%s3 + $0x858] sm:$0xff]
    %v3725 = vld [vmem:[%s3 + $0x860] sm:$0xff]
    %v3726 = vld [vmem:[%s3 + $0x868] sm:$0xff]
    %v3727 = vld [vmem:[%s3 + $0x870] sm:$0xff]
    %v3728 = vld [vmem:[%s3 + $0x878] sm:$0xff]
    %v3729 = vld [vmem:[%s3 + $0x880] sm:$0xff]
    %v3730 = vld [vmem:[%s3 + $0x888] sm:$0xff]
    %v3731 = vld [vmem:[%s3 + $0x890] sm:$0xff]
    %v3732 = vld [vmem:[%s3 + $0x898] sm:$0xff]
    %v3733 = vld [vmem:[%s3 + $0x8a0] sm:$0xff]
    %v3734 = vld [vmem:[%s3 + $0x8a8] sm:$0xff]
    %v3735 = vld [vmem:[%s3 + $0x8b0] sm:$0xff]
    %v3736 = vld [vmem:[%s3 + $0x8b8] sm:$0xff]
    %v3737 = vld [vmem:[%s3 + $0x8c0] sm:$0xff]
    %v3738 = vld [vmem:[%s3 + $0x8c8] sm:$0xff]
    %v3739 = vld [vmem:[%s3 + $0x8d0] sm:$0xff]
    %v3740 = vld [vmem:[%s3 + $0x8d8] sm:$0xff]
    %v3741 = vld [vmem:[%s3 + $0x8e0] sm:$0xff]
    %v3742 = vld [vmem:[%s3 + $0x8e8] sm:$0xff]
    %v3743 = vld [vmem:[%s3 + $0x8f0] sm:$0xff]
    %v3744 = vld [vmem:[%s3 + $0x8f8] sm:$0xff]
    %v3745 = vld [vmem:[%s3 + $0x900] sm:$0xff]
    %v3746 = vld [vmem:[%s3 + $0x908] sm:$0xff]
    %v3747 = vld [vmem:[%s3 + $0x910] sm:$0xff]
    %v3748 = vld [vmem:[%s3 + $0x918] sm:$0xff]
    %v3749 = vld [vmem:[%s3 + $0x920] sm:$0xff]
    %v3750 = vld [vmem:[%s3 + $0x928] sm:$0xff]
    %v3751 = vld [vmem:[%s3 + $0x930] sm:$0xff]
    %v3752 = vld [vmem:[%s3 + $0x938] sm:$0xff]
    %v3753 = vld [vmem:[%s3 + $0x940] sm:$0xff]
    %v3754 = vld [vmem:[%s3 + $0x948] sm:$0xff]
    %v3755 = vld [vmem:[%s3 + $0x950] sm:$0xff]
    %v3756 = vld [vmem:[%s3 + $0x958] sm:$0xff]
    %v3757 = vld [vmem:[%s3 + $0x960] sm:$0xff]
    %v3758 = vld [vmem:[%s3 + $0x968] sm:$0xff]
    %v3759 = vld [vmem:[%s3 + $0x970] sm:$0xff]
    %v3760 = vld [vmem:[%s3 + $0x978] sm:$0xff]
    %v3761 = vld [vmem:[%s3 + $0x980] sm:$0xff]
    %v3762 = vld [vmem:[%s3 + $0x988] sm:$0xff]
    %v3763 = vld [vmem:[%s3 + $0x990] sm:$0xff]
    %v3764 = vld [vmem:[%s3 + $0x998] sm:$0xff]
    %v3765 = vld [vmem:[%s3 + $0x9a0] sm:$0xff]
    %v3766 = vld [vmem:[%s3 + $0x9a8] sm:$0xff]
    %v3767 = vld [vmem:[%s3 + $0x9b0] sm:$0xff]
    %v3768 = vld [vmem:[%s3 + $0x9b8] sm:$0xff]
    %v3769 = vld [vmem:[%s3 + $0x9c0] sm:$0xff]
    %v3770 = vld [vmem:[%s3 + $0x9c8] sm:$0xff]
    %v3771 = vld [vmem:[%s3 + $0x9d0] sm:$0xff]
    %v3772 = vld [vmem:[%s3 + $0x9d8] sm:$0xff]
    %v3773 = vld [vmem:[%s3 + $0x9e0] sm:$0xff]
    %v3774 = vld [vmem:[%s3 + $0x9e8] sm:$0xff]
    %v3775 = vld [vmem:[%s3 + $0x9f0] sm:$0xff]
    %v3776 = vld [vmem:[%s3 + $0x9f8] sm:$0xff]
    %v3777 = vld [vmem:[%s3 + $0xa00] sm:$0xff]
    %v3778 = vld [vmem:[%s3 + $0xa08] sm:$0xff]
    %v3779 = vld [vmem:[%s3 + $0xa10] sm:$0xff]
    %v3780 = vld [vmem:[%s3 + $0xa18] sm:$0xff]
    %v3781 = vld [vmem:[%s3 + $0xa20] sm:$0xff]
    %v3782 = vld [vmem:[%s3 + $0xa28] sm:$0xff]
    %v3783 = vld [vmem:[%s3 + $0xa30] sm:$0xff]
    %v3784 = vld [vmem:[%s3 + $0xa38] sm:$0xff]
    %v3785 = vld [vmem:[%s3 + $0xa40] sm:$0xff]
    %v3786 = vld [vmem:[%s3 + $0xa48] sm:$0xff]
    %v3787 = vld [vmem:[%s3 + $0xa50] sm:$0xff]
    %v3788 = vld [vmem:[%s3 + $0xa58] sm:$0xff]
    %v3789 = vld [vmem:[%s3 + $0xa60] sm:$0xff]
    %v3790 = vld [vmem:[%s3 + $0xa68] sm:$0xff]
    %v3791 = vld [vmem:[%s3 + $0xa70] sm:$0xff]
    %v3792 = vld [vmem:[%s3 + $0xa78] sm:$0xff]
    %v3793 = vld [vmem:[%s3 + $0xa80] sm:$0xff]
    %v3794 = vld [vmem:[%s3 + $0xa88] sm:$0xff]
    %v3795 = vld [vmem:[%s3 + $0xa90] sm:$0xff]
    %v3796 = vld [vmem:[%s3 + $0xa98] sm:$0xff]
    %v3797 = vld [vmem:[%s3 + $0xaa0] sm:$0xff]
    %v3798 = vld [vmem:[%s3 + $0xaa8] sm:$0xff]
    %v3799 = vld [vmem:[%s3 + $0xab0] sm:$0xff]
    %v3800 = vld [vmem:[%s3 + $0xab8] sm:$0xff]
    %v3801 = vld [vmem:[%s3 + $0xac0] sm:$0xff]
    %v3802 = vld [vmem:[%s3 + $0xac8] sm:$0xff]
    %v3803 = vld [vmem:[%s3 + $0xad0] sm:$0xff]
    %v3804 = vld [vmem:[%s3 + $0xad8] sm:$0xff]
    %v3805 = vld [vmem:[%s3 + $0xae0] sm:$0xff]
    %v3806 = vld [vmem:[%s3 + $0xae8] sm:$0xff]
    %v3807 = vld [vmem:[%s3 + $0xaf0] sm:$0xff]
    %v3808 = vld [vmem:[%s3 + $0xaf8] sm:$0xff]
    %v3809 = vld [vmem:[%s3 + $0xb00] sm:$0xff]
    %v3810 = vld [vmem:[%s3 + $0xb08] sm:$0xff]
    %v3811 = vld [vmem:[%s3 + $0xb10] sm:$0xff]
    %v3812 = vld [vmem:[%s3 + $0xb18] sm:$0xff]
    %v3813 = vld [vmem:[%s3 + $0xb20] sm:$0xff]
    %v3814 = vld [vmem:[%s3 + $0xb28] sm:$0xff]
    %v3815 = vld [vmem:[%s3 + $0xb30] sm:$0xff]
    %v3816 = vld [vmem:[%s3 + $0xb38] sm:$0xff]
    %v3817 = vld [vmem:[%s3 + $0xb40] sm:$0xff]
    %v3818 = vld [vmem:[%s3 + $0xb48] sm:$0xff]
    %v3819 = vld [vmem:[%s3 + $0xb50] sm:$0xff]
    %v3820 = vld [vmem:[%s3 + $0xb58] sm:$0xff]
    %v3821 = vld [vmem:[%s3 + $0xb60] sm:$0xff]
    %v3822 = vld [vmem:[%s3 + $0xb68] sm:$0xff]
    %v3823 = vld [vmem:[%s3 + $0xb70] sm:$0xff]
    %v3824 = vld [vmem:[%s3 + $0xb78] sm:$0xff]
    %v3825 = vld [vmem:[%s3 + $0xb80] sm:$0xff]
    %v3826 = vld [vmem:[%s3 + $0xb88] sm:$0xff]
    %v3827 = vld [vmem:[%s3 + $0xb90] sm:$0xff]
    %v3828 = vld [vmem:[%s3 + $0xb98] sm:$0xff]
    %v3829 = vld [vmem:[%s3 + $0xba0] sm:$0xff]
    %v3830 = vld [vmem:[%s3 + $0xba8] sm:$0xff]
    %v3831 = vld [vmem:[%s3 + $0xbb0] sm:$0xff]
    %v3832 = vld [vmem:[%s3 + $0xbb8] sm:$0xff]
    %v3833 = vld [vmem:[%s3 + $0xbc0] sm:$0xff]
    %v3834 = vld [vmem:[%s3 + $0xbc8] sm:$0xff]
    %v3835 = vld [vmem:[%s3 + $0xbd0] sm:$0xff]
    %v3836 = vld [vmem:[%s3 + $0xbd8] sm:$0xff]
    %v3837 = vld [vmem:[%s3 + $0xbe0] sm:$0xff]
    %v3838 = vld [vmem:[%s3 + $0xbe8] sm:$0xff]
    %v3839 = vld [vmem:[%s3 + $0xbf0] sm:$0xff]
    %v3840 = vld [vmem:[%s3 + $0xbf8] sm:$0xff]
    %v3841 = vld [vmem:[%s3 + $0xc00] sm:$0xff]
    %v3842 = vld [vmem:[%s3 + $0xc08] sm:$0xff]
    %v3843 = vld [vmem:[%s3 + $0xc10] sm:$0xff]
    %v3844 = vld [vmem:[%s3 + $0xc18] sm:$0xff]
    %v3845 = vld [vmem:[%s3 + $0xc20] sm:$0xff]
    %v3846 = vld [vmem:[%s3 + $0xc28] sm:$0xff]
    %v3847 = vld [vmem:[%s3 + $0xc30] sm:$0xff]
    %v3848 = vld [vmem:[%s3 + $0xc38] sm:$0xff]
    %v3849 = vld [vmem:[%s3 + $0xc40] sm:$0xff]
    %v3850 = vld [vmem:[%s3 + $0xc48] sm:$0xff]
    %v3851 = vld [vmem:[%s3 + $0xc50] sm:$0xff]
    %v3852 = vld [vmem:[%s3 + $0xc58] sm:$0xff]
    %v3853 = vld [vmem:[%s3 + $0xc60] sm:$0xff]
    %v3854 = vld [vmem:[%s3 + $0xc68] sm:$0xff]
    %v3855 = vld [vmem:[%s3 + $0xc70] sm:$0xff]
    %v3856 = vld [vmem:[%s3 + $0xc78] sm:$0xff]
    %v3857 = vld [vmem:[%s3 + $0xc80] sm:$0xff]
    %v3858 = vld [vmem:[%s3 + $0xc88] sm:$0xff]
    %v3859 = vld [vmem:[%s3 + $0xc90] sm:$0xff]
    %v3860 = vld [vmem:[%s3 + $0xc98] sm:$0xff]
    %v3861 = vld [vmem:[%s3 + $0xca0] sm:$0xff]
    %v3862 = vld [vmem:[%s3 + $0xca8] sm:$0xff]
    %v3863 = vld [vmem:[%s3 + $0xcb0] sm:$0xff]
    %v3864 = vld [vmem:[%s3 + $0xcb8] sm:$0xff]
    %v3865 = vld [vmem:[%s3 + $0xcc0] sm:$0xff]
    %v3866 = vld [vmem:[%s3 + $0xcc8] sm:$0xff]
    %v3867 = vld [vmem:[%s3 + $0xcd0] sm:$0xff]
    %v3868 = vld [vmem:[%s3 + $0xcd8] sm:$0xff]
    %v3869 = vld [vmem:[%s3 + $0xce0] sm:$0xff]
    %v3870 = vld [vmem:[%s3 + $0xce8] sm:$0xff]
    %v3871 = vld [vmem:[%s3 + $0xcf0] sm:$0xff]
    %v3872 = vld [vmem:[%s3 + $0xcf8] sm:$0xff]
    %v3873 = vld [vmem:[%s3 + $0xd00] sm:$0xff]
    %v3874 = vld [vmem:[%s3 + $0xd08] sm:$0xff]
    %v3875 = vld [vmem:[%s3 + $0xd10] sm:$0xff]
    %v3876 = vld [vmem:[%s3 + $0xd18] sm:$0xff]
    %v3877 = vld [vmem:[%s3 + $0xd20] sm:$0xff]
    %v3878 = vld [vmem:[%s3 + $0xd28] sm:$0xff]
    %v3879 = vld [vmem:[%s3 + $0xd30] sm:$0xff]
    %v3880 = vld [vmem:[%s3 + $0xd38] sm:$0xff]
    %v3881 = vld [vmem:[%s3 + $0xd40] sm:$0xff]
    %v3882 = vld [vmem:[%s3 + $0xd48] sm:$0xff]
    %v3883 = vld [vmem:[%s3 + $0xd50] sm:$0xff]
    %v3884 = vld [vmem:[%s3 + $0xd58] sm:$0xff]
    %v3885 = vld [vmem:[%s3 + $0xd60] sm:$0xff]
    %v3886 = vld [vmem:[%s3 + $0xd68] sm:$0xff]
    %v3887 = vld [vmem:[%s3 + $0xd70] sm:$0xff]
    %v3888 = vld [vmem:[%s3 + $0xd78] sm:$0xff]
    %v3889 = vld [vmem:[%s3 + $0xd80] sm:$0xff]
    %v3890 = vld [vmem:[%s3 + $0xd88] sm:$0xff]
    %v3891 = vld [vmem:[%s3 + $0xd90] sm:$0xff]
    %v3892 = vld [vmem:[%s3 + $0xd98] sm:$0xff]
    %v3893 = vld [vmem:[%s3 + $0xda0] sm:$0xff]
    %v3894 = vld [vmem:[%s3 + $0xda8] sm:$0xff]
    %v3895 = vld [vmem:[%s3 + $0xdb0] sm:$0xff]
    %v3896 = vld [vmem:[%s3 + $0xdb8] sm:$0xff]
    %v3897 = vld [vmem:[%s3 + $0xdc0] sm:$0xff]
    %v3898 = vld [vmem:[%s3 + $0xdc8] sm:$0xff]
    %v3899 = vld [vmem:[%s3 + $0xdd0] sm:$0xff]
    %v3900 = vld [vmem:[%s3 + $0xdd8] sm:$0xff]
    %v3901 = vld [vmem:[%s3 + $0xde0] sm:$0xff]
    %v3902 = vld [vmem:[%s3 + $0xde8] sm:$0xff]
    %v3903 = vld [vmem:[%s3 + $0xdf0] sm:$0xff]
    %v3904 = vld [vmem:[%s3 + $0xdf8] sm:$0xff]
    %v3905 = vld [vmem:[%s3 + $0xe00] sm:$0xff]
    %v3906 = vld [vmem:[%s3 + $0xe08] sm:$0xff]
    %v3907 = vld [vmem:[%s3 + $0xe10] sm:$0xff]
    %v3908 = vld [vmem:[%s3 + $0xe18] sm:$0xff]
    %v3909 = vld [vmem:[%s3 + $0xe20] sm:$0xff]
    %v3910 = vld [vmem:[%s3 + $0xe28] sm:$0xff]
    %v3911 = vld [vmem:[%s3 + $0xe30] sm:$0xff]
    %v3912 = vld [vmem:[%s3 + $0xe38] sm:$0xff]
    %v3913 = vld [vmem:[%s3 + $0xe40] sm:$0xff]
    %v3914 = vld [vmem:[%s3 + $0xe48] sm:$0xff]
    %v3915 = vld [vmem:[%s3 + $0xe50] sm:$0xff]
    %v3916 = vld [vmem:[%s3 + $0xe58] sm:$0xff]
    %v3917 = vld [vmem:[%s3 + $0xe60] sm:$0xff]
    %v3918 = vld [vmem:[%s3 + $0xe68] sm:$0xff]
    %v3919 = vld [vmem:[%s3 + $0xe70] sm:$0xff]
    %v3920 = vld [vmem:[%s3 + $0xe78] sm:$0xff]
    %v3921 = vld [vmem:[%s3 + $0xe80] sm:$0xff]
    %v3922 = vld [vmem:[%s3 + $0xe88] sm:$0xff]
    %v3923 = vld [vmem:[%s3 + $0xe90] sm:$0xff]
    %v3924 = vld [vmem:[%s3 + $0xe98] sm:$0xff]
    %v3925 = vld [vmem:[%s3 + $0xea0] sm:$0xff]
    %v3926 = vld [vmem:[%s3 + $0xea8] sm:$0xff]
    %v3927 = vld [vmem:[%s3 + $0xeb0] sm:$0xff]
    %v3928 = vld [vmem:[%s3 + $0xeb8] sm:$0xff]
    %v3929 = vld [vmem:[%s3 + $0xec0] sm:$0xff]
    %v3930 = vld [vmem:[%s3 + $0xec8] sm:$0xff]
    %v3931 = vld [vmem:[%s3 + $0xed0] sm:$0xff]
    %v3932 = vld [vmem:[%s3 + $0xed8] sm:$0xff]
    %v3933 = vld [vmem:[%s3 + $0xee0] sm:$0xff]
    %v3934 = vld [vmem:[%s3 + $0xee8] sm:$0xff]
    %v3935 = vld [vmem:[%s3 + $0xef0] sm:$0xff]
    %v3936 = vld [vmem:[%s3 + $0xef8] sm:$0xff]
    %v3937 = vld [vmem:[%s3 + $0xf00] sm:$0xff]
    %v3938 = vld [vmem:[%s3 + $0xf08] sm:$0xff]
    %v3939 = vld [vmem:[%s3 + $0xf10] sm:$0xff]
    %v3940 = vld [vmem:[%s3 + $0xf18] sm:$0xff]
    %v3941 = vld [vmem:[%s3 + $0xf20] sm:$0xff]
    %v3942 = vld [vmem:[%s3 + $0xf28] sm:$0xff]
    %v3943 = vld [vmem:[%s3 + $0xf30] sm:$0xff]
    %v3944 = vld [vmem:[%s3 + $0xf38] sm:$0xff]
    %v3945 = vld [vmem:[%s3 + $0xf40] sm:$0xff]
    %v3946 = vld [vmem:[%s3 + $0xf48] sm:$0xff]
    %v3947 = vld [vmem:[%s3 + $0xf50] sm:$0xff]
    %v3948 = vld [vmem:[%s3 + $0xf58] sm:$0xff]
    %v3949 = vld [vmem:[%s3 + $0xf60] sm:$0xff]
    %v3950 = vld [vmem:[%s3 + $0xf68] sm:$0xff]
    %v3951 = vld [vmem:[%s3 + $0xf70] sm:$0xff]
    %v3952 = vld [vmem:[%s3 + $0xf78] sm:$0xff]
    %v3953 = vld [vmem:[%s3 + $0xf80] sm:$0xff]
    %v3954 = vld [vmem:[%s3 + $0xf88] sm:$0xff]
    %v3955 = vld [vmem:[%s3 + $0xf90] sm:$0xff]
    %v3956 = vld [vmem:[%s3 + $0xf98] sm:$0xff]
    %v3957 = vld [vmem:[%s3 + $0xfa0] sm:$0xff]
    %v3958 = vld [vmem:[%s3 + $0xfa8] sm:$0xff]
    %v3959 = vld [vmem:[%s3 + $0xfb0] sm:$0xff]
    %v3960 = vld [vmem:[%s3 + $0xfb8] sm:$0xff]
    %v3961 = vld [vmem:[%s3 + $0xfc0] sm:$0xff]
    %v3962 = vld [vmem:[%s3 + $0xfc8] sm:$0xff]
    %v3963 = vld [vmem:[%s3 + $0xfd0] sm:$0xff]
    %v3964 = vld [vmem:[%s3 + $0xfd8] sm:$0xff]
    %v3965 = vld [vmem:[%s3 + $0xfe0] sm:$0xff]
    %v3966 = vld [vmem:[%s3 + $0xfe8] sm:$0xff]
    %v3967 = vld [vmem:[%s3 + $0xff0] sm:$0xff]
    %v3968 = vld [vmem:[%s3 + $0xff8] sm:$0xff]
    %v3969 = vld [vmem:[%s3 + $0x1000] sm:$0xff]
    %v3970 = vld [vmem:[%s3 + $0x1008] sm:$0xff]
    %v3971 = vld [vmem:[%s3 + $0x1010] sm:$0xff]
    %v3972 = vld [vmem:[%s3 + $0x1018] sm:$0xff]
    %v3973 = vld [vmem:[%s3 + $0x1020] sm:$0xff]
    %v3974 = vld [vmem:[%s3 + $0x1028] sm:$0xff]
    %v3975 = vld [vmem:[%s3 + $0x1030] sm:$0xff]
    %v3976 = vld [vmem:[%s3 + $0x1038] sm:$0xff]
    %v3977 = vld [vmem:[%s3 + $0x1040] sm:$0xff]
    %v3978 = vld [vmem:[%s3 + $0x1048] sm:$0xff]
    %v3979 = vld [vmem:[%s3 + $0x1050] sm:$0xff]
    %v3980 = vld [vmem:[%s3 + $0x1058] sm:$0xff]
    %v3981 = vld [vmem:[%s3 + $0x1060] sm:$0xff]
    %v3982 = vld [vmem:[%s3 + $0x1068] sm:$0xff]
    %v3983 = vld [vmem:[%s3 + $0x1070] sm:$0xff]
    %v3984 = vld [vmem:[%s3 + $0x1078] sm:$0xff]
    %v3985 = vld [vmem:[%s3 + $0x1080] sm:$0xff]
    %v3986 = vld [vmem:[%s3 + $0x1088] sm:$0xff]
    %v3987 = vld [vmem:[%s3 + $0x1090] sm:$0xff]
    %v3988 = vld [vmem:[%s3 + $0x1098] sm:$0xff]
    %v3989 = vld [vmem:[%s3 + $0x10a0] sm:$0xff]
    %v3990 = vld [vmem:[%s3 + $0x10a8] sm:$0xff]
    %v3991 = vld [vmem:[%s3 + $0x10b0] sm:$0xff]
    %v3992 = vld [vmem:[%s3 + $0x10b8] sm:$0xff]
    %v3993 = vld [vmem:[%s3 + $0x10c0] sm:$0xff]
    %v3994 = vld [vmem:[%s3 + $0x10c8] sm:$0xff]
    %v3995 = vld [vmem:[%s3 + $0x10d0] sm:$0xff]
    %v3996 = vld [vmem:[%s3 + $0x10d8] sm:$0xff]
    %v3997 = vld [vmem:[%s3 + $0x10e0] sm:$0xff]
    %v3998 = vld [vmem:[%s3 + $0x10e8] sm:$0xff]
    %v3999 = vld [vmem:[%s3 + $0x10f0] sm:$0xff]
    %v4000 = vld [vmem:[%s3 + $0x10f8] sm:$0xff]
    %v4001 = vld [vmem:[%s3 + $0x1100] sm:$0xff]
    %v4002 = vld [vmem:[%s3 + $0x1108] sm:$0xff]
    %v4003 = vld [vmem:[%s3 + $0x1110] sm:$0xff]
    %v4004 = vld [vmem:[%s3 + $0x1118] sm:$0xff]
    %v4005 = vld [vmem:[%s3 + $0x1120] sm:$0xff]
    %v4006 = vld [vmem:[%s3 + $0x1128] sm:$0xff]
    %v4007 = vld [vmem:[%s3 + $0x1130] sm:$0xff]
    %v4008 = vld [vmem:[%s3 + $0x1138] sm:$0xff]
    %v4009 = vld [vmem:[%s3 + $0x1140] sm:$0xff]
    %v4010 = vld [vmem:[%s3 + $0x1148] sm:$0xff]
    %v4011 = vld [vmem:[%s3 + $0x1150] sm:$0xff]
    %v4012 = vld [vmem:[%s3 + $0x1158] sm:$0xff]
    %v4013 = vld [vmem:[%s3 + $0x1160] sm:$0xff]
    %v4014 = vld [vmem:[%s3 + $0x1168] sm:$0xff]
    %v4015 = vld [vmem:[%s3 + $0x1170] sm:$0xff]
    %v4016 = vld [vmem:[%s3 + $0x1178] sm:$0xff]
    %v4017 = vld [vmem:[%s3 + $0x1180] sm:$0xff]
    %v4018 = vld [vmem:[%s3 + $0x1188] sm:$0xff]
    %v4019 = vld [vmem:[%s3 + $0x1190] sm:$0xff]
    %v4020 = vld [vmem:[%s3 + $0x1198] sm:$0xff]
    %v4021 = vld [vmem:[%s3 + $0x11a0] sm:$0xff]
    %v4022 = vld [vmem:[%s3 + $0x11a8] sm:$0xff]
    %v4023 = vld [vmem:[%s3 + $0x11b0] sm:$0xff]
    %v4024 = vld [vmem:[%s3 + $0x11b8] sm:$0xff]
    %v4025 = vld [vmem:[%s3 + $0x11c0] sm:$0xff]
    %v4026 = vld [vmem:[%s3 + $0x11c8] sm:$0xff]
    %v4027 = vld [vmem:[%s3 + $0x11d0] sm:$0xff]
    %v4028 = vld [vmem:[%s3 + $0x11d8] sm:$0xff]
    %v4029 = vld [vmem:[%s3 + $0x11e0] sm:$0xff]
    %v4030 = vld [vmem:[%s3 + $0x11e8] sm:$0xff]
    %v4031 = vld [vmem:[%s3 + $0x11f0] sm:$0xff]
    %v4032 = vld [vmem:[%s3 + $0x11f8] sm:$0xff]
    %v4033 = vld [vmem:[%s3 + $0x1200] sm:$0xff]
    %v4034 = vld [vmem:[%s3 + $0x1208] sm:$0xff]
    %v4035 = vld [vmem:[%s3 + $0x1210] sm:$0xff]
    %v4036 = vld [vmem:[%s3 + $0x1218] sm:$0xff]
    %v4037 = vld [vmem:[%s3 + $0x1220] sm:$0xff]
    %v4038 = vld [vmem:[%s3 + $0x1228] sm:$0xff]
    %v4039 = vld [vmem:[%s3 + $0x1230] sm:$0xff]
    %v4040 = vld [vmem:[%s3 + $0x1238] sm:$0xff]
    %v4041 = vld [vmem:[%s3 + $0x1240] sm:$0xff]
    %v4042 = vld [vmem:[%s3 + $0x1248] sm:$0xff]
    %v4043 = vld [vmem:[%s3 + $0x1250] sm:$0xff]
    %v4044 = vld [vmem:[%s3 + $0x1258] sm:$0xff]
    %v4045 = vld [vmem:[%s3 + $0x1260] sm:$0xff]
    %v4046 = vld [vmem:[%s3 + $0x1268] sm:$0xff]
    %v4047 = vld [vmem:[%s3 + $0x1270] sm:$0xff]
    %v4048 = vld [vmem:[%s3 + $0x1278] sm:$0xff]
    %v4049 = vld [vmem:[%s3 + $0x1280] sm:$0xff]
    %v4050 = vld [vmem:[%s3 + $0x1288] sm:$0xff]
    %v4051 = vld [vmem:[%s3 + $0x1290] sm:$0xff]
    %v4052 = vld [vmem:[%s3 + $0x1298] sm:$0xff]
    %v4053 = vld [vmem:[%s3 + $0x12a0] sm:$0xff]
    %v4054 = vld [vmem:[%s3 + $0x12a8] sm:$0xff]
    %v4055 = vld [vmem:[%s3 + $0x12b0] sm:$0xff]
    %v4056 = vld [vmem:[%s3 + $0x12b8] sm:$0xff]
    %v4057 = vld [vmem:[%s3 + $0x12c0] sm:$0xff]
    %v4058 = vld [vmem:[%s3 + $0x12c8] sm:$0xff]
    %v4059 = vld [vmem:[%s3 + $0x12d0] sm:$0xff]
    %v4060 = vld [vmem:[%s3 + $0x12d8] sm:$0xff]
    %v4061 = vld [vmem:[%s3 + $0x12e0] sm:$0xff]
    %v4062 = vld [vmem:[%s3 + $0x12e8] sm:$0xff]
    %v4063 = vld [vmem:[%s3 + $0x12f0] sm:$0xff]
    %v4064 = vld [vmem:[%s3 + $0x12f8] sm:$0xff]
    %v4065 = vld [vmem:[%s3 + $0x1300] sm:$0xff]
    %v4066 = vld [vmem:[%s3 + $0x1308] sm:$0xff]
    %v4067 = vld [vmem:[%s3 + $0x1310] sm:$0xff]
    %v4068 = vld [vmem:[%s3 + $0x1318] sm:$0xff]
    %v4069 = vld [vmem:[%s3 + $0x1320] sm:$0xff]
    %v4070 = vld [vmem:[%s3 + $0x1328] sm:$0xff]
    %v4071 = vld [vmem:[%s3 + $0x1330] sm:$0xff]
    %v4072 = vld [vmem:[%s3 + $0x1338] sm:$0xff]
    %v4073 = vld [vmem:[%s3 + $0x1340] sm:$0xff]
    %v4074 = vld [vmem:[%s3 + $0x1348] sm:$0xff]
    %v4075 = vld [vmem:[%s3 + $0x1350] sm:$0xff]
    %v4076 = vld [vmem:[%s3 + $0x1358] sm:$0xff]
    %v4077 = vld [vmem:[%s3 + $0x1360] sm:$0xff]
    %v4078 = vld [vmem:[%s3 + $0x1368] sm:$0xff]
    %v4079 = vld [vmem:[%s3 + $0x1370] sm:$0xff]
    %v4080 = vld [vmem:[%s3 + $0x1378] sm:$0xff]
    %v4081 = vld [vmem:[%s3 + $0x1380] sm:$0xff]
    %v4082 = vld [vmem:[%s3 + $0x1388] sm:$0xff]
    %v4083 = vld [vmem:[%s3 + $0x1390] sm:$0xff]
    %v4084 = vld [vmem:[%s3 + $0x1398] sm:$0xff]
    %v4085 = vld [vmem:[%s3 + $0x13a0] sm:$0xff]
    %v4086 = vld [vmem:[%s3 + $0x13a8] sm:$0xff]
    %v4087 = vld [vmem:[%s3 + $0x13b0] sm:$0xff]
    %v4088 = vld [vmem:[%s3 + $0x13b8] sm:$0xff]
    %v4089 = vld [vmem:[%s3 + $0x13c0] sm:$0xff]
    %v4090 = vld [vmem:[%s3 + $0x13c8] sm:$0xff]
    %v4091 = vld [vmem:[%s3 + $0x13d0] sm:$0xff]
    %v4092 = vld [vmem:[%s3 + $0x13d8] sm:$0xff]
    %v4093 = vld [vmem:[%s3 + $0x13e0] sm:$0xff]
    %v4094 = vld [vmem:[%s3 + $0x13e8] sm:$0xff]
    %v4095 = vld [vmem:[%s3 + $0x13f0] sm:$0xff]
    %v4096 = vld [vmem:[%s3 + $0x13f8] sm:$0xff]
    %v4097 = vld [vmem:[%s3 + $0x1400] sm:$0xff]
    %v4098 = vld [vmem:[%s3 + $0x1408] sm:$0xff]
    %v4099 = vld [vmem:[%s3 + $0x1410] sm:$0xff]
    %v4100 = vld [vmem:[%s3 + $0x1418] sm:$0xff]
    %v4101 = vld [vmem:[%s3 + $0x1420] sm:$0xff]
    %v4102 = vld [vmem:[%s3 + $0x1428] sm:$0xff]
    %v4103 = vld [vmem:[%s3 + $0x1430] sm:$0xff]
    %v4104 = vld [vmem:[%s3 + $0x1438] sm:$0xff]
    %v4105 = vld [vmem:[%s3 + $0x1440] sm:$0xff]
    %v4106 = vld [vmem:[%s3 + $0x1448] sm:$0xff]
    %v4107 = vld [vmem:[%s3 + $0x1450] sm:$0xff]
    %v4108 = vld [vmem:[%s3 + $0x1458] sm:$0xff]
    %v4109 = vld [vmem:[%s3 + $0x1460] sm:$0xff]
    %v4110 = vld [vmem:[%s3 + $0x1468] sm:$0xff]
    %v4111 = vld [vmem:[%s3 + $0x1470] sm:$0xff]
    %v4112 = vld [vmem:[%s3 + $0x1478] sm:$0xff]
    %v4113 = vld [vmem:[%s3 + $0x1480] sm:$0xff]
    %v4114 = vld [vmem:[%s3 + $0x1488] sm:$0xff]
    %v4115 = vld [vmem:[%s3 + $0x1490] sm:$0xff]
    %v4116 = vld [vmem:[%s3 + $0x1498] sm:$0xff]
    %v4117 = vld [vmem:[%s3 + $0x14a0] sm:$0xff]
    %v4118 = vld [vmem:[%s3 + $0x14a8] sm:$0xff]
    %v4119 = vld [vmem:[%s3 + $0x14b0] sm:$0xff]
    %v4120 = vld [vmem:[%s3 + $0x14b8] sm:$0xff]
    %v4121 = vld [vmem:[%s3 + $0x14c0] sm:$0xff]
    %v4122 = vld [vmem:[%s3 + $0x14c8] sm:$0xff]
    %v4123 = vld [vmem:[%s3 + $0x14d0] sm:$0xff]
    %v4124 = vld [vmem:[%s3 + $0x14d8] sm:$0xff]
    %v4125 = vld [vmem:[%s3 + $0x14e0] sm:$0xff]
    %v4126 = vld [vmem:[%s3 + $0x14e8] sm:$0xff]
    %v4127 = vld [vmem:[%s3 + $0x14f0] sm:$0xff]
    %v4128 = vld [vmem:[%s3 + $0x14f8] sm:$0xff]
    %v4129 = vld [vmem:[%s3 + $0x1500] sm:$0xff]
    %v4130 = vld [vmem:[%s3 + $0x1508] sm:$0xff]
    %v4131 = vld [vmem:[%s3 + $0x1510] sm:$0xff]
    %v4132 = vld [vmem:[%s3 + $0x1518] sm:$0xff]
    %v4133 = vld [vmem:[%s3 + $0x1520] sm:$0xff]
    %v4134 = vld [vmem:[%s3 + $0x1528] sm:$0xff]
    %v4135 = vld [vmem:[%s3 + $0x1530] sm:$0xff]
    %v4136 = vld [vmem:[%s3 + $0x1538] sm:$0xff]
    %v4137 = vld [vmem:[%s3 + $0x1540] sm:$0xff]
    %v4138 = vld [vmem:[%s3 + $0x1548] sm:$0xff]
    %v4139 = vld [vmem:[%s3 + $0x1550] sm:$0xff]
    %v4140 = vld [vmem:[%s3 + $0x1558] sm:$0xff]
    %v4141 = vld [vmem:[%s3 + $0x1560] sm:$0xff]
    %v4142 = vld [vmem:[%s3 + $0x1568] sm:$0xff]
    %v4143 = vld [vmem:[%s3 + $0x1570] sm:$0xff]
    %v4144 = vld [vmem:[%s3 + $0x1578] sm:$0xff]
    %v4145 = vld [vmem:[%s3 + $0x1580] sm:$0xff]
    %v4146 = vld [vmem:[%s3 + $0x1588] sm:$0xff]
    %v4147 = vld [vmem:[%s3 + $0x1590] sm:$0xff]
    %v4148 = vld [vmem:[%s3 + $0x1598] sm:$0xff]
    %v4149 = vld [vmem:[%s3 + $0x15a0] sm:$0xff]
    %v4150 = vld [vmem:[%s3 + $0x15a8] sm:$0xff]
    %v4151 = vld [vmem:[%s3 + $0x15b0] sm:$0xff]
    %v4152 = vld [vmem:[%s3 + $0x15b8] sm:$0xff]
    %v4153 = vld [vmem:[%s3 + $0x15c0] sm:$0xff]
    %v4154 = vld [vmem:[%s3 + $0x15c8] sm:$0xff]
    %v4155 = vld [vmem:[%s3 + $0x15d0] sm:$0xff]
    %v4156 = vld [vmem:[%s3 + $0x15d8] sm:$0xff]
    %v4157 = vld [vmem:[%s3 + $0x15e0] sm:$0xff]
    %v4158 = vld [vmem:[%s3 + $0x15e8] sm:$0xff]
    %v4159 = vld [vmem:[%s3 + $0x15f0] sm:$0xff]
    %v4160 = vld [vmem:[%s3 + $0x15f8] sm:$0xff]
    %v4161 = vld [vmem:[%s3 + $0x1600] sm:$0xff]
    %v4162 = vld [vmem:[%s3 + $0x1608] sm:$0xff]
    %v4163 = vld [vmem:[%s3 + $0x1610] sm:$0xff]
    %v4164 = vld [vmem:[%s3 + $0x1618] sm:$0xff]
    %v4165 = vld [vmem:[%s3 + $0x1620] sm:$0xff]
    %v4166 = vld [vmem:[%s3 + $0x1628] sm:$0xff]
    %v4167 = vld [vmem:[%s3 + $0x1630] sm:$0xff]
    %v4168 = vld [vmem:[%s3 + $0x1638] sm:$0xff]
    %v4169 = vld [vmem:[%s3 + $0x1640] sm:$0xff]
    %v4170 = vld [vmem:[%s3 + $0x1648] sm:$0xff]
    %v4171 = vld [vmem:[%s3 + $0x1650] sm:$0xff]
    %v4172 = vld [vmem:[%s3 + $0x1658] sm:$0xff]
    %v4173 = vld [vmem:[%s3 + $0x1660] sm:$0xff]
    %v4174 = vld [vmem:[%s3 + $0x1668] sm:$0xff]
    %v4175 = vld [vmem:[%s3 + $0x1670] sm:$0xff]
    %v4176 = vld [vmem:[%s3 + $0x1678] sm:$0xff]
    %v4177 = vld [vmem:[%s3 + $0x1680] sm:$0xff]
    %v4178 = vld [vmem:[%s3 + $0x1688] sm:$0xff]
    %v4179 = vld [vmem:[%s3 + $0x1690] sm:$0xff]
    %v4180 = vld [vmem:[%s3 + $0x1698] sm:$0xff]
    %v4181 = vld [vmem:[%s3 + $0x16a0] sm:$0xff]
    %v4182 = vld [vmem:[%s3 + $0x16a8] sm:$0xff]
    %v4183 = vld [vmem:[%s3 + $0x16b0] sm:$0xff]
    %v4184 = vld [vmem:[%s3 + $0x16b8] sm:$0xff]
    %v4185 = vld [vmem:[%s3 + $0x16c0] sm:$0xff]
    %v4186 = vld [vmem:[%s3 + $0x16c8] sm:$0xff]
    %v4187 = vld [vmem:[%s3 + $0x16d0] sm:$0xff]
    %v4188 = vld [vmem:[%s3 + $0x16d8] sm:$0xff]
    %v4189 = vld [vmem:[%s3 + $0x16e0] sm:$0xff]
    %v4190 = vld [vmem:[%s3 + $0x16e8] sm:$0xff]
    %v4191 = vld [vmem:[%s3 + $0x16f0] sm:$0xff]
    %v4192 = vld [vmem:[%s3 + $0x16f8] sm:$0xff]
    %v4193 = vld [vmem:[%s3 + $0x1700] sm:$0xff]
    %v4194 = vld [vmem:[%s3 + $0x1708] sm:$0xff]
    %v4195 = vld [vmem:[%s3 + $0x1710] sm:$0xff]
    %v4196 = vld [vmem:[%s3 + $0x1718] sm:$0xff]
    %v4197 = vld [vmem:[%s3 + $0x1720] sm:$0xff]
    %v4198 = vld [vmem:[%s3 + $0x1728] sm:$0xff]
    %v4199 = vld [vmem:[%s3 + $0x1730] sm:$0xff]
    %v4200 = vld [vmem:[%s3 + $0x1738] sm:$0xff]
    %v4201 = vld [vmem:[%s3 + $0x1740] sm:$0xff]
    %v4202 = vld [vmem:[%s3 + $0x1748] sm:$0xff]
    %v4203 = vld [vmem:[%s3 + $0x1750] sm:$0xff]
    %v4204 = vld [vmem:[%s3 + $0x1758] sm:$0xff]
    %v4205 = vld [vmem:[%s3 + $0x1760] sm:$0xff]
    %v4206 = vld [vmem:[%s3 + $0x1768] sm:$0xff]
    %v4207 = vld [vmem:[%s3 + $0x1770] sm:$0xff]
    %v4208 = vld [vmem:[%s3 + $0x1778] sm:$0xff]
    %v4209 = vld [vmem:[%s3 + $0x1780] sm:$0xff]
    %v4210 = vld [vmem:[%s3 + $0x1788] sm:$0xff]
    %v4211 = vld [vmem:[%s3 + $0x1790] sm:$0xff]
    %v4212 = vld [vmem:[%s3 + $0x1798] sm:$0xff]
    %v4213 = vld [vmem:[%s3 + $0x17a0] sm:$0xff]
    %v4214 = vld [vmem:[%s3 + $0x17a8] sm:$0xff]
    %v4215 = vld [vmem:[%s3 + $0x17b0] sm:$0xff]
    %v4216 = vld [vmem:[%s3 + $0x17b8] sm:$0xff]
    %v4217 = vld [vmem:[%s3 + $0x17c0] sm:$0xff]
    %v4218 = vld [vmem:[%s3 + $0x17c8] sm:$0xff]
    %v4219 = vld [vmem:[%s3 + $0x17d0] sm:$0xff]
    %v4220 = vld [vmem:[%s3 + $0x17d8] sm:$0xff]
    %v4221 = vld [vmem:[%s3 + $0x17e0] sm:$0xff]
    %v4222 = vld [vmem:[%s3 + $0x17e8] sm:$0xff]
    %v4223 = vld [vmem:[%s3 + $0x17f0] sm:$0xff]
    %v4224 = vld [vmem:[%s3 + $0x17f8] sm:$0xff]
    %v4225 = vld [vmem:[%s3 + $0x1800] sm:$0xff]
    %v4226 = vld [vmem:[%s3 + $0x1808] sm:$0xff]
    %v4227 = vld [vmem:[%s3 + $0x1810] sm:$0xff]
    %v4228 = vld [vmem:[%s3 + $0x1818] sm:$0xff]
    %v4229 = vld [vmem:[%s3 + $0x1820] sm:$0xff]
    %v4230 = vld [vmem:[%s3 + $0x1828] sm:$0xff]
    %v4231 = vld [vmem:[%s3 + $0x1830] sm:$0xff]
    %v4232 = vld [vmem:[%s3 + $0x1838] sm:$0xff]
    %v4233 = vld [vmem:[%s3 + $0x1840] sm:$0xff]
    %v4234 = vld [vmem:[%s3 + $0x1848] sm:$0xff]
    %v4235 = vld [vmem:[%s3 + $0x1850] sm:$0xff]
    %v4236 = vld [vmem:[%s3 + $0x1858] sm:$0xff]
    %v4237 = vld [vmem:[%s3 + $0x1860] sm:$0xff]
    %v4238 = vld [vmem:[%s3 + $0x1868] sm:$0xff]
    %v4239 = vld [vmem:[%s3 + $0x1870] sm:$0xff]
    %v4240 = vld [vmem:[%s3 + $0x1878] sm:$0xff]
    %v4241 = vld [vmem:[%s3 + $0x1880] sm:$0xff]
    %v4242 = vld [vmem:[%s3 + $0x1888] sm:$0xff]
    %v4243 = vld [vmem:[%s3 + $0x1890] sm:$0xff]
    %v4244 = vld [vmem:[%s3 + $0x1898] sm:$0xff]
    %v4245 = vld [vmem:[%s3 + $0x18a0] sm:$0xff]
    %v4246 = vld [vmem:[%s3 + $0x18a8] sm:$0xff]
    %v4247 = vld [vmem:[%s3 + $0x18b0] sm:$0xff]
    %v4248 = vld [vmem:[%s3 + $0x18b8] sm:$0xff]
    %v4249 = vld [vmem:[%s3 + $0x18c0] sm:$0xff]
    %v4250 = vld [vmem:[%s3 + $0x18c8] sm:$0xff]
    %v4251 = vld [vmem:[%s3 + $0x18d0] sm:$0xff]
    %v4252 = vld [vmem:[%s3 + $0x18d8] sm:$0xff]
    %v4253 = vld [vmem:[%s3 + $0x18e0] sm:$0xff]
    %v4254 = vld [vmem:[%s3 + $0x18e8] sm:$0xff]
    %v4255 = vld [vmem:[%s3 + $0x18f0] sm:$0xff]
    %v4256 = vld [vmem:[%s3 + $0x18f8] sm:$0xff]
    %v4257 = vld [vmem:[%s3 + $0x1900] sm:$0xff]
    %v4258 = vld [vmem:[%s3 + $0x1908] sm:$0xff]
    %v4259 = vld [vmem:[%s3 + $0x1910] sm:$0xff]
    %v4260 = vld [vmem:[%s3 + $0x1918] sm:$0xff]
    %v4261 = vld [vmem:[%s3 + $0x1920] sm:$0xff]
    %v4262 = vld [vmem:[%s3 + $0x1928] sm:$0xff]
    %v4263 = vld [vmem:[%s3 + $0x1930] sm:$0xff]
    %v4264 = vld [vmem:[%s3 + $0x1938] sm:$0xff]
    %v4265 = vld [vmem:[%s3 + $0x1940] sm:$0xff]
    %v4266 = vld [vmem:[%s3 + $0x1948] sm:$0xff]
    %v4267 = vld [vmem:[%s3 + $0x1950] sm:$0xff]
    %v4268 = vld [vmem:[%s3 + $0x1958] sm:$0xff]
    %v4269 = vld [vmem:[%s3 + $0x1960] sm:$0xff]
    %v4270 = vld [vmem:[%s3 + $0x1968] sm:$0xff]
    %v4271 = vld [vmem:[%s3 + $0x1970] sm:$0xff]
    %v4272 = vld [vmem:[%s3 + $0x1978] sm:$0xff]
    %v4273 = vld [vmem:[%s3 + $0x1980] sm:$0xff]
    %v4274 = vld [vmem:[%s3 + $0x1988] sm:$0xff]
    %v4275 = vld [vmem:[%s3 + $0x1990] sm:$0xff]
    %v4276 = vld [vmem:[%s3 + $0x1998] sm:$0xff]
    %v4277 = vld [vmem:[%s3 + $0x19a0] sm:$0xff]
    %v4278 = vld [vmem:[%s3 + $0x19a8] sm:$0xff]
    %v4279 = vld [vmem:[%s3 + $0x19b0] sm:$0xff]
    %v4280 = vld [vmem:[%s3 + $0x19b8] sm:$0xff]
    %v4281 = vld [vmem:[%s3 + $0x19c0] sm:$0xff]
    %v4282 = vld [vmem:[%s3 + $0x19c8] sm:$0xff]
    %v4283 = vld [vmem:[%s3 + $0x19d0] sm:$0xff]
    %v4284 = vld [vmem:[%s3 + $0x19d8] sm:$0xff]
    %v4285 = vld [vmem:[%s3 + $0x19e0] sm:$0xff]
    %v4286 = vld [vmem:[%s3 + $0x19e8] sm:$0xff]
    %v4287 = vld [vmem:[%s3 + $0x19f0] sm:$0xff]
    %v4288 = vld [vmem:[%s3 + $0x19f8] sm:$0xff]
    %v4289 = vld [vmem:[%s3 + $0x1a00] sm:$0xff]
    %v4290 = vld [vmem:[%s3 + $0x1a08] sm:$0xff]
    %v4291 = vld [vmem:[%s3 + $0x1a10] sm:$0xff]
    %v4292 = vld [vmem:[%s3 + $0x1a18] sm:$0xff]
    %v4293 = vld [vmem:[%s3 + $0x1a20] sm:$0xff]
    %v4294 = vld [vmem:[%s3 + $0x1a28] sm:$0xff]
    %v4295 = vld [vmem:[%s3 + $0x1a30] sm:$0xff]
    %v4296 = vld [vmem:[%s3 + $0x1a38] sm:$0xff]
    %v4297 = vld [vmem:[%s3 + $0x1a40] sm:$0xff]
    %v4298 = vld [vmem:[%s3 + $0x1a48] sm:$0xff]
    %v4299 = vld [vmem:[%s3 + $0x1a50] sm:$0xff]
    %v4300 = vld [vmem:[%s3 + $0x1a58] sm:$0xff]
    %v4301 = vld [vmem:[%s3 + $0x1a60] sm:$0xff]
    %v4302 = vld [vmem:[%s3 + $0x1a68] sm:$0xff]
    %v4303 = vld [vmem:[%s3 + $0x1a70] sm:$0xff]
    %v4304 = vld [vmem:[%s3 + $0x1a78] sm:$0xff]
    %v4305 = vld [vmem:[%s3 + $0x1a80] sm:$0xff]
    %v4306 = vld [vmem:[%s3 + $0x1a88] sm:$0xff]
    %v4307 = vld [vmem:[%s3 + $0x1a90] sm:$0xff]
    %v4308 = vld [vmem:[%s3 + $0x1a98] sm:$0xff]
    %v4309 = vld [vmem:[%s3 + $0x1aa0] sm:$0xff]
    %v4310 = vld [vmem:[%s3 + $0x1aa8] sm:$0xff]
    %v4311 = vld [vmem:[%s3 + $0x1ab0] sm:$0xff]
    %v4312 = vld [vmem:[%s3 + $0x1ab8] sm:$0xff]
    %v4313 = vld [vmem:[%s3 + $0x1ac0] sm:$0xff]
    %v4314 = vld [vmem:[%s3 + $0x1ac8] sm:$0xff]
    %v4315 = vld [vmem:[%s3 + $0x1ad0] sm:$0xff]
    %v4316 = vld [vmem:[%s3 + $0x1ad8] sm:$0xff]
    %v4317 = vld [vmem:[%s3 + $0x1ae0] sm:$0xff]
    %v4318 = vld [vmem:[%s3 + $0x1ae8] sm:$0xff]
    %v4319 = vld [vmem:[%s3 + $0x1af0] sm:$0xff]
    %v4320 = vld [vmem:[%s3 + $0x1af8] sm:$0xff]
    %v4321 = vld [vmem:[%s3 + $0x1b00] sm:$0xff]
    %v4322 = vld [vmem:[%s3 + $0x1b08] sm:$0xff]
    %v4323 = vld [vmem:[%s3 + $0x1b10] sm:$0xff]
    %v4324 = vld [vmem:[%s3 + $0x1b18] sm:$0xff]
    %v4325 = vld [vmem:[%s3 + $0x1b20] sm:$0xff]
    %v4326 = vld [vmem:[%s3 + $0x1b28] sm:$0xff]
    %v4327 = vld [vmem:[%s3 + $0x1b30] sm:$0xff]
    %v4328 = vld [vmem:[%s3 + $0x1b38] sm:$0xff]
    %v4329 = vld [vmem:[%s3 + $0x1b40] sm:$0xff]
    %v4330 = vld [vmem:[%s3 + $0x1b48] sm:$0xff]
    %v4331 = vld [vmem:[%s3 + $0x1b50] sm:$0xff]
    %v4332 = vld [vmem:[%s3 + $0x1b58] sm:$0xff]
    %v4333 = vld [vmem:[%s3 + $0x1b60] sm:$0xff]
    %v4334 = vld [vmem:[%s3 + $0x1b68] sm:$0xff]
    %v4335 = vld [vmem:[%s3 + $0x1b70] sm:$0xff]
    %v4336 = vld [vmem:[%s3 + $0x1b78] sm:$0xff]
    %v4337 = vld [vmem:[%s3 + $0x1b80] sm:$0xff]
    %v4338 = vld [vmem:[%s3 + $0x1b88] sm:$0xff]
    %v4339 = vld [vmem:[%s3 + $0x1b90] sm:$0xff]
    %v4340 = vld [vmem:[%s3 + $0x1b98] sm:$0xff]
    %v4341 = vld [vmem:[%s3 + $0x1ba0] sm:$0xff]
    %v4342 = vld [vmem:[%s3 + $0x1ba8] sm:$0xff]
    %v4343 = vld [vmem:[%s3 + $0x1bb0] sm:$0xff]
    %v4344 = vld [vmem:[%s3 + $0x1bb8] sm:$0xff]
    %v4345 = vld [vmem:[%s3 + $0x1bc0] sm:$0xff]
    %v4346 = vld [vmem:[%s3 + $0x1bc8] sm:$0xff]
    %v4347 = vld [vmem:[%s3 + $0x1bd0] sm:$0xff]
    %v4348 = vld [vmem:[%s3 + $0x1bd8] sm:$0xff]
    %v4349 = vld [vmem:[%s3 + $0x1be0] sm:$0xff]
    %v4350 = vld [vmem:[%s3 + $0x1be8] sm:$0xff]
    %v4351 = vld [vmem:[%s3 + $0x1bf0] sm:$0xff]
    %v4352 = vld [vmem:[%s3 + $0x1bf8] sm:$0xff]
    %v4353 = vld [vmem:[%s3 + $0x1c00] sm:$0xff]
    %v4354 = vld [vmem:[%s3 + $0x1c08] sm:$0xff]
    %v4355 = vld [vmem:[%s3 + $0x1c10] sm:$0xff]
    %v4356 = vld [vmem:[%s3 + $0x1c18] sm:$0xff]
    %v4357 = vld [vmem:[%s3 + $0x1c20] sm:$0xff]
    %v4358 = vld [vmem:[%s3 + $0x1c28] sm:$0xff]
    %v4359 = vld [vmem:[%s3 + $0x1c30] sm:$0xff]
    %v4360 = vld [vmem:[%s3 + $0x1c38] sm:$0xff]
    %v4361 = vld [vmem:[%s3 + $0x1c40] sm:$0xff]
    %v4362 = vld [vmem:[%s3 + $0x1c48] sm:$0xff]
    %v4363 = vld [vmem:[%s3 + $0x1c50] sm:$0xff]
    %v4364 = vld [vmem:[%s3 + $0x1c58] sm:$0xff]
    %v4365 = vld [vmem:[%s3 + $0x1c60] sm:$0xff]
    %v4366 = vld [vmem:[%s3 + $0x1c68] sm:$0xff]
    %v4367 = vld [vmem:[%s3 + $0x1c70] sm:$0xff]
    %v4368 = vld [vmem:[%s3 + $0x1c78] sm:$0xff]
    %v4369 = vld [vmem:[%s3 + $0x1c80] sm:$0xff]
    %v4370 = vld [vmem:[%s3 + $0x1c88] sm:$0xff]
    %v4371 = vld [vmem:[%s3 + $0x1c90] sm:$0xff]
    %v4372 = vld [vmem:[%s3 + $0x1c98] sm:$0xff]
    %v4373 = vld [vmem:[%s3 + $0x1ca0] sm:$0xff]
    %v4374 = vld [vmem:[%s3 + $0x1ca8] sm:$0xff]
    %v4375 = vld [vmem:[%s3 + $0x1cb0] sm:$0xff]
    %v4376 = vld [vmem:[%s3 + $0x1cb8] sm:$0xff]
    %v4377 = vld [vmem:[%s3 + $0x1cc0] sm:$0xff]
    %v4378 = vld [vmem:[%s3 + $0x1cc8] sm:$0xff]
    %v4379 = vld [vmem:[%s3 + $0x1cd0] sm:$0xff]
    %v4380 = vld [vmem:[%s3 + $0x1cd8] sm:$0xff]
    %v4381 = vld [vmem:[%s3 + $0x1ce0] sm:$0xff]
    %v4382 = vld [vmem:[%s3 + $0x1ce8] sm:$0xff]
    %v4383 = vld [vmem:[%s3 + $0x1cf0] sm:$0xff]
    %v4384 = vld [vmem:[%s3 + $0x1cf8] sm:$0xff]
    %v4385 = vld [vmem:[%s3 + $0x1d00] sm:$0xff]
    %v4386 = vld [vmem:[%s3 + $0x1d08] sm:$0xff]
    %v4387 = vld [vmem:[%s3 + $0x1d10] sm:$0xff]
    %v4388 = vld [vmem:[%s3 + $0x1d18] sm:$0xff]
    %v4389 = vld [vmem:[%s3 + $0x1d20] sm:$0xff]
    %v4390 = vld [vmem:[%s3 + $0x1d28] sm:$0xff]
    %v4391 = vld [vmem:[%s3 + $0x1d30] sm:$0xff]
    %v4392 = vld [vmem:[%s3 + $0x1d38] sm:$0xff]
    %v4393 = vld [vmem:[%s3 + $0x1d40] sm:$0xff]
    %v4394 = vld [vmem:[%s3 + $0x1d48] sm:$0xff]
    %v4395 = vld [vmem:[%s3 + $0x1d50] sm:$0xff]
    %v4396 = vld [vmem:[%s3 + $0x1d58] sm:$0xff]
    %v4397 = vld [vmem:[%s3 + $0x1d60] sm:$0xff]
    %v4398 = vld [vmem:[%s3 + $0x1d68] sm:$0xff]
    %v4399 = vld [vmem:[%s3 + $0x1d70] sm:$0xff]
    %v4400 = vld [vmem:[%s3 + $0x1d78] sm:$0xff]
    %v4401 = vld [vmem:[%s3 + $0x1d80] sm:$0xff]
    %v4402 = vld [vmem:[%s3 + $0x1d88] sm:$0xff]
    %v4403 = vld [vmem:[%s3 + $0x1d90] sm:$0xff]
    %v4404 = vld [vmem:[%s3 + $0x1d98] sm:$0xff]
    %v4405 = vld [vmem:[%s3 + $0x1da0] sm:$0xff]
    %v4406 = vld [vmem:[%s3 + $0x1da8] sm:$0xff]
    %v4407 = vld [vmem:[%s3 + $0x1db0] sm:$0xff]
    %v4408 = vld [vmem:[%s3 + $0x1db8] sm:$0xff]
    %v4409 = vld [vmem:[%s3 + $0x1dc0] sm:$0xff]
    %v4410 = vld [vmem:[%s3 + $0x1dc8] sm:$0xff]
    %v4411 = vld [vmem:[%s3 + $0x1dd0] sm:$0xff]
    %v4412 = vld [vmem:[%s3 + $0x1dd8] sm:$0xff]
    %v4413 = vld [vmem:[%s3 + $0x1de0] sm:$0xff]
    %v4414 = vld [vmem:[%s3 + $0x1de8] sm:$0xff]
    %v4415 = vld [vmem:[%s3 + $0x1df0] sm:$0xff]
    %v4416 = vld [vmem:[%s3 + $0x1df8] sm:$0xff]
    %v4417 = vld [vmem:[%s3 + $0x1e00] sm:$0xff]
    %v4418 = vld [vmem:[%s3 + $0x1e08] sm:$0xff]
    %v4419 = vld [vmem:[%s3 + $0x1e10] sm:$0xff]
    %v4420 = vld [vmem:[%s3 + $0x1e18] sm:$0xff]
    %v4421 = vld [vmem:[%s3 + $0x1e20] sm:$0xff]
    %v4422 = vld [vmem:[%s3 + $0x1e28] sm:$0xff]
    %v4423 = vld [vmem:[%s3 + $0x1e30] sm:$0xff]
    %v4424 = vld [vmem:[%s3 + $0x1e38] sm:$0xff]
    %v4425 = vld [vmem:[%s3 + $0x1e40] sm:$0xff]
    %v4426 = vld [vmem:[%s3 + $0x1e48] sm:$0xff]
    %v4427 = vld [vmem:[%s3 + $0x1e50] sm:$0xff]
    %v4428 = vld [vmem:[%s3 + $0x1e58] sm:$0xff]
    %v4429 = vld [vmem:[%s3 + $0x1e60] sm:$0xff]
    %v4430 = vld [vmem:[%s3 + $0x1e68] sm:$0xff]
    %v4431 = vld [vmem:[%s3 + $0x1e70] sm:$0xff]
    %v4432 = vld [vmem:[%s3 + $0x1e78] sm:$0xff]
    %v4433 = vld [vmem:[%s3 + $0x1e80] sm:$0xff]
    %v4434 = vld [vmem:[%s3 + $0x1e88] sm:$0xff]
    %v4435 = vld [vmem:[%s3 + $0x1e90] sm:$0xff]
    %v4436 = vld [vmem:[%s3 + $0x1e98] sm:$0xff]
    %v4437 = vld [vmem:[%s3 + $0x1ea0] sm:$0xff]
    %v4438 = vld [vmem:[%s3 + $0x1ea8] sm:$0xff]
    %v4439 = vld [vmem:[%s3 + $0x1eb0] sm:$0xff]
    %v4440 = vld [vmem:[%s3 + $0x1eb8] sm:$0xff]
    %v4441 = vld [vmem:[%s3 + $0x1ec0] sm:$0xff]
    %v4442 = vld [vmem:[%s3 + $0x1ec8] sm:$0xff]
    %v4443 = vld [vmem:[%s3 + $0x1ed0] sm:$0xff]
    %v4444 = vld [vmem:[%s3 + $0x1ed8] sm:$0xff]
    %v4445 = vld [vmem:[%s3 + $0x1ee0] sm:$0xff]
    %v4446 = vld [vmem:[%s3 + $0x1ee8] sm:$0xff]
    %v4447 = vld [vmem:[%s3 + $0x1ef0] sm:$0xff]
    %v4448 = vld [vmem:[%s3 + $0x1ef8] sm:$0xff]
    %v4449 = vld [vmem:[%s3 + $0x1f00] sm:$0xff]
    %v4450 = vld [vmem:[%s3 + $0x1f08] sm:$0xff]
    %v4451 = vld [vmem:[%s3 + $0x1f10] sm:$0xff]
    %v4452 = vld [vmem:[%s3 + $0x1f18] sm:$0xff]
    %v4453 = vld [vmem:[%s3 + $0x1f20] sm:$0xff]
    %v4454 = vld [vmem:[%s3 + $0x1f28] sm:$0xff]
    %v4455 = vld [vmem:[%s3 + $0x1f30] sm:$0xff]
    %v4456 = vld [vmem:[%s3 + $0x1f38] sm:$0xff]
    %v4457 = vld [vmem:[%s3 + $0x1f40] sm:$0xff]
    %v4458 = vld [vmem:[%s3 + $0x1f48] sm:$0xff]
    %v4459 = vld [vmem:[%s3 + $0x1f50] sm:$0xff]
    %v4460 = vld [vmem:[%s3 + $0x1f58] sm:$0xff]
    %v4461 = vld [vmem:[%s3 + $0x1f60] sm:$0xff]
    %v4462 = vld [vmem:[%s3 + $0x1f68] sm:$0xff]
    %v4463 = vld [vmem:[%s3 + $0x1f70] sm:$0xff]
    %v4464 = vld [vmem:[%s3 + $0x1f78] sm:$0xff]
    %v4465 = vld [vmem:[%s3 + $0x1f80] sm:$0xff]
    %v4466 = vld [vmem:[%s3 + $0x1f88] sm:$0xff]
    %v4467 = vld [vmem:[%s3 + $0x1f90] sm:$0xff]
    %v4468 = vld [vmem:[%s3 + $0x1f98] sm:$0xff]
    %v4469 = vld [vmem:[%s3 + $0x1fa0] sm:$0xff]
    %v4470 = vld [vmem:[%s3 + $0x1fa8] sm:$0xff]
    %v4471 = vld [vmem:[%s3 + $0x1fb0] sm:$0xff]
    %v4472 = vld [vmem:[%s3 + $0x1fb8] sm:$0xff]
    %v4473 = vld [vmem:[%s3 + $0x1fc0] sm:$0xff]
    %v4474 = vld [vmem:[%s3 + $0x1fc8] sm:$0xff]
    %v4475 = vld [vmem:[%s3 + $0x1fd0] sm:$0xff]
    %v4476 = vld [vmem:[%s3 + $0x1fd8] sm:$0xff]
    %v4477 = vld [vmem:[%s3 + $0x1fe0] sm:$0xff]
    %v4478 = vld [vmem:[%s3 + $0x1fe8] sm:$0xff]
    %v4479 = vld [vmem:[%s3 + $0x1ff0] sm:$0xff]
    %v4480 = vld [vmem:[%s3 + $0x1ff8] sm:$0xff]
    %v4481 = vld [vmem:[%s3 + $0x2000] sm:$0xff]
    %v4482 = vld [vmem:[%s3 + $0x2008] sm:$0xff]
    %v4483 = vld [vmem:[%s3 + $0x2010] sm:$0xff]
    %v4484 = vld [vmem:[%s3 + $0x2018] sm:$0xff]
    %v4485 = vld [vmem:[%s3 + $0x2020] sm:$0xff]
    %v4486 = vld [vmem:[%s3 + $0x2028] sm:$0xff]
    %v4487 = vld [vmem:[%s3 + $0x2030] sm:$0xff]
    %v4488 = vld [vmem:[%s3 + $0x2038] sm:$0xff]
    %v4489 = vld [vmem:[%s3 + $0x2040] sm:$0xff]
    %v4490 = vld [vmem:[%s3 + $0x2048] sm:$0xff]
    %v4491 = vld [vmem:[%s3 + $0x2050] sm:$0xff]
    %v4492 = vld [vmem:[%s3 + $0x2058] sm:$0xff]
    %v4493 = vld [vmem:[%s3 + $0x2060] sm:$0xff]
    %v4494 = vld [vmem:[%s3 + $0x2068] sm:$0xff]
    %v4495 = vld [vmem:[%s3 + $0x2070] sm:$0xff]
    %v4496 = vld [vmem:[%s3 + $0x2078] sm:$0xff]
    %v4497 = vld [vmem:[%s3 + $0x2080] sm:$0xff]
    %v4498 = vld [vmem:[%s3 + $0x2088] sm:$0xff]
    %v4499 = vld [vmem:[%s3 + $0x2090] sm:$0xff]
    %v4500 = vld [vmem:[%s3 + $0x2098] sm:$0xff]
    %v4501 = vld [vmem:[%s3 + $0x20a0] sm:$0xff]
    %v4502 = vld [vmem:[%s3 + $0x20a8] sm:$0xff]
    %v4503 = vld [vmem:[%s3 + $0x20b0] sm:$0xff]
    %v4504 = vld [vmem:[%s3 + $0x20b8] sm:$0xff]
    %v4505 = vld [vmem:[%s3 + $0x20c0] sm:$0xff]
    %v4506 = vld [vmem:[%s3 + $0x20c8] sm:$0xff]
    %v4507 = vld [vmem:[%s3 + $0x20d0] sm:$0xff]
    %v4508 = vld [vmem:[%s3 + $0x20d8] sm:$0xff]
    %v4509 = vld [vmem:[%s3 + $0x20e0] sm:$0xff]
    %v4510 = vld [vmem:[%s3 + $0x20e8] sm:$0xff]
    %v4511 = vld [vmem:[%s3 + $0x20f0] sm:$0xff]
    %v4512 = vld [vmem:[%s3 + $0x20f8] sm:$0xff]
    %v4513 = vld [vmem:[%s3 + $0x2100] sm:$0xff]
    %v4514 = vld [vmem:[%s3 + $0x2108] sm:$0xff]
    %v4515 = vld [vmem:[%s3 + $0x2110] sm:$0xff]
    %v4516 = vld [vmem:[%s3 + $0x2118] sm:$0xff]
    %v4517 = vld [vmem:[%s3 + $0x2120] sm:$0xff]
    %v4518 = vld [vmem:[%s3 + $0x2128] sm:$0xff]
    %v4519 = vld [vmem:[%s3 + $0x2130] sm:$0xff]
    %v4520 = vld [vmem:[%s3 + $0x2138] sm:$0xff]
    %v4521 = vld [vmem:[%s3 + $0x2140] sm:$0xff]
    %v4522 = vld [vmem:[%s3 + $0x2148] sm:$0xff]
    %v4523 = vld [vmem:[%s3 + $0x2150] sm:$0xff]
    %v4524 = vld [vmem:[%s3 + $0x2158] sm:$0xff]
    %v4525 = vld [vmem:[%s3 + $0x2160] sm:$0xff]
    %v4526 = vld [vmem:[%s3 + $0x2168] sm:$0xff]
    %v4527 = vld [vmem:[%s3 + $0x2170] sm:$0xff]
    %v4528 = vld [vmem:[%s3 + $0x2178] sm:$0xff]
    %v4529 = vld [vmem:[%s3 + $0x2180] sm:$0xff]
    %v4530 = vld [vmem:[%s3 + $0x2188] sm:$0xff]
    %v4531 = vld [vmem:[%s3 + $0x2190] sm:$0xff]
    %v4532 = vld [vmem:[%s3 + $0x2198] sm:$0xff]
    %v4533 = vld [vmem:[%s3 + $0x21a0] sm:$0xff]
    %v4534 = vld [vmem:[%s3 + $0x21a8] sm:$0xff]
    %v4535 = vld [vmem:[%s3 + $0x21b0] sm:$0xff]
    %v4536 = vld [vmem:[%s3 + $0x21b8] sm:$0xff]
    %v4537 = vld [vmem:[%s3 + $0x21c0] sm:$0xff]
    %v4538 = vld [vmem:[%s3 + $0x21c8] sm:$0xff]
    %v4539 = vld [vmem:[%s3 + $0x21d0] sm:$0xff]
    %v4540 = vld [vmem:[%s3 + $0x21d8] sm:$0xff]
    %v4541 = vld [vmem:[%s3 + $0x21e0] sm:$0xff]
    %v4542 = vld [vmem:[%s3 + $0x21e8] sm:$0xff]
    %v4543 = vld [vmem:[%s3 + $0x21f0] sm:$0xff]
    %v4544 = vld [vmem:[%s3 + $0x21f8] sm:$0xff]
    %v4545 = vld [vmem:[%s3 + $0x2200] sm:$0xff]
    %v4546 = vld [vmem:[%s3 + $0x2208] sm:$0xff]
    %v4547 = vld [vmem:[%s3 + $0x2210] sm:$0xff]
    %v4548 = vld [vmem:[%s3 + $0x2218] sm:$0xff]
    %v4549 = vld [vmem:[%s3 + $0x2220] sm:$0xff]
    %v4550 = vld [vmem:[%s3 + $0x2228] sm:$0xff]
    %v4551 = vld [vmem:[%s3 + $0x2230] sm:$0xff]
    %v4552 = vld [vmem:[%s3 + $0x2238] sm:$0xff]
    %v4553 = vld [vmem:[%s3 + $0x2240] sm:$0xff]
    %v4554 = vld [vmem:[%s3 + $0x2248] sm:$0xff]
    %v4555 = vld [vmem:[%s3 + $0x2250] sm:$0xff]
    %v4556 = vld [vmem:[%s3 + $0x2258] sm:$0xff]
    %v4557 = vld [vmem:[%s3 + $0x2260] sm:$0xff]
    %v4558 = vld [vmem:[%s3 + $0x2268] sm:$0xff]
    %v4559 = vld [vmem:[%s3 + $0x2270] sm:$0xff]
    %v4560 = vld [vmem:[%s3 + $0x2278] sm:$0xff]
    %v4561 = vld [vmem:[%s3 + $0x2280] sm:$0xff]
    %v4562 = vld [vmem:[%s3 + $0x2288] sm:$0xff]
    %v4563 = vld [vmem:[%s3 + $0x2290] sm:$0xff]
    %v4564 = vld [vmem:[%s3 + $0x2298] sm:$0xff]
    %v4565 = vld [vmem:[%s3 + $0x22a0] sm:$0xff]
    %v4566 = vld [vmem:[%s3 + $0x22a8] sm:$0xff]
    %v4567 = vld [vmem:[%s3 + $0x22b0] sm:$0xff]
    %v4568 = vld [vmem:[%s3 + $0x22b8] sm:$0xff]
    %v4569 = vld [vmem:[%s3 + $0x22c0] sm:$0xff]
    %v4570 = vld [vmem:[%s3 + $0x22c8] sm:$0xff]
    %v4571 = vld [vmem:[%s3 + $0x22d0] sm:$0xff]
    %v4572 = vld [vmem:[%s3 + $0x22d8] sm:$0xff]
    %v4573 = vld [vmem:[%s3 + $0x22e0] sm:$0xff]
    %v4574 = vld [vmem:[%s3 + $0x22e8] sm:$0xff]
    %v4575 = vld [vmem:[%s3 + $0x22f0] sm:$0xff]
    %v4576 = vld [vmem:[%s3 + $0x22f8] sm:$0xff]
    %v4577 = vld [vmem:[%s3 + $0x2300] sm:$0xff]
    %v4578 = vld [vmem:[%s3 + $0x2308] sm:$0xff]
    %v4579 = vld [vmem:[%s3 + $0x2310] sm:$0xff]
    %v4580 = vld [vmem:[%s3 + $0x2318] sm:$0xff]
    %v4581 = vld [vmem:[%s3 + $0x2320] sm:$0xff]
    %v4582 = vld [vmem:[%s3 + $0x2328] sm:$0xff]
    %v4583 = vld [vmem:[%s3 + $0x2330] sm:$0xff]
    %v4584 = vld [vmem:[%s3 + $0x2338] sm:$0xff]
    %v4585 = vld [vmem:[%s3 + $0x2340] sm:$0xff]
    %v4586 = vld [vmem:[%s3 + $0x2348] sm:$0xff]
    %v4587 = vld [vmem:[%s3 + $0x2350] sm:$0xff]
    %v4588 = vld [vmem:[%s3 + $0x2358] sm:$0xff]
    %v4589 = vld [vmem:[%s3 + $0x2360] sm:$0xff]
    %v4590 = vld [vmem:[%s3 + $0x2368] sm:$0xff]
    %v4591 = vld [vmem:[%s3 + $0x2370] sm:$0xff]
    %v4592 = vld [vmem:[%s3 + $0x2378] sm:$0xff]
    %v4593 = vld [vmem:[%s3 + $0x2380] sm:$0xff]
    %v4594 = vld [vmem:[%s3 + $0x2388] sm:$0xff]
    %v4595 = vld [vmem:[%s3 + $0x2390] sm:$0xff]
    %v4596 = vld [vmem:[%s3 + $0x2398] sm:$0xff]
    %v4597 = vld [vmem:[%s3 + $0x23a0] sm:$0xff]
    %v4598 = vld [vmem:[%s3 + $0x23a8] sm:$0xff]
    %v4599 = vld [vmem:[%s3 + $0x23b0] sm:$0xff]
    %v4600 = vld [vmem:[%s3 + $0x23b8] sm:$0xff]
    %v4601 = vld [vmem:[%s3 + $0x23c0] sm:$0xff]
    %v4602 = vld [vmem:[%s3 + $0x23c8] sm:$0xff]
    %v4603 = vld [vmem:[%s3 + $0x23d0] sm:$0xff]
    %v4604 = vld [vmem:[%s3 + $0x23d8] sm:$0xff]
    %v4605 = vld [vmem:[%s3 + $0x23e0] sm:$0xff]
    %v4606 = vld [vmem:[%s3 + $0x23e8] sm:$0xff]
    %v4607 = vld [vmem:[%s3 + $0x23f0] sm:$0xff]
    %v4608 = vld [vmem:[%s3 + $0x23f8] sm:$0xff]
    %v4609 = vld [vmem:[%s3 + $0x2400] sm:$0xff]
    %v4610 = vld [vmem:[%s3 + $0x2408] sm:$0xff]
    %v4611 = vld [vmem:[%s3 + $0x2410] sm:$0xff]
    %v4612 = vld [vmem:[%s3 + $0x2418] sm:$0xff]
    %v4613 = vld [vmem:[%s3 + $0x2420] sm:$0xff]
    %v4614 = vld [vmem:[%s3 + $0x2428] sm:$0xff]
    %v4615 = vld [vmem:[%s3 + $0x2430] sm:$0xff]
    %v4616 = vld [vmem:[%s3 + $0x2438] sm:$0xff]
    %v4617 = vld [vmem:[%s3 + $0x2440] sm:$0xff]
    %v4618 = vld [vmem:[%s3 + $0x2448] sm:$0xff]
    %v4619 = vld [vmem:[%s3 + $0x2450] sm:$0xff]
    %v4620 = vld [vmem:[%s3 + $0x2458] sm:$0xff]
    %v4621 = vld [vmem:[%s3 + $0x2460] sm:$0xff]
    %v4622 = vld [vmem:[%s3 + $0x2468] sm:$0xff]
    %v4623 = vld [vmem:[%s3 + $0x2470] sm:$0xff]
    %v4624 = vld [vmem:[%s3 + $0x2478] sm:$0xff]
    %v4625 = vld [vmem:[%s3 + $0x2480] sm:$0xff]
    %v4626 = vld [vmem:[%s3 + $0x2488] sm:$0xff]
    %v4627 = vld [vmem:[%s3 + $0x2490] sm:$0xff]
    %v4628 = vld [vmem:[%s3 + $0x2498] sm:$0xff]
    %v4629 = vld [vmem:[%s3 + $0x24a0] sm:$0xff]
    %v4630 = vld [vmem:[%s3 + $0x24a8] sm:$0xff]
    %v4631 = vld [vmem:[%s3 + $0x24b0] sm:$0xff]
    %v4632 = vld [vmem:[%s3 + $0x24b8] sm:$0xff]
    %v4633 = vld [vmem:[%s3 + $0x24c0] sm:$0xff]
    %v4634 = vld [vmem:[%s3 + $0x24c8] sm:$0xff]
    %v4635 = vld [vmem:[%s3 + $0x24d0] sm:$0xff]
    %v4636 = vld [vmem:[%s3 + $0x24d8] sm:$0xff]
    %v4637 = vld [vmem:[%s3 + $0x24e0] sm:$0xff]
    %v4638 = vld [vmem:[%s3 + $0x24e8] sm:$0xff]
    %v4639 = vld [vmem:[%s3 + $0x24f0] sm:$0xff]
    %v4640 = vld [vmem:[%s3 + $0x24f8] sm:$0xff]
    %v4641 = vld [vmem:[%s3 + $0x2500] sm:$0xff]
    %v4642 = vld [vmem:[%s3 + $0x2508] sm:$0xff]
    %v4643 = vld [vmem:[%s3 + $0x2510] sm:$0xff]
    %v4644 = vld [vmem:[%s3 + $0x2518] sm:$0xff]
    %v4645 = vld [vmem:[%s3 + $0x2520] sm:$0xff]
    %v4646 = vld [vmem:[%s3 + $0x2528] sm:$0xff]
    %v4647 = vld [vmem:[%s3 + $0x2530] sm:$0xff]
    %v4648 = vld [vmem:[%s3 + $0x2538] sm:$0xff]
    %v4649 = vld [vmem:[%s3 + $0x2540] sm:$0xff]
    %v4650 = vld [vmem:[%s3 + $0x2548] sm:$0xff]
    %v4651 = vld [vmem:[%s3 + $0x2550] sm:$0xff]
    %v4652 = vld [vmem:[%s3 + $0x2558] sm:$0xff]
    %v4653 = vld [vmem:[%s3 + $0x2560] sm:$0xff]
    %v4654 = vld [vmem:[%s3 + $0x2568] sm:$0xff]
    %v4655 = vld [vmem:[%s3 + $0x2570] sm:$0xff]
    %v4656 = vld [vmem:[%s3 + $0x2578] sm:$0xff]
    %v4657 = vld [vmem:[%s3 + $0x2580] sm:$0xff]
    %v4658 = vld [vmem:[%s3 + $0x2588] sm:$0xff]
    %v4659 = vld [vmem:[%s3 + $0x2590] sm:$0xff]
    %v4660 = vld [vmem:[%s3 + $0x2598] sm:$0xff]
    %v4661 = vld [vmem:[%s3 + $0x25a0] sm:$0xff]
    %v4662 = vld [vmem:[%s3 + $0x25a8] sm:$0xff]
    %v4663 = vld [vmem:[%s3 + $0x25b0] sm:$0xff]
    %v4664 = vld [vmem:[%s3 + $0x25b8] sm:$0xff]
    %v4665 = vld [vmem:[%s3 + $0x25c0] sm:$0xff]
    %v4666 = vld [vmem:[%s3 + $0x25c8] sm:$0xff]
    %v4667 = vld [vmem:[%s3 + $0x25d0] sm:$0xff]
    %v4668 = vld [vmem:[%s3 + $0x25d8] sm:$0xff]
    %v4669 = vld [vmem:[%s3 + $0x25e0] sm:$0xff]
    %v4670 = vld [vmem:[%s3 + $0x25e8] sm:$0xff]
    %v4671 = vld [vmem:[%s3 + $0x25f0] sm:$0xff]
    %v4672 = vld [vmem:[%s3 + $0x25f8] sm:$0xff]
    %v4673 = vld [vmem:[%s3 + $0x2600] sm:$0xff]
    %v4674 = vld [vmem:[%s3 + $0x2608] sm:$0xff]
    %v4675 = vld [vmem:[%s3 + $0x2610] sm:$0xff]
    %v4676 = vld [vmem:[%s3 + $0x2618] sm:$0xff]
    %v4677 = vld [vmem:[%s3 + $0x2620] sm:$0xff]
    %v4678 = vld [vmem:[%s3 + $0x2628] sm:$0xff]
    %v4679 = vld [vmem:[%s3 + $0x2630] sm:$0xff]
    %v4680 = vld [vmem:[%s3 + $0x2638] sm:$0xff]
    %v4681 = vld [vmem:[%s3 + $0x2640] sm:$0xff]
    %v4682 = vld [vmem:[%s3 + $0x2648] sm:$0xff]
    %v4683 = vld [vmem:[%s3 + $0x2650] sm:$0xff]
    %v4684 = vld [vmem:[%s3 + $0x2658] sm:$0xff]
    %v4685 = vld [vmem:[%s3 + $0x2660] sm:$0xff]
    %v4686 = vld [vmem:[%s3 + $0x2668] sm:$0xff]
    %v4687 = vld [vmem:[%s3 + $0x2670] sm:$0xff]
    %v4688 = vld [vmem:[%s3 + $0x2678] sm:$0xff]
    %v4689 = vld [vmem:[%s3 + $0x2680] sm:$0xff]
    %v4690 = vld [vmem:[%s3 + $0x2688] sm:$0xff]
    %v4691 = vld [vmem:[%s3 + $0x2690] sm:$0xff]
    %v4692 = vld [vmem:[%s3 + $0x2698] sm:$0xff]
    %v4693 = vld [vmem:[%s3 + $0x26a0] sm:$0xff]
    %v4694 = vld [vmem:[%s3 + $0x26a8] sm:$0xff]
    %v4695 = vld [vmem:[%s3 + $0x26b0] sm:$0xff]
    %v4696 = vld [vmem:[%s3 + $0x26b8] sm:$0xff]
    %v4697 = vld [vmem:[%s3 + $0x26c0] sm:$0xff]
    %v4698 = vld [vmem:[%s3 + $0x26c8] sm:$0xff]
    %v4699 = vld [vmem:[%s3 + $0x26d0] sm:$0xff]
    %v4700 = vld [vmem:[%s3 + $0x26d8] sm:$0xff]
    %v4701 = vld [vmem:[%s3 + $0x26e0] sm:$0xff]
    %v4702 = vld [vmem:[%s3 + $0x26e8] sm:$0xff]
    %v4703 = vld [vmem:[%s3 + $0x26f0] sm:$0xff]
    %v4704 = vld [vmem:[%s3 + $0x26f8] sm:$0xff]
    %v4705 = vld [vmem:[%s3 + $0x2700] sm:$0xff]
    %v4706 = vld [vmem:[%s3 + $0x2708] sm:$0xff]
    %v4707 = vld [vmem:[%s3 + $0x2710] sm:$0xff]
    %v4708 = vld [vmem:[%s3 + $0x2718] sm:$0xff]
    %v4709 = vld [vmem:[%s3 + $0x2720] sm:$0xff]
    %v4710 = vld [vmem:[%s3 + $0x2728] sm:$0xff]
    %v4711 = vld [vmem:[%s3 + $0x2730] sm:$0xff]
    %v4712 = vld [vmem:[%s3 + $0x2738] sm:$0xff]
    %v4713 = vld [vmem:[%s3 + $0x2740] sm:$0xff]
    %v4714 = vld [vmem:[%s3 + $0x2748] sm:$0xff]
    %v4715 = vld [vmem:[%s3 + $0x2750] sm:$0xff]
    %v4716 = vld [vmem:[%s3 + $0x2758] sm:$0xff]
    %v4717 = vld [vmem:[%s3 + $0x2760] sm:$0xff]
    %v4718 = vld [vmem:[%s3 + $0x2768] sm:$0xff]
    %v4719 = vld [vmem:[%s3 + $0x2770] sm:$0xff]
    %v4720 = vld [vmem:[%s3 + $0x2778] sm:$0xff]
    %v4721 = vld [vmem:[%s3 + $0x2780] sm:$0xff]
    %v4722 = vld [vmem:[%s3 + $0x2788] sm:$0xff]
    %v4723 = vld [vmem:[%s3 + $0x2790] sm:$0xff]
    %v4724 = vld [vmem:[%s3 + $0x2798] sm:$0xff]
    %v4725 = vld [vmem:[%s3 + $0x27a0] sm:$0xff]
    %v4726 = vld [vmem:[%s3 + $0x27a8] sm:$0xff]
    %v4727 = vld [vmem:[%s3 + $0x27b0] sm:$0xff]
    %v4728 = vld [vmem:[%s3 + $0x27b8] sm:$0xff]
    %v4729 = vld [vmem:[%s3 + $0x27c0] sm:$0xff]
    %v4730 = vld [vmem:[%s3 + $0x27c8] sm:$0xff]
    %v4731 = vld [vmem:[%s3 + $0x27d0] sm:$0xff]
    %v4732 = vld [vmem:[%s3 + $0x27d8] sm:$0xff]
    %v4733 = vld [vmem:[%s3 + $0x27e0] sm:$0xff]
    %v4734 = vld [vmem:[%s3 + $0x27e8] sm:$0xff]
    %v4735 = vld [vmem:[%s3 + $0x27f0] sm:$0xff]
    %v4736 = vld [vmem:[%s3 + $0x27f8] sm:$0xff]
    %v4737 = vld [vmem:[%s3 + $0x2800] sm:$0xff]
    %v4738 = vld [vmem:[%s3 + $0x2808] sm:$0xff]
    %v4739 = vld [vmem:[%s3 + $0x2810] sm:$0xff]
    %v4740 = vld [vmem:[%s3 + $0x2818] sm:$0xff]
    %v4741 = vld [vmem:[%s3 + $0x2820] sm:$0xff]
    %v4742 = vld [vmem:[%s3 + $0x2828] sm:$0xff]
    %v4743 = vld [vmem:[%s3 + $0x2830] sm:$0xff]
    %v4744 = vld [vmem:[%s3 + $0x2838] sm:$0xff]
    %v4745 = vld [vmem:[%s3 + $0x2840] sm:$0xff]
    %v4746 = vld [vmem:[%s3 + $0x2848] sm:$0xff]
    %v4747 = vld [vmem:[%s3 + $0x2850] sm:$0xff]
    %v4748 = vld [vmem:[%s3 + $0x2858] sm:$0xff]
    %v4749 = vld [vmem:[%s3 + $0x2860] sm:$0xff]
    %v4750 = vld [vmem:[%s3 + $0x2868] sm:$0xff]
    %v4751 = vld [vmem:[%s3 + $0x2870] sm:$0xff]
    %v4752 = vld [vmem:[%s3 + $0x2878] sm:$0xff]
    %v4753 = vld [vmem:[%s3 + $0x2880] sm:$0xff]
    %v4754 = vld [vmem:[%s3 + $0x2888] sm:$0xff]
    %v4755 = vld [vmem:[%s3 + $0x2890] sm:$0xff]
    %v4756 = vld [vmem:[%s3 + $0x2898] sm:$0xff]
    %v4757 = vld [vmem:[%s3 + $0x28a0] sm:$0xff]
    %v4758 = vld [vmem:[%s3 + $0x28a8] sm:$0xff]
    %v4759 = vld [vmem:[%s3 + $0x28b0] sm:$0xff]
    %v4760 = vld [vmem:[%s3 + $0x28b8] sm:$0xff]
    %v4761 = vld [vmem:[%s3 + $0x28c0] sm:$0xff]
    %v4762 = vld [vmem:[%s3 + $0x28c8] sm:$0xff]
    %v4763 = vld [vmem:[%s3 + $0x28d0] sm:$0xff]
    %v4764 = vld [vmem:[%s3 + $0x28d8] sm:$0xff]
    %v4765 = vld [vmem:[%s3 + $0x28e0] sm:$0xff]
    %v4766 = vld [vmem:[%s3 + $0x28e8] sm:$0xff]
    %v4767 = vld [vmem:[%s3 + $0x28f0] sm:$0xff]
    %v4768 = vld [vmem:[%s3 + $0x28f8] sm:$0xff]
    %v4769 = vld [vmem:[%s3 + $0x2900] sm:$0xff]
    %v4770 = vld [vmem:[%s3 + $0x2908] sm:$0xff]
    %v4771 = vld [vmem:[%s3 + $0x2910] sm:$0xff]
    %v4772 = vld [vmem:[%s3 + $0x2918] sm:$0xff]
    %v4773 = vld [vmem:[%s3 + $0x2920] sm:$0xff]
    %v4774 = vld [vmem:[%s3 + $0x2928] sm:$0xff]
    %v4775 = vld [vmem:[%s3 + $0x2930] sm:$0xff]
    %v4776 = vld [vmem:[%s3 + $0x2938] sm:$0xff]
    %v4777 = vld [vmem:[%s3 + $0x2940] sm:$0xff]
    %v4778 = vld [vmem:[%s3 + $0x2948] sm:$0xff]
    %v4779 = vld [vmem:[%s3 + $0x2950] sm:$0xff]
    %v4780 = vld [vmem:[%s3 + $0x2958] sm:$0xff]
    %v4781 = vld [vmem:[%s3 + $0x2960] sm:$0xff]
    %v4782 = vld [vmem:[%s3 + $0x2968] sm:$0xff]
    %v4783 = vld [vmem:[%s3 + $0x2970] sm:$0xff]
    %v4784 = vld [vmem:[%s3 + $0x2978] sm:$0xff]
    %v4785 = vld [vmem:[%s3 + $0x2980] sm:$0xff]
    %v4786 = vld [vmem:[%s3 + $0x2988] sm:$0xff]
    %v4787 = vld [vmem:[%s3 + $0x2990] sm:$0xff]
    %v4788 = vld [vmem:[%s3 + $0x2998] sm:$0xff]
    %v4789 = vld [vmem:[%s3 + $0x29a0] sm:$0xff]
    %v4790 = vld [vmem:[%s3 + $0x29a8] sm:$0xff]
    %v4791 = vld [vmem:[%s3 + $0x29b0] sm:$0xff]
    %v4792 = vld [vmem:[%s3 + $0x29b8] sm:$0xff]
    %v4793 = vld [vmem:[%s3 + $0x29c0] sm:$0xff]
    %v4794 = vld [vmem:[%s3 + $0x29c8] sm:$0xff]
    %v4795 = vld [vmem:[%s3 + $0x29d0] sm:$0xff]
    %v4796 = vld [vmem:[%s3 + $0x29d8] sm:$0xff]
    %v4797 = vld [vmem:[%s3 + $0x29e0] sm:$0xff]
    %v4798 = vld [vmem:[%s3 + $0x29e8] sm:$0xff]
    %v4799 = vld [vmem:[%s3 + $0x29f0] sm:$0xff]
    %v4800 = vld [vmem:[%s3 + $0x29f8] sm:$0xff]
    %v4801 = vld [vmem:[%s3 + $0x2a00] sm:$0xff]
    %v4802 = vld [vmem:[%s3 + $0x2a08] sm:$0xff]
    %v4803 = vld [vmem:[%s3 + $0x2a10] sm:$0xff]
    %v4804 = vld [vmem:[%s3 + $0x2a18] sm:$0xff]
    %v4805 = vld [vmem:[%s3 + $0x2a20] sm:$0xff]
    %v4806 = vld [vmem:[%s3 + $0x2a28] sm:$0xff]
    %v4807 = vld [vmem:[%s3 + $0x2a30] sm:$0xff]
    %v4808 = vld [vmem:[%s3 + $0x2a38] sm:$0xff]
    %v4809 = vld [vmem:[%s3 + $0x2a40] sm:$0xff]
    %v4810 = vld [vmem:[%s3 + $0x2a48] sm:$0xff]
    %v4811 = vld [vmem:[%s3 + $0x2a50] sm:$0xff]
    %v4812 = vld [vmem:[%s3 + $0x2a58] sm:$0xff]
    %v4813 = vld [vmem:[%s3 + $0x2a60] sm:$0xff]
    %v4814 = vld [vmem:[%s3 + $0x2a68] sm:$0xff]
    %v4815 = vld [vmem:[%s3 + $0x2a70] sm:$0xff]
    %v4816 = vld [vmem:[%s3 + $0x2a78] sm:$0xff]
    %v4817 = vld [vmem:[%s3 + $0x2a80] sm:$0xff]
    %v4818 = vld [vmem:[%s3 + $0x2a88] sm:$0xff]
    %v4819 = vld [vmem:[%s3 + $0x2a90] sm:$0xff]
    %v4820 = vld [vmem:[%s3 + $0x2a98] sm:$0xff]
    %v4821 = vld [vmem:[%s3 + $0x2aa0] sm:$0xff]
    %v4822 = vld [vmem:[%s3 + $0x2aa8] sm:$0xff]
    %v4823 = vld [vmem:[%s3 + $0x2ab0] sm:$0xff]
    %v4824 = vld [vmem:[%s3 + $0x2ab8] sm:$0xff]
    %v4825 = vld [vmem:[%s3 + $0x2ac0] sm:$0xff]
    %v4826 = vld [vmem:[%s3 + $0x2ac8] sm:$0xff]
    %v4827 = vld [vmem:[%s3 + $0x2ad0] sm:$0xff]
    %v4828 = vld [vmem:[%s3 + $0x2ad8] sm:$0xff]
    %v4829 = vld [vmem:[%s3 + $0x2ae0] sm:$0xff]
    %v4830 = vld [vmem:[%s3 + $0x2ae8] sm:$0xff]
    %v4831 = vld [vmem:[%s3 + $0x2af0] sm:$0xff]
    %v4832 = vld [vmem:[%s3 + $0x2af8] sm:$0xff]
    %v4833 = vld [vmem:[%s3 + $0x2b00] sm:$0xff]
    %v4834 = vld [vmem:[%s3 + $0x2b08] sm:$0xff]
    %v4835 = vld [vmem:[%s3 + $0x2b10] sm:$0xff]
    %v4836 = vld [vmem:[%s3 + $0x2b18] sm:$0xff]
    %v4837 = vld [vmem:[%s3 + $0x2b20] sm:$0xff]
    %v4838 = vld [vmem:[%s3 + $0x2b28] sm:$0xff]
    %v4839 = vld [vmem:[%s3 + $0x2b30] sm:$0xff]
    %v4840 = vld [vmem:[%s3 + $0x2b38] sm:$0xff]
    %v4841 = vld [vmem:[%s3 + $0x2b40] sm:$0xff]
    %v4842 = vld [vmem:[%s3 + $0x2b48] sm:$0xff]
    %v4843 = vld [vmem:[%s3 + $0x2b50] sm:$0xff]
    %v4844 = vld [vmem:[%s3 + $0x2b58] sm:$0xff]
    %v4845 = vld [vmem:[%s3 + $0x2b60] sm:$0xff]
    %v4846 = vld [vmem:[%s3 + $0x2b68] sm:$0xff]
    %v4847 = vld [vmem:[%s3 + $0x2b70] sm:$0xff]
    %v4848 = vld [vmem:[%s3 + $0x2b78] sm:$0xff]
    %v4849 = vld [vmem:[%s3 + $0x2b80] sm:$0xff]
    %v4850 = vld [vmem:[%s3 + $0x2b88] sm:$0xff]
    %v4851 = vld [vmem:[%s3 + $0x2b90] sm:$0xff]
    %v4852 = vld [vmem:[%s3 + $0x2b98] sm:$0xff]
    %v4853 = vld [vmem:[%s3 + $0x2ba0] sm:$0xff]
    %v4854 = vld [vmem:[%s3 + $0x2ba8] sm:$0xff]
    %v4855 = vld [vmem:[%s3 + $0x2bb0] sm:$0xff]
    %v4856 = vld [vmem:[%s3 + $0x2bb8] sm:$0xff]
    %v4857 = vld [vmem:[%s3 + $0x2bc0] sm:$0xff]
    %v4858 = vld [vmem:[%s3 + $0x2bc8] sm:$0xff]
    %v4859 = vld [vmem:[%s3 + $0x2bd0] sm:$0xff]
    %v4860 = vld [vmem:[%s3 + $0x2bd8] sm:$0xff]
    %v4861 = vld [vmem:[%s3 + $0x2be0] sm:$0xff]
    %v4862 = vld [vmem:[%s3 + $0x2be8] sm:$0xff]
    %v4863 = vld [vmem:[%s3 + $0x2bf0] sm:$0xff]
    %v4864 = vld [vmem:[%s3 + $0x2bf8] sm:$0xff]
    %v4865 = vld [vmem:[%s3 + $0x2c00] sm:$0xff]
    %v4866 = vld [vmem:[%s3 + $0x2c08] sm:$0xff]
    %v4867 = vld [vmem:[%s3 + $0x2c10] sm:$0xff]
    %v4868 = vld [vmem:[%s3 + $0x2c18] sm:$0xff]
    %v4869 = vld [vmem:[%s3 + $0x2c20] sm:$0xff]
    %v4870 = vld [vmem:[%s3 + $0x2c28] sm:$0xff]
    %v4871 = vld [vmem:[%s3 + $0x2c30] sm:$0xff]
    %v4872 = vld [vmem:[%s3 + $0x2c38] sm:$0xff]
    %v4873 = vld [vmem:[%s3 + $0x2c40] sm:$0xff]
    %v4874 = vld [vmem:[%s3 + $0x2c48] sm:$0xff]
    %v4875 = vld [vmem:[%s3 + $0x2c50] sm:$0xff]
    %v4876 = vld [vmem:[%s3 + $0x2c58] sm:$0xff]
    %v4877 = vld [vmem:[%s3 + $0x2c60] sm:$0xff]
    %v4878 = vld [vmem:[%s3 + $0x2c68] sm:$0xff]
    %v4879 = vld [vmem:[%s3 + $0x2c70] sm:$0xff]
    %v4880 = vld [vmem:[%s3 + $0x2c78] sm:$0xff]
    %v4881 = vld [vmem:[%s3 + $0x2c80] sm:$0xff]
    %v4882 = vld [vmem:[%s3 + $0x2c88] sm:$0xff]
    %v4883 = vld [vmem:[%s3 + $0x2c90] sm:$0xff]
    %v4884 = vld [vmem:[%s3 + $0x2c98] sm:$0xff]
    %v4885 = vld [vmem:[%s3 + $0x2ca0] sm:$0xff]
    %v4886 = vld [vmem:[%s3 + $0x2ca8] sm:$0xff]
    %v4887 = vld [vmem:[%s3 + $0x2cb0] sm:$0xff]
    %v4888 = vld [vmem:[%s3 + $0x2cb8] sm:$0xff]
    %v4889 = vld [vmem:[%s3 + $0x2cc0] sm:$0xff]
    %v4890 = vld [vmem:[%s3 + $0x2cc8] sm:$0xff]
    %v4891 = vld [vmem:[%s3 + $0x2cd0] sm:$0xff]
    %v4892 = vld [vmem:[%s3 + $0x2cd8] sm:$0xff]
    %v4893 = vld [vmem:[%s3 + $0x2ce0] sm:$0xff]
    %v4894 = vld [vmem:[%s3 + $0x2ce8] sm:$0xff]
    %v4895 = vld [vmem:[%s3 + $0x2cf0] sm:$0xff]
    %v4896 = vld [vmem:[%s3 + $0x2cf8] sm:$0xff]
    %v4897 = vld [vmem:[%s3 + $0x2d00] sm:$0xff]
    %v4898 = vld [vmem:[%s3 + $0x2d08] sm:$0xff]
    %v4899 = vld [vmem:[%s3 + $0x2d10] sm:$0xff]
    %v4900 = vld [vmem:[%s3 + $0x2d18] sm:$0xff]
    %v4901 = vld [vmem:[%s3 + $0x2d20] sm:$0xff]
    %v4902 = vld [vmem:[%s3 + $0x2d28] sm:$0xff]
    %v4903 = vld [vmem:[%s3 + $0x2d30] sm:$0xff]
    %v4904 = vld [vmem:[%s3 + $0x2d38] sm:$0xff]
    %v4905 = vld [vmem:[%s3 + $0x2d40] sm:$0xff]
    %v4906 = vld [vmem:[%s3 + $0x2d48] sm:$0xff]
    %v4907 = vld [vmem:[%s3 + $0x2d50] sm:$0xff]
    %v4908 = vld [vmem:[%s3 + $0x2d58] sm:$0xff]
    %v4909 = vld [vmem:[%s3 + $0x2d60] sm:$0xff]
    %v4910 = vld [vmem:[%s3 + $0x2d68] sm:$0xff]
    %v4911 = vld [vmem:[%s3 + $0x2d70] sm:$0xff]
    %v4912 = vld [vmem:[%s3 + $0x2d78] sm:$0xff]
    %v4913 = vld [vmem:[%s3 + $0x2d80] sm:$0xff]
    %v4914 = vld [vmem:[%s3 + $0x2d88] sm:$0xff]
    %v4915 = vld [vmem:[%s3 + $0x2d90] sm:$0xff]
    %v4916 = vld [vmem:[%s3 + $0x2d98] sm:$0xff]
    %v4917 = vld [vmem:[%s3 + $0x2da0] sm:$0xff]
    %v4918 = vld [vmem:[%s3 + $0x2da8] sm:$0xff]
    %v4919 = vld [vmem:[%s3 + $0x2db0] sm:$0xff]
    %v4920 = vld [vmem:[%s3 + $0x2db8] sm:$0xff]
    %v4921 = vld [vmem:[%s3 + $0x2dc0] sm:$0xff]
    %v4922 = vld [vmem:[%s3 + $0x2dc8] sm:$0xff]
    %v4923 = vld [vmem:[%s3 + $0x2dd0] sm:$0xff]
    %v4924 = vld [vmem:[%s3 + $0x2dd8] sm:$0xff]
    %v4925 = vld [vmem:[%s3 + $0x2de0] sm:$0xff]
    %v4926 = vld [vmem:[%s3 + $0x2de8] sm:$0xff]
    %v4927 = vld [vmem:[%s3 + $0x2df0] sm:$0xff]
    %v4928 = vld [vmem:[%s3 + $0x2df8] sm:$0xff]
    %v4929 = vld [vmem:[%s3 + $0x2e00] sm:$0xff]
    %v4930 = vld [vmem:[%s3 + $0x2e08] sm:$0xff]
    %v4931 = vld [vmem:[%s3 + $0x2e10] sm:$0xff]
    %v4932 = vld [vmem:[%s3 + $0x2e18] sm:$0xff]
    %v4933 = vld [vmem:[%s3 + $0x2e20] sm:$0xff]
    %v4934 = vld [vmem:[%s3 + $0x2e28] sm:$0xff]
    %v4935 = vld [vmem:[%s3 + $0x2e30] sm:$0xff]
    %v4936 = vld [vmem:[%s3 + $0x2e38] sm:$0xff]
    %v4937 = vld [vmem:[%s3 + $0x2e40] sm:$0xff]
    %v4938 = vld [vmem:[%s3 + $0x2e48] sm:$0xff]
    %v4939 = vld [vmem:[%s3 + $0x2e50] sm:$0xff]
    %v4940 = vld [vmem:[%s3 + $0x2e58] sm:$0xff]
    %v4941 = vld [vmem:[%s3 + $0x2e60] sm:$0xff]
    %v4942 = vld [vmem:[%s3 + $0x2e68] sm:$0xff]
    %v4943 = vld [vmem:[%s3 + $0x2e70] sm:$0xff]
    %v4944 = vld [vmem:[%s3 + $0x2e78] sm:$0xff]
    %v4945 = vld [vmem:[%s3 + $0x2e80] sm:$0xff]
    %v4946 = vld [vmem:[%s3 + $0x2e88] sm:$0xff]
    %v4947 = vld [vmem:[%s3 + $0x2e90] sm:$0xff]
    %v4948 = vld [vmem:[%s3 + $0x2e98] sm:$0xff]
    %v4949 = vld [vmem:[%s3 + $0x2ea0] sm:$0xff]
    %v4950 = vld [vmem:[%s3 + $0x2ea8] sm:$0xff]
    %v4951 = vld [vmem:[%s3 + $0x2eb0] sm:$0xff]
    %v4952 = vld [vmem:[%s3 + $0x2eb8] sm:$0xff]
    %v4953 = vld [vmem:[%s3 + $0x2ec0] sm:$0xff]
    %v4954 = vld [vmem:[%s3 + $0x2ec8] sm:$0xff]
    %v4955 = vld [vmem:[%s3 + $0x2ed0] sm:$0xff]
    %v4956 = vld [vmem:[%s3 + $0x2ed8] sm:$0xff]
    %v4957 = vld [vmem:[%s3 + $0x2ee0] sm:$0xff]
    %v4958 = vld [vmem:[%s3 + $0x2ee8] sm:$0xff]
    %v4959 = vld [vmem:[%s3 + $0x2ef0] sm:$0xff]
    %v4960 = vld [vmem:[%s3 + $0x2ef8] sm:$0xff]
    %v4961 = vld [vmem:[%s3 + $0x2f00] sm:$0xff]
    %v4962 = vld [vmem:[%s3 + $0x2f08] sm:$0xff]
    %v4963 = vld [vmem:[%s3 + $0x2f10] sm:$0xff]
    %v4964 = vld [vmem:[%s3 + $0x2f18] sm:$0xff]
    %v4965 = vld [vmem:[%s3 + $0x2f20] sm:$0xff]
    %v4966 = vld [vmem:[%s3 + $0x2f28] sm:$0xff]
    %v4967 = vld [vmem:[%s3 + $0x2f30] sm:$0xff]
    %v4968 = vld [vmem:[%s3 + $0x2f38] sm:$0xff]
    %v4969 = vld [vmem:[%s3 + $0x2f40] sm:$0xff]
    %v4970 = vld [vmem:[%s3 + $0x2f48] sm:$0xff]
    %v4971 = vld [vmem:[%s3 + $0x2f50] sm:$0xff]
    %v4972 = vld [vmem:[%s3 + $0x2f58] sm:$0xff]
    %v4973 = vld [vmem:[%s3 + $0x2f60] sm:$0xff]
    %v4974 = vld [vmem:[%s3 + $0x2f68] sm:$0xff]
    %v4975 = vld [vmem:[%s3 + $0x2f70] sm:$0xff]
    %v4976 = vld [vmem:[%s3 + $0x2f78] sm:$0xff]
    %v4977 = vld [vmem:[%s3 + $0x2f80] sm:$0xff]
    %v4978 = vld [vmem:[%s3 + $0x2f88] sm:$0xff]
    %v4979 = vld [vmem:[%s3 + $0x2f90] sm:$0xff]
    %v4980 = vld [vmem:[%s3 + $0x2f98] sm:$0xff]
    %v4981 = vld [vmem:[%s3 + $0x2fa0] sm:$0xff]
    %v4982 = vld [vmem:[%s3 + $0x2fa8] sm:$0xff]
    %v4983 = vld [vmem:[%s3 + $0x2fb0] sm:$0xff]
    %v4984 = vld [vmem:[%s3 + $0x2fb8] sm:$0xff]
    %v4985 = vld [vmem:[%s3 + $0x2fc0] sm:$0xff]
    %v4986 = vld [vmem:[%s3 + $0x2fc8] sm:$0xff]
    %v4987 = vld [vmem:[%s3 + $0x2fd0] sm:$0xff]
    %v4988 = vld [vmem:[%s3 + $0x2fd8] sm:$0xff]
    %v4989 = vld [vmem:[%s3 + $0x2fe0] sm:$0xff]
    %v4990 = vld [vmem:[%s3 + $0x2fe8] sm:$0xff]
    %v4991 = vld [vmem:[%s3 + $0x2ff0] sm:$0xff]
    %v4992 = vld [vmem:[%s3 + $0x2ff8] sm:$0xff]
    %v4993 = vld [vmem:[%s3 + $0x3000] sm:$0xff]
    %v4994 = vld [vmem:[%s3 + $0x3008] sm:$0xff]
    %v4995 = vld [vmem:[%s3 + $0x3010] sm:$0xff]
    %v4996 = vld [vmem:[%s3 + $0x3018] sm:$0xff]
    %v4997 = vld [vmem:[%s3 + $0x3020] sm:$0xff]
    %v4998 = vld [vmem:[%s3 + $0x3028] sm:$0xff]
    %v4999 = vld [vmem:[%s3 + $0x3030] sm:$0xff]
    %v5000 = vld [vmem:[%s3 + $0x3038] sm:$0xff]
    %v5001 = vld [vmem:[%s3 + $0x3040] sm:$0xff]
    %v5002 = vld [vmem:[%s3 + $0x3048] sm:$0xff]
    %v5003 = vld [vmem:[%s3 + $0x3050] sm:$0xff]
    %v5004 = vld [vmem:[%s3 + $0x3058] sm:$0xff]
    %v5005 = vld [vmem:[%s3 + $0x3060] sm:$0xff]
    %v5006 = vld [vmem:[%s3 + $0x3068] sm:$0xff]
    %v5007 = vld [vmem:[%s3 + $0x3070] sm:$0xff]
    %v5008 = vld [vmem:[%s3 + $0x3078] sm:$0xff]
    %v5009 = vld [vmem:[%s3 + $0x3080] sm:$0xff]
    %v5010 = vld [vmem:[%s3 + $0x3088] sm:$0xff]
    %v5011 = vld [vmem:[%s3 + $0x3090] sm:$0xff]
    %v5012 = vld [vmem:[%s3 + $0x3098] sm:$0xff]
    %v5013 = vld [vmem:[%s3 + $0x30a0] sm:$0xff]
    %v5014 = vld [vmem:[%s3 + $0x30a8] sm:$0xff]
    %v5015 = vld [vmem:[%s3 + $0x30b0] sm:$0xff]
    %v5016 = vld [vmem:[%s3 + $0x30b8] sm:$0xff]
    %v5017 = vld [vmem:[%s3 + $0x30c0] sm:$0xff]
    %v5018 = vld [vmem:[%s3 + $0x30c8] sm:$0xff]
    %v5019 = vld [vmem:[%s3 + $0x30d0] sm:$0xff]
    %v5020 = vld [vmem:[%s3 + $0x30d8] sm:$0xff]
    %v5021 = vld [vmem:[%s3 + $0x30e0] sm:$0xff]
    %v5022 = vld [vmem:[%s3 + $0x30e8] sm:$0xff]
    %v5023 = vld [vmem:[%s3 + $0x30f0] sm:$0xff]
    %v5024 = vld [vmem:[%s3 + $0x30f8] sm:$0xff]
    %v5025 = vld [vmem:[%s3 + $0x3100] sm:$0xff]
    %v5026 = vld [vmem:[%s3 + $0x3108] sm:$0xff]
    %v5027 = vld [vmem:[%s3 + $0x3110] sm:$0xff]
    %v5028 = vld [vmem:[%s3 + $0x3118] sm:$0xff]
    %v5029 = vld [vmem:[%s3 + $0x3120] sm:$0xff]
    %v5030 = vld [vmem:[%s3 + $0x3128] sm:$0xff]
    %v5031 = vld [vmem:[%s3 + $0x3130] sm:$0xff]
    %v5032 = vld [vmem:[%s3 + $0x3138] sm:$0xff]
    %v5033 = vld [vmem:[%s3 + $0x3140] sm:$0xff]
    %v5034 = vld [vmem:[%s3 + $0x3148] sm:$0xff]
    %v5035 = vld [vmem:[%s3 + $0x3150] sm:$0xff]
    %v5036 = vld [vmem:[%s3 + $0x3158] sm:$0xff]
    %v5037 = vld [vmem:[%s3 + $0x3160] sm:$0xff]
    %v5038 = vld [vmem:[%s3 + $0x3168] sm:$0xff]
    %v5039 = vld [vmem:[%s3 + $0x3170] sm:$0xff]
    %v5040 = vld [vmem:[%s3 + $0x3178] sm:$0xff]
    %v5041 = vld [vmem:[%s3 + $0x3180] sm:$0xff]
    %v5042 = vld [vmem:[%s3 + $0x3188] sm:$0xff]
    %v5043 = vld [vmem:[%s3 + $0x3190] sm:$0xff]
    %v5044 = vld [vmem:[%s3 + $0x3198] sm:$0xff]
    %v5045 = vld [vmem:[%s3 + $0x31a0] sm:$0xff]
    %v5046 = vld [vmem:[%s3 + $0x31a8] sm:$0xff]
    %v5047 = vld [vmem:[%s3 + $0x31b0] sm:$0xff]
    %v5048 = vld [vmem:[%s3 + $0x31b8] sm:$0xff]
    %v5049 = vld [vmem:[%s3 + $0x31c0] sm:$0xff]
    %v5050 = vld [vmem:[%s3 + $0x31c8] sm:$0xff]
    %v5051 = vld [vmem:[%s3 + $0x31d0] sm:$0xff]
    %v5052 = vld [vmem:[%s3 + $0x31d8] sm:$0xff]
    %v5053 = vld [vmem:[%s3 + $0x31e0] sm:$0xff]
    %v5054 = vld [vmem:[%s3 + $0x31e8] sm:$0xff]
    %v5055 = vld [vmem:[%s3 + $0x31f0] sm:$0xff]
    %v5056 = vld [vmem:[%s3 + $0x31f8] sm:$0xff]
    %v5057 = vld [vmem:[%s3 + $0x3200] sm:$0xff]
    %v5058 = vld [vmem:[%s3 + $0x3208] sm:$0xff]
    %v5059 = vld [vmem:[%s3 + $0x3210] sm:$0xff]
    %v5060 = vld [vmem:[%s3 + $0x3218] sm:$0xff]
    %v5061 = vld [vmem:[%s3 + $0x3220] sm:$0xff]
    %v5062 = vld [vmem:[%s3 + $0x3228] sm:$0xff]
    %v5063 = vld [vmem:[%s3 + $0x3230] sm:$0xff]
    %v5064 = vld [vmem:[%s3 + $0x3238] sm:$0xff]
    %v5065 = vld [vmem:[%s3 + $0x3240] sm:$0xff]
    %v5066 = vld [vmem:[%s3 + $0x3248] sm:$0xff]
    %v5067 = vld [vmem:[%s3 + $0x3250] sm:$0xff]
    %v5068 = vld [vmem:[%s3 + $0x3258] sm:$0xff]
    %v5069 = vld [vmem:[%s3 + $0x3260] sm:$0xff]
    %v5070 = vld [vmem:[%s3 + $0x3268] sm:$0xff]
    %v5071 = vld [vmem:[%s3 + $0x3270] sm:$0xff]
    %v5072 = vld [vmem:[%s3 + $0x3278] sm:$0xff]
    %v5073 = vld [vmem:[%s3 + $0x3280] sm:$0xff]
    %v5074 = vld [vmem:[%s3 + $0x3288] sm:$0xff]
    %v5075 = vld [vmem:[%s3 + $0x3290] sm:$0xff]
    %v5076 = vld [vmem:[%s3 + $0x3298] sm:$0xff]
    %v5077 = vld [vmem:[%s3 + $0x32a0] sm:$0xff]
    %v5078 = vld [vmem:[%s3 + $0x32a8] sm:$0xff]
    %v5079 = vld [vmem:[%s3 + $0x32b0] sm:$0xff]
    %v5080 = vld [vmem:[%s3 + $0x32b8] sm:$0xff]
    %v5081 = vld [vmem:[%s3 + $0x32c0] sm:$0xff]
    %v5082 = vld [vmem:[%s3 + $0x32c8] sm:$0xff]
    %v5083 = vld [vmem:[%s3 + $0x32d0] sm:$0xff]
    %v5084 = vld [vmem:[%s3 + $0x32d8] sm:$0xff]
    %v5085 = vld [vmem:[%s3 + $0x32e0] sm:$0xff]
    %v5086 = vld [vmem:[%s3 + $0x32e8] sm:$0xff]
    %v5087 = vld [vmem:[%s3 + $0x32f0] sm:$0xff]
    %v5088 = vld [vmem:[%s3 + $0x32f8] sm:$0xff]
    %v5089 = vld [vmem:[%s3 + $0x3300] sm:$0xff]
    %v5090 = vld [vmem:[%s3 + $0x3308] sm:$0xff]
    %v5091 = vld [vmem:[%s3 + $0x3310] sm:$0xff]
    %v5092 = vld [vmem:[%s3 + $0x3318] sm:$0xff]
    %v5093 = vld [vmem:[%s3 + $0x3320] sm:$0xff]
    %v5094 = vld [vmem:[%s3 + $0x3328] sm:$0xff]
    %v5095 = vld [vmem:[%s3 + $0x3330] sm:$0xff]
    %v5096 = vld [vmem:[%s3 + $0x3338] sm:$0xff]
    %v5097 = vld [vmem:[%s3 + $0x3340] sm:$0xff]
    %v5098 = vld [vmem:[%s3 + $0x3348] sm:$0xff]
    %v5099 = vld [vmem:[%s3 + $0x3350] sm:$0xff]
    %v5100 = vld [vmem:[%s3 + $0x3358] sm:$0xff]
    %v5101 = vld [vmem:[%s3 + $0x3360] sm:$0xff]
    %v5102 = vld [vmem:[%s3 + $0x3368] sm:$0xff]
    %v5103 = vld [vmem:[%s3 + $0x3370] sm:$0xff]
    %v5104 = vld [vmem:[%s3 + $0x3378] sm:$0xff]
    %v5105 = vld [vmem:[%s3 + $0x3380] sm:$0xff]
    %v5106 = vld [vmem:[%s3 + $0x3388] sm:$0xff]
    %v5107 = vld [vmem:[%s3 + $0x3390] sm:$0xff]
    %v5108 = vld [vmem:[%s3 + $0x3398] sm:$0xff]
    %v5109 = vld [vmem:[%s3 + $0x33a0] sm:$0xff]
    %v5110 = vld [vmem:[%s3 + $0x33a8] sm:$0xff]
    %v5111 = vld [vmem:[%s3 + $0x33b0] sm:$0xff]
    %v5112 = vld [vmem:[%s3 + $0x33b8] sm:$0xff]
    %v5113 = vld [vmem:[%s3 + $0x33c0] sm:$0xff]
    %v5114 = vld [vmem:[%s3 + $0x33c8] sm:$0xff]
    %v5115 = vld [vmem:[%s3 + $0x33d0] sm:$0xff]
    %v5116 = vld [vmem:[%s3 + $0x33d8] sm:$0xff]
    %v5117 = vld [vmem:[%s3 + $0x33e0] sm:$0xff]
    %v5118 = vld [vmem:[%s3 + $0x33e8] sm:$0xff]
    %v5119 = vld [vmem:[%s3 + $0x33f0] sm:$0xff]
    %v5120 = vld [vmem:[%s3 + $0x33f8] sm:$0xff]
    %v5121 = vld [vmem:[%s3 + $0x3400] sm:$0xff]
    %v5122 = vld [vmem:[%s3 + $0x3408] sm:$0xff]
    %v5123 = vld [vmem:[%s3 + $0x3410] sm:$0xff]
    %v5124 = vld [vmem:[%s3 + $0x3418] sm:$0xff]
    %v5125 = vld [vmem:[%s3 + $0x3420] sm:$0xff]
    %v5126 = vld [vmem:[%s3 + $0x3428] sm:$0xff]
    %v5127 = vld [vmem:[%s3 + $0x3430] sm:$0xff]
    %v5128 = vld [vmem:[%s3 + $0x3438] sm:$0xff]
    %v5129 = vld [vmem:[%s3 + $0x3440] sm:$0xff]
    %v5130 = vld [vmem:[%s3 + $0x3448] sm:$0xff]
    %v5131 = vld [vmem:[%s3 + $0x3450] sm:$0xff]
    %v5132 = vld [vmem:[%s3 + $0x3458] sm:$0xff]
    %v5133 = vld [vmem:[%s3 + $0x3460] sm:$0xff]
    %v5134 = vld [vmem:[%s3 + $0x3468] sm:$0xff]
    %v5135 = vld [vmem:[%s3 + $0x3470] sm:$0xff]
    %v5136 = vld [vmem:[%s3 + $0x3478] sm:$0xff]
    %v5137 = vld [vmem:[%s3 + $0x3480] sm:$0xff]
    %v5138 = vld [vmem:[%s3 + $0x3488] sm:$0xff]
    %v5139 = vld [vmem:[%s3 + $0x3490] sm:$0xff]
    %v5140 = vld [vmem:[%s3 + $0x3498] sm:$0xff]
    %v5141 = vld [vmem:[%s3 + $0x34a0] sm:$0xff]
    %v5142 = vld [vmem:[%s3 + $0x34a8] sm:$0xff]
    %v5143 = vld [vmem:[%s3 + $0x34b0] sm:$0xff]
    %v5144 = vld [vmem:[%s3 + $0x34b8] sm:$0xff]
    %v5145 = vld [vmem:[%s3 + $0x34c0] sm:$0xff]
    %v5146 = vld [vmem:[%s3 + $0x34c8] sm:$0xff]
    %v5147 = vld [vmem:[%s3 + $0x34d0] sm:$0xff]
    %v5148 = vld [vmem:[%s3 + $0x34d8] sm:$0xff]
    %v5149 = vld [vmem:[%s3 + $0x34e0] sm:$0xff]
    %v5150 = vld [vmem:[%s3 + $0x34e8] sm:$0xff]
    %v5151 = vld [vmem:[%s3 + $0x34f0] sm:$0xff]
    %v5152 = vld [vmem:[%s3 + $0x34f8] sm:$0xff]
    %v5153 = vld [vmem:[%s3 + $0x3500] sm:$0xff]
    %v5154 = vld [vmem:[%s3 + $0x3508] sm:$0xff]
    %v5155 = vld [vmem:[%s3 + $0x3510] sm:$0xff]
    %v5156 = vld [vmem:[%s3 + $0x3518] sm:$0xff]
    %v5157 = vld [vmem:[%s3 + $0x3520] sm:$0xff]
    %v5158 = vld [vmem:[%s3 + $0x3528] sm:$0xff]
    %v5159 = vld [vmem:[%s3 + $0x3530] sm:$0xff]
    %v5160 = vld [vmem:[%s3 + $0x3538] sm:$0xff]
    %v5161 = vld [vmem:[%s3 + $0x3540] sm:$0xff]
    %v5162 = vld [vmem:[%s3 + $0x3548] sm:$0xff]
    %v5163 = vld [vmem:[%s3 + $0x3550] sm:$0xff]
    %v5164 = vld [vmem:[%s3 + $0x3558] sm:$0xff]
    %v5165 = vld [vmem:[%s3 + $0x3560] sm:$0xff]
    %v5166 = vld [vmem:[%s3 + $0x3568] sm:$0xff]
    %v5167 = vld [vmem:[%s3 + $0x3570] sm:$0xff]
    %v5168 = vld [vmem:[%s3 + $0x3578] sm:$0xff]
    %v5169 = vld [vmem:[%s3 + $0x3580] sm:$0xff]
    %v5170 = vld [vmem:[%s3 + $0x3588] sm:$0xff]
    %v5171 = vld [vmem:[%s3 + $0x3590] sm:$0xff]
    %v5172 = vld [vmem:[%s3 + $0x3598] sm:$0xff]
    %v5173 = vld [vmem:[%s3 + $0x35a0] sm:$0xff]
    %v5174 = vld [vmem:[%s3 + $0x35a8] sm:$0xff]
    %v5175 = vld [vmem:[%s3 + $0x35b0] sm:$0xff]
    %v5176 = vld [vmem:[%s3 + $0x35b8] sm:$0xff]
    %v5177 = vld [vmem:[%s3 + $0x35c0] sm:$0xff]
    %v5178 = vld [vmem:[%s3 + $0x35c8] sm:$0xff]
    %v5179 = vld [vmem:[%s3 + $0x35d0] sm:$0xff]
    %v5180 = vld [vmem:[%s3 + $0x35d8] sm:$0xff]
    %v5181 = vld [vmem:[%s3 + $0x35e0] sm:$0xff]
    %v5182 = vld [vmem:[%s3 + $0x35e8] sm:$0xff]
    %v5183 = vld [vmem:[%s3 + $0x35f0] sm:$0xff]
    %v5184 = vld [vmem:[%s3 + $0x35f8] sm:$0xff]
    %v5185 = vld [vmem:[%s3 + $0x3600] sm:$0xff]
    %v5186 = vld [vmem:[%s3 + $0x3608] sm:$0xff]
    %v5187 = vld [vmem:[%s3 + $0x3610] sm:$0xff]
    %v5188 = vld [vmem:[%s3 + $0x3618] sm:$0xff]
    %v5189 = vld [vmem:[%s3 + $0x3620] sm:$0xff]
    %v5190 = vld [vmem:[%s3 + $0x3628] sm:$0xff]
    %v5191 = vld [vmem:[%s3 + $0x3630] sm:$0xff]
    %v5192 = vld [vmem:[%s3 + $0x3638] sm:$0xff]
    %v5193 = vld [vmem:[%s3 + $0x3640] sm:$0xff]
    %v5194 = vld [vmem:[%s3 + $0x3648] sm:$0xff]
    %v5195 = vld [vmem:[%s3 + $0x3650] sm:$0xff]
    %v5196 = vld [vmem:[%s3 + $0x3658] sm:$0xff]
    %v5197 = vld [vmem:[%s3 + $0x3660] sm:$0xff]
    %v5198 = vld [vmem:[%s3 + $0x3668] sm:$0xff]
    %v5199 = vld [vmem:[%s3 + $0x3670] sm:$0xff]
    %v5200 = vld [vmem:[%s3 + $0x3678] sm:$0xff]
    %v5201 = vld [vmem:[%s3 + $0x3680] sm:$0xff]
    %v5202 = vld [vmem:[%s3 + $0x3688] sm:$0xff]
    %v5203 = vld [vmem:[%s3 + $0x3690] sm:$0xff]
    %v5204 = vld [vmem:[%s3 + $0x3698] sm:$0xff]
    %v5205 = vld [vmem:[%s3 + $0x36a0] sm:$0xff]
    %v5206 = vld [vmem:[%s3 + $0x36a8] sm:$0xff]
    %v5207 = vld [vmem:[%s3 + $0x36b0] sm:$0xff]
    %v5208 = vld [vmem:[%s3 + $0x36b8] sm:$0xff]
    %v5209 = vld [vmem:[%s3 + $0x36c0] sm:$0xff]
    %v5210 = vld [vmem:[%s3 + $0x36c8] sm:$0xff]
    %v5211 = vld [vmem:[%s3 + $0x36d0] sm:$0xff]
    %v5212 = vld [vmem:[%s3 + $0x36d8] sm:$0xff]
    %v5213 = vld [vmem:[%s3 + $0x36e0] sm:$0xff]
    %v5214 = vld [vmem:[%s3 + $0x36e8] sm:$0xff]
    %v5215 = vld [vmem:[%s3 + $0x36f0] sm:$0xff]
    %v5216 = vld [vmem:[%s3 + $0x36f8] sm:$0xff]
    %v5217 = vld [vmem:[%s3 + $0x3700] sm:$0xff]
    %v5218 = vld [vmem:[%s3 + $0x3708] sm:$0xff]
    %v5219 = vld [vmem:[%s3 + $0x3710] sm:$0xff]
    %v5220 = vld [vmem:[%s3 + $0x3718] sm:$0xff]
    %v5221 = vld [vmem:[%s3 + $0x3720] sm:$0xff]
    %v5222 = vld [vmem:[%s3 + $0x3728] sm:$0xff]
    %v5223 = vld [vmem:[%s3 + $0x3730] sm:$0xff]
    %v5224 = vld [vmem:[%s3 + $0x3738] sm:$0xff]
    %v5225 = vld [vmem:[%s3 + $0x3740] sm:$0xff]
    %v5226 = vld [vmem:[%s3 + $0x3748] sm:$0xff]
    %v5227 = vld [vmem:[%s3 + $0x3750] sm:$0xff]
    %v5228 = vld [vmem:[%s3 + $0x3758] sm:$0xff]
    %v5229 = vld [vmem:[%s3 + $0x3760] sm:$0xff]
    %v5230 = vld [vmem:[%s3 + $0x3768] sm:$0xff]
    %v5231 = vld [vmem:[%s3 + $0x3770] sm:$0xff]
    %v5232 = vld [vmem:[%s3 + $0x3778] sm:$0xff]
    %v5233 = vld [vmem:[%s3 + $0x3780] sm:$0xff]
    %v5234 = vld [vmem:[%s3 + $0x3788] sm:$0xff]
    %v5235 = vld [vmem:[%s3 + $0x3790] sm:$0xff]
    %v5236 = vld [vmem:[%s3 + $0x3798] sm:$0xff]
    %v5237 = vld [vmem:[%s3 + $0x37a0] sm:$0xff]
    %v5238 = vld [vmem:[%s3 + $0x37a8] sm:$0xff]
    %v5239 = vld [vmem:[%s3 + $0x37b0] sm:$0xff]
    %v5240 = vld [vmem:[%s3 + $0x37b8] sm:$0xff]
    %v5241 = vld [vmem:[%s3 + $0x37c0] sm:$0xff]
    %v5242 = vld [vmem:[%s3 + $0x37c8] sm:$0xff]
    %v5243 = vld [vmem:[%s3 + $0x37d0] sm:$0xff]
    %v5244 = vld [vmem:[%s3 + $0x37d8] sm:$0xff]
    %v5245 = vld [vmem:[%s3 + $0x37e0] sm:$0xff]
    %v5246 = vld [vmem:[%s3 + $0x37e8] sm:$0xff]
    %v5247 = vld [vmem:[%s3 + $0x37f0] sm:$0xff]
    %v5248 = vld [vmem:[%s3 + $0x37f8] sm:$0xff]
    %v5249 = vld [vmem:[%s3 + $0x3800] sm:$0xff]
    %v5250 = vld [vmem:[%s3 + $0x3808] sm:$0xff]
    %v5251 = vld [vmem:[%s3 + $0x3810] sm:$0xff]
    %v5252 = vld [vmem:[%s3 + $0x3818] sm:$0xff]
    %v5253 = vld [vmem:[%s3 + $0x3820] sm:$0xff]
    %v5254 = vld [vmem:[%s3 + $0x3828] sm:$0xff]
    %v5255 = vld [vmem:[%s3 + $0x3830] sm:$0xff]
    %v5256 = vld [vmem:[%s3 + $0x3838] sm:$0xff]
    %v5257 = vld [vmem:[%s3 + $0x3840] sm:$0xff]
    %v5258 = vld [vmem:[%s3 + $0x3848] sm:$0xff]
    %v5259 = vld [vmem:[%s3 + $0x3850] sm:$0xff]
    %v5260 = vld [vmem:[%s3 + $0x3858] sm:$0xff]
    %v5261 = vld [vmem:[%s3 + $0x3860] sm:$0xff]
    %v5262 = vld [vmem:[%s3 + $0x3868] sm:$0xff]
    %v5263 = vld [vmem:[%s3 + $0x3870] sm:$0xff]
    %v5264 = vld [vmem:[%s3 + $0x3878] sm:$0xff]
    %v5265 = vld [vmem:[%s3 + $0x3880] sm:$0xff]
    %v5266 = vld [vmem:[%s3 + $0x3888] sm:$0xff]
    %v5267 = vld [vmem:[%s3 + $0x3890] sm:$0xff]
    %v5268 = vld [vmem:[%s3 + $0x3898] sm:$0xff]
    %v5269 = vld [vmem:[%s3 + $0x38a0] sm:$0xff]
    %v5270 = vld [vmem:[%s3 + $0x38a8] sm:$0xff]
    %v5271 = vld [vmem:[%s3 + $0x38b0] sm:$0xff]
    %v5272 = vld [vmem:[%s3 + $0x38b8] sm:$0xff]
    %v5273 = vld [vmem:[%s3 + $0x38c0] sm:$0xff]
    %v5274 = vld [vmem:[%s3 + $0x38c8] sm:$0xff]
    %v5275 = vld [vmem:[%s3 + $0x38d0] sm:$0xff]
    %v5276 = vld [vmem:[%s3 + $0x38d8] sm:$0xff]
    %v5277 = vld [vmem:[%s3 + $0x38e0] sm:$0xff]
    %v5278 = vld [vmem:[%s3 + $0x38e8] sm:$0xff]
    %v5279 = vld [vmem:[%s3 + $0x38f0] sm:$0xff]
    %v5280 = vld [vmem:[%s3 + $0x38f8] sm:$0xff]
    %v5281 = vld [vmem:[%s3 + $0x3900] sm:$0xff]
    %v5282 = vld [vmem:[%s3 + $0x3908] sm:$0xff]
    %v5283 = vld [vmem:[%s3 + $0x3910] sm:$0xff]
    %v5284 = vld [vmem:[%s3 + $0x3918] sm:$0xff]
    %v5285 = vld [vmem:[%s3 + $0x3920] sm:$0xff]
    %v5286 = vld [vmem:[%s3 + $0x3928] sm:$0xff]
    %v5287 = vld [vmem:[%s3 + $0x3930] sm:$0xff]
    %v5288 = vld [vmem:[%s3 + $0x3938] sm:$0xff]
    %v5289 = vld [vmem:[%s3 + $0x3940] sm:$0xff]
    %v5290 = vld [vmem:[%s3 + $0x3948] sm:$0xff]
    %v5291 = vld [vmem:[%s3 + $0x3950] sm:$0xff]
    %v5292 = vld [vmem:[%s3 + $0x3958] sm:$0xff]
    %v5293 = vld [vmem:[%s3 + $0x3960] sm:$0xff]
    %v5294 = vld [vmem:[%s3 + $0x3968] sm:$0xff]
    %v5295 = vld [vmem:[%s3 + $0x3970] sm:$0xff]
    %v5296 = vld [vmem:[%s3 + $0x3978] sm:$0xff]
    %v5297 = vld [vmem:[%s3 + $0x3980] sm:$0xff]
    %v5298 = vld [vmem:[%s3 + $0x3988] sm:$0xff]
    %v5299 = vld [vmem:[%s3 + $0x3990] sm:$0xff]
    %v5300 = vld [vmem:[%s3 + $0x3998] sm:$0xff]
    %v5301 = vld [vmem:[%s3 + $0x39a0] sm:$0xff]
    %v5302 = vld [vmem:[%s3 + $0x39a8] sm:$0xff]
    %v5303 = vld [vmem:[%s3 + $0x39b0] sm:$0xff]
    %v5304 = vld [vmem:[%s3 + $0x39b8] sm:$0xff]
    %v5305 = vld [vmem:[%s3 + $0x39c0] sm:$0xff]
    %v5306 = vld [vmem:[%s3 + $0x39c8] sm:$0xff]
    %v5307 = vld [vmem:[%s3 + $0x39d0] sm:$0xff]
    %v5308 = vld [vmem:[%s3 + $0x39d8] sm:$0xff]
    %v5309 = vld [vmem:[%s3 + $0x39e0] sm:$0xff]
    %v5310 = vld [vmem:[%s3 + $0x39e8] sm:$0xff]
    %v5311 = vld [vmem:[%s3 + $0x39f0] sm:$0xff]
    %v5312 = vld [vmem:[%s3 + $0x39f8] sm:$0xff]
    %v5313 = vld [vmem:[%s3 + $0x3a00] sm:$0xff]
    %v5314 = vld [vmem:[%s3 + $0x3a08] sm:$0xff]
    %v5315 = vld [vmem:[%s3 + $0x3a10] sm:$0xff]
    %v5316 = vld [vmem:[%s3 + $0x3a18] sm:$0xff]
    %v5317 = vld [vmem:[%s3 + $0x3a20] sm:$0xff]
    %v5318 = vld [vmem:[%s3 + $0x3a28] sm:$0xff]
    %v5319 = vld [vmem:[%s3 + $0x3a30] sm:$0xff]
    %v5320 = vld [vmem:[%s3 + $0x3a38] sm:$0xff]
    %v5321 = vld [vmem:[%s3 + $0x3a40] sm:$0xff]
    %v5322 = vld [vmem:[%s3 + $0x3a48] sm:$0xff]
    %v5323 = vld [vmem:[%s3 + $0x3a50] sm:$0xff]
    %v5324 = vld [vmem:[%s3 + $0x3a58] sm:$0xff]
    %v5325 = vld [vmem:[%s3 + $0x3a60] sm:$0xff]
    %v5326 = vld [vmem:[%s3 + $0x3a68] sm:$0xff]
    %v5327 = vld [vmem:[%s3 + $0x3a70] sm:$0xff]
    %v5328 = vld [vmem:[%s3 + $0x3a78] sm:$0xff]
    %v5329 = vld [vmem:[%s3 + $0x3a80] sm:$0xff]
    %v5330 = vld [vmem:[%s3 + $0x3a88] sm:$0xff]
    %v5331 = vld [vmem:[%s3 + $0x3a90] sm:$0xff]
    %v5332 = vld [vmem:[%s3 + $0x3a98] sm:$0xff]
    %v5333 = vld [vmem:[%s3 + $0x3aa0] sm:$0xff]
    %v5334 = vld [vmem:[%s3 + $0x3aa8] sm:$0xff]
    %v5335 = vld [vmem:[%s3 + $0x3ab0] sm:$0xff]
    %v5336 = vld [vmem:[%s3 + $0x3ab8] sm:$0xff]
    %v5337 = vld [vmem:[%s3 + $0x3ac0] sm:$0xff]
    %v5338 = vld [vmem:[%s3 + $0x3ac8] sm:$0xff]
    %v5339 = vld [vmem:[%s3 + $0x3ad0] sm:$0xff]
    %v5340 = vld [vmem:[%s3 + $0x3ad8] sm:$0xff]
    %v5341 = vld [vmem:[%s3 + $0x3ae0] sm:$0xff]
    %v5342 = vld [vmem:[%s3 + $0x3ae8] sm:$0xff]
    %v5343 = vld [vmem:[%s3 + $0x3af0] sm:$0xff]
    %v5344 = vld [vmem:[%s3 + $0x3af8] sm:$0xff]
    %v5345 = vld [vmem:[%s3 + $0x3b00] sm:$0xff]
    %v5346 = vld [vmem:[%s3 + $0x3b08] sm:$0xff]
    %v5347 = vld [vmem:[%s3 + $0x3b10] sm:$0xff]
    %v5348 = vld [vmem:[%s3 + $0x3b18] sm:$0xff]
    %v5349 = vld [vmem:[%s3 + $0x3b20] sm:$0xff]
    %v5350 = vld [vmem:[%s3 + $0x3b28] sm:$0xff]
    %v5351 = vld [vmem:[%s3 + $0x3b30] sm:$0xff]
    %v5352 = vld [vmem:[%s3 + $0x3b38] sm:$0xff]
    %v5353 = vld [vmem:[%s3 + $0x3b40] sm:$0xff]
    %v5354 = vld [vmem:[%s3 + $0x3b48] sm:$0xff]
    %v5355 = vld [vmem:[%s3 + $0x3b50] sm:$0xff]
    %v5356 = vld [vmem:[%s3 + $0x3b58] sm:$0xff]
    %v5357 = vld [vmem:[%s3 + $0x3b60] sm:$0xff]
    %v5358 = vld [vmem:[%s3 + $0x3b68] sm:$0xff]
    %v5359 = vld [vmem:[%s3 + $0x3b70] sm:$0xff]
    %v5360 = vld [vmem:[%s3 + $0x3b78] sm:$0xff]
    %v5361 = vld [vmem:[%s3 + $0x3b80] sm:$0xff]
    %v5362 = vld [vmem:[%s3 + $0x3b88] sm:$0xff]
    %v5363 = vld [vmem:[%s3 + $0x3b90] sm:$0xff]
    %v5364 = vld [vmem:[%s3 + $0x3b98] sm:$0xff]
    %v5365 = vld [vmem:[%s3 + $0x3ba0] sm:$0xff]
    %v5366 = vld [vmem:[%s3 + $0x3ba8] sm:$0xff]
    %v5367 = vld [vmem:[%s3 + $0x3bb0] sm:$0xff]
    %v5368 = vld [vmem:[%s3 + $0x3bb8] sm:$0xff]
    %v5369 = vld [vmem:[%s3 + $0x3bc0] sm:$0xff]
    %v5370 = vld [vmem:[%s3 + $0x3bc8] sm:$0xff]
    %v5371 = vld [vmem:[%s3 + $0x3bd0] sm:$0xff]
    %v5372 = vld [vmem:[%s3 + $0x3bd8] sm:$0xff]
    %v5373 = vld [vmem:[%s3 + $0x3be0] sm:$0xff]
    %v5374 = vld [vmem:[%s3 + $0x3be8] sm:$0xff]
    %v5375 = vld [vmem:[%s3 + $0x3bf0] sm:$0xff]
    %v5376 = vld [vmem:[%s3 + $0x3bf8] sm:$0xff]
    %v5377 = vld [vmem:[%s3 + $0x3c00] sm:$0xff]
    %v5378 = vld [vmem:[%s3 + $0x3c08] sm:$0xff]
    %v5379 = vld [vmem:[%s3 + $0x3c10] sm:$0xff]
    %v5380 = vld [vmem:[%s3 + $0x3c18] sm:$0xff]
    %v5381 = vld [vmem:[%s3 + $0x3c20] sm:$0xff]
    %v5382 = vld [vmem:[%s3 + $0x3c28] sm:$0xff]
    %v5383 = vld [vmem:[%s3 + $0x3c30] sm:$0xff]
    %v5384 = vld [vmem:[%s3 + $0x3c38] sm:$0xff]
    %v5385 = vld [vmem:[%s3 + $0x3c40] sm:$0xff]
    %v5386 = vld [vmem:[%s3 + $0x3c48] sm:$0xff]
    %v5387 = vld [vmem:[%s3 + $0x3c50] sm:$0xff]
    %v5388 = vld [vmem:[%s3 + $0x3c58] sm:$0xff]
    %v5389 = vld [vmem:[%s3 + $0x3c60] sm:$0xff]
    %v5390 = vld [vmem:[%s3 + $0x3c68] sm:$0xff]
    %v5391 = vld [vmem:[%s3 + $0x3c70] sm:$0xff]
    %v5392 = vld [vmem:[%s3 + $0x3c78] sm:$0xff]
    %v5393 = vld [vmem:[%s3 + $0x3c80] sm:$0xff]
    %v5394 = vld [vmem:[%s3 + $0x3c88] sm:$0xff]
    %v5395 = vld [vmem:[%s3 + $0x3c90] sm:$0xff]
    %v5396 = vld [vmem:[%s3 + $0x3c98] sm:$0xff]
    %v5397 = vld [vmem:[%s3 + $0x3ca0] sm:$0xff]
    %v5398 = vld [vmem:[%s3 + $0x3ca8] sm:$0xff]
    %v5399 = vld [vmem:[%s3 + $0x3cb0] sm:$0xff]
    %v5400 = vld [vmem:[%s3 + $0x3cb8] sm:$0xff]
    %v5401 = vld [vmem:[%s3 + $0x3cc0] sm:$0xff]
    %v5402 = vld [vmem:[%s3 + $0x3cc8] sm:$0xff]
    %v5403 = vld [vmem:[%s3 + $0x3cd0] sm:$0xff]
    %v5404 = vld [vmem:[%s3 + $0x3cd8] sm:$0xff]
    %v5405 = vld [vmem:[%s3 + $0x3ce0] sm:$0xff]
    %v5406 = vld [vmem:[%s3 + $0x3ce8] sm:$0xff]
    %v5407 = vld [vmem:[%s3 + $0x3cf0] sm:$0xff]
    %v5408 = vld [vmem:[%s3 + $0x3cf8] sm:$0xff]
    %v5409 = vld [vmem:[%s3 + $0x3d00] sm:$0xff]
    %v5410 = vld [vmem:[%s3 + $0x3d08] sm:$0xff]
    %v5411 = vld [vmem:[%s3 + $0x3d10] sm:$0xff]
    %v5412 = vld [vmem:[%s3 + $0x3d18] sm:$0xff]
    %v5413 = vld [vmem:[%s3 + $0x3d20] sm:$0xff]
    %v5414 = vld [vmem:[%s3 + $0x3d28] sm:$0xff]
    %v5415 = vld [vmem:[%s3 + $0x3d30] sm:$0xff]
    %v5416 = vld [vmem:[%s3 + $0x3d38] sm:$0xff]
    %v5417 = vld [vmem:[%s3 + $0x3d40] sm:$0xff]
    %v5418 = vld [vmem:[%s3 + $0x3d48] sm:$0xff]
    %v5419 = vld [vmem:[%s3 + $0x3d50] sm:$0xff]
    %v5420 = vld [vmem:[%s3 + $0x3d58] sm:$0xff]
    %v5421 = vld [vmem:[%s3 + $0x3d60] sm:$0xff]
    %v5422 = vld [vmem:[%s3 + $0x3d68] sm:$0xff]
    %v5423 = vld [vmem:[%s3 + $0x3d70] sm:$0xff]
    %v5424 = vld [vmem:[%s3 + $0x3d78] sm:$0xff]
    %v5425 = vld [vmem:[%s3 + $0x3d80] sm:$0xff]
    %v5426 = vld [vmem:[%s3 + $0x3d88] sm:$0xff]
    %v5427 = vld [vmem:[%s3 + $0x3d90] sm:$0xff]
    %v5428 = vld [vmem:[%s3 + $0x3d98] sm:$0xff]
    %v5429 = vld [vmem:[%s3 + $0x3da0] sm:$0xff]
    %v5430 = vld [vmem:[%s3 + $0x3da8] sm:$0xff]
    %v5431 = vld [vmem:[%s3 + $0x3db0] sm:$0xff]
    %v5432 = vld [vmem:[%s3 + $0x3db8] sm:$0xff]
    %v5433 = vld [vmem:[%s3 + $0x3dc0] sm:$0xff]
    %v5434 = vld [vmem:[%s3 + $0x3dc8] sm:$0xff]
    %v5435 = vld [vmem:[%s3 + $0x3dd0] sm:$0xff]
    %v5436 = vld [vmem:[%s3 + $0x3dd8] sm:$0xff]
    %v5437 = vld [vmem:[%s3 + $0x3de0] sm:$0xff]
    %v5438 = vld [vmem:[%s3 + $0x3de8] sm:$0xff]
    %v5439 = vld [vmem:[%s3 + $0x3df0] sm:$0xff]
    %v5440 = vld [vmem:[%s3 + $0x3df8] sm:$0xff]
    %v5441 = vld [vmem:[%s3 + $0x3e00] sm:$0xff]
    %v5442 = vld [vmem:[%s3 + $0x3e08] sm:$0xff]
    %v5443 = vld [vmem:[%s3 + $0x3e10] sm:$0xff]
    %v5444 = vld [vmem:[%s3 + $0x3e18] sm:$0xff]
    %v5445 = vld [vmem:[%s3 + $0x3e20] sm:$0xff]
    %v5446 = vld [vmem:[%s3 + $0x3e28] sm:$0xff]
    %v5447 = vld [vmem:[%s3 + $0x3e30] sm:$0xff]
    %v5448 = vld [vmem:[%s3 + $0x3e38] sm:$0xff]
    %v5449 = vld [vmem:[%s3 + $0x3e40] sm:$0xff]
    %v5450 = vld [vmem:[%s3 + $0x3e48] sm:$0xff]
    %v5451 = vld [vmem:[%s3 + $0x3e50] sm:$0xff]
    %v5452 = vld [vmem:[%s3 + $0x3e58] sm:$0xff]
    %v5453 = vld [vmem:[%s3 + $0x3e60] sm:$0xff]
    %v5454 = vld [vmem:[%s3 + $0x3e68] sm:$0xff]
    %v5455 = vld [vmem:[%s3 + $0x3e70] sm:$0xff]
    %v5456 = vld [vmem:[%s3 + $0x3e78] sm:$0xff]
    %v5457 = vld [vmem:[%s3 + $0x3e80] sm:$0xff]
    %v5458 = vld [vmem:[%s3 + $0x3e88] sm:$0xff]
    %v5459 = vld [vmem:[%s3 + $0x3e90] sm:$0xff]
    %v5460 = vld [vmem:[%s3 + $0x3e98] sm:$0xff]
    %v5461 = vld [vmem:[%s3 + $0x3ea0] sm:$0xff]
    %v5462 = vld [vmem:[%s3 + $0x3ea8] sm:$0xff]
    %v5463 = vld [vmem:[%s3 + $0x3eb0] sm:$0xff]
    %v5464 = vld [vmem:[%s3 + $0x3eb8] sm:$0xff]
    %v5465 = vld [vmem:[%s3 + $0x3ec0] sm:$0xff]
    %v5466 = vld [vmem:[%s3 + $0x3ec8] sm:$0xff]
    %v5467 = vld [vmem:[%s3 + $0x3ed0] sm:$0xff]
    %v5468 = vld [vmem:[%s3 + $0x3ed8] sm:$0xff]
    %v5469 = vld [vmem:[%s3 + $0x3ee0] sm:$0xff]
    %v5470 = vld [vmem:[%s3 + $0x3ee8] sm:$0xff]
    %v5471 = vld [vmem:[%s3 + $0x3ef0] sm:$0xff]
    %v5472 = vld [vmem:[%s3 + $0x3ef8] sm:$0xff]
    %v5473 = vld [vmem:[%s3 + $0x3f00] sm:$0xff]
    %v5474 = vld [vmem:[%s3 + $0x3f08] sm:$0xff]
    %v5475 = vld [vmem:[%s3 + $0x3f10] sm:$0xff]
    %v5476 = vld [vmem:[%s3 + $0x3f18] sm:$0xff]
    %v5477 = vld [vmem:[%s3 + $0x3f20] sm:$0xff]
    %v5478 = vld [vmem:[%s3 + $0x3f28] sm:$0xff]
    %v5479 = vld [vmem:[%s3 + $0x3f30] sm:$0xff]
    %v5480 = vld [vmem:[%s3 + $0x3f38] sm:$0xff]
    %v5481 = vld [vmem:[%s3 + $0x3f40] sm:$0xff]
    %v5482 = vld [vmem:[%s3 + $0x3f48] sm:$0xff]
    %v5483 = vld [vmem:[%s3 + $0x3f50] sm:$0xff]
    %v5484 = vld [vmem:[%s3 + $0x3f58] sm:$0xff]
    %v5485 = vld [vmem:[%s3 + $0x3f60] sm:$0xff]
    %v5486 = vld [vmem:[%s3 + $0x3f68] sm:$0xff]
    %v5487 = vld [vmem:[%s3 + $0x3f70] sm:$0xff]
    %v5488 = vld [vmem:[%s3 + $0x3f78] sm:$0xff]
    %v5489 = vld [vmem:[%s3 + $0x3f80] sm:$0xff]
    %v5490 = vld [vmem:[%s3 + $0x3f88] sm:$0xff]
    %v5491 = vld [vmem:[%s3 + $0x3f90] sm:$0xff]
    %v5492 = vld [vmem:[%s3 + $0x3f98] sm:$0xff]
    %v5493 = vld [vmem:[%s3 + $0x3fa0] sm:$0xff]
    %v5494 = vld [vmem:[%s3 + $0x3fa8] sm:$0xff]
    %v5495 = vld [vmem:[%s3 + $0x3fb0] sm:$0xff]
    %v5496 = vld [vmem:[%s3 + $0x3fb8] sm:$0xff]
    %v5497 = vld [vmem:[%s3 + $0x3fc0] sm:$0xff]
    %v5498 = vld [vmem:[%s3 + $0x3fc8] sm:$0xff]
    %v5499 = vld [vmem:[%s3 + $0x3fd0] sm:$0xff]
    %v5500 = vld [vmem:[%s3 + $0x3fd8] sm:$0xff]
    %v5501 = vld [vmem:[%s3 + $0x3fe0] sm:$0xff]
    %v5502 = vld [vmem:[%s3 + $0x3fe8] sm:$0xff]
    %v5503 = vld [vmem:[%s3 + $0x3ff0] sm:$0xff]
    %v5504 = vld [vmem:[%s3 + $0x3ff8] sm:$0xff]
    %v5505 = vld [vmem:[%s4] sm:$0x1]
    %v5507 = vlaneseq
    %v5508 = vshrl.u32 %v5507, 7
    %v5509 = vsub.s32 0, %v5508
    %v5510 = vrot.slane %v5505, %v5509
    %v5544 = vcombine.high %v3425, %v3425
    %v5546 = vunpack.c.l.s4 1983009808
    %v5547 = vunpack.c.0.s8 %v5546
    %v5548 = vlaneseq
    %v5549 = vshrl.u32 %v5548, 7
    %v5550 = vsub.s32 %v5547, %v5549
    %v5551 = vrot.slane %v3425, %v5550
    %v5553 = vunpack.c.l.s4 1983009808
    %v5554 = vunpack.c.0.s8 %v5553
    %v5555 = vlaneseq
    %v5556 = vshrl.u32 %v5555, 7
    %v5557 = vsub.s32 %v5554, %v5556
    %v5558 = vrot.slane %v5544, %v5557
    %v5559 = vcombine.high %v5551, %v5551
    %v5560 = vcombine.high %v5558, %v5558
    %v5561 = vcombine.high %v3426, %v3426
    %v5563 = vunpack.c.l.s4 1983009808
    %v5564 = vunpack.c.0.s8 %v5563
    %v5565 = vlaneseq
    %v5566 = vshrl.u32 %v5565, 7
    %v5567 = vsub.s32 %v5564, %v5566
    %v5568 = vrot.slane %v3426, %v5567
    %v5570 = vunpack.c.l.s4 1983009808
    %v5571 = vunpack.c.0.s8 %v5570
    %v5572 = vlaneseq
    %v5573 = vshrl.u32 %v5572, 7
    %v5574 = vsub.s32 %v5571, %v5573
    %v5575 = vrot.slane %v5561, %v5574
    %v5576 = vcombine.high %v5568, %v5568
    %v5577 = vcombine.high %v5575, %v5575
    %v5578 = vcombine.high %v3427, %v3427
    %v5580 = vunpack.c.l.s4 1983009808
    %v5581 = vunpack.c.0.s8 %v5580
    %v5582 = vlaneseq
    %v5583 = vshrl.u32 %v5582, 7
    %v5584 = vsub.s32 %v5581, %v5583
    %v5585 = vrot.slane %v3427, %v5584
    %v5587 = vunpack.c.l.s4 1983009808
    %v5588 = vunpack.c.0.s8 %v5587
    %v5589 = vlaneseq
    %v5590 = vshrl.u32 %v5589, 7
    %v5591 = vsub.s32 %v5588, %v5590
    %v5592 = vrot.slane %v5578, %v5591
    %v5593 = vcombine.high %v5585, %v5585
    %v5594 = vcombine.high %v5592, %v5592
    %v5595 = vcombine.high %v3428, %v3428
    %v5597 = vunpack.c.l.s4 1983009808
    %v5598 = vunpack.c.0.s8 %v5597
    %v5599 = vlaneseq
    %v5600 = vshrl.u32 %v5599, 7
    %v5601 = vsub.s32 %v5598, %v5600
    %v5602 = vrot.slane %v3428, %v5601
    %v5604 = vunpack.c.l.s4 1983009808
    %v5605 = vunpack.c.0.s8 %v5604
    %v5606 = vlaneseq
    %v5607 = vshrl.u32 %v5606, 7
    %v5608 = vsub.s32 %v5605, %v5607
    %v5609 = vrot.slane %v5595, %v5608
    %v5610 = vcombine.high %v5602, %v5602
    %v5611 = vcombine.high %v5609, %v5609
    %v5612 = vcombine.high %v3429, %v3429
    %v5614 = vunpack.c.l.s4 1983009808
    %v5615 = vunpack.c.0.s8 %v5614
    %v5616 = vlaneseq
    %v5617 = vshrl.u32 %v5616, 7
    %v5618 = vsub.s32 %v5615, %v5617
    %v5619 = vrot.slane %v3429, %v5618
    %v5621 = vunpack.c.l.s4 1983009808
    %v5622 = vunpack.c.0.s8 %v5621
    %v5623 = vlaneseq
    %v5624 = vshrl.u32 %v5623, 7
    %v5625 = vsub.s32 %v5622, %v5624
    %v5626 = vrot.slane %v5612, %v5625
    %v5627 = vcombine.high %v5619, %v5619
    %v5628 = vcombine.high %v5626, %v5626
    %v5629 = vcombine.high %v3430, %v3430
    %v5631 = vunpack.c.l.s4 1983009808
    %v5632 = vunpack.c.0.s8 %v5631
    %v5633 = vlaneseq
    %v5634 = vshrl.u32 %v5633, 7
    %v5635 = vsub.s32 %v5632, %v5634
    %v5636 = vrot.slane %v3430, %v5635
    %v5638 = vunpack.c.l.s4 1983009808
    %v5639 = vunpack.c.0.s8 %v5638
    %v5640 = vlaneseq
    %v5641 = vshrl.u32 %v5640, 7
    %v5642 = vsub.s32 %v5639, %v5641
    %v5643 = vrot.slane %v5629, %v5642
    %v5644 = vcombine.high %v5636, %v5636
    %v5645 = vcombine.high %v5643, %v5643
    %v5646 = vcombine.high %v3431, %v3431
    %v5648 = vunpack.c.l.s4 1983009808
    %v5649 = vunpack.c.0.s8 %v5648
    %v5650 = vlaneseq
    %v5651 = vshrl.u32 %v5650, 7
    %v5652 = vsub.s32 %v5649, %v5651
    %v5653 = vrot.slane %v3431, %v5652
    %v5655 = vunpack.c.l.s4 1983009808
    %v5656 = vunpack.c.0.s8 %v5655
    %v5657 = vlaneseq
    %v5658 = vshrl.u32 %v5657, 7
    %v5659 = vsub.s32 %v5656, %v5658
    %v5660 = vrot.slane %v5646, %v5659
    %v5661 = vcombine.high %v5653, %v5653
    %v5662 = vcombine.high %v5660, %v5660
    %v5663 = vcombine.high %v3432, %v3432
    %v5665 = vunpack.c.l.s4 1983009808
    %v5666 = vunpack.c.0.s8 %v5665
    %v5667 = vlaneseq
    %v5668 = vshrl.u32 %v5667, 7
    %v5669 = vsub.s32 %v5666, %v5668
    %v5670 = vrot.slane %v3432, %v5669
    %v5672 = vunpack.c.l.s4 1983009808
    %v5673 = vunpack.c.0.s8 %v5672
    %v5674 = vlaneseq
    %v5675 = vshrl.u32 %v5674, 7
    %v5676 = vsub.s32 %v5673, %v5675
    %v5677 = vrot.slane %v5663, %v5676
    %v5678 = vcombine.high %v5670, %v5670
    %v5679 = vcombine.high %v5677, %v5677
    %v5680 = vcombine.high %v3433, %v3433
    %v5682 = vunpack.c.l.s4 1983009808
    %v5683 = vunpack.c.0.s8 %v5682
    %v5684 = vlaneseq
    %v5685 = vshrl.u32 %v5684, 7
    %v5686 = vsub.s32 %v5683, %v5685
    %v5687 = vrot.slane %v3433, %v5686
    %v5689 = vunpack.c.l.s4 1983009808
    %v5690 = vunpack.c.0.s8 %v5689
    %v5691 = vlaneseq
    %v5692 = vshrl.u32 %v5691, 7
    %v5693 = vsub.s32 %v5690, %v5692
    %v5694 = vrot.slane %v5680, %v5693
    %v5695 = vcombine.high %v5687, %v5687
    %v5696 = vcombine.high %v5694, %v5694
    %v5697 = vcombine.high %v3434, %v3434
    %v5699 = vunpack.c.l.s4 1983009808
    %v5700 = vunpack.c.0.s8 %v5699
    %v5701 = vlaneseq
    %v5702 = vshrl.u32 %v5701, 7
    %v5703 = vsub.s32 %v5700, %v5702
    %v5704 = vrot.slane %v3434, %v5703
    %v5706 = vunpack.c.l.s4 1983009808
    %v5707 = vunpack.c.0.s8 %v5706
    %v5708 = vlaneseq
    %v5709 = vshrl.u32 %v5708, 7
    %v5710 = vsub.s32 %v5707, %v5709
    %v5711 = vrot.slane %v5697, %v5710
    %v5712 = vcombine.high %v5704, %v5704
    %v5713 = vcombine.high %v5711, %v5711
    %v5714 = vcombine.high %v3435, %v3435
    %v5716 = vunpack.c.l.s4 1983009808
    %v5717 = vunpack.c.0.s8 %v5716
    %v5718 = vlaneseq
    %v5719 = vshrl.u32 %v5718, 7
    %v5720 = vsub.s32 %v5717, %v5719
    %v5721 = vrot.slane %v3435, %v5720
    %v5723 = vunpack.c.l.s4 1983009808
    %v5724 = vunpack.c.0.s8 %v5723
    %v5725 = vlaneseq
    %v5726 = vshrl.u32 %v5725, 7
    %v5727 = vsub.s32 %v5724, %v5726
    %v5728 = vrot.slane %v5714, %v5727
    %v5729 = vcombine.high %v5721, %v5721
    %v5730 = vcombine.high %v5728, %v5728
    %v5731 = vcombine.high %v3436, %v3436
    %v5733 = vunpack.c.l.s4 1983009808
    %v5734 = vunpack.c.0.s8 %v5733
    %v5735 = vlaneseq
    %v5736 = vshrl.u32 %v5735, 7
    %v5737 = vsub.s32 %v5734, %v5736
    %v5738 = vrot.slane %v3436, %v5737
    %v5740 = vunpack.c.l.s4 1983009808
    %v5741 = vunpack.c.0.s8 %v5740
    %v5742 = vlaneseq
    %v5743 = vshrl.u32 %v5742, 7
    %v5744 = vsub.s32 %v5741, %v5743
    %v5745 = vrot.slane %v5731, %v5744
    %v5746 = vcombine.high %v5738, %v5738
    %v5747 = vcombine.high %v5745, %v5745
    %v5748 = vcombine.high %v3437, %v3437
    %v5750 = vunpack.c.l.s4 1983009808
    %v5751 = vunpack.c.0.s8 %v5750
    %v5752 = vlaneseq
    %v5753 = vshrl.u32 %v5752, 7
    %v5754 = vsub.s32 %v5751, %v5753
    %v5755 = vrot.slane %v3437, %v5754
    %v5757 = vunpack.c.l.s4 1983009808
    %v5758 = vunpack.c.0.s8 %v5757
    %v5759 = vlaneseq
    %v5760 = vshrl.u32 %v5759, 7
    %v5761 = vsub.s32 %v5758, %v5760
    %v5762 = vrot.slane %v5748, %v5761
    %v5763 = vcombine.high %v5755, %v5755
    %v5764 = vcombine.high %v5762, %v5762
    %v5765 = vcombine.high %v3438, %v3438
    %v5767 = vunpack.c.l.s4 1983009808
    %v5768 = vunpack.c.0.s8 %v5767
    %v5769 = vlaneseq
    %v5770 = vshrl.u32 %v5769, 7
    %v5771 = vsub.s32 %v5768, %v5770
    %v5772 = vrot.slane %v3438, %v5771
    %v5774 = vunpack.c.l.s4 1983009808
    %v5775 = vunpack.c.0.s8 %v5774
    %v5776 = vlaneseq
    %v5777 = vshrl.u32 %v5776, 7
    %v5778 = vsub.s32 %v5775, %v5777
    %v5779 = vrot.slane %v5765, %v5778
    %v5780 = vcombine.high %v5772, %v5772
    %v5781 = vcombine.high %v5779, %v5779
    %v5782 = vcombine.high %v3439, %v3439
    %v5784 = vunpack.c.l.s4 1983009808
    %v5785 = vunpack.c.0.s8 %v5784
    %v5786 = vlaneseq
    %v5787 = vshrl.u32 %v5786, 7
    %v5788 = vsub.s32 %v5785, %v5787
    %v5789 = vrot.slane %v3439, %v5788
    %v5791 = vunpack.c.l.s4 1983009808
    %v5792 = vunpack.c.0.s8 %v5791
    %v5793 = vlaneseq
    %v5794 = vshrl.u32 %v5793, 7
    %v5795 = vsub.s32 %v5792, %v5794
    %v5796 = vrot.slane %v5782, %v5795
    %v5797 = vcombine.high %v5789, %v5789
    %v5798 = vcombine.high %v5796, %v5796
    %v5799 = vcombine.high %v3440, %v3440
    %v5801 = vunpack.c.l.s4 1983009808
    %v5802 = vunpack.c.0.s8 %v5801
    %v5803 = vlaneseq
    %v5804 = vshrl.u32 %v5803, 7
    %v5805 = vsub.s32 %v5802, %v5804
    %v5806 = vrot.slane %v3440, %v5805
    %v5808 = vunpack.c.l.s4 1983009808
    %v5809 = vunpack.c.0.s8 %v5808
    %v5810 = vlaneseq
    %v5811 = vshrl.u32 %v5810, 7
    %v5812 = vsub.s32 %v5809, %v5811
    %v5813 = vrot.slane %v5799, %v5812
    %v5814 = vcombine.high %v5806, %v5806
    %v5815 = vcombine.high %v5813, %v5813
    %v5816 = vcombine.high %v3441, %v3441
    %v5818 = vunpack.c.l.s4 1983009808
    %v5819 = vunpack.c.0.s8 %v5818
    %v5820 = vlaneseq
    %v5821 = vshrl.u32 %v5820, 7
    %v5822 = vsub.s32 %v5819, %v5821
    %v5823 = vrot.slane %v3441, %v5822
    %v5825 = vunpack.c.l.s4 1983009808
    %v5826 = vunpack.c.0.s8 %v5825
    %v5827 = vlaneseq
    %v5828 = vshrl.u32 %v5827, 7
    %v5829 = vsub.s32 %v5826, %v5828
    %v5830 = vrot.slane %v5816, %v5829
    %v5831 = vcombine.high %v5823, %v5823
    %v5832 = vcombine.high %v5830, %v5830
    %v5833 = vcombine.high %v3442, %v3442
    %v5835 = vunpack.c.l.s4 1983009808
    %v5836 = vunpack.c.0.s8 %v5835
    %v5837 = vlaneseq
    %v5838 = vshrl.u32 %v5837, 7
    %v5839 = vsub.s32 %v5836, %v5838
    %v5840 = vrot.slane %v3442, %v5839
    %v5842 = vunpack.c.l.s4 1983009808
    %v5843 = vunpack.c.0.s8 %v5842
    %v5844 = vlaneseq
    %v5845 = vshrl.u32 %v5844, 7
    %v5846 = vsub.s32 %v5843, %v5845
    %v5847 = vrot.slane %v5833, %v5846
    %v5848 = vcombine.high %v5840, %v5840
    %v5849 = vcombine.high %v5847, %v5847
    %v5850 = vcombine.high %v3443, %v3443
    %v5852 = vunpack.c.l.s4 1983009808
    %v5853 = vunpack.c.0.s8 %v5852
    %v5854 = vlaneseq
    %v5855 = vshrl.u32 %v5854, 7
    %v5856 = vsub.s32 %v5853, %v5855
    %v5857 = vrot.slane %v3443, %v5856
    %v5859 = vunpack.c.l.s4 1983009808
    %v5860 = vunpack.c.0.s8 %v5859
    %v5861 = vlaneseq
    %v5862 = vshrl.u32 %v5861, 7
    %v5863 = vsub.s32 %v5860, %v5862
    %v5864 = vrot.slane %v5850, %v5863
    %v5865 = vcombine.high %v5857, %v5857
    %v5866 = vcombine.high %v5864, %v5864
    %v5867 = vcombine.high %v3444, %v3444
    %v5869 = vunpack.c.l.s4 1983009808
    %v5870 = vunpack.c.0.s8 %v5869
    %v5871 = vlaneseq
    %v5872 = vshrl.u32 %v5871, 7
    %v5873 = vsub.s32 %v5870, %v5872
    %v5874 = vrot.slane %v3444, %v5873
    %v5876 = vunpack.c.l.s4 1983009808
    %v5877 = vunpack.c.0.s8 %v5876
    %v5878 = vlaneseq
    %v5879 = vshrl.u32 %v5878, 7
    %v5880 = vsub.s32 %v5877, %v5879
    %v5881 = vrot.slane %v5867, %v5880
    %v5882 = vcombine.high %v5874, %v5874
    %v5883 = vcombine.high %v5881, %v5881
    %v5884 = vcombine.high %v3445, %v3445
    %v5886 = vunpack.c.l.s4 1983009808
    %v5887 = vunpack.c.0.s8 %v5886
    %v5888 = vlaneseq
    %v5889 = vshrl.u32 %v5888, 7
    %v5890 = vsub.s32 %v5887, %v5889
    %v5891 = vrot.slane %v3445, %v5890
    %v5893 = vunpack.c.l.s4 1983009808
    %v5894 = vunpack.c.0.s8 %v5893
    %v5895 = vlaneseq
    %v5896 = vshrl.u32 %v5895, 7
    %v5897 = vsub.s32 %v5894, %v5896
    %v5898 = vrot.slane %v5884, %v5897
    %v5899 = vcombine.high %v5891, %v5891
    %v5900 = vcombine.high %v5898, %v5898
    %v5901 = vcombine.high %v3446, %v3446
    %v5903 = vunpack.c.l.s4 1983009808
    %v5904 = vunpack.c.0.s8 %v5903
    %v5905 = vlaneseq
    %v5906 = vshrl.u32 %v5905, 7
    %v5907 = vsub.s32 %v5904, %v5906
    %v5908 = vrot.slane %v3446, %v5907
    %v5910 = vunpack.c.l.s4 1983009808
    %v5911 = vunpack.c.0.s8 %v5910
    %v5912 = vlaneseq
    %v5913 = vshrl.u32 %v5912, 7
    %v5914 = vsub.s32 %v5911, %v5913
    %v5915 = vrot.slane %v5901, %v5914
    %v5916 = vcombine.high %v5908, %v5908
    %v5917 = vcombine.high %v5915, %v5915
    %v5918 = vcombine.high %v3447, %v3447
    %v5920 = vunpack.c.l.s4 1983009808
    %v5921 = vunpack.c.0.s8 %v5920
    %v5922 = vlaneseq
    %v5923 = vshrl.u32 %v5922, 7
    %v5924 = vsub.s32 %v5921, %v5923
    %v5925 = vrot.slane %v3447, %v5924
    %v5927 = vunpack.c.l.s4 1983009808
    %v5928 = vunpack.c.0.s8 %v5927
    %v5929 = vlaneseq
    %v5930 = vshrl.u32 %v5929, 7
    %v5931 = vsub.s32 %v5928, %v5930
    %v5932 = vrot.slane %v5918, %v5931
    %v5933 = vcombine.high %v5925, %v5925
    %v5934 = vcombine.high %v5932, %v5932
    %v5935 = vcombine.high %v3448, %v3448
    %v5937 = vunpack.c.l.s4 1983009808
    %v5938 = vunpack.c.0.s8 %v5937
    %v5939 = vlaneseq
    %v5940 = vshrl.u32 %v5939, 7
    %v5941 = vsub.s32 %v5938, %v5940
    %v5942 = vrot.slane %v3448, %v5941
    %v5944 = vunpack.c.l.s4 1983009808
    %v5945 = vunpack.c.0.s8 %v5944
    %v5946 = vlaneseq
    %v5947 = vshrl.u32 %v5946, 7
    %v5948 = vsub.s32 %v5945, %v5947
    %v5949 = vrot.slane %v5935, %v5948
    %v5950 = vcombine.high %v5942, %v5942
    %v5951 = vcombine.high %v5949, %v5949
    %v5952 = vcombine.high %v3449, %v3449
    %v5954 = vunpack.c.l.s4 1983009808
    %v5955 = vunpack.c.0.s8 %v5954
    %v5956 = vlaneseq
    %v5957 = vshrl.u32 %v5956, 7
    %v5958 = vsub.s32 %v5955, %v5957
    %v5959 = vrot.slane %v3449, %v5958
    %v5961 = vunpack.c.l.s4 1983009808
    %v5962 = vunpack.c.0.s8 %v5961
    %v5963 = vlaneseq
    %v5964 = vshrl.u32 %v5963, 7
    %v5965 = vsub.s32 %v5962, %v5964
    %v5966 = vrot.slane %v5952, %v5965
    %v5967 = vcombine.high %v5959, %v5959
    %v5968 = vcombine.high %v5966, %v5966
    %v5969 = vcombine.high %v3450, %v3450
    %v5971 = vunpack.c.l.s4 1983009808
    %v5972 = vunpack.c.0.s8 %v5971
    %v5973 = vlaneseq
    %v5974 = vshrl.u32 %v5973, 7
    %v5975 = vsub.s32 %v5972, %v5974
    %v5976 = vrot.slane %v3450, %v5975
    %v5978 = vunpack.c.l.s4 1983009808
    %v5979 = vunpack.c.0.s8 %v5978
    %v5980 = vlaneseq
    %v5981 = vshrl.u32 %v5980, 7
    %v5982 = vsub.s32 %v5979, %v5981
    %v5983 = vrot.slane %v5969, %v5982
    %v5984 = vcombine.high %v5976, %v5976
    %v5985 = vcombine.high %v5983, %v5983
    %v5986 = vcombine.high %v3451, %v3451
    %v5988 = vunpack.c.l.s4 1983009808
    %v5989 = vunpack.c.0.s8 %v5988
    %v5990 = vlaneseq
    %v5991 = vshrl.u32 %v5990, 7
    %v5992 = vsub.s32 %v5989, %v5991
    %v5993 = vrot.slane %v3451, %v5992
    %v5995 = vunpack.c.l.s4 1983009808
    %v5996 = vunpack.c.0.s8 %v5995
    %v5997 = vlaneseq
    %v5998 = vshrl.u32 %v5997, 7
    %v5999 = vsub.s32 %v5996, %v5998
    %v6000 = vrot.slane %v5986, %v5999
    %v6001 = vcombine.high %v5993, %v5993
    %v6002 = vcombine.high %v6000, %v6000
    %v6003 = vcombine.high %v3452, %v3452
    %v6005 = vunpack.c.l.s4 1983009808
    %v6006 = vunpack.c.0.s8 %v6005
    %v6007 = vlaneseq
    %v6008 = vshrl.u32 %v6007, 7
    %v6009 = vsub.s32 %v6006, %v6008
    %v6010 = vrot.slane %v3452, %v6009
    %v6012 = vunpack.c.l.s4 1983009808
    %v6013 = vunpack.c.0.s8 %v6012
    %v6014 = vlaneseq
    %v6015 = vshrl.u32 %v6014, 7
    %v6016 = vsub.s32 %v6013, %v6015
    %v6017 = vrot.slane %v6003, %v6016
    %v6018 = vcombine.high %v6010, %v6010
    %v6019 = vcombine.high %v6017, %v6017
    %v6020 = vcombine.high %v3453, %v3453
    %v6022 = vunpack.c.l.s4 1983009808
    %v6023 = vunpack.c.0.s8 %v6022
    %v6024 = vlaneseq
    %v6025 = vshrl.u32 %v6024, 7
    %v6026 = vsub.s32 %v6023, %v6025
    %v6027 = vrot.slane %v3453, %v6026
    %v6029 = vunpack.c.l.s4 1983009808
    %v6030 = vunpack.c.0.s8 %v6029
    %v6031 = vlaneseq
    %v6032 = vshrl.u32 %v6031, 7
    %v6033 = vsub.s32 %v6030, %v6032
    %v6034 = vrot.slane %v6020, %v6033
    %v6035 = vcombine.high %v6027, %v6027
    %v6036 = vcombine.high %v6034, %v6034
    %v6037 = vcombine.high %v3454, %v3454
    %v6039 = vunpack.c.l.s4 1983009808
    %v6040 = vunpack.c.0.s8 %v6039
    %v6041 = vlaneseq
    %v6042 = vshrl.u32 %v6041, 7
    %v6043 = vsub.s32 %v6040, %v6042
    %v6044 = vrot.slane %v3454, %v6043
    %v6046 = vunpack.c.l.s4 1983009808
    %v6047 = vunpack.c.0.s8 %v6046
    %v6048 = vlaneseq
    %v6049 = vshrl.u32 %v6048, 7
    %v6050 = vsub.s32 %v6047, %v6049
    %v6051 = vrot.slane %v6037, %v6050
    %v6052 = vcombine.high %v6044, %v6044
    %v6053 = vcombine.high %v6051, %v6051
    %v6054 = vcombine.high %v3455, %v3455
    %v6056 = vunpack.c.l.s4 1983009808
    %v6057 = vunpack.c.0.s8 %v6056
    %v6058 = vlaneseq
    %v6059 = vshrl.u32 %v6058, 7
    %v6060 = vsub.s32 %v6057, %v6059
    %v6061 = vrot.slane %v3455, %v6060
    %v6063 = vunpack.c.l.s4 1983009808
    %v6064 = vunpack.c.0.s8 %v6063
    %v6065 = vlaneseq
    %v6066 = vshrl.u32 %v6065, 7
    %v6067 = vsub.s32 %v6064, %v6066
    %v6068 = vrot.slane %v6054, %v6067
    %v6069 = vcombine.high %v6061, %v6061
    %v6070 = vcombine.high %v6068, %v6068
    %v6071 = vcombine.high %v3456, %v3456
    %v6073 = vunpack.c.l.s4 1983009808
    %v6074 = vunpack.c.0.s8 %v6073
    %v6075 = vlaneseq
    %v6076 = vshrl.u32 %v6075, 7
    %v6077 = vsub.s32 %v6074, %v6076
    %v6078 = vrot.slane %v3456, %v6077
    %v6080 = vunpack.c.l.s4 1983009808
    %v6081 = vunpack.c.0.s8 %v6080
    %v6082 = vlaneseq
    %v6083 = vshrl.u32 %v6082, 7
    %v6084 = vsub.s32 %v6081, %v6083
    %v6085 = vrot.slane %v6071, %v6084
    %v6086 = vcombine.high %v6078, %v6078
    %v6087 = vcombine.high %v6085, %v6085
    %6216 = vmatprep.subr.mxu0 0.0
    %6217 = vmatpush1.msra.mxu0 %v3457
    %6218 = vmatprep.subr.mxu0 0.0
    %6219 = vmatpush1.msra.mxu0 %v3458
    %6220 = vmatprep.subr.mxu0 0.0
    %6221 = vmatpush1.msra.mxu0 %v3459
    %6222 = vmatprep.subr.mxu0 0.0
    %6223 = vmatpush1.msra.mxu0 %v3460
    %6224 = vmatprep.subr.mxu0 0.0
    %6225 = vmatpush1.msra.mxu0 %v3461
    %6226 = vmatprep.subr.mxu0 0.0
    %6227 = vmatpush1.msra.mxu0 %v3462
    %6228 = vmatprep.subr.mxu0 0.0
    %6229 = vmatpush1.msra.mxu0 %v3463
    %6230 = vmatprep.subr.mxu0 0.0
    %6231 = vmatpush1.msra.mxu0 %v3464
    %6232 = vmatprep.subr.mxu0 0.0
    %6233 = vmatpush1.msra.mxu0 %v3465
    %6234 = vmatprep.subr.mxu0 0.0
    %6235 = vmatpush1.msra.mxu0 %v3466
    %6236 = vmatprep.subr.mxu0 0.0
    %6237 = vmatpush1.msra.mxu0 %v3467
    %6238 = vmatprep.subr.mxu0 0.0
    %6239 = vmatpush1.msra.mxu0 %v3468
    %6240 = vmatprep.subr.mxu0 0.0
    %6241 = vmatpush1.msra.mxu0 %v3469
    %6242 = vmatprep.subr.mxu0 0.0
    %6243 = vmatpush1.msra.mxu0 %v3470
    %6244 = vmatprep.subr.mxu0 0.0
    %6245 = vmatpush1.msra.mxu0 %v3471
    %6246 = vmatprep.subr.mxu0 0.0
    %6247 = vmatpush1.msra.mxu0 %v3472
    %6248 = vmatprep.subr.mxu0 0.0
    %6249 = vmatpush1.msra.mxu0 %v3473
    %6250 = vmatprep.subr.mxu0 0.0
    %6251 = vmatpush1.msra.mxu0 %v3474
    %6252 = vmatprep.subr.mxu0 0.0
    %6253 = vmatpush1.msra.mxu0 %v3475
    %6254 = vmatprep.subr.mxu0 0.0
    %6255 = vmatpush1.msra.mxu0 %v3476
    %6256 = vmatprep.subr.mxu0 0.0
    %6257 = vmatpush1.msra.mxu0 %v3477
    %6258 = vmatprep.subr.mxu0 0.0
    %6259 = vmatpush1.msra.mxu0 %v3478
    %6260 = vmatprep.subr.mxu0 0.0
    %6261 = vmatpush1.msra.mxu0 %v3479
    %6262 = vmatprep.subr.mxu0 0.0
    %6263 = vmatpush1.msra.mxu0 %v3480
    %6264 = vmatprep.subr.mxu0 0.0
    %6265 = vmatpush1.msra.mxu0 %v3481
    %6266 = vmatprep.subr.mxu0 0.0
    %6267 = vmatpush1.msra.mxu0 %v3482
    %6268 = vmatprep.subr.mxu0 0.0
    %6269 = vmatpush1.msra.mxu0 %v3483
    %6270 = vmatprep.subr.mxu0 0.0
    %6271 = vmatpush1.msra.mxu0 %v3484
    %6272 = vmatprep.subr.mxu0 0.0
    %6273 = vmatpush1.msra.mxu0 %v3485
    %6274 = vmatprep.subr.mxu0 0.0
    %6275 = vmatpush1.msra.mxu0 %v3486
    %6276 = vmatprep.subr.mxu0 0.0
    %6277 = vmatpush1.msra.mxu0 %v3487
    %6278 = vmatprep.subr.mxu0 0.0
    %6279 = vmatpush1.msra.mxu0 %v3488
    %6280 = vmatprep.mubr.f32.mxu0 %v5559
    %6281 = vmatmul.mubr.f32.gmra.mrb[0].mxu0 %v5551
    %v6282 = vpop.f32.mrb[0].mxu0
    %v6283 = vadd.f32 %v5510, %v6282
    %v6284 = vpop.f32.mrb[0].mxu0
    %6285 = vdwg.mxu0
    %6286 = vmatprep.subr.mxu0 0.0
    %6287 = vmatpush1.msra.mxu0 %v3489
    %6288 = vmatprep.subr.mxu0 0.0
    %6289 = vmatpush1.msra.mxu0 %v3490
    %6290 = vmatprep.subr.mxu0 0.0
    %6291 = vmatpush1.msra.mxu0 %v3491
    %6292 = vmatprep.subr.mxu0 0.0
    %6293 = vmatpush1.msra.mxu0 %v3492
    %6294 = vmatprep.subr.mxu0 0.0
    %6295 = vmatpush1.msra.mxu0 %v3493
    %6296 = vmatprep.subr.mxu0 0.0
    %6297 = vmatpush1.msra.mxu0 %v3494
    %6298 = vmatprep.subr.mxu0 0.0
    %6299 = vmatpush1.msra.mxu0 %v3495
    %6300 = vmatprep.subr.mxu0 0.0
    %6301 = vmatpush1.msra.mxu0 %v3496
    %6302 = vmatprep.subr.mxu0 0.0
    %6303 = vmatpush1.msra.mxu0 %v3497
    %6304 = vmatprep.subr.mxu0 0.0
    %6305 = vmatpush1.msra.mxu0 %v3498
    %6306 = vmatprep.subr.mxu0 0.0
    %6307 = vmatpush1.msra.mxu0 %v3499
    %6308 = vmatprep.subr.mxu0 0.0
    %6309 = vmatpush1.msra.mxu0 %v3500
    %6310 = vmatprep.subr.mxu0 0.0
    %6311 = vmatpush1.msra.mxu0 %v3501
    %6312 = vmatprep.subr.mxu0 0.0
    %6313 = vmatpush1.msra.mxu0 %v3502
    %6314 = vmatprep.subr.mxu0 0.0
    %6315 = vmatpush1.msra.mxu0 %v3503
    %6316 = vmatprep.subr.mxu0 0.0
    %6317 = vmatpush1.msra.mxu0 %v3504
    %6318 = vmatprep.subr.mxu0 0.0
    %6319 = vmatpush1.msra.mxu0 %v3505
    %6320 = vmatprep.subr.mxu0 0.0
    %6321 = vmatpush1.msra.mxu0 %v3506
    %6322 = vmatprep.subr.mxu0 0.0
    %6323 = vmatpush1.msra.mxu0 %v3507
    %6324 = vmatprep.subr.mxu0 0.0
    %6325 = vmatpush1.msra.mxu0 %v3508
    %6326 = vmatprep.subr.mxu0 0.0
    %6327 = vmatpush1.msra.mxu0 %v3509
    %6328 = vmatprep.subr.mxu0 0.0
    %6329 = vmatpush1.msra.mxu0 %v3510
    %6330 = vmatprep.subr.mxu0 0.0
    %6331 = vmatpush1.msra.mxu0 %v3511
    %6332 = vmatprep.subr.mxu0 0.0
    %6333 = vmatpush1.msra.mxu0 %v3512
    %6334 = vmatprep.subr.mxu0 0.0
    %6335 = vmatpush1.msra.mxu0 %v3513
    %6336 = vmatprep.subr.mxu0 0.0
    %6337 = vmatpush1.msra.mxu0 %v3514
    %6338 = vmatprep.subr.mxu0 0.0
    %6339 = vmatpush1.msra.mxu0 %v3515
    %6340 = vmatprep.subr.mxu0 0.0
    %6341 = vmatpush1.msra.mxu0 %v3516
    %6342 = vmatprep.subr.mxu0 0.0
    %6343 = vmatpush1.msra.mxu0 %v3517
    %6344 = vmatprep.subr.mxu0 0.0
    %6345 = vmatpush1.msra.mxu0 %v3518
    %6346 = vmatprep.subr.mxu0 0.0
    %6347 = vmatpush1.msra.mxu0 %v3519
    %6348 = vmatprep.subr.mxu0 0.0
    %6349 = vmatpush1.msra.mxu0 %v3520
    %6350 = vmatprep.mubr.f32.mxu0 %v5560
    %6351 = vmatmul.mubr.f32.gmra.mrb[0].mxu0 %v5558
    %v6352 = vpop.f32.mrb[0].mxu0
    %v6353 = vadd.f32 %v6283, %v6352
    %v6354 = vpop.f32.mrb[0].mxu0
    %6355 = vdwg.mxu0
    %6356 = vmatprep.subr.mxu0 0.0
    %6357 = vmatpush1.msra.mxu0 %v3521
    %6358 = vmatprep.subr.mxu0 0.0
    %6359 = vmatpush1.msra.mxu0 %v3522
    %6360 = vmatprep.subr.mxu0 0.0
    %6361 = vmatpush1.msra.mxu0 %v3523
    %6362 = vmatprep.subr.mxu0 0.0
    %6363 = vmatpush1.msra.mxu0 %v3524
    %6364 = vmatprep.subr.mxu0 0.0
    %6365 = vmatpush1.msra.mxu0 %v3525
    %6366 = vmatprep.subr.mxu0 0.0
    %6367 = vmatpush1.msra.mxu0 %v3526
    %6368 = vmatprep.subr.mxu0 0.0
    %6369 = vmatpush1.msra.mxu0 %v3527
    %6370 = vmatprep.subr.mxu0 0.0
    %6371 = vmatpush1.msra.mxu0 %v3528
    %6372 = vmatprep.subr.mxu0 0.0
    %6373 = vmatpush1.msra.mxu0 %v3529
    %6374 = vmatprep.subr.mxu0 0.0
    %6375 = vmatpush1.msra.mxu0 %v3530
    %6376 = vmatprep.subr.mxu0 0.0
    %6377 = vmatpush1.msra.mxu0 %v3531
    %6378 = vmatprep.subr.mxu0 0.0
    %6379 = vmatpush1.msra.mxu0 %v3532
    %6380 = vmatprep.subr.mxu0 0.0
    %6381 = vmatpush1.msra.mxu0 %v3533
    %6382 = vmatprep.subr.mxu0 0.0
    %6383 = vmatpush1.msra.mxu0 %v3534
    %6384 = vmatprep.subr.mxu0 0.0
    %6385 = vmatpush1.msra.mxu0 %v3535
    %6386 = vmatprep.subr.mxu0 0.0
    %6387 = vmatpush1.msra.mxu0 %v3536
    %6388 = vmatprep.subr.mxu0 0.0
    %6389 = vmatpush1.msra.mxu0 %v3537
    %6390 = vmatprep.subr.mxu0 0.0
    %6391 = vmatpush1.msra.mxu0 %v3538
    %6392 = vmatprep.subr.mxu0 0.0
    %6393 = vmatpush1.msra.mxu0 %v3539
    %6394 = vmatprep.subr.mxu0 0.0
    %6395 = vmatpush1.msra.mxu0 %v3540
    %6396 = vmatprep.subr.mxu0 0.0
    %6397 = vmatpush1.msra.mxu0 %v3541
    %6398 = vmatprep.subr.mxu0 0.0
    %6399 = vmatpush1.msra.mxu0 %v3542
    %6400 = vmatprep.subr.mxu0 0.0
    %6401 = vmatpush1.msra.mxu0 %v3543
    %6402 = vmatprep.subr.mxu0 0.0
    %6403 = vmatpush1.msra.mxu0 %v3544
    %6404 = vmatprep.subr.mxu0 0.0
    %6405 = vmatpush1.msra.mxu0 %v3545
    %6406 = vmatprep.subr.mxu0 0.0
    %6407 = vmatpush1.msra.mxu0 %v3546
    %6408 = vmatprep.subr.mxu0 0.0
    %6409 = vmatpush1.msra.mxu0 %v3547
    %6410 = vmatprep.subr.mxu0 0.0
    %6411 = vmatpush1.msra.mxu0 %v3548
    %6412 = vmatprep.subr.mxu0 0.0
    %6413 = vmatpush1.msra.mxu0 %v3549
    %6414 = vmatprep.subr.mxu0 0.0
    %6415 = vmatpush1.msra.mxu0 %v3550
    %6416 = vmatprep.subr.mxu0 0.0
    %6417 = vmatpush1.msra.mxu0 %v3551
    %6418 = vmatprep.subr.mxu0 0.0
    %6419 = vmatpush1.msra.mxu0 %v3552
    %6420 = vmatprep.mubr.f32.mxu0 %v5576
    %6421 = vmatmul.mubr.f32.gmra.mrb[0].mxu0 %v5568
    %v6422 = vpop.f32.mrb[0].mxu0
    %v6423 = vadd.f32 %v6353, %v6422
    %v6424 = vpop.f32.mrb[0].mxu0
    %6425 = vdwg.mxu0
    %6426 = vmatprep.subr.mxu0 0.0
    %6427 = vmatpush1.msra.mxu0 %v3553
    %6428 = vmatprep.subr.mxu0 0.0
    %6429 = vmatpush1.msra.mxu0 %v3554
    %6430 = vmatprep.subr.mxu0 0.0
    %6431 = vmatpush1.msra.mxu0 %v3555
    %6432 = vmatprep.subr.mxu0 0.0
    %6433 = vmatpush1.msra.mxu0 %v3556
    %6434 = vmatprep.subr.mxu0 0.0
    %6435 = vmatpush1.msra.mxu0 %v3557
    %6436 = vmatprep.subr.mxu0 0.0
    %6437 = vmatpush1.msra.mxu0 %v3558
    %6438 = vmatprep.subr.mxu0 0.0
    %6439 = vmatpush1.msra.mxu0 %v3559
    %6440 = vmatprep.subr.mxu0 0.0
    %6441 = vmatpush1.msra.mxu0 %v3560
    %6442 = vmatprep.subr.mxu0 0.0
    %6443 = vmatpush1.msra.mxu0 %v3561
    %6444 = vmatprep.subr.mxu0 0.0
    %6445 = vmatpush1.msra.mxu0 %v3562
    %6446 = vmatprep.subr.mxu0 0.0
    %6447 = vmatpush1.msra.mxu0 %v3563
    %6448 = vmatprep.subr.mxu0 0.0
    %6449 = vmatpush1.msra.mxu0 %v3564
    %6450 = vmatprep.subr.mxu0 0.0
    %6451 = vmatpush1.msra.mxu0 %v3565
    %6452 = vmatprep.subr.mxu0 0.0
    %6453 = vmatpush1.msra.mxu0 %v3566
    %6454 = vmatprep.subr.mxu0 0.0
    %6455 = vmatpush1.msra.mxu0 %v3567
    %6456 = vmatprep.subr.mxu0 0.0
    %6457 = vmatpush1.msra.mxu0 %v3568
    %6458 = vmatprep.subr.mxu0 0.0
    %6459 = vmatpush1.msra.mxu0 %v3569
    %6460 = vmatprep.subr.mxu0 0.0
    %6461 = vmatpush1.msra.mxu0 %v3570
    %6462 = vmatprep.subr.mxu0 0.0
    %6463 = vmatpush1.msra.mxu0 %v3571
    %6464 = vmatprep.subr.mxu0 0.0
    %6465 = vmatpush1.msra.mxu0 %v3572
    %6466 = vmatprep.subr.mxu0 0.0
    %6467 = vmatpush1.msra.mxu0 %v3573
    %6468 = vmatprep.subr.mxu0 0.0
    %6469 = vmatpush1.msra.mxu0 %v3574
    %6470 = vmatprep.subr.mxu0 0.0
    %6471 = vmatpush1.msra.mxu0 %v3575
    %6472 = vmatprep.subr.mxu0 0.0
    %6473 = vmatpush1.msra.mxu0 %v3576
    %6474 = vmatprep.subr.mxu0 0.0
    %6475 = vmatpush1.msra.mxu0 %v3577
    %6476 = vmatprep.subr.mxu0 0.0
    %6477 = vmatpush1.msra.mxu0 %v3578
    %6478 = vmatprep.subr.mxu0 0.0
    %6479 = vmatpush1.msra.mxu0 %v3579
    %6480 = vmatprep.subr.mxu0 0.0
    %6481 = vmatpush1.msra.mxu0 %v3580
    %6482 = vmatprep.subr.mxu0 0.0
    %6483 = vmatpush1.msra.mxu0 %v3581
    %6484 = vmatprep.subr.mxu0 0.0
    %6485 = vmatpush1.msra.mxu0 %v3582
    %6486 = vmatprep.subr.mxu0 0.0
    %6487 = vmatpush1.msra.mxu0 %v3583
    %6488 = vmatprep.subr.mxu0 0.0
    %6489 = vmatpush1.msra.mxu0 %v3584
    %6490 = vmatprep.mubr.f32.mxu0 %v5577
    %6491 = vmatmul.mubr.f32.gmra.mrb[0].mxu0 %v5575
    %v6492 = vpop.f32.mrb[0].mxu0
    %v6493 = vadd.f32 %v6423, %v6492
    %v6494 = vpop.f32.mrb[0].mxu0
    %6495 = vdwg.mxu0
    %6496 = vmatprep.subr.mxu0 0.0
    %6497 = vmatpush1.msra.mxu0 %v3585
    %6498 = vmatprep.subr.mxu0 0.0
    %6499 = vmatpush1.msra.mxu0 %v3586
    %6500 = vmatprep.subr.mxu0 0.0
    %6501 = vmatpush1.msra.mxu0 %v3587
    %6502 = vmatprep.subr.mxu0 0.0
    %6503 = vmatpush1.msra.mxu0 %v3588
    %6504 = vmatprep.subr.mxu0 0.0
    %6505 = vmatpush1.msra.mxu0 %v3589
    %6506 = vmatprep.subr.mxu0 0.0
    %6507 = vmatpush1.msra.mxu0 %v3590
    %6508 = vmatprep.subr.mxu0 0.0
    %6509 = vmatpush1.msra.mxu0 %v3591
    %6510 = vmatprep.subr.mxu0 0.0
    %6511 = vmatpush1.msra.mxu0 %v3592
    %6512 = vmatprep.subr.mxu0 0.0
    %6513 = vmatpush1.msra.mxu0 %v3593
    %6514 = vmatprep.subr.mxu0 0.0
    %6515 = vmatpush1.msra.mxu0 %v3594
    %6516 = vmatprep.subr.mxu0 0.0
    %6517 = vmatpush1.msra.mxu0 %v3595
    %6518 = vmatprep.subr.mxu0 0.0
    %6519 = vmatpush1.msra.mxu0 %v3596
    %6520 = vmatprep.subr.mxu0 0.0
    %6521 = vmatpush1.msra.mxu0 %v3597
    %6522 = vmatprep.subr.mxu0 0.0
    %6523 = vmatpush1.msra.mxu0 %v3598
    %6524 = vmatprep.subr.mxu0 0.0
    %6525 = vmatpush1.msra.mxu0 %v3599
    %6526 = vmatprep.subr.mxu0 0.0
    %6527 = vmatpush1.msra.mxu0 %v3600
    %6528 = vmatprep.subr.mxu0 0.0
    %6529 = vmatpush1.msra.mxu0 %v3601
    %6530 = vmatprep.subr.mxu0 0.0
    %6531 = vmatpush1.msra.mxu0 %v3602
    %6532 = vmatprep.subr.mxu0 0.0
    %6533 = vmatpush1.msra.mxu0 %v3603
    %6534 = vmatprep.subr.mxu0 0.0
    %6535 = vmatpush1.msra.mxu0 %v3604
    %6536 = vmatprep.subr.mxu0 0.0
    %6537 = vmatpush1.msra.mxu0 %v3605
    %6538 = vmatprep.subr.mxu0 0.0
    %6539 = vmatpush1.msra.mxu0 %v3606
    %6540 = vmatprep.subr.mxu0 0.0
    %6541 = vmatpush1.msra.mxu0 %v3607
    %6542 = vmatprep.subr.mxu0 0.0
    %6543 = vmatpush1.msra.mxu0 %v3608
    %6544 = vmatprep.subr.mxu0 0.0
    %6545 = vmatpush1.msra.mxu0 %v3609
    %6546 = vmatprep.subr.mxu0 0.0
    %6547 = vmatpush1.msra.mxu0 %v3610
    %6548 = vmatprep.subr.mxu0 0.0
    %6549 = vmatpush1.msra.mxu0 %v3611
    %6550 = vmatprep.subr.mxu0 0.0
    %6551 = vmatpush1.msra.mxu0 %v3612
    %6552 = vmatprep.subr.mxu0 0.0
    %6553 = vmatpush1.msra.mxu0 %v3613
    %6554 = vmatprep.subr.mxu0 0.0
    %6555 = vmatpush1.msra.mxu0 %v3614
    %6556 = vmatprep.subr.mxu0 0.0
    %6557 = vmatpush1.msra.mxu0 %v3615
    %6558 = vmatprep.subr.mxu0 0.0
    %6559 = vmatpush1.msra.mxu0 %v3616
    %6560 = vmatprep.mubr.f32.mxu0 %v5593
    %6561 = vmatmul.mubr.f32.gmra.mrb[0].mxu0 %v5585
    %v6562 = vpop.f32.mrb[0].mxu0
    %v6563 = vadd.f32 %v6493, %v6562
    %v6564 = vpop.f32.mrb[0].mxu0
    %6565 = vdwg.mxu0
    %6566 = vmatprep.subr.mxu0 0.0
    %6567 = vmatpush1.msra.mxu0 %v3617
    %6568 = vmatprep.subr.mxu0 0.0
    %6569 = vmatpush1.msra.mxu0 %v3618
    %6570 = vmatprep.subr.mxu0 0.0
    %6571 = vmatpush1.msra.mxu0 %v3619
    %6572 = vmatprep.subr.mxu0 0.0
    %6573 = vmatpush1.msra.mxu0 %v3620
    %6574 = vmatprep.subr.mxu0 0.0
    %6575 = vmatpush1.msra.mxu0 %v3621
    %6576 = vmatprep.subr.mxu0 0.0
    %6577 = vmatpush1.msra.mxu0 %v3622
    %6578 = vmatprep.subr.mxu0 0.0
    %6579 = vmatpush1.msra.mxu0 %v3623
    %6580 = vmatprep.subr.mxu0 0.0
    %6581 = vmatpush1.msra.mxu0 %v3624
    %6582 = vmatprep.subr.mxu0 0.0
    %6583 = vmatpush1.msra.mxu0 %v3625
    %6584 = vmatprep.subr.mxu0 0.0
    %6585 = vmatpush1.msra.mxu0 %v3626
    %6586 = vmatprep.subr.mxu0 0.0
    %6587 = vmatpush1.msra.mxu0 %v3627
    %6588 = vmatprep.subr.mxu0 0.0
    %6589 = vmatpush1.msra.mxu0 %v3628
    %6590 = vmatprep.subr.mxu0 0.0
    %6591 = vmatpush1.msra.mxu0 %v3629
    %6592 = vmatprep.subr.mxu0 0.0
    %6593 = vmatpush1.msra.mxu0 %v3630
    %6594 = vmatprep.subr.mxu0 0.0
    %6595 = vmatpush1.msra.mxu0 %v3631
    %6596 = vmatprep.subr.mxu0 0.0
    %6597 = vmatpush1.msra.mxu0 %v3632
    %6598 = vmatprep.subr.mxu0 0.0
    %6599 = vmatpush1.msra.mxu0 %v3633
    %6600 = vmatprep.subr.mxu0 0.0
    %6601 = vmatpush1.msra.mxu0 %v3634
    %6602 = vmatprep.subr.mxu0 0.0
    %6603 = vmatpush1.msra.mxu0 %v3635
    %6604 = vmatprep.subr.mxu0 0.0
    %6605 = vmatpush1.msra.mxu0 %v3636
    %6606 = vmatprep.subr.mxu0 0.0
    %6607 = vmatpush1.msra.mxu0 %v3637
    %6608 = vmatprep.subr.mxu0 0.0
    %6609 = vmatpush1.msra.mxu0 %v3638
    %6610 = vmatprep.subr.mxu0 0.0
    %6611 = vmatpush1.msra.mxu0 %v3639
    %6612 = vmatprep.subr.mxu0 0.0
    %6613 = vmatpush1.msra.mxu0 %v3640
    %6614 = vmatprep.subr.mxu0 0.0
    %6615 = vmatpush1.msra.mxu0 %v3641
    %6616 = vmatprep.subr.mxu0 0.0
    %6617 = vmatpush1.msra.mxu0 %v3642
    %6618 = vmatprep.subr.mxu0 0.0
    %6619 = vmatpush1.msra.mxu0 %v3643
    %6620 = vmatprep.subr.mxu0 0.0
    %6621 = vmatpush1.msra.mxu0 %v3644
    %6622 = vmatprep.subr.mxu0 0.0
    %6623 = vmatpush1.msra.mxu0 %v3645
    %6624 = vmatprep.subr.mxu0 0.0
    %6625 = vmatpush1.msra.mxu0 %v3646
    %6626 = vmatprep.subr.mxu0 0.0
    %6627 = vmatpush1.msra.mxu0 %v3647
    %6628 = vmatprep.subr.mxu0 0.0
    %6629 = vmatpush1.msra.mxu0 %v3648
    %6630 = vmatprep.mubr.f32.mxu0 %v5594
    %6631 = vmatmul.mubr.f32.gmra.mrb[0].mxu0 %v5592
    %v6632 = vpop.f32.mrb[0].mxu0
    %v6633 = vadd.f32 %v6563, %v6632
    %v6634 = vpop.f32.mrb[0].mxu0
    %6635 = vdwg.mxu0
    %6636 = vmatprep.subr.mxu0 0.0
    %6637 = vmatpush1.msra.mxu0 %v3649
    %6638 = vmatprep.subr.mxu0 0.0
    %6639 = vmatpush1.msra.mxu0 %v3650
    %6640 = vmatprep.subr.mxu0 0.0
    %6641 = vmatpush1.msra.mxu0 %v3651
    %6642 = vmatprep.subr.mxu0 0.0
    %6643 = vmatpush1.msra.mxu0 %v3652
    %6644 = vmatprep.subr.mxu0 0.0
    %6645 = vmatpush1.msra.mxu0 %v3653
    %6646 = vmatprep.subr.mxu0 0.0
    %6647 = vmatpush1.msra.mxu0 %v3654
    %6648 = vmatprep.subr.mxu0 0.0
    %6649 = vmatpush1.msra.mxu0 %v3655
    %6650 = vmatprep.subr.mxu0 0.0
    %6651 = vmatpush1.msra.mxu0 %v3656
    %6652 = vmatprep.subr.mxu0 0.0
    %6653 = vmatpush1.msra.mxu0 %v3657
    %6654 = vmatprep.subr.mxu0 0.0
    %6655 = vmatpush1.msra.mxu0 %v3658
    %6656 = vmatprep.subr.mxu0 0.0
    %6657 = vmatpush1.msra.mxu0 %v3659
    %6658 = vmatprep.subr.mxu0 0.0
    %6659 = vmatpush1.msra.mxu0 %v3660
    %6660 = vmatprep.subr.mxu0 0.0
    %6661 = vmatpush1.msra.mxu0 %v3661
    %6662 = vmatprep.subr.mxu0 0.0
    %6663 = vmatpush1.msra.mxu0 %v3662
    %6664 = vmatprep.subr.mxu0 0.0
    %6665 = vmatpush1.msra.mxu0 %v3663
    %6666 = vmatprep.subr.mxu0 0.0
    %6667 = vmatpush1.msra.mxu0 %v3664
    %6668 = vmatprep.subr.mxu0 0.0
    %6669 = vmatpush1.msra.mxu0 %v3665
    %6670 = vmatprep.subr.mxu0 0.0
    %6671 = vmatpush1.msra.mxu0 %v3666
    %6672 = vmatprep.subr.mxu0 0.0
    %6673 = vmatpush1.msra.mxu0 %v3667
    %6674 = vmatprep.subr.mxu0 0.0
    %6675 = vmatpush1.msra.mxu0 %v3668
    %6676 = vmatprep.subr.mxu0 0.0
    %6677 = vmatpush1.msra.mxu0 %v3669
    %6678 = vmatprep.subr.mxu0 0.0
    %6679 = vmatpush1.msra.mxu0 %v3670
    %6680 = vmatprep.subr.mxu0 0.0
    %6681 = vmatpush1.msra.mxu0 %v3671
    %6682 = vmatprep.subr.mxu0 0.0
    %6683 = vmatpush1.msra.mxu0 %v3672
    %6684 = vmatprep.subr.mxu0 0.0
    %6685 = vmatpush1.msra.mxu0 %v3673
    %6686 = vmatprep.subr.mxu0 0.0
    %6687 = vmatpush1.msra.mxu0 %v3674
    %6688 = vmatprep.subr.mxu0 0.0
    %6689 = vmatpush1.msra.mxu0 %v3675
    %6690 = vmatprep.subr.mxu0 0.0
    %6691 = vmatpush1.msra.mxu0 %v3676
    %6692 = vmatprep.subr.mxu0 0.0
    %6693 = vmatpush1.msra.mxu0 %v3677
    %6694 = vmatprep.subr.mxu0 0.0
    %6695 = vmatpush1.msra.mxu0 %v3678
    %6696 = vmatprep.subr.mxu0 0.0
    %6697 = vmatpush1.msra.mxu0 %v3679
    %6698 = vmatprep.subr.mxu0 0.0
    %6699 = vmatpush1.msra.mxu0 %v3680
    %6700 = vmatprep.mubr.f32.mxu0 %v5610
    %6701 = vmatmul.mubr.f32.gmra.mrb[0].mxu0 %v5602
    %v6702 = vpop.f32.mrb[0].mxu0
    %v6703 = vadd.f32 %v6633, %v6702
    %v6704 = vpop.f32.mrb[0].mxu0
    %6705 = vdwg.mxu0
    %6706 = vmatprep.subr.mxu0 0.0
    %6707 = vmatpush1.msra.mxu0 %v3681
    %6708 = vmatprep.subr.mxu0 0.0
    %6709 = vmatpush1.msra.mxu0 %v3682
    %6710 = vmatprep.subr.mxu0 0.0
    %6711 = vmatpush1.msra.mxu0 %v3683
    %6712 = vmatprep.subr.mxu0 0.0
    %6713 = vmatpush1.msra.mxu0 %v3684
    %6714 = vmatprep.subr.mxu0 0.0
    %6715 = vmatpush1.msra.mxu0 %v3685
    %6716 = vmatprep.subr.mxu0 0.0
    %6717 = vmatpush1.msra.mxu0 %v3686
    %6718 = vmatprep.subr.mxu0 0.0
    %6719 = vmatpush1.msra.mxu0 %v3687
    %6720 = vmatprep.subr.mxu0 0.0
    %6721 = vmatpush1.msra.mxu0 %v3688
    %6722 = vmatprep.subr.mxu0 0.0
    %6723 = vmatpush1.msra.mxu0 %v3689
    %6724 = vmatprep.subr.mxu0 0.0
    %6725 = vmatpush1.msra.mxu0 %v3690
    %6726 = vmatprep.subr.mxu0 0.0
    %6727 = vmatpush1.msra.mxu0 %v3691
    %6728 = vmatprep.subr.mxu0 0.0
    %6729 = vmatpush1.msra.mxu0 %v3692
    %6730 = vmatprep.subr.mxu0 0.0
    %6731 = vmatpush1.msra.mxu0 %v3693
    %6732 = vmatprep.subr.mxu0 0.0
    %6733 = vmatpush1.msra.mxu0 %v3694
    %6734 = vmatprep.subr.mxu0 0.0
    %6735 = vmatpush1.msra.mxu0 %v3695
    %6736 = vmatprep.subr.mxu0 0.0
    %6737 = vmatpush1.msra.mxu0 %v3696
    %6738 = vmatprep.subr.mxu0 0.0
    %6739 = vmatpush1.msra.mxu0 %v3697
    %6740 = vmatprep.subr.mxu0 0.0
    %6741 = vmatpush1.msra.mxu0 %v3698
    %6742 = vmatprep.subr.mxu0 0.0
    %6743 = vmatpush1.msra.mxu0 %v3699
    %6744 = vmatprep.subr.mxu0 0.0
    %6745 = vmatpush1.msra.mxu0 %v3700
    %6746 = vmatprep.subr.mxu0 0.0
    %6747 = vmatpush1.msra.mxu0 %v3701
    %6748 = vmatprep.subr.mxu0 0.0
    %6749 = vmatpush1.msra.mxu0 %v3702
    %6750 = vmatprep.subr.mxu0 0.0
    %6751 = vmatpush1.msra.mxu0 %v3703
    %6752 = vmatprep.subr.mxu0 0.0
    %6753 = vmatpush1.msra.mxu0 %v3704
    %6754 = vmatprep.subr.mxu0 0.0
    %6755 = vmatpush1.msra.mxu0 %v3705
    %6756 = vmatprep.subr.mxu0 0.0
    %6757 = vmatpush1.msra.mxu0 %v3706
    %6758 = vmatprep.subr.mxu0 0.0
    %6759 = vmatpush1.msra.mxu0 %v3707
    %6760 = vmatprep.subr.mxu0 0.0
    %6761 = vmatpush1.msra.mxu0 %v3708
    %6762 = vmatprep.subr.mxu0 0.0
    %6763 = vmatpush1.msra.mxu0 %v3709
    %6764 = vmatprep.subr.mxu0 0.0
    %6765 = vmatpush1.msra.mxu0 %v3710
    %6766 = vmatprep.subr.mxu0 0.0
    %6767 = vmatpush1.msra.mxu0 %v3711
    %6768 = vmatprep.subr.mxu0 0.0
    %6769 = vmatpush1.msra.mxu0 %v3712
    %6770 = vmatprep.mubr.f32.mxu0 %v5611
    %6771 = vmatmul.mubr.f32.gmra.mrb[0].mxu0 %v5609
    %v6772 = vpop.f32.mrb[0].mxu0
    %v6773 = vadd.f32 %v6703, %v6772
    %v6774 = vpop.f32.mrb[0].mxu0
    %6775 = vdwg.mxu0
    %6776 = vmatprep.subr.mxu0 0.0
    %6777 = vmatpush1.msra.mxu0 %v3713
    %6778 = vmatprep.subr.mxu0 0.0
    %6779 = vmatpush1.msra.mxu0 %v3714
    %6780 = vmatprep.subr.mxu0 0.0
    %6781 = vmatpush1.msra.mxu0 %v3715
    %6782 = vmatprep.subr.mxu0 0.0
    %6783 = vmatpush1.msra.mxu0 %v3716
    %6784 = vmatprep.subr.mxu0 0.0
    %6785 = vmatpush1.msra.mxu0 %v3717
    %6786 = vmatprep.subr.mxu0 0.0
    %6787 = vmatpush1.msra.mxu0 %v3718
    %6788 = vmatprep.subr.mxu0 0.0
    %6789 = vmatpush1.msra.mxu0 %v3719
    %6790 = vmatprep.subr.mxu0 0.0
    %6791 = vmatpush1.msra.mxu0 %v3720
    %6792 = vmatprep.subr.mxu0 0.0
    %6793 = vmatpush1.msra.mxu0 %v3721
    %6794 = vmatprep.subr.mxu0 0.0
    %6795 = vmatpush1.msra.mxu0 %v3722
    %6796 = vmatprep.subr.mxu0 0.0
    %6797 = vmatpush1.msra.mxu0 %v3723
    %6798 = vmatprep.subr.mxu0 0.0
    %6799 = vmatpush1.msra.mxu0 %v3724
    %6800 = vmatprep.subr.mxu0 0.0
    %6801 = vmatpush1.msra.mxu0 %v3725
    %6802 = vmatprep.subr.mxu0 0.0
    %6803 = vmatpush1.msra.mxu0 %v3726
    %6804 = vmatprep.subr.mxu0 0.0
    %6805 = vmatpush1.msra.mxu0 %v3727
    %6806 = vmatprep.subr.mxu0 0.0
    %6807 = vmatpush1.msra.mxu0 %v3728
    %6808 = vmatprep.subr.mxu0 0.0
    %6809 = vmatpush1.msra.mxu0 %v3729
    %6810 = vmatprep.subr.mxu0 0.0
    %6811 = vmatpush1.msra.mxu0 %v3730
    %6812 = vmatprep.subr.mxu0 0.0
    %6813 = vmatpush1.msra.mxu0 %v3731
    %6814 = vmatprep.subr.mxu0 0.0
    %6815 = vmatpush1.msra.mxu0 %v3732
    %6816 = vmatprep.subr.mxu0 0.0
    %6817 = vmatpush1.msra.mxu0 %v3733
    %6818 = vmatprep.subr.mxu0 0.0
    %6819 = vmatpush1.msra.mxu0 %v3734
    %6820 = vmatprep.subr.mxu0 0.0
    %6821 = vmatpush1.msra.mxu0 %v3735
    %6822 = vmatprep.subr.mxu0 0.0
    %6823 = vmatpush1.msra.mxu0 %v3736
    %6824 = vmatprep.subr.mxu0 0.0
    %6825 = vmatpush1.msra.mxu0 %v3737
    %6826 = vmatprep.subr.mxu0 0.0
    %6827 = vmatpush1.msra.mxu0 %v3738
    %6828 = vmatprep.subr.mxu0 0.0
    %6829 = vmatpush1.msra.mxu0 %v3739
    %6830 = vmatprep.subr.mxu0 0.0
    %6831 = vmatpush1.msra.mxu0 %v3740
    %6832 = vmatprep.subr.mxu0 0.0
    %6833 = vmatpush1.msra.mxu0 %v3741
    %6834 = vmatprep.subr.mxu0 0.0
    %6835 = vmatpush1.msra.mxu0 %v3742
    %6836 = vmatprep.subr.mxu0 0.0
    %6837 = vmatpush1.msra.mxu0 %v3743
    %6838 = vmatprep.subr.mxu0 0.0
    %6839 = vmatpush1.msra.mxu0 %v3744
    %6840 = vmatprep.mubr.f32.mxu0 %v5627
    %6841 = vmatmul.mubr.f32.gmra.mrb[0].mxu0 %v5619
    %v6842 = vpop.f32.mrb[0].mxu0
    %v6843 = vadd.f32 %v6773, %v6842
    %v6844 = vpop.f32.mrb[0].mxu0
    %6845 = vdwg.mxu0
    %6846 = vmatprep.subr.mxu0 0.0
    %6847 = vmatpush1.msra.mxu0 %v3745
    %6848 = vmatprep.subr.mxu0 0.0
    %6849 = vmatpush1.msra.mxu0 %v3746
    %6850 = vmatprep.subr.mxu0 0.0
    %6851 = vmatpush1.msra.mxu0 %v3747
    %6852 = vmatprep.subr.mxu0 0.0
    %6853 = vmatpush1.msra.mxu0 %v3748
    %6854 = vmatprep.subr.mxu0 0.0
    %6855 = vmatpush1.msra.mxu0 %v3749
    %6856 = vmatprep.subr.mxu0 0.0
    %6857 = vmatpush1.msra.mxu0 %v3750
    %6858 = vmatprep.subr.mxu0 0.0
    %6859 = vmatpush1.msra.mxu0 %v3751
    %6860 = vmatprep.subr.mxu0 0.0
    %6861 = vmatpush1.msra.mxu0 %v3752
    %6862 = vmatprep.subr.mxu0 0.0
    %6863 = vmatpush1.msra.mxu0 %v3753
    %6864 = vmatprep.subr.mxu0 0.0
    %6865 = vmatpush1.msra.mxu0 %v3754
    %6866 = vmatprep.subr.mxu0 0.0
    %6867 = vmatpush1.msra.mxu0 %v3755
    %6868 = vmatprep.subr.mxu0 0.0
    %6869 = vmatpush1.msra.mxu0 %v3756
    %6870 = vmatprep.subr.mxu0 0.0
    %6871 = vmatpush1.msra.mxu0 %v3757
    %6872 = vmatprep.subr.mxu0 0.0
    %6873 = vmatpush1.msra.mxu0 %v3758
    %6874 = vmatprep.subr.mxu0 0.0
    %6875 = vmatpush1.msra.mxu0 %v3759
    %6876 = vmatprep.subr.mxu0 0.0
    %6877 = vmatpush1.msra.mxu0 %v3760
    %6878 = vmatprep.subr.mxu0 0.0
    %6879 = vmatpush1.msra.mxu0 %v3761
    %6880 = vmatprep.subr.mxu0 0.0
    %6881 = vmatpush1.msra.mxu0 %v3762
    %6882 = vmatprep.subr.mxu0 0.0
    %6883 = vmatpush1.msra.mxu0 %v3763
    %6884 = vmatprep.subr.mxu0 0.0
    %6885 = vmatpush1.msra.mxu0 %v3764
    %6886 = vmatprep.subr.mxu0 0.0
    %6887 = vmatpush1.msra.mxu0 %v3765
    %6888 = vmatprep.subr.mxu0 0.0
    %6889 = vmatpush1.msra.mxu0 %v3766
    %6890 = vmatprep.subr.mxu0 0.0
    %6891 = vmatpush1.msra.mxu0 %v3767
    %6892 = vmatprep.subr.mxu0 0.0
    %6893 = vmatpush1.msra.mxu0 %v3768
    %6894 = vmatprep.subr.mxu0 0.0
    %6895 = vmatpush1.msra.mxu0 %v3769
    %6896 = vmatprep.subr.mxu0 0.0
    %6897 = vmatpush1.msra.mxu0 %v3770
    %6898 = vmatprep.subr.mxu0 0.0
    %6899 = vmatpush1.msra.mxu0 %v3771
    %6900 = vmatprep.subr.mxu0 0.0
    %6901 = vmatpush1.msra.mxu0 %v3772
    %6902 = vmatprep.subr.mxu0 0.0
    %6903 = vmatpush1.msra.mxu0 %v3773
    %6904 = vmatprep.subr.mxu0 0.0
    %6905 = vmatpush1.msra.mxu0 %v3774
    %6906 = vmatprep.subr.mxu0 0.0
    %6907 = vmatpush1.msra.mxu0 %v3775
    %6908 = vmatprep.subr.mxu0 0.0
    %6909 = vmatpush1.msra.mxu0 %v3776
    %6910 = vmatprep.mubr.f32.mxu0 %v5628
    %6911 = vmatmul.mubr.f32.gmra.mrb[0].mxu0 %v5626
    %v6912 = vpop.f32.mrb[0].mxu0
    %v6913 = vadd.f32 %v6843, %v6912
    %v6914 = vpop.f32.mrb[0].mxu0
    %6915 = vdwg.mxu0
    %6916 = vmatprep.subr.mxu0 0.0
    %6917 = vmatpush1.msra.mxu0 %v3777
    %6918 = vmatprep.subr.mxu0 0.0
    %6919 = vmatpush1.msra.mxu0 %v3778
    %6920 = vmatprep.subr.mxu0 0.0
    %6921 = vmatpush1.msra.mxu0 %v3779
    %6922 = vmatprep.subr.mxu0 0.0
    %6923 = vmatpush1.msra.mxu0 %v3780
    %6924 = vmatprep.subr.mxu0 0.0
    %6925 = vmatpush1.msra.mxu0 %v3781
    %6926 = vmatprep.subr.mxu0 0.0
    %6927 = vmatpush1.msra.mxu0 %v3782
    %6928 = vmatprep.subr.mxu0 0.0
    %6929 = vmatpush1.msra.mxu0 %v3783
    %6930 = vmatprep.subr.mxu0 0.0
    %6931 = vmatpush1.msra.mxu0 %v3784
    %6932 = vmatprep.subr.mxu0 0.0
    %6933 = vmatpush1.msra.mxu0 %v3785
    %6934 = vmatprep.subr.mxu0 0.0
    %6935 = vmatpush1.msra.mxu0 %v3786
    %6936 = vmatprep.subr.mxu0 0.0
    %6937 = vmatpush1.msra.mxu0 %v3787
    %6938 = vmatprep.subr.mxu0 0.0
    %6939 = vmatpush1.msra.mxu0 %v3788
    %6940 = vmatprep.subr.mxu0 0.0
    %6941 = vmatpush1.msra.mxu0 %v3789
    %6942 = vmatprep.subr.mxu0 0.0
    %6943 = vmatpush1.msra.mxu0 %v3790
    %6944 = vmatprep.subr.mxu0 0.0
    %6945 = vmatpush1.msra.mxu0 %v3791
    %6946 = vmatprep.subr.mxu0 0.0
    %6947 = vmatpush1.msra.mxu0 %v3792
    %6948 = vmatprep.subr.mxu0 0.0
    %6949 = vmatpush1.msra.mxu0 %v3793
    %6950 = vmatprep.subr.mxu0 0.0
    %6951 = vmatpush1.msra.mxu0 %v3794
    %6952 = vmatprep.subr.mxu0 0.0
    %6953 = vmatpush1.msra.mxu0 %v3795
    %6954 = vmatprep.subr.mxu0 0.0
    %6955 = vmatpush1.msra.mxu0 %v3796
    %6956 = vmatprep.subr.mxu0 0.0
    %6957 = vmatpush1.msra.mxu0 %v3797
    %6958 = vmatprep.subr.mxu0 0.0
    %6959 = vmatpush1.msra.mxu0 %v3798
    %6960 = vmatprep.subr.mxu0 0.0
    %6961 = vmatpush1.msra.mxu0 %v3799
    %6962 = vmatprep.subr.mxu0 0.0
    %6963 = vmatpush1.msra.mxu0 %v3800
    %6964 = vmatprep.subr.mxu0 0.0
    %6965 = vmatpush1.msra.mxu0 %v3801
    %6966 = vmatprep.subr.mxu0 0.0
    %6967 = vmatpush1.msra.mxu0 %v3802
    %6968 = vmatprep.subr.mxu0 0.0
    %6969 = vmatpush1.msra.mxu0 %v3803
    %6970 = vmatprep.subr.mxu0 0.0
    %6971 = vmatpush1.msra.mxu0 %v3804
    %6972 = vmatprep.subr.mxu0 0.0
    %6973 = vmatpush1.msra.mxu0 %v3805
    %6974 = vmatprep.subr.mxu0 0.0
    %6975 = vmatpush1.msra.mxu0 %v3806
    %6976 = vmatprep.subr.mxu0 0.0
    %6977 = vmatpush1.msra.mxu0 %v3807
    %6978 = vmatprep.subr.mxu0 0.0
    %6979 = vmatpush1.msra.mxu0 %v3808
    %6980 = vmatprep.mubr.f32.mxu0 %v5644
    %6981 = vmatmul.mubr.f32.gmra.mrb[0].mxu0 %v5636
    %v6982 = vpop.f32.mrb[0].mxu0
    %v6983 = vadd.f32 %v6913, %v6982
    %v6984 = vpop.f32.mrb[0].mxu0
    %6985 = vdwg.mxu0
    %6986 = vmatprep.subr.mxu0 0.0
    %6987 = vmatpush1.msra.mxu0 %v3809
    %6988 = vmatprep.subr.mxu0 0.0
    %6989 = vmatpush1.msra.mxu0 %v3810
    %6990 = vmatprep.subr.mxu0 0.0
    %6991 = vmatpush1.msra.mxu0 %v3811
    %6992 = vmatprep.subr.mxu0 0.0
    %6993 = vmatpush1.msra.mxu0 %v3812
    %6994 = vmatprep.subr.mxu0 0.0
    %6995 = vmatpush1.msra.mxu0 %v3813
    %6996 = vmatprep.subr.mxu0 0.0
    %6997 = vmatpush1.msra.mxu0 %v3814
    %6998 = vmatprep.subr.mxu0 0.0
    %6999 = vmatpush1.msra.mxu0 %v3815
    %7000 = vmatprep.subr.mxu0 0.0
    %7001 = vmatpush1.msra.mxu0 %v3816
    %7002 = vmatprep.subr.mxu0 0.0
    %7003 = vmatpush1.msra.mxu0 %v3817
    %7004 = vmatprep.subr.mxu0 0.0
    %7005 = vmatpush1.msra.mxu0 %v3818
    %7006 = vmatprep.subr.mxu0 0.0
    %7007 = vmatpush1.msra.mxu0 %v3819
    %7008 = vmatprep.subr.mxu0 0.0
    %7009 = vmatpush1.msra.mxu0 %v3820
    %7010 = vmatprep.subr.mxu0 0.0
    %7011 = vmatpush1.msra.mxu0 %v3821
    %7012 = vmatprep.subr.mxu0 0.0
    %7013 = vmatpush1.msra.mxu0 %v3822
    %7014 = vmatprep.subr.mxu0 0.0
    %7015 = vmatpush1.msra.mxu0 %v3823
    %7016 = vmatprep.subr.mxu0 0.0
    %7017 = vmatpush1.msra.mxu0 %v3824
    %7018 = vmatprep.subr.mxu0 0.0
    %7019 = vmatpush1.msra.mxu0 %v3825
    %7020 = vmatprep.subr.mxu0 0.0
    %7021 = vmatpush1.msra.mxu0 %v3826
    %7022 = vmatprep.subr.mxu0 0.0
    %7023 = vmatpush1.msra.mxu0 %v3827
    %7024 = vmatprep.subr.mxu0 0.0
    %7025 = vmatpush1.msra.mxu0 %v3828
    %7026 = vmatprep.subr.mxu0 0.0
    %7027 = vmatpush1.msra.mxu0 %v3829
    %7028 = vmatprep.subr.mxu0 0.0
    %7029 = vmatpush1.msra.mxu0 %v3830
    %7030 = vmatprep.subr.mxu0 0.0
    %7031 = vmatpush1.msra.mxu0 %v3831
    %7032 = vmatprep.subr.mxu0 0.0
    %7033 = vmatpush1.msra.mxu0 %v3832
    %7034 = vmatprep.subr.mxu0 0.0
    %7035 = vmatpush1.msra.mxu0 %v3833
    %7036 = vmatprep.subr.mxu0 0.0
    %7037 = vmatpush1.msra.mxu0 %v3834
    %7038 = vmatprep.subr.mxu0 0.0
    %7039 = vmatpush1.msra.mxu0 %v3835
    %7040 = vmatprep.subr.mxu0 0.0
    %7041 = vmatpush1.msra.mxu0 %v3836
    %7042 = vmatprep.subr.mxu0 0.0
    %7043 = vmatpush1.msra.mxu0 %v3837
    %7044 = vmatprep.subr.mxu0 0.0
    %7045 = vmatpush1.msra.mxu0 %v3838
    %7046 = vmatprep.subr.mxu0 0.0
    %7047 = vmatpush1.msra.mxu0 %v3839
    %7048 = vmatprep.subr.mxu0 0.0
    %7049 = vmatpush1.msra.mxu0 %v3840
    %7050 = vmatprep.mubr.f32.mxu0 %v5645
    %7051 = vmatmul.mubr.f32.gmra.mrb[0].mxu0 %v5643
    %v7052 = vpop.f32.mrb[0].mxu0
    %v7053 = vadd.f32 %v6983, %v7052
    %v7054 = vpop.f32.mrb[0].mxu0
    %7055 = vdwg.mxu0
    %7056 = vmatprep.subr.mxu0 0.0
    %7057 = vmatpush1.msra.mxu0 %v3841
    %7058 = vmatprep.subr.mxu0 0.0
    %7059 = vmatpush1.msra.mxu0 %v3842
    %7060 = vmatprep.subr.mxu0 0.0
    %7061 = vmatpush1.msra.mxu0 %v3843
    %7062 = vmatprep.subr.mxu0 0.0
    %7063 = vmatpush1.msra.mxu0 %v3844
    %7064 = vmatprep.subr.mxu0 0.0
    %7065 = vmatpush1.msra.mxu0 %v3845
    %7066 = vmatprep.subr.mxu0 0.0
    %7067 = vmatpush1.msra.mxu0 %v3846
    %7068 = vmatprep.subr.mxu0 0.0
    %7069 = vmatpush1.msra.mxu0 %v3847
    %7070 = vmatprep.subr.mxu0 0.0
    %7071 = vmatpush1.msra.mxu0 %v3848
    %7072 = vmatprep.subr.mxu0 0.0
    %7073 = vmatpush1.msra.mxu0 %v3849
    %7074 = vmatprep.subr.mxu0 0.0
    %7075 = vmatpush1.msra.mxu0 %v3850
    %7076 = vmatprep.subr.mxu0 0.0
    %7077 = vmatpush1.msra.mxu0 %v3851
    %7078 = vmatprep.subr.mxu0 0.0
    %7079 = vmatpush1.msra.mxu0 %v3852
    %7080 = vmatprep.subr.mxu0 0.0
    %7081 = vmatpush1.msra.mxu0 %v3853
    %7082 = vmatprep.subr.mxu0 0.0
    %7083 = vmatpush1.msra.mxu0 %v3854
    %7084 = vmatprep.subr.mxu0 0.0
    %7085 = vmatpush1.msra.mxu0 %v3855
    %7086 = vmatprep.subr.mxu0 0.0
    %7087 = vmatpush1.msra.mxu0 %v3856
    %7088 = vmatprep.subr.mxu0 0.0
    %7089 = vmatpush1.msra.mxu0 %v3857
    %7090 = vmatprep.subr.mxu0 0.0
    %7091 = vmatpush1.msra.mxu0 %v3858
    %7092 = vmatprep.subr.mxu0 0.0
    %7093 = vmatpush1.msra.mxu0 %v3859
    %7094 = vmatprep.subr.mxu0 0.0
    %7095 = vmatpush1.msra.mxu0 %v3860
    %7096 = vmatprep.subr.mxu0 0.0
    %7097 = vmatpush1.msra.mxu0 %v3861
    %7098 = vmatprep.subr.mxu0 0.0
    %7099 = vmatpush1.msra.mxu0 %v3862
    %7100 = vmatprep.subr.mxu0 0.0
    %7101 = vmatpush1.msra.mxu0 %v3863
    %7102 = vmatprep.subr.mxu0 0.0
    %7103 = vmatpush1.msra.mxu0 %v3864
    %7104 = vmatprep.subr.mxu0 0.0
    %7105 = vmatpush1.msra.mxu0 %v3865
    %7106 = vmatprep.subr.mxu0 0.0
    %7107 = vmatpush1.msra.mxu0 %v3866
    %7108 = vmatprep.subr.mxu0 0.0
    %7109 = vmatpush1.msra.mxu0 %v3867
    %7110 = vmatprep.subr.mxu0 0.0
    %7111 = vmatpush1.msra.mxu0 %v3868
    %7112 = vmatprep.subr.mxu0 0.0
    %7113 = vmatpush1.msra.mxu0 %v3869
    %7114 = vmatprep.subr.mxu0 0.0
    %7115 = vmatpush1.msra.mxu0 %v3870
    %7116 = vmatprep.subr.mxu0 0.0
    %7117 = vmatpush1.msra.mxu0 %v3871
    %7118 = vmatprep.subr.mxu0 0.0
    %7119 = vmatpush1.msra.mxu0 %v3872
    %7120 = vmatprep.mubr.f32.mxu0 %v5661
    %7121 = vmatmul.mubr.f32.gmra.mrb[0].mxu0 %v5653
    %v7122 = vpop.f32.mrb[0].mxu0
    %v7123 = vadd.f32 %v7053, %v7122
    %v7124 = vpop.f32.mrb[0].mxu0
    %7125 = vdwg.mxu0
    %7126 = vmatprep.subr.mxu0 0.0
    %7127 = vmatpush1.msra.mxu0 %v3873
    %7128 = vmatprep.subr.mxu0 0.0
    %7129 = vmatpush1.msra.mxu0 %v3874
    %7130 = vmatprep.subr.mxu0 0.0
    %7131 = vmatpush1.msra.mxu0 %v3875
    %7132 = vmatprep.subr.mxu0 0.0
    %7133 = vmatpush1.msra.mxu0 %v3876
    %7134 = vmatprep.subr.mxu0 0.0
    %7135 = vmatpush1.msra.mxu0 %v3877
    %7136 = vmatprep.subr.mxu0 0.0
    %7137 = vmatpush1.msra.mxu0 %v3878
    %7138 = vmatprep.subr.mxu0 0.0
    %7139 = vmatpush1.msra.mxu0 %v3879
    %7140 = vmatprep.subr.mxu0 0.0
    %7141 = vmatpush1.msra.mxu0 %v3880
    %7142 = vmatprep.subr.mxu0 0.0
    %7143 = vmatpush1.msra.mxu0 %v3881
    %7144 = vmatprep.subr.mxu0 0.0
    %7145 = vmatpush1.msra.mxu0 %v3882
    %7146 = vmatprep.subr.mxu0 0.0
    %7147 = vmatpush1.msra.mxu0 %v3883
    %7148 = vmatprep.subr.mxu0 0.0
    %7149 = vmatpush1.msra.mxu0 %v3884
    %7150 = vmatprep.subr.mxu0 0.0
    %7151 = vmatpush1.msra.mxu0 %v3885
    %7152 = vmatprep.subr.mxu0 0.0
    %7153 = vmatpush1.msra.mxu0 %v3886
    %7154 = vmatprep.subr.mxu0 0.0
    %7155 = vmatpush1.msra.mxu0 %v3887
    %7156 = vmatprep.subr.mxu0 0.0
    %7157 = vmatpush1.msra.mxu0 %v3888
    %7158 = vmatprep.subr.mxu0 0.0
    %7159 = vmatpush1.msra.mxu0 %v3889
    %7160 = vmatprep.subr.mxu0 0.0
    %7161 = vmatpush1.msra.mxu0 %v3890
    %7162 = vmatprep.subr.mxu0 0.0
    %7163 = vmatpush1.msra.mxu0 %v3891
    %7164 = vmatprep.subr.mxu0 0.0
    %7165 = vmatpush1.msra.mxu0 %v3892
    %7166 = vmatprep.subr.mxu0 0.0
    %7167 = vmatpush1.msra.mxu0 %v3893
    %7168 = vmatprep.subr.mxu0 0.0
    %7169 = vmatpush1.msra.mxu0 %v3894
    %7170 = vmatprep.subr.mxu0 0.0
    %7171 = vmatpush1.msra.mxu0 %v3895
    %7172 = vmatprep.subr.mxu0 0.0
    %7173 = vmatpush1.msra.mxu0 %v3896
    %7174 = vmatprep.subr.mxu0 0.0
    %7175 = vmatpush1.msra.mxu0 %v3897
    %7176 = vmatprep.subr.mxu0 0.0
    %7177 = vmatpush1.msra.mxu0 %v3898
    %7178 = vmatprep.subr.mxu0 0.0
    %7179 = vmatpush1.msra.mxu0 %v3899
    %7180 = vmatprep.subr.mxu0 0.0
    %7181 = vmatpush1.msra.mxu0 %v3900
    %7182 = vmatprep.subr.mxu0 0.0
    %7183 = vmatpush1.msra.mxu0 %v3901
    %7184 = vmatprep.subr.mxu0 0.0
    %7185 = vmatpush1.msra.mxu0 %v3902
    %7186 = vmatprep.subr.mxu0 0.0
    %7187 = vmatpush1.msra.mxu0 %v3903
    %7188 = vmatprep.subr.mxu0 0.0
    %7189 = vmatpush1.msra.mxu0 %v3904
    %7190 = vmatprep.mubr.f32.mxu0 %v5662
    %7191 = vmatmul.mubr.f32.gmra.mrb[0].mxu0 %v5660
    %v7192 = vpop.f32.mrb[0].mxu0
    %v7193 = vadd.f32 %v7123, %v7192
    %v7194 = vpop.f32.mrb[0].mxu0
    %7195 = vdwg.mxu0
    %7196 = vmatprep.subr.mxu0 0.0
    %7197 = vmatpush1.msra.mxu0 %v3905
    %7198 = vmatprep.subr.mxu0 0.0
    %7199 = vmatpush1.msra.mxu0 %v3906
    %7200 = vmatprep.subr.mxu0 0.0
    %7201 = vmatpush1.msra.mxu0 %v3907
    %7202 = vmatprep.subr.mxu0 0.0
    %7203 = vmatpush1.msra.mxu0 %v3908
    %7204 = vmatprep.subr.mxu0 0.0
    %7205 = vmatpush1.msra.mxu0 %v3909
    %7206 = vmatprep.subr.mxu0 0.0
    %7207 = vmatpush1.msra.mxu0 %v3910
    %7208 = vmatprep.subr.mxu0 0.0
    %7209 = vmatpush1.msra.mxu0 %v3911
    %7210 = vmatprep.subr.mxu0 0.0
    %7211 = vmatpush1.msra.mxu0 %v3912
    %7212 = vmatprep.subr.mxu0 0.0
    %7213 = vmatpush1.msra.mxu0 %v3913
    %7214 = vmatprep.subr.mxu0 0.0
    %7215 = vmatpush1.msra.mxu0 %v3914
    %7216 = vmatprep.subr.mxu0 0.0
    %7217 = vmatpush1.msra.mxu0 %v3915
    %7218 = vmatprep.subr.mxu0 0.0
    %7219 = vmatpush1.msra.mxu0 %v3916
    %7220 = vmatprep.subr.mxu0 0.0
    %7221 = vmatpush1.msra.mxu0 %v3917
    %7222 = vmatprep.subr.mxu0 0.0
    %7223 = vmatpush1.msra.mxu0 %v3918
    %7224 = vmatprep.subr.mxu0 0.0
    %7225 = vmatpush1.msra.mxu0 %v3919
    %7226 = vmatprep.subr.mxu0 0.0
    %7227 = vmatpush1.msra.mxu0 %v3920
    %7228 = vmatprep.subr.mxu0 0.0
    %7229 = vmatpush1.msra.mxu0 %v3921
    %7230 = vmatprep.subr.mxu0 0.0
    %7231 = vmatpush1.msra.mxu0 %v3922
    %7232 = vmatprep.subr.mxu0 0.0
    %7233 = vmatpush1.msra.mxu0 %v3923
    %7234 = vmatprep.subr.mxu0 0.0
    %7235 = vmatpush1.msra.mxu0 %v3924
    %7236 = vmatprep.subr.mxu0 0.0
    %7237 = vmatpush1.msra.mxu0 %v3925
    %7238 = vmatprep.subr.mxu0 0.0
    %7239 = vmatpush1.msra.mxu0 %v3926
    %7240 = vmatprep.subr.mxu0 0.0
    %7241 = vmatpush1.msra.mxu0 %v3927
    %7242 = vmatprep.subr.mxu0 0.0
    %7243 = vmatpush1.msra.mxu0 %v3928
    %7244 = vmatprep.subr.mxu0 0.0
    %7245 = vmatpush1.msra.mxu0 %v3929
    %7246 = vmatprep.subr.mxu0 0.0
    %7247 = vmatpush1.msra.mxu0 %v3930
    %7248 = vmatprep.subr.mxu0 0.0
    %7249 = vmatpush1.msra.mxu0 %v3931
    %7250 = vmatprep.subr.mxu0 0.0
    %7251 = vmatpush1.msra.mxu0 %v3932
    %7252 = vmatprep.subr.mxu0 0.0
    %7253 = vmatpush1.msra.mxu0 %v3933
    %7254 = vmatprep.subr.mxu0 0.0
    %7255 = vmatpush1.msra.mxu0 %v3934
    %7256 = vmatprep.subr.mxu0 0.0
    %7257 = vmatpush1.msra.mxu0 %v3935
    %7258 = vmatprep.subr.mxu0 0.0
    %7259 = vmatpush1.msra.mxu0 %v3936
    %7260 = vmatprep.mubr.f32.mxu0 %v5678
    %7261 = vmatmul.mubr.f32.gmra.mrb[0].mxu0 %v5670
    %v7262 = vpop.f32.mrb[0].mxu0
    %v7263 = vadd.f32 %v7193, %v7262
    %v7264 = vpop.f32.mrb[0].mxu0
    %7265 = vdwg.mxu0
    %7266 = vmatprep.subr.mxu0 0.0
    %7267 = vmatpush1.msra.mxu0 %v3937
    %7268 = vmatprep.subr.mxu0 0.0
    %7269 = vmatpush1.msra.mxu0 %v3938
    %7270 = vmatprep.subr.mxu0 0.0
    %7271 = vmatpush1.msra.mxu0 %v3939
    %7272 = vmatprep.subr.mxu0 0.0
    %7273 = vmatpush1.msra.mxu0 %v3940
    %7274 = vmatprep.subr.mxu0 0.0
    %7275 = vmatpush1.msra.mxu0 %v3941
    %7276 = vmatprep.subr.mxu0 0.0
    %7277 = vmatpush1.msra.mxu0 %v3942
    %7278 = vmatprep.subr.mxu0 0.0
    %7279 = vmatpush1.msra.mxu0 %v3943
    %7280 = vmatprep.subr.mxu0 0.0
    %7281 = vmatpush1.msra.mxu0 %v3944
    %7282 = vmatprep.subr.mxu0 0.0
    %7283 = vmatpush1.msra.mxu0 %v3945
    %7284 = vmatprep.subr.mxu0 0.0
    %7285 = vmatpush1.msra.mxu0 %v3946
    %7286 = vmatprep.subr.mxu0 0.0
    %7287 = vmatpush1.msra.mxu0 %v3947
    %7288 = vmatprep.subr.mxu0 0.0
    %7289 = vmatpush1.msra.mxu0 %v3948
    %7290 = vmatprep.subr.mxu0 0.0
    %7291 = vmatpush1.msra.mxu0 %v3949
    %7292 = vmatprep.subr.mxu0 0.0
    %7293 = vmatpush1.msra.mxu0 %v3950
    %7294 = vmatprep.subr.mxu0 0.0
    %7295 = vmatpush1.msra.mxu0 %v3951
    %7296 = vmatprep.subr.mxu0 0.0
    %7297 = vmatpush1.msra.mxu0 %v3952
    %7298 = vmatprep.subr.mxu0 0.0
    %7299 = vmatpush1.msra.mxu0 %v3953
    %7300 = vmatprep.subr.mxu0 0.0
    %7301 = vmatpush1.msra.mxu0 %v3954
    %7302 = vmatprep.subr.mxu0 0.0
    %7303 = vmatpush1.msra.mxu0 %v3955
    %7304 = vmatprep.subr.mxu0 0.0
    %7305 = vmatpush1.msra.mxu0 %v3956
    %7306 = vmatprep.subr.mxu0 0.0
    %7307 = vmatpush1.msra.mxu0 %v3957
    %7308 = vmatprep.subr.mxu0 0.0
    %7309 = vmatpush1.msra.mxu0 %v3958
    %7310 = vmatprep.subr.mxu0 0.0
    %7311 = vmatpush1.msra.mxu0 %v3959
    %7312 = vmatprep.subr.mxu0 0.0
    %7313 = vmatpush1.msra.mxu0 %v3960
    %7314 = vmatprep.subr.mxu0 0.0
    %7315 = vmatpush1.msra.mxu0 %v3961
    %7316 = vmatprep.subr.mxu0 0.0
    %7317 = vmatpush1.msra.mxu0 %v3962
    %7318 = vmatprep.subr.mxu0 0.0
    %7319 = vmatpush1.msra.mxu0 %v3963
    %7320 = vmatprep.subr.mxu0 0.0
    %7321 = vmatpush1.msra.mxu0 %v3964
    %7322 = vmatprep.subr.mxu0 0.0
    %7323 = vmatpush1.msra.mxu0 %v3965
    %7324 = vmatprep.subr.mxu0 0.0
    %7325 = vmatpush1.msra.mxu0 %v3966
    %7326 = vmatprep.subr.mxu0 0.0
    %7327 = vmatpush1.msra.mxu0 %v3967
    %7328 = vmatprep.subr.mxu0 0.0
    %7329 = vmatpush1.msra.mxu0 %v3968
    %7330 = vmatprep.mubr.f32.mxu0 %v5679
    %7331 = vmatmul.mubr.f32.gmra.mrb[0].mxu0 %v5677
    %v7332 = vpop.f32.mrb[0].mxu0
    %v7333 = vadd.f32 %v7263, %v7332
    %v7334 = vpop.f32.mrb[0].mxu0
    %7335 = vdwg.mxu0
    %7336 = vmatprep.subr.mxu0 0.0
    %7337 = vmatpush1.msra.mxu0 %v3969
    %7338 = vmatprep.subr.mxu0 0.0
    %7339 = vmatpush1.msra.mxu0 %v3970
    %7340 = vmatprep.subr.mxu0 0.0
    %7341 = vmatpush1.msra.mxu0 %v3971
    %7342 = vmatprep.subr.mxu0 0.0
    %7343 = vmatpush1.msra.mxu0 %v3972
    %7344 = vmatprep.subr.mxu0 0.0
    %7345 = vmatpush1.msra.mxu0 %v3973
    %7346 = vmatprep.subr.mxu0 0.0
    %7347 = vmatpush1.msra.mxu0 %v3974
    %7348 = vmatprep.subr.mxu0 0.0
    %7349 = vmatpush1.msra.mxu0 %v3975
    %7350 = vmatprep.subr.mxu0 0.0
    %7351 = vmatpush1.msra.mxu0 %v3976
    %7352 = vmatprep.subr.mxu0 0.0
    %7353 = vmatpush1.msra.mxu0 %v3977
    %7354 = vmatprep.subr.mxu0 0.0
    %7355 = vmatpush1.msra.mxu0 %v3978
    %7356 = vmatprep.subr.mxu0 0.0
    %7357 = vmatpush1.msra.mxu0 %v3979
    %7358 = vmatprep.subr.mxu0 0.0
    %7359 = vmatpush1.msra.mxu0 %v3980
    %7360 = vmatprep.subr.mxu0 0.0
    %7361 = vmatpush1.msra.mxu0 %v3981
    %7362 = vmatprep.subr.mxu0 0.0
    %7363 = vmatpush1.msra.mxu0 %v3982
    %7364 = vmatprep.subr.mxu0 0.0
    %7365 = vmatpush1.msra.mxu0 %v3983
    %7366 = vmatprep.subr.mxu0 0.0
    %7367 = vmatpush1.msra.mxu0 %v3984
    %7368 = vmatprep.subr.mxu0 0.0
    %7369 = vmatpush1.msra.mxu0 %v3985
    %7370 = vmatprep.subr.mxu0 0.0
    %7371 = vmatpush1.msra.mxu0 %v3986
    %7372 = vmatprep.subr.mxu0 0.0
    %7373 = vmatpush1.msra.mxu0 %v3987
    %7374 = vmatprep.subr.mxu0 0.0
    %7375 = vmatpush1.msra.mxu0 %v3988
    %7376 = vmatprep.subr.mxu0 0.0
    %7377 = vmatpush1.msra.mxu0 %v3989
    %7378 = vmatprep.subr.mxu0 0.0
    %7379 = vmatpush1.msra.mxu0 %v3990
    %7380 = vmatprep.subr.mxu0 0.0
    %7381 = vmatpush1.msra.mxu0 %v3991
    %7382 = vmatprep.subr.mxu0 0.0
    %7383 = vmatpush1.msra.mxu0 %v3992
    %7384 = vmatprep.subr.mxu0 0.0
    %7385 = vmatpush1.msra.mxu0 %v3993
    %7386 = vmatprep.subr.mxu0 0.0
    %7387 = vmatpush1.msra.mxu0 %v3994
    %7388 = vmatprep.subr.mxu0 0.0
    %7389 = vmatpush1.msra.mxu0 %v3995
    %7390 = vmatprep.subr.mxu0 0.0
    %7391 = vmatpush1.msra.mxu0 %v3996
    %7392 = vmatprep.subr.mxu0 0.0
    %7393 = vmatpush1.msra.mxu0 %v3997
    %7394 = vmatprep.subr.mxu0 0.0
    %7395 = vmatpush1.msra.mxu0 %v3998
    %7396 = vmatprep.subr.mxu0 0.0
    %7397 = vmatpush1.msra.mxu0 %v3999
    %7398 = vmatprep.subr.mxu0 0.0
    %7399 = vmatpush1.msra.mxu0 %v4000
    %7400 = vmatprep.mubr.f32.mxu0 %v5695
    %7401 = vmatmul.mubr.f32.gmra.mrb[0].mxu0 %v5687
    %v7402 = vpop.f32.mrb[0].mxu0
    %v7403 = vadd.f32 %v7333, %v7402
    %v7404 = vpop.f32.mrb[0].mxu0
    %7405 = vdwg.mxu0
    %7406 = vmatprep.subr.mxu0 0.0
    %7407 = vmatpush1.msra.mxu0 %v4001
    %7408 = vmatprep.subr.mxu0 0.0
    %7409 = vmatpush1.msra.mxu0 %v4002
    %7410 = vmatprep.subr.mxu0 0.0
    %7411 = vmatpush1.msra.mxu0 %v4003
    %7412 = vmatprep.subr.mxu0 0.0
    %7413 = vmatpush1.msra.mxu0 %v4004
    %7414 = vmatprep.subr.mxu0 0.0
    %7415 = vmatpush1.msra.mxu0 %v4005
    %7416 = vmatprep.subr.mxu0 0.0
    %7417 = vmatpush1.msra.mxu0 %v4006
    %7418 = vmatprep.subr.mxu0 0.0
    %7419 = vmatpush1.msra.mxu0 %v4007
    %7420 = vmatprep.subr.mxu0 0.0
    %7421 = vmatpush1.msra.mxu0 %v4008
    %7422 = vmatprep.subr.mxu0 0.0
    %7423 = vmatpush1.msra.mxu0 %v4009
    %7424 = vmatprep.subr.mxu0 0.0
    %7425 = vmatpush1.msra.mxu0 %v4010
    %7426 = vmatprep.subr.mxu0 0.0
    %7427 = vmatpush1.msra.mxu0 %v4011
    %7428 = vmatprep.subr.mxu0 0.0
    %7429 = vmatpush1.msra.mxu0 %v4012
    %7430 = vmatprep.subr.mxu0 0.0
    %7431 = vmatpush1.msra.mxu0 %v4013
    %7432 = vmatprep.subr.mxu0 0.0
    %7433 = vmatpush1.msra.mxu0 %v4014
    %7434 = vmatprep.subr.mxu0 0.0
    %7435 = vmatpush1.msra.mxu0 %v4015
    %7436 = vmatprep.subr.mxu0 0.0
    %7437 = vmatpush1.msra.mxu0 %v4016
    %7438 = vmatprep.subr.mxu0 0.0
    %7439 = vmatpush1.msra.mxu0 %v4017
    %7440 = vmatprep.subr.mxu0 0.0
    %7441 = vmatpush1.msra.mxu0 %v4018
    %7442 = vmatprep.subr.mxu0 0.0
    %7443 = vmatpush1.msra.mxu0 %v4019
    %7444 = vmatprep.subr.mxu0 0.0
    %7445 = vmatpush1.msra.mxu0 %v4020
    %7446 = vmatprep.subr.mxu0 0.0
    %7447 = vmatpush1.msra.mxu0 %v4021
    %7448 = vmatprep.subr.mxu0 0.0
    %7449 = vmatpush1.msra.mxu0 %v4022
    %7450 = vmatprep.subr.mxu0 0.0
    %7451 = vmatpush1.msra.mxu0 %v4023
    %7452 = vmatprep.subr.mxu0 0.0
    %7453 = vmatpush1.msra.mxu0 %v4024
    %7454 = vmatprep.subr.mxu0 0.0
    %7455 = vmatpush1.msra.mxu0 %v4025
    %7456 = vmatprep.subr.mxu0 0.0
    %7457 = vmatpush1.msra.mxu0 %v4026
    %7458 = vmatprep.subr.mxu0 0.0
    %7459 = vmatpush1.msra.mxu0 %v4027
    %7460 = vmatprep.subr.mxu0 0.0
    %7461 = vmatpush1.msra.mxu0 %v4028
    %7462 = vmatprep.subr.mxu0 0.0
    %7463 = vmatpush1.msra.mxu0 %v4029
    %7464 = vmatprep.subr.mxu0 0.0
    %7465 = vmatpush1.msra.mxu0 %v4030
    %7466 = vmatprep.subr.mxu0 0.0
    %7467 = vmatpush1.msra.mxu0 %v4031
    %7468 = vmatprep.subr.mxu0 0.0
    %7469 = vmatpush1.msra.mxu0 %v4032
    %7470 = vmatprep.mubr.f32.mxu0 %v5696
    %7471 = vmatmul.mubr.f32.gmra.mrb[0].mxu0 %v5694
    %v7472 = vpop.f32.mrb[0].mxu0
    %v7473 = vadd.f32 %v7403, %v7472
    %v7474 = vpop.f32.mrb[0].mxu0
    %7475 = vdwg.mxu0
    %7476 = vmatprep.subr.mxu0 0.0
    %7477 = vmatpush1.msra.mxu0 %v4033
    %7478 = vmatprep.subr.mxu0 0.0
    %7479 = vmatpush1.msra.mxu0 %v4034
    %7480 = vmatprep.subr.mxu0 0.0
    %7481 = vmatpush1.msra.mxu0 %v4035
    %7482 = vmatprep.subr.mxu0 0.0
    %7483 = vmatpush1.msra.mxu0 %v4036
    %7484 = vmatprep.subr.mxu0 0.0
    %7485 = vmatpush1.msra.mxu0 %v4037
    %7486 = vmatprep.subr.mxu0 0.0
    %7487 = vmatpush1.msra.mxu0 %v4038
    %7488 = vmatprep.subr.mxu0 0.0
    %7489 = vmatpush1.msra.mxu0 %v4039
    %7490 = vmatprep.subr.mxu0 0.0
    %7491 = vmatpush1.msra.mxu0 %v4040
    %7492 = vmatprep.subr.mxu0 0.0
    %7493 = vmatpush1.msra.mxu0 %v4041
    %7494 = vmatprep.subr.mxu0 0.0
    %7495 = vmatpush1.msra.mxu0 %v4042
    %7496 = vmatprep.subr.mxu0 0.0
    %7497 = vmatpush1.msra.mxu0 %v4043
    %7498 = vmatprep.subr.mxu0 0.0
    %7499 = vmatpush1.msra.mxu0 %v4044
    %7500 = vmatprep.subr.mxu0 0.0
    %7501 = vmatpush1.msra.mxu0 %v4045
    %7502 = vmatprep.subr.mxu0 0.0
    %7503 = vmatpush1.msra.mxu0 %v4046
    %7504 = vmatprep.subr.mxu0 0.0
    %7505 = vmatpush1.msra.mxu0 %v4047
    %7506 = vmatprep.subr.mxu0 0.0
    %7507 = vmatpush1.msra.mxu0 %v4048
    %7508 = vmatprep.subr.mxu0 0.0
    %7509 = vmatpush1.msra.mxu0 %v4049
    %7510 = vmatprep.subr.mxu0 0.0
    %7511 = vmatpush1.msra.mxu0 %v4050
    %7512 = vmatprep.subr.mxu0 0.0
    %7513 = vmatpush1.msra.mxu0 %v4051
    %7514 = vmatprep.subr.mxu0 0.0
    %7515 = vmatpush1.msra.mxu0 %v4052
    %7516 = vmatprep.subr.mxu0 0.0
    %7517 = vmatpush1.msra.mxu0 %v4053
    %7518 = vmatprep.subr.mxu0 0.0
    %7519 = vmatpush1.msra.mxu0 %v4054
    %7520 = vmatprep.subr.mxu0 0.0
    %7521 = vmatpush1.msra.mxu0 %v4055
    %7522 = vmatprep.subr.mxu0 0.0
    %7523 = vmatpush1.msra.mxu0 %v4056
    %7524 = vmatprep.subr.mxu0 0.0
    %7525 = vmatpush1.msra.mxu0 %v4057
    %7526 = vmatprep.subr.mxu0 0.0
    %7527 = vmatpush1.msra.mxu0 %v4058
    %7528 = vmatprep.subr.mxu0 0.0
    %7529 = vmatpush1.msra.mxu0 %v4059
    %7530 = vmatprep.subr.mxu0 0.0
    %7531 = vmatpush1.msra.mxu0 %v4060
    %7532 = vmatprep.subr.mxu0 0.0
    %7533 = vmatpush1.msra.mxu0 %v4061
    %7534 = vmatprep.subr.mxu0 0.0
    %7535 = vmatpush1.msra.mxu0 %v4062
    %7536 = vmatprep.subr.mxu0 0.0
    %7537 = vmatpush1.msra.mxu0 %v4063
    %7538 = vmatprep.subr.mxu0 0.0
    %7539 = vmatpush1.msra.mxu0 %v4064
    %7540 = vmatprep.mubr.f32.mxu0 %v5712
    %7541 = vmatmul.mubr.f32.gmra.mrb[0].mxu0 %v5704
    %v7542 = vpop.f32.mrb[0].mxu0
    %v7543 = vadd.f32 %v7473, %v7542
    %v7544 = vpop.f32.mrb[0].mxu0
    %7545 = vdwg.mxu0
    %7546 = vmatprep.subr.mxu0 0.0
    %7547 = vmatpush1.msra.mxu0 %v4065
    %7548 = vmatprep.subr.mxu0 0.0
    %7549 = vmatpush1.msra.mxu0 %v4066
    %7550 = vmatprep.subr.mxu0 0.0
    %7551 = vmatpush1.msra.mxu0 %v4067
    %7552 = vmatprep.subr.mxu0 0.0
    %7553 = vmatpush1.msra.mxu0 %v4068
    %7554 = vmatprep.subr.mxu0 0.0
    %7555 = vmatpush1.msra.mxu0 %v4069
    %7556 = vmatprep.subr.mxu0 0.0
    %7557 = vmatpush1.msra.mxu0 %v4070
    %7558 = vmatprep.subr.mxu0 0.0
    %7559 = vmatpush1.msra.mxu0 %v4071
    %7560 = vmatprep.subr.mxu0 0.0
    %7561 = vmatpush1.msra.mxu0 %v4072
    %7562 = vmatprep.subr.mxu0 0.0
    %7563 = vmatpush1.msra.mxu0 %v4073
    %7564 = vmatprep.subr.mxu0 0.0
    %7565 = vmatpush1.msra.mxu0 %v4074
    %7566 = vmatprep.subr.mxu0 0.0
    %7567 = vmatpush1.msra.mxu0 %v4075
    %7568 = vmatprep.subr.mxu0 0.0
    %7569 = vmatpush1.msra.mxu0 %v4076
    %7570 = vmatprep.subr.mxu0 0.0
    %7571 = vmatpush1.msra.mxu0 %v4077
    %7572 = vmatprep.subr.mxu0 0.0
    %7573 = vmatpush1.msra.mxu0 %v4078
    %7574 = vmatprep.subr.mxu0 0.0
    %7575 = vmatpush1.msra.mxu0 %v4079
    %7576 = vmatprep.subr.mxu0 0.0
    %7577 = vmatpush1.msra.mxu0 %v4080
    %7578 = vmatprep.subr.mxu0 0.0
    %7579 = vmatpush1.msra.mxu0 %v4081
    %7580 = vmatprep.subr.mxu0 0.0
    %7581 = vmatpush1.msra.mxu0 %v4082
    %7582 = vmatprep.subr.mxu0 0.0
    %7583 = vmatpush1.msra.mxu0 %v4083
    %7584 = vmatprep.subr.mxu0 0.0
    %7585 = vmatpush1.msra.mxu0 %v4084
    %7586 = vmatprep.subr.mxu0 0.0
    %7587 = vmatpush1.msra.mxu0 %v4085
    %7588 = vmatprep.subr.mxu0 0.0
    %7589 = vmatpush1.msra.mxu0 %v4086
    %7590 = vmatprep.subr.mxu0 0.0
    %7591 = vmatpush1.msra.mxu0 %v4087
    %7592 = vmatprep.subr.mxu0 0.0
    %7593 = vmatpush1.msra.mxu0 %v4088
    %7594 = vmatprep.subr.mxu0 0.0
    %7595 = vmatpush1.msra.mxu0 %v4089
    %7596 = vmatprep.subr.mxu0 0.0
    %7597 = vmatpush1.msra.mxu0 %v4090
    %7598 = vmatprep.subr.mxu0 0.0
    %7599 = vmatpush1.msra.mxu0 %v4091
    %7600 = vmatprep.subr.mxu0 0.0
    %7601 = vmatpush1.msra.mxu0 %v4092
    %7602 = vmatprep.subr.mxu0 0.0
    %7603 = vmatpush1.msra.mxu0 %v4093
    %7604 = vmatprep.subr.mxu0 0.0
    %7605 = vmatpush1.msra.mxu0 %v4094
    %7606 = vmatprep.subr.mxu0 0.0
    %7607 = vmatpush1.msra.mxu0 %v4095
    %7608 = vmatprep.subr.mxu0 0.0
    %7609 = vmatpush1.msra.mxu0 %v4096
    %7610 = vmatprep.mubr.f32.mxu0 %v5713
    %7611 = vmatmul.mubr.f32.gmra.mrb[0].mxu0 %v5711
    %v7612 = vpop.f32.mrb[0].mxu0
    %v7613 = vadd.f32 %v7543, %v7612
    %v7614 = vpop.f32.mrb[0].mxu0
    %7615 = vdwg.mxu0
    %7616 = vmatprep.subr.mxu0 0.0
    %7617 = vmatpush1.msra.mxu0 %v4097
    %7618 = vmatprep.subr.mxu0 0.0
    %7619 = vmatpush1.msra.mxu0 %v4098
    %7620 = vmatprep.subr.mxu0 0.0
    %7621 = vmatpush1.msra.mxu0 %v4099
    %7622 = vmatprep.subr.mxu0 0.0
    %7623 = vmatpush1.msra.mxu0 %v4100
    %7624 = vmatprep.subr.mxu0 0.0
    %7625 = vmatpush1.msra.mxu0 %v4101
    %7626 = vmatprep.subr.mxu0 0.0
    %7627 = vmatpush1.msra.mxu0 %v4102
    %7628 = vmatprep.subr.mxu0 0.0
    %7629 = vmatpush1.msra.mxu0 %v4103
    %7630 = vmatprep.subr.mxu0 0.0
    %7631 = vmatpush1.msra.mxu0 %v4104
    %7632 = vmatprep.subr.mxu0 0.0
    %7633 = vmatpush1.msra.mxu0 %v4105
    %7634 = vmatprep.subr.mxu0 0.0
    %7635 = vmatpush1.msra.mxu0 %v4106
    %7636 = vmatprep.subr.mxu0 0.0
    %7637 = vmatpush1.msra.mxu0 %v4107
    %7638 = vmatprep.subr.mxu0 0.0
    %7639 = vmatpush1.msra.mxu0 %v4108
    %7640 = vmatprep.subr.mxu0 0.0
    %7641 = vmatpush1.msra.mxu0 %v4109
    %7642 = vmatprep.subr.mxu0 0.0
    %7643 = vmatpush1.msra.mxu0 %v4110
    %7644 = vmatprep.subr.mxu0 0.0
    %7645 = vmatpush1.msra.mxu0 %v4111
    %7646 = vmatprep.subr.mxu0 0.0
    %7647 = vmatpush1.msra.mxu0 %v4112
    %7648 = vmatprep.subr.mxu0 0.0
    %7649 = vmatpush1.msra.mxu0 %v4113
    %7650 = vmatprep.subr.mxu0 0.0
    %7651 = vmatpush1.msra.mxu0 %v4114
    %7652 = vmatprep.subr.mxu0 0.0
    %7653 = vmatpush1.msra.mxu0 %v4115
    %7654 = vmatprep.subr.mxu0 0.0
    %7655 = vmatpush1.msra.mxu0 %v4116
    %7656 = vmatprep.subr.mxu0 0.0
    %7657 = vmatpush1.msra.mxu0 %v4117
    %7658 = vmatprep.subr.mxu0 0.0
    %7659 = vmatpush1.msra.mxu0 %v4118
    %7660 = vmatprep.subr.mxu0 0.0
    %7661 = vmatpush1.msra.mxu0 %v4119
    %7662 = vmatprep.subr.mxu0 0.0
    %7663 = vmatpush1.msra.mxu0 %v4120
    %7664 = vmatprep.subr.mxu0 0.0
    %7665 = vmatpush1.msra.mxu0 %v4121
    %7666 = vmatprep.subr.mxu0 0.0
    %7667 = vmatpush1.msra.mxu0 %v4122
    %7668 = vmatprep.subr.mxu0 0.0
    %7669 = vmatpush1.msra.mxu0 %v4123
    %7670 = vmatprep.subr.mxu0 0.0
    %7671 = vmatpush1.msra.mxu0 %v4124
    %7672 = vmatprep.subr.mxu0 0.0
    %7673 = vmatpush1.msra.mxu0 %v4125
    %7674 = vmatprep.subr.mxu0 0.0
    %7675 = vmatpush1.msra.mxu0 %v4126
    %7676 = vmatprep.subr.mxu0 0.0
    %7677 = vmatpush1.msra.mxu0 %v4127
    %7678 = vmatprep.subr.mxu0 0.0
    %7679 = vmatpush1.msra.mxu0 %v4128
    %7680 = vmatprep.mubr.f32.mxu0 %v5729
    %7681 = vmatmul.mubr.f32.gmra.mrb[0].mxu0 %v5721
    %v7682 = vpop.f32.mrb[0].mxu0
    %v7683 = vadd.f32 %v7613, %v7682
    %v7684 = vpop.f32.mrb[0].mxu0
    %7685 = vdwg.mxu0
    %7686 = vmatprep.subr.mxu0 0.0
    %7687 = vmatpush1.msra.mxu0 %v4129
    %7688 = vmatprep.subr.mxu0 0.0
    %7689 = vmatpush1.msra.mxu0 %v4130
    %7690 = vmatprep.subr.mxu0 0.0
    %7691 = vmatpush1.msra.mxu0 %v4131
    %7692 = vmatprep.subr.mxu0 0.0
    %7693 = vmatpush1.msra.mxu0 %v4132
    %7694 = vmatprep.subr.mxu0 0.0
    %7695 = vmatpush1.msra.mxu0 %v4133
    %7696 = vmatprep.subr.mxu0 0.0
    %7697 = vmatpush1.msra.mxu0 %v4134
    %7698 = vmatprep.subr.mxu0 0.0
    %7699 = vmatpush1.msra.mxu0 %v4135
    %7700 = vmatprep.subr.mxu0 0.0
    %7701 = vmatpush1.msra.mxu0 %v4136
    %7702 = vmatprep.subr.mxu0 0.0
    %7703 = vmatpush1.msra.mxu0 %v4137
    %7704 = vmatprep.subr.mxu0 0.0
    %7705 = vmatpush1.msra.mxu0 %v4138
    %7706 = vmatprep.subr.mxu0 0.0
    %7707 = vmatpush1.msra.mxu0 %v4139
    %7708 = vmatprep.subr.mxu0 0.0
    %7709 = vmatpush1.msra.mxu0 %v4140
    %7710 = vmatprep.subr.mxu0 0.0
    %7711 = vmatpush1.msra.mxu0 %v4141
    %7712 = vmatprep.subr.mxu0 0.0
    %7713 = vmatpush1.msra.mxu0 %v4142
    %7714 = vmatprep.subr.mxu0 0.0
    %7715 = vmatpush1.msra.mxu0 %v4143
    %7716 = vmatprep.subr.mxu0 0.0
    %7717 = vmatpush1.msra.mxu0 %v4144
    %7718 = vmatprep.subr.mxu0 0.0
    %7719 = vmatpush1.msra.mxu0 %v4145
    %7720 = vmatprep.subr.mxu0 0.0
    %7721 = vmatpush1.msra.mxu0 %v4146
    %7722 = vmatprep.subr.mxu0 0.0
    %7723 = vmatpush1.msra.mxu0 %v4147
    %7724 = vmatprep.subr.mxu0 0.0
    %7725 = vmatpush1.msra.mxu0 %v4148
    %7726 = vmatprep.subr.mxu0 0.0
    %7727 = vmatpush1.msra.mxu0 %v4149
    %7728 = vmatprep.subr.mxu0 0.0
    %7729 = vmatpush1.msra.mxu0 %v4150
    %7730 = vmatprep.subr.mxu0 0.0
    %7731 = vmatpush1.msra.mxu0 %v4151
    %7732 = vmatprep.subr.mxu0 0.0
    %7733 = vmatpush1.msra.mxu0 %v4152
    %7734 = vmatprep.subr.mxu0 0.0
    %7735 = vmatpush1.msra.mxu0 %v4153
    %7736 = vmatprep.subr.mxu0 0.0
    %7737 = vmatpush1.msra.mxu0 %v4154
    %7738 = vmatprep.subr.mxu0 0.0
    %7739 = vmatpush1.msra.mxu0 %v4155
    %7740 = vmatprep.subr.mxu0 0.0
    %7741 = vmatpush1.msra.mxu0 %v4156
    %7742 = vmatprep.subr.mxu0 0.0
    %7743 = vmatpush1.msra.mxu0 %v4157
    %7744 = vmatprep.subr.mxu0 0.0
    %7745 = vmatpush1.msra.mxu0 %v4158
    %7746 = vmatprep.subr.mxu0 0.0
    %7747 = vmatpush1.msra.mxu0 %v4159
    %7748 = vmatprep.subr.mxu0 0.0
    %7749 = vmatpush1.msra.mxu0 %v4160
    %7750 = vmatprep.mubr.f32.mxu0 %v5730
    %7751 = vmatmul.mubr.f32.gmra.mrb[0].mxu0 %v5728
    %v7752 = vpop.f32.mrb[0].mxu0
    %v7753 = vadd.f32 %v7683, %v7752
    %v7754 = vpop.f32.mrb[0].mxu0
    %7755 = vdwg.mxu0
    %7756 = vmatprep.subr.mxu0 0.0
    %7757 = vmatpush1.msra.mxu0 %v4161
    %7758 = vmatprep.subr.mxu0 0.0
    %7759 = vmatpush1.msra.mxu0 %v4162
    %7760 = vmatprep.subr.mxu0 0.0
    %7761 = vmatpush1.msra.mxu0 %v4163
    %7762 = vmatprep.subr.mxu0 0.0
    %7763 = vmatpush1.msra.mxu0 %v4164
    %7764 = vmatprep.subr.mxu0 0.0
    %7765 = vmatpush1.msra.mxu0 %v4165
    %7766 = vmatprep.subr.mxu0 0.0
    %7767 = vmatpush1.msra.mxu0 %v4166
    %7768 = vmatprep.subr.mxu0 0.0
    %7769 = vmatpush1.msra.mxu0 %v4167
    %7770 = vmatprep.subr.mxu0 0.0
    %7771 = vmatpush1.msra.mxu0 %v4168
    %7772 = vmatprep.subr.mxu0 0.0
    %7773 = vmatpush1.msra.mxu0 %v4169
    %7774 = vmatprep.subr.mxu0 0.0
    %7775 = vmatpush1.msra.mxu0 %v4170
    %7776 = vmatprep.subr.mxu0 0.0
    %7777 = vmatpush1.msra.mxu0 %v4171
    %7778 = vmatprep.subr.mxu0 0.0
    %7779 = vmatpush1.msra.mxu0 %v4172
    %7780 = vmatprep.subr.mxu0 0.0
    %7781 = vmatpush1.msra.mxu0 %v4173
    %7782 = vmatprep.subr.mxu0 0.0
    %7783 = vmatpush1.msra.mxu0 %v4174
    %7784 = vmatprep.subr.mxu0 0.0
    %7785 = vmatpush1.msra.mxu0 %v4175
    %7786 = vmatprep.subr.mxu0 0.0
    %7787 = vmatpush1.msra.mxu0 %v4176
    %7788 = vmatprep.subr.mxu0 0.0
    %7789 = vmatpush1.msra.mxu0 %v4177
    %7790 = vmatprep.subr.mxu0 0.0
    %7791 = vmatpush1.msra.mxu0 %v4178
    %7792 = vmatprep.subr.mxu0 0.0
    %7793 = vmatpush1.msra.mxu0 %v4179
    %7794 = vmatprep.subr.mxu0 0.0
    %7795 = vmatpush1.msra.mxu0 %v4180
    %7796 = vmatprep.subr.mxu0 0.0
    %7797 = vmatpush1.msra.mxu0 %v4181
    %7798 = vmatprep.subr.mxu0 0.0
    %7799 = vmatpush1.msra.mxu0 %v4182
    %7800 = vmatprep.subr.mxu0 0.0
    %7801 = vmatpush1.msra.mxu0 %v4183
    %7802 = vmatprep.subr.mxu0 0.0
    %7803 = vmatpush1.msra.mxu0 %v4184
    %7804 = vmatprep.subr.mxu0 0.0
    %7805 = vmatpush1.msra.mxu0 %v4185
    %7806 = vmatprep.subr.mxu0 0.0
    %7807 = vmatpush1.msra.mxu0 %v4186
    %7808 = vmatprep.subr.mxu0 0.0
    %7809 = vmatpush1.msra.mxu0 %v4187
    %7810 = vmatprep.subr.mxu0 0.0
    %7811 = vmatpush1.msra.mxu0 %v4188
    %7812 = vmatprep.subr.mxu0 0.0
    %7813 = vmatpush1.msra.mxu0 %v4189
    %7814 = vmatprep.subr.mxu0 0.0
    %7815 = vmatpush1.msra.mxu0 %v4190
    %7816 = vmatprep.subr.mxu0 0.0
    %7817 = vmatpush1.msra.mxu0 %v4191
    %7818 = vmatprep.subr.mxu0 0.0
    %7819 = vmatpush1.msra.mxu0 %v4192
    %7820 = vmatprep.mubr.f32.mxu0 %v5746
    %7821 = vmatmul.mubr.f32.gmra.mrb[0].mxu0 %v5738
    %v7822 = vpop.f32.mrb[0].mxu0
    %v7823 = vadd.f32 %v7753, %v7822
    %v7824 = vpop.f32.mrb[0].mxu0
    %7825 = vdwg.mxu0
    %7826 = vmatprep.subr.mxu0 0.0
    %7827 = vmatpush1.msra.mxu0 %v4193
    %7828 = vmatprep.subr.mxu0 0.0
    %7829 = vmatpush1.msra.mxu0 %v4194
    %7830 = vmatprep.subr.mxu0 0.0
    %7831 = vmatpush1.msra.mxu0 %v4195
    %7832 = vmatprep.subr.mxu0 0.0
    %7833 = vmatpush1.msra.mxu0 %v4196
    %7834 = vmatprep.subr.mxu0 0.0
    %7835 = vmatpush1.msra.mxu0 %v4197
    %7836 = vmatprep.subr.mxu0 0.0
    %7837 = vmatpush1.msra.mxu0 %v4198
    %7838 = vmatprep.subr.mxu0 0.0
    %7839 = vmatpush1.msra.mxu0 %v4199
    %7840 = vmatprep.subr.mxu0 0.0
    %7841 = vmatpush1.msra.mxu0 %v4200
    %7842 = vmatprep.subr.mxu0 0.0
    %7843 = vmatpush1.msra.mxu0 %v4201
    %7844 = vmatprep.subr.mxu0 0.0
    %7845 = vmatpush1.msra.mxu0 %v4202
    %7846 = vmatprep.subr.mxu0 0.0
    %7847 = vmatpush1.msra.mxu0 %v4203
    %7848 = vmatprep.subr.mxu0 0.0
    %7849 = vmatpush1.msra.mxu0 %v4204
    %7850 = vmatprep.subr.mxu0 0.0
    %7851 = vmatpush1.msra.mxu0 %v4205
    %7852 = vmatprep.subr.mxu0 0.0
    %7853 = vmatpush1.msra.mxu0 %v4206
    %7854 = vmatprep.subr.mxu0 0.0
    %7855 = vmatpush1.msra.mxu0 %v4207
    %7856 = vmatprep.subr.mxu0 0.0
    %7857 = vmatpush1.msra.mxu0 %v4208
    %7858 = vmatprep.subr.mxu0 0.0
    %7859 = vmatpush1.msra.mxu0 %v4209
    %7860 = vmatprep.subr.mxu0 0.0
    %7861 = vmatpush1.msra.mxu0 %v4210
    %7862 = vmatprep.subr.mxu0 0.0
    %7863 = vmatpush1.msra.mxu0 %v4211
    %7864 = vmatprep.subr.mxu0 0.0
    %7865 = vmatpush1.msra.mxu0 %v4212
    %7866 = vmatprep.subr.mxu0 0.0
    %7867 = vmatpush1.msra.mxu0 %v4213
    %7868 = vmatprep.subr.mxu0 0.0
    %7869 = vmatpush1.msra.mxu0 %v4214
    %7870 = vmatprep.subr.mxu0 0.0
    %7871 = vmatpush1.msra.mxu0 %v4215
    %7872 = vmatprep.subr.mxu0 0.0
    %7873 = vmatpush1.msra.mxu0 %v4216
    %7874 = vmatprep.subr.mxu0 0.0
    %7875 = vmatpush1.msra.mxu0 %v4217
    %7876 = vmatprep.subr.mxu0 0.0
    %7877 = vmatpush1.msra.mxu0 %v4218
    %7878 = vmatprep.subr.mxu0 0.0
    %7879 = vmatpush1.msra.mxu0 %v4219
    %7880 = vmatprep.subr.mxu0 0.0
    %7881 = vmatpush1.msra.mxu0 %v4220
    %7882 = vmatprep.subr.mxu0 0.0
    %7883 = vmatpush1.msra.mxu0 %v4221
    %7884 = vmatprep.subr.mxu0 0.0
    %7885 = vmatpush1.msra.mxu0 %v4222
    %7886 = vmatprep.subr.mxu0 0.0
    %7887 = vmatpush1.msra.mxu0 %v4223
    %7888 = vmatprep.subr.mxu0 0.0
    %7889 = vmatpush1.msra.mxu0 %v4224
    %7890 = vmatprep.mubr.f32.mxu0 %v5747
    %7891 = vmatmul.mubr.f32.gmra.mrb[0].mxu0 %v5745
    %v7892 = vpop.f32.mrb[0].mxu0
    %v7893 = vadd.f32 %v7823, %v7892
    %v7894 = vpop.f32.mrb[0].mxu0
    %7895 = vdwg.mxu0
    %7896 = vmatprep.subr.mxu0 0.0
    %7897 = vmatpush1.msra.mxu0 %v4225
    %7898 = vmatprep.subr.mxu0 0.0
    %7899 = vmatpush1.msra.mxu0 %v4226
    %7900 = vmatprep.subr.mxu0 0.0
    %7901 = vmatpush1.msra.mxu0 %v4227
    %7902 = vmatprep.subr.mxu0 0.0
    %7903 = vmatpush1.msra.mxu0 %v4228
    %7904 = vmatprep.subr.mxu0 0.0
    %7905 = vmatpush1.msra.mxu0 %v4229
    %7906 = vmatprep.subr.mxu0 0.0
    %7907 = vmatpush1.msra.mxu0 %v4230
    %7908 = vmatprep.subr.mxu0 0.0
    %7909 = vmatpush1.msra.mxu0 %v4231
    %7910 = vmatprep.subr.mxu0 0.0
    %7911 = vmatpush1.msra.mxu0 %v4232
    %7912 = vmatprep.subr.mxu0 0.0
    %7913 = vmatpush1.msra.mxu0 %v4233
    %7914 = vmatprep.subr.mxu0 0.0
    %7915 = vmatpush1.msra.mxu0 %v4234
    %7916 = vmatprep.subr.mxu0 0.0
    %7917 = vmatpush1.msra.mxu0 %v4235
    %7918 = vmatprep.subr.mxu0 0.0
    %7919 = vmatpush1.msra.mxu0 %v4236
    %7920 = vmatprep.subr.mxu0 0.0
    %7921 = vmatpush1.msra.mxu0 %v4237
    %7922 = vmatprep.subr.mxu0 0.0
    %7923 = vmatpush1.msra.mxu0 %v4238
    %7924 = vmatprep.subr.mxu0 0.0
    %7925 = vmatpush1.msra.mxu0 %v4239
    %7926 = vmatprep.subr.mxu0 0.0
    %7927 = vmatpush1.msra.mxu0 %v4240
    %7928 = vmatprep.subr.mxu0 0.0
    %7929 = vmatpush1.msra.mxu0 %v4241
    %7930 = vmatprep.subr.mxu0 0.0
    %7931 = vmatpush1.msra.mxu0 %v4242
    %7932 = vmatprep.subr.mxu0 0.0
    %7933 = vmatpush1.msra.mxu0 %v4243
    %7934 = vmatprep.subr.mxu0 0.0
    %7935 = vmatpush1.msra.mxu0 %v4244
    %7936 = vmatprep.subr.mxu0 0.0
    %7937 = vmatpush1.msra.mxu0 %v4245
    %7938 = vmatprep.subr.mxu0 0.0
    %7939 = vmatpush1.msra.mxu0 %v4246
    %7940 = vmatprep.subr.mxu0 0.0
    %7941 = vmatpush1.msra.mxu0 %v4247
    %7942 = vmatprep.subr.mxu0 0.0
    %7943 = vmatpush1.msra.mxu0 %v4248
    %7944 = vmatprep.subr.mxu0 0.0
    %7945 = vmatpush1.msra.mxu0 %v4249
    %7946 = vmatprep.subr.mxu0 0.0
    %7947 = vmatpush1.msra.mxu0 %v4250
    %7948 = vmatprep.subr.mxu0 0.0
    %7949 = vmatpush1.msra.mxu0 %v4251
    %7950 = vmatprep.subr.mxu0 0.0
    %7951 = vmatpush1.msra.mxu0 %v4252
    %7952 = vmatprep.subr.mxu0 0.0
    %7953 = vmatpush1.msra.mxu0 %v4253
    %7954 = vmatprep.subr.mxu0 0.0
    %7955 = vmatpush1.msra.mxu0 %v4254
    %7956 = vmatprep.subr.mxu0 0.0
    %7957 = vmatpush1.msra.mxu0 %v4255
    %7958 = vmatprep.subr.mxu0 0.0
    %7959 = vmatpush1.msra.mxu0 %v4256
    %7960 = vmatprep.mubr.f32.mxu0 %v5763
    %7961 = vmatmul.mubr.f32.gmra.mrb[0].mxu0 %v5755
    %v7962 = vpop.f32.mrb[0].mxu0
    %v7963 = vadd.f32 %v7893, %v7962
    %v7964 = vpop.f32.mrb[0].mxu0
    %7965 = vdwg.mxu0
    %7966 = vmatprep.subr.mxu0 0.0
    %7967 = vmatpush1.msra.mxu0 %v4257
    %7968 = vmatprep.subr.mxu0 0.0
    %7969 = vmatpush1.msra.mxu0 %v4258
    %7970 = vmatprep.subr.mxu0 0.0
    %7971 = vmatpush1.msra.mxu0 %v4259
    %7972 = vmatprep.subr.mxu0 0.0
    %7973 = vmatpush1.msra.mxu0 %v4260
    %7974 = vmatprep.subr.mxu0 0.0
    %7975 = vmatpush1.msra.mxu0 %v4261
    %7976 = vmatprep.subr.mxu0 0.0
    %7977 = vmatpush1.msra.mxu0 %v4262
    %7978 = vmatprep.subr.mxu0 0.0
    %7979 = vmatpush1.msra.mxu0 %v4263
    %7980 = vmatprep.subr.mxu0 0.0
    %7981 = vmatpush1.msra.mxu0 %v4264
    %7982 = vmatprep.subr.mxu0 0.0
    %7983 = vmatpush1.msra.mxu0 %v4265
    %7984 = vmatprep.subr.mxu0 0.0
    %7985 = vmatpush1.msra.mxu0 %v4266
    %7986 = vmatprep.subr.mxu0 0.0
    %7987 = vmatpush1.msra.mxu0 %v4267
    %7988 = vmatprep.subr.mxu0 0.0
    %7989 = vmatpush1.msra.mxu0 %v4268
    %7990 = vmatprep.subr.mxu0 0.0
    %7991 = vmatpush1.msra.mxu0 %v4269
    %7992 = vmatprep.subr.mxu0 0.0
    %7993 = vmatpush1.msra.mxu0 %v4270
    %7994 = vmatprep.subr.mxu0 0.0
    %7995 = vmatpush1.msra.mxu0 %v4271
    %7996 = vmatprep.subr.mxu0 0.0
    %7997 = vmatpush1.msra.mxu0 %v4272
    %7998 = vmatprep.subr.mxu0 0.0
    %7999 = vmatpush1.msra.mxu0 %v4273
    %8000 = vmatprep.subr.mxu0 0.0
    %8001 = vmatpush1.msra.mxu0 %v4274
    %8002 = vmatprep.subr.mxu0 0.0
    %8003 = vmatpush1.msra.mxu0 %v4275
    %8004 = vmatprep.subr.mxu0 0.0
    %8005 = vmatpush1.msra.mxu0 %v4276
    %8006 = vmatprep.subr.mxu0 0.0
    %8007 = vmatpush1.msra.mxu0 %v4277
    %8008 = vmatprep.subr.mxu0 0.0
    %8009 = vmatpush1.msra.mxu0 %v4278
    %8010 = vmatprep.subr.mxu0 0.0
    %8011 = vmatpush1.msra.mxu0 %v4279
    %8012 = vmatprep.subr.mxu0 0.0
    %8013 = vmatpush1.msra.mxu0 %v4280
    %8014 = vmatprep.subr.mxu0 0.0
    %8015 = vmatpush1.msra.mxu0 %v4281
    %8016 = vmatprep.subr.mxu0 0.0
    %8017 = vmatpush1.msra.mxu0 %v4282
    %8018 = vmatprep.subr.mxu0 0.0
    %8019 = vmatpush1.msra.mxu0 %v4283
    %8020 = vmatprep.subr.mxu0 0.0
    %8021 = vmatpush1.msra.mxu0 %v4284
    %8022 = vmatprep.subr.mxu0 0.0
    %8023 = vmatpush1.msra.mxu0 %v4285
    %8024 = vmatprep.subr.mxu0 0.0
    %8025 = vmatpush1.msra.mxu0 %v4286
    %8026 = vmatprep.subr.mxu0 0.0
    %8027 = vmatpush1.msra.mxu0 %v4287
    %8028 = vmatprep.subr.mxu0 0.0
    %8029 = vmatpush1.msra.mxu0 %v4288
    %8030 = vmatprep.mubr.f32.mxu0 %v5764
    %8031 = vmatmul.mubr.f32.gmra.mrb[0].mxu0 %v5762
    %v8032 = vpop.f32.mrb[0].mxu0
    %v8033 = vadd.f32 %v7963, %v8032
    %v8034 = vpop.f32.mrb[0].mxu0
    %8035 = vdwg.mxu0
    %8036 = vmatprep.subr.mxu0 0.0
    %8037 = vmatpush1.msra.mxu0 %v4289
    %8038 = vmatprep.subr.mxu0 0.0
    %8039 = vmatpush1.msra.mxu0 %v4290
    %8040 = vmatprep.subr.mxu0 0.0
    %8041 = vmatpush1.msra.mxu0 %v4291
    %8042 = vmatprep.subr.mxu0 0.0
    %8043 = vmatpush1.msra.mxu0 %v4292
    %8044 = vmatprep.subr.mxu0 0.0
    %8045 = vmatpush1.msra.mxu0 %v4293
    %8046 = vmatprep.subr.mxu0 0.0
    %8047 = vmatpush1.msra.mxu0 %v4294
    %8048 = vmatprep.subr.mxu0 0.0
    %8049 = vmatpush1.msra.mxu0 %v4295
    %8050 = vmatprep.subr.mxu0 0.0
    %8051 = vmatpush1.msra.mxu0 %v4296
    %8052 = vmatprep.subr.mxu0 0.0
    %8053 = vmatpush1.msra.mxu0 %v4297
    %8054 = vmatprep.subr.mxu0 0.0
    %8055 = vmatpush1.msra.mxu0 %v4298
    %8056 = vmatprep.subr.mxu0 0.0
    %8057 = vmatpush1.msra.mxu0 %v4299
    %8058 = vmatprep.subr.mxu0 0.0
    %8059 = vmatpush1.msra.mxu0 %v4300
    %8060 = vmatprep.subr.mxu0 0.0
    %8061 = vmatpush1.msra.mxu0 %v4301
    %8062 = vmatprep.subr.mxu0 0.0
    %8063 = vmatpush1.msra.mxu0 %v4302
    %8064 = vmatprep.subr.mxu0 0.0
    %8065 = vmatpush1.msra.mxu0 %v4303
    %8066 = vmatprep.subr.mxu0 0.0
    %8067 = vmatpush1.msra.mxu0 %v4304
    %8068 = vmatprep.subr.mxu0 0.0
    %8069 = vmatpush1.msra.mxu0 %v4305
    %8070 = vmatprep.subr.mxu0 0.0
    %8071 = vmatpush1.msra.mxu0 %v4306
    %8072 = vmatprep.subr.mxu0 0.0
    %8073 = vmatpush1.msra.mxu0 %v4307
    %8074 = vmatprep.subr.mxu0 0.0
    %8075 = vmatpush1.msra.mxu0 %v4308
    %8076 = vmatprep.subr.mxu0 0.0
    %8077 = vmatpush1.msra.mxu0 %v4309
    %8078 = vmatprep.subr.mxu0 0.0
    %8079 = vmatpush1.msra.mxu0 %v4310
    %8080 = vmatprep.subr.mxu0 0.0
    %8081 = vmatpush1.msra.mxu0 %v4311
    %8082 = vmatprep.subr.mxu0 0.0
    %8083 = vmatpush1.msra.mxu0 %v4312
    %8084 = vmatprep.subr.mxu0 0.0
    %8085 = vmatpush1.msra.mxu0 %v4313
    %8086 = vmatprep.subr.mxu0 0.0
    %8087 = vmatpush1.msra.mxu0 %v4314
    %8088 = vmatprep.subr.mxu0 0.0
    %8089 = vmatpush1.msra.mxu0 %v4315
    %8090 = vmatprep.subr.mxu0 0.0
    %8091 = vmatpush1.msra.mxu0 %v4316
    %8092 = vmatprep.subr.mxu0 0.0
    %8093 = vmatpush1.msra.mxu0 %v4317
    %8094 = vmatprep.subr.mxu0 0.0
    %8095 = vmatpush1.msra.mxu0 %v4318
    %8096 = vmatprep.subr.mxu0 0.0
    %8097 = vmatpush1.msra.mxu0 %v4319
    %8098 = vmatprep.subr.mxu0 0.0
    %8099 = vmatpush1.msra.mxu0 %v4320
    %8100 = vmatprep.mubr.f32.mxu0 %v5780
    %8101 = vmatmul.mubr.f32.gmra.mrb[0].mxu0 %v5772
    %v8102 = vpop.f32.mrb[0].mxu0
    %v8103 = vadd.f32 %v8033, %v8102
    %v8104 = vpop.f32.mrb[0].mxu0
    %8105 = vdwg.mxu0
    %8106 = vmatprep.subr.mxu0 0.0
    %8107 = vmatpush1.msra.mxu0 %v4321
    %8108 = vmatprep.subr.mxu0 0.0
    %8109 = vmatpush1.msra.mxu0 %v4322
    %8110 = vmatprep.subr.mxu0 0.0
    %8111 = vmatpush1.msra.mxu0 %v4323
    %8112 = vmatprep.subr.mxu0 0.0
    %8113 = vmatpush1.msra.mxu0 %v4324
    %8114 = vmatprep.subr.mxu0 0.0
    %8115 = vmatpush1.msra.mxu0 %v4325
    %8116 = vmatprep.subr.mxu0 0.0
    %8117 = vmatpush1.msra.mxu0 %v4326
    %8118 = vmatprep.subr.mxu0 0.0
    %8119 = vmatpush1.msra.mxu0 %v4327
    %8120 = vmatprep.subr.mxu0 0.0
    %8121 = vmatpush1.msra.mxu0 %v4328
    %8122 = vmatprep.subr.mxu0 0.0
    %8123 = vmatpush1.msra.mxu0 %v4329
    %8124 = vmatprep.subr.mxu0 0.0
    %8125 = vmatpush1.msra.mxu0 %v4330
    %8126 = vmatprep.subr.mxu0 0.0
    %8127 = vmatpush1.msra.mxu0 %v4331
    %8128 = vmatprep.subr.mxu0 0.0
    %8129 = vmatpush1.msra.mxu0 %v4332
    %8130 = vmatprep.subr.mxu0 0.0
    %8131 = vmatpush1.msra.mxu0 %v4333
    %8132 = vmatprep.subr.mxu0 0.0
    %8133 = vmatpush1.msra.mxu0 %v4334
    %8134 = vmatprep.subr.mxu0 0.0
    %8135 = vmatpush1.msra.mxu0 %v4335
    %8136 = vmatprep.subr.mxu0 0.0
    %8137 = vmatpush1.msra.mxu0 %v4336
    %8138 = vmatprep.subr.mxu0 0.0
    %8139 = vmatpush1.msra.mxu0 %v4337
    %8140 = vmatprep.subr.mxu0 0.0
    %8141 = vmatpush1.msra.mxu0 %v4338
    %8142 = vmatprep.subr.mxu0 0.0
    %8143 = vmatpush1.msra.mxu0 %v4339
    %8144 = vmatprep.subr.mxu0 0.0
    %8145 = vmatpush1.msra.mxu0 %v4340
    %8146 = vmatprep.subr.mxu0 0.0
    %8147 = vmatpush1.msra.mxu0 %v4341
    %8148 = vmatprep.subr.mxu0 0.0
    %8149 = vmatpush1.msra.mxu0 %v4342
    %8150 = vmatprep.subr.mxu0 0.0
    %8151 = vmatpush1.msra.mxu0 %v4343
    %8152 = vmatprep.subr.mxu0 0.0
    %8153 = vmatpush1.msra.mxu0 %v4344
    %8154 = vmatprep.subr.mxu0 0.0
    %8155 = vmatpush1.msra.mxu0 %v4345
    %8156 = vmatprep.subr.mxu0 0.0
    %8157 = vmatpush1.msra.mxu0 %v4346
    %8158 = vmatprep.subr.mxu0 0.0
    %8159 = vmatpush1.msra.mxu0 %v4347
    %8160 = vmatprep.subr.mxu0 0.0
    %8161 = vmatpush1.msra.mxu0 %v4348
    %8162 = vmatprep.subr.mxu0 0.0
    %8163 = vmatpush1.msra.mxu0 %v4349
    %8164 = vmatprep.subr.mxu0 0.0
    %8165 = vmatpush1.msra.mxu0 %v4350
    %8166 = vmatprep.subr.mxu0 0.0
    %8167 = vmatpush1.msra.mxu0 %v4351
    %8168 = vmatprep.subr.mxu0 0.0
    %8169 = vmatpush1.msra.mxu0 %v4352
    %8170 = vmatprep.mubr.f32.mxu0 %v5781
    %8171 = vmatmul.mubr.f32.gmra.mrb[0].mxu0 %v5779
    %v8172 = vpop.f32.mrb[0].mxu0
    %v8173 = vadd.f32 %v8103, %v8172
    %v8174 = vpop.f32.mrb[0].mxu0
    %8175 = vdwg.mxu0
    %8176 = vmatprep.subr.mxu0 0.0
    %8177 = vmatpush1.msra.mxu0 %v4353
    %8178 = vmatprep.subr.mxu0 0.0
    %8179 = vmatpush1.msra.mxu0 %v4354
    %8180 = vmatprep.subr.mxu0 0.0
    %8181 = vmatpush1.msra.mxu0 %v4355
    %8182 = vmatprep.subr.mxu0 0.0
    %8183 = vmatpush1.msra.mxu0 %v4356
    %8184 = vmatprep.subr.mxu0 0.0
    %8185 = vmatpush1.msra.mxu0 %v4357
    %8186 = vmatprep.subr.mxu0 0.0
    %8187 = vmatpush1.msra.mxu0 %v4358
    %8188 = vmatprep.subr.mxu0 0.0
    %8189 = vmatpush1.msra.mxu0 %v4359
    %8190 = vmatprep.subr.mxu0 0.0
    %8191 = vmatpush1.msra.mxu0 %v4360
    %8192 = vmatprep.subr.mxu0 0.0
    %8193 = vmatpush1.msra.mxu0 %v4361
    %8194 = vmatprep.subr.mxu0 0.0
    %8195 = vmatpush1.msra.mxu0 %v4362
    %8196 = vmatprep.subr.mxu0 0.0
    %8197 = vmatpush1.msra.mxu0 %v4363
    %8198 = vmatprep.subr.mxu0 0.0
    %8199 = vmatpush1.msra.mxu0 %v4364
    %8200 = vmatprep.subr.mxu0 0.0
    %8201 = vmatpush1.msra.mxu0 %v4365
    %8202 = vmatprep.subr.mxu0 0.0
    %8203 = vmatpush1.msra.mxu0 %v4366
    %8204 = vmatprep.subr.mxu0 0.0
    %8205 = vmatpush1.msra.mxu0 %v4367
    %8206 = vmatprep.subr.mxu0 0.0
    %8207 = vmatpush1.msra.mxu0 %v4368
    %8208 = vmatprep.subr.mxu0 0.0
    %8209 = vmatpush1.msra.mxu0 %v4369
    %8210 = vmatprep.subr.mxu0 0.0
    %8211 = vmatpush1.msra.mxu0 %v4370
    %8212 = vmatprep.subr.mxu0 0.0
    %8213 = vmatpush1.msra.mxu0 %v4371
    %8214 = vmatprep.subr.mxu0 0.0
    %8215 = vmatpush1.msra.mxu0 %v4372
    %8216 = vmatprep.subr.mxu0 0.0
    %8217 = vmatpush1.msra.mxu0 %v4373
    %8218 = vmatprep.subr.mxu0 0.0
    %8219 = vmatpush1.msra.mxu0 %v4374
    %8220 = vmatprep.subr.mxu0 0.0
    %8221 = vmatpush1.msra.mxu0 %v4375
    %8222 = vmatprep.subr.mxu0 0.0
    %8223 = vmatpush1.msra.mxu0 %v4376
    %8224 = vmatprep.subr.mxu0 0.0
    %8225 = vmatpush1.msra.mxu0 %v4377
    %8226 = vmatprep.subr.mxu0 0.0
    %8227 = vmatpush1.msra.mxu0 %v4378
    %8228 = vmatprep.subr.mxu0 0.0
    %8229 = vmatpush1.msra.mxu0 %v4379
    %8230 = vmatprep.subr.mxu0 0.0
    %8231 = vmatpush1.msra.mxu0 %v4380
    %8232 = vmatprep.subr.mxu0 0.0
    %8233 = vmatpush1.msra.mxu0 %v4381
    %8234 = vmatprep.subr.mxu0 0.0
    %8235 = vmatpush1.msra.mxu0 %v4382
    %8236 = vmatprep.subr.mxu0 0.0
    %8237 = vmatpush1.msra.mxu0 %v4383
    %8238 = vmatprep.subr.mxu0 0.0
    %8239 = vmatpush1.msra.mxu0 %v4384
    %8240 = vmatprep.mubr.f32.mxu0 %v5797
    %8241 = vmatmul.mubr.f32.gmra.mrb[0].mxu0 %v5789
    %v8242 = vpop.f32.mrb[0].mxu0
    %v8243 = vadd.f32 %v8173, %v8242
    %v8244 = vpop.f32.mrb[0].mxu0
    %8245 = vdwg.mxu0
    %8246 = vmatprep.subr.mxu0 0.0
    %8247 = vmatpush1.msra.mxu0 %v4385
    %8248 = vmatprep.subr.mxu0 0.0
    %8249 = vmatpush1.msra.mxu0 %v4386
    %8250 = vmatprep.subr.mxu0 0.0
    %8251 = vmatpush1.msra.mxu0 %v4387
    %8252 = vmatprep.subr.mxu0 0.0
    %8253 = vmatpush1.msra.mxu0 %v4388
    %8254 = vmatprep.subr.mxu0 0.0
    %8255 = vmatpush1.msra.mxu0 %v4389
    %8256 = vmatprep.subr.mxu0 0.0
    %8257 = vmatpush1.msra.mxu0 %v4390
    %8258 = vmatprep.subr.mxu0 0.0
    %8259 = vmatpush1.msra.mxu0 %v4391
    %8260 = vmatprep.subr.mxu0 0.0
    %8261 = vmatpush1.msra.mxu0 %v4392
    %8262 = vmatprep.subr.mxu0 0.0
    %8263 = vmatpush1.msra.mxu0 %v4393
    %8264 = vmatprep.subr.mxu0 0.0
    %8265 = vmatpush1.msra.mxu0 %v4394
    %8266 = vmatprep.subr.mxu0 0.0
    %8267 = vmatpush1.msra.mxu0 %v4395
    %8268 = vmatprep.subr.mxu0 0.0
    %8269 = vmatpush1.msra.mxu0 %v4396
    %8270 = vmatprep.subr.mxu0 0.0
    %8271 = vmatpush1.msra.mxu0 %v4397
    %8272 = vmatprep.subr.mxu0 0.0
    %8273 = vmatpush1.msra.mxu0 %v4398
    %8274 = vmatprep.subr.mxu0 0.0
    %8275 = vmatpush1.msra.mxu0 %v4399
    %8276 = vmatprep.subr.mxu0 0.0
    %8277 = vmatpush1.msra.mxu0 %v4400
    %8278 = vmatprep.subr.mxu0 0.0
    %8279 = vmatpush1.msra.mxu0 %v4401
    %8280 = vmatprep.subr.mxu0 0.0
    %8281 = vmatpush1.msra.mxu0 %v4402
    %8282 = vmatprep.subr.mxu0 0.0
    %8283 = vmatpush1.msra.mxu0 %v4403
    %8284 = vmatprep.subr.mxu0 0.0
    %8285 = vmatpush1.msra.mxu0 %v4404
    %8286 = vmatprep.subr.mxu0 0.0
    %8287 = vmatpush1.msra.mxu0 %v4405
    %8288 = vmatprep.subr.mxu0 0.0
    %8289 = vmatpush1.msra.mxu0 %v4406
    %8290 = vmatprep.subr.mxu0 0.0
    %8291 = vmatpush1.msra.mxu0 %v4407
    %8292 = vmatprep.subr.mxu0 0.0
    %8293 = vmatpush1.msra.mxu0 %v4408
    %8294 = vmatprep.subr.mxu0 0.0
    %8295 = vmatpush1.msra.mxu0 %v4409
    %8296 = vmatprep.subr.mxu0 0.0
    %8297 = vmatpush1.msra.mxu0 %v4410
    %8298 = vmatprep.subr.mxu0 0.0
    %8299 = vmatpush1.msra.mxu0 %v4411
    %8300 = vmatprep.subr.mxu0 0.0
    %8301 = vmatpush1.msra.mxu0 %v4412
    %8302 = vmatprep.subr.mxu0 0.0
    %8303 = vmatpush1.msra.mxu0 %v4413
    %8304 = vmatprep.subr.mxu0 0.0
    %8305 = vmatpush1.msra.mxu0 %v4414
    %8306 = vmatprep.subr.mxu0 0.0
    %8307 = vmatpush1.msra.mxu0 %v4415
    %8308 = vmatprep.subr.mxu0 0.0
    %8309 = vmatpush1.msra.mxu0 %v4416
    %8310 = vmatprep.mubr.f32.mxu0 %v5798
    %8311 = vmatmul.mubr.f32.gmra.mrb[0].mxu0 %v5796
    %v8312 = vpop.f32.mrb[0].mxu0
    %v8313 = vadd.f32 %v8243, %v8312
    %v8314 = vpop.f32.mrb[0].mxu0
    %8315 = vdwg.mxu0
    %8316 = vmatprep.subr.mxu0 0.0
    %8317 = vmatpush1.msra.mxu0 %v4417
    %8318 = vmatprep.subr.mxu0 0.0
    %8319 = vmatpush1.msra.mxu0 %v4418
    %8320 = vmatprep.subr.mxu0 0.0
    %8321 = vmatpush1.msra.mxu0 %v4419
    %8322 = vmatprep.subr.mxu0 0.0
    %8323 = vmatpush1.msra.mxu0 %v4420
    %8324 = vmatprep.subr.mxu0 0.0
    %8325 = vmatpush1.msra.mxu0 %v4421
    %8326 = vmatprep.subr.mxu0 0.0
    %8327 = vmatpush1.msra.mxu0 %v4422
    %8328 = vmatprep.subr.mxu0 0.0
    %8329 = vmatpush1.msra.mxu0 %v4423
    %8330 = vmatprep.subr.mxu0 0.0
    %8331 = vmatpush1.msra.mxu0 %v4424
    %8332 = vmatprep.subr.mxu0 0.0
    %8333 = vmatpush1.msra.mxu0 %v4425
    %8334 = vmatprep.subr.mxu0 0.0
    %8335 = vmatpush1.msra.mxu0 %v4426
    %8336 = vmatprep.subr.mxu0 0.0
    %8337 = vmatpush1.msra.mxu0 %v4427
    %8338 = vmatprep.subr.mxu0 0.0
    %8339 = vmatpush1.msra.mxu0 %v4428
    %8340 = vmatprep.subr.mxu0 0.0
    %8341 = vmatpush1.msra.mxu0 %v4429
    %8342 = vmatprep.subr.mxu0 0.0
    %8343 = vmatpush1.msra.mxu0 %v4430
    %8344 = vmatprep.subr.mxu0 0.0
    %8345 = vmatpush1.msra.mxu0 %v4431
    %8346 = vmatprep.subr.mxu0 0.0
    %8347 = vmatpush1.msra.mxu0 %v4432
    %8348 = vmatprep.subr.mxu0 0.0
    %8349 = vmatpush1.msra.mxu0 %v4433
    %8350 = vmatprep.subr.mxu0 0.0
    %8351 = vmatpush1.msra.mxu0 %v4434
    %8352 = vmatprep.subr.mxu0 0.0
    %8353 = vmatpush1.msra.mxu0 %v4435
    %8354 = vmatprep.subr.mxu0 0.0
    %8355 = vmatpush1.msra.mxu0 %v4436
    %8356 = vmatprep.subr.mxu0 0.0
    %8357 = vmatpush1.msra.mxu0 %v4437
    %8358 = vmatprep.subr.mxu0 0.0
    %8359 = vmatpush1.msra.mxu0 %v4438
    %8360 = vmatprep.subr.mxu0 0.0
    %8361 = vmatpush1.msra.mxu0 %v4439
    %8362 = vmatprep.subr.mxu0 0.0
    %8363 = vmatpush1.msra.mxu0 %v4440
    %8364 = vmatprep.subr.mxu0 0.0
    %8365 = vmatpush1.msra.mxu0 %v4441
    %8366 = vmatprep.subr.mxu0 0.0
    %8367 = vmatpush1.msra.mxu0 %v4442
    %8368 = vmatprep.subr.mxu0 0.0
    %8369 = vmatpush1.msra.mxu0 %v4443
    %8370 = vmatprep.subr.mxu0 0.0
    %8371 = vmatpush1.msra.mxu0 %v4444
    %8372 = vmatprep.subr.mxu0 0.0
    %8373 = vmatpush1.msra.mxu0 %v4445
    %8374 = vmatprep.subr.mxu0 0.0
    %8375 = vmatpush1.msra.mxu0 %v4446
    %8376 = vmatprep.subr.mxu0 0.0
    %8377 = vmatpush1.msra.mxu0 %v4447
    %8378 = vmatprep.subr.mxu0 0.0
    %8379 = vmatpush1.msra.mxu0 %v4448
    %8380 = vmatprep.mubr.f32.mxu0 %v5814
    %8381 = vmatmul.mubr.f32.gmra.mrb[0].mxu0 %v5806
    %v8382 = vpop.f32.mrb[0].mxu0
    %v8383 = vadd.f32 %v8313, %v8382
    %v8384 = vpop.f32.mrb[0].mxu0
    %8385 = vdwg.mxu0
    %8386 = vmatprep.subr.mxu0 0.0
    %8387 = vmatpush1.msra.mxu0 %v4449
    %8388 = vmatprep.subr.mxu0 0.0
    %8389 = vmatpush1.msra.mxu0 %v4450
    %8390 = vmatprep.subr.mxu0 0.0
    %8391 = vmatpush1.msra.mxu0 %v4451
    %8392 = vmatprep.subr.mxu0 0.0
    %8393 = vmatpush1.msra.mxu0 %v4452
    %8394 = vmatprep.subr.mxu0 0.0
    %8395 = vmatpush1.msra.mxu0 %v4453
    %8396 = vmatprep.subr.mxu0 0.0
    %8397 = vmatpush1.msra.mxu0 %v4454
    %8398 = vmatprep.subr.mxu0 0.0
    %8399 = vmatpush1.msra.mxu0 %v4455
    %8400 = vmatprep.subr.mxu0 0.0
    %8401 = vmatpush1.msra.mxu0 %v4456
    %8402 = vmatprep.subr.mxu0 0.0
    %8403 = vmatpush1.msra.mxu0 %v4457
    %8404 = vmatprep.subr.mxu0 0.0
    %8405 = vmatpush1.msra.mxu0 %v4458
    %8406 = vmatprep.subr.mxu0 0.0
    %8407 = vmatpush1.msra.mxu0 %v4459
    %8408 = vmatprep.subr.mxu0 0.0
    %8409 = vmatpush1.msra.mxu0 %v4460
    %8410 = vmatprep.subr.mxu0 0.0
    %8411 = vmatpush1.msra.mxu0 %v4461
    %8412 = vmatprep.subr.mxu0 0.0
    %8413 = vmatpush1.msra.mxu0 %v4462
    %8414 = vmatprep.subr.mxu0 0.0
    %8415 = vmatpush1.msra.mxu0 %v4463
    %8416 = vmatprep.subr.mxu0 0.0
    %8417 = vmatpush1.msra.mxu0 %v4464
    %8418 = vmatprep.subr.mxu0 0.0
    %8419 = vmatpush1.msra.mxu0 %v4465
    %8420 = vmatprep.subr.mxu0 0.0
    %8421 = vmatpush1.msra.mxu0 %v4466
    %8422 = vmatprep.subr.mxu0 0.0
    %8423 = vmatpush1.msra.mxu0 %v4467
    %8424 = vmatprep.subr.mxu0 0.0
    %8425 = vmatpush1.msra.mxu0 %v4468
    %8426 = vmatprep.subr.mxu0 0.0
    %8427 = vmatpush1.msra.mxu0 %v4469
    %8428 = vmatprep.subr.mxu0 0.0
    %8429 = vmatpush1.msra.mxu0 %v4470
    %8430 = vmatprep.subr.mxu0 0.0
    %8431 = vmatpush1.msra.mxu0 %v4471
    %8432 = vmatprep.subr.mxu0 0.0
    %8433 = vmatpush1.msra.mxu0 %v4472
    %8434 = vmatprep.subr.mxu0 0.0
    %8435 = vmatpush1.msra.mxu0 %v4473
    %8436 = vmatprep.subr.mxu0 0.0
    %8437 = vmatpush1.msra.mxu0 %v4474
    %8438 = vmatprep.subr.mxu0 0.0
    %8439 = vmatpush1.msra.mxu0 %v4475
    %8440 = vmatprep.subr.mxu0 0.0
    %8441 = vmatpush1.msra.mxu0 %v4476
    %8442 = vmatprep.subr.mxu0 0.0
    %8443 = vmatpush1.msra.mxu0 %v4477
    %8444 = vmatprep.subr.mxu0 0.0
    %8445 = vmatpush1.msra.mxu0 %v4478
    %8446 = vmatprep.subr.mxu0 0.0
    %8447 = vmatpush1.msra.mxu0 %v4479
    %8448 = vmatprep.subr.mxu0 0.0
    %8449 = vmatpush1.msra.mxu0 %v4480
    %8450 = vmatprep.mubr.f32.mxu0 %v5815
    %8451 = vmatmul.mubr.f32.gmra.mrb[0].mxu0 %v5813
    %v8452 = vpop.f32.mrb[0].mxu0
    %v8453 = vadd.f32 %v8383, %v8452
    %v8454 = vpop.f32.mrb[0].mxu0
    %8455 = vdwg.mxu0
    %8456 = vmatprep.subr.mxu0 0.0
    %8457 = vmatpush1.msra.mxu0 %v4481
    %8458 = vmatprep.subr.mxu0 0.0
    %8459 = vmatpush1.msra.mxu0 %v4482
    %8460 = vmatprep.subr.mxu0 0.0
    %8461 = vmatpush1.msra.mxu0 %v4483
    %8462 = vmatprep.subr.mxu0 0.0
    %8463 = vmatpush1.msra.mxu0 %v4484
    %8464 = vmatprep.subr.mxu0 0.0
    %8465 = vmatpush1.msra.mxu0 %v4485
    %8466 = vmatprep.subr.mxu0 0.0
    %8467 = vmatpush1.msra.mxu0 %v4486
    %8468 = vmatprep.subr.mxu0 0.0
    %8469 = vmatpush1.msra.mxu0 %v4487
    %8470 = vmatprep.subr.mxu0 0.0
    %8471 = vmatpush1.msra.mxu0 %v4488
    %8472 = vmatprep.subr.mxu0 0.0
    %8473 = vmatpush1.msra.mxu0 %v4489
    %8474 = vmatprep.subr.mxu0 0.0
    %8475 = vmatpush1.msra.mxu0 %v4490
    %8476 = vmatprep.subr.mxu0 0.0
    %8477 = vmatpush1.msra.mxu0 %v4491
    %8478 = vmatprep.subr.mxu0 0.0
    %8479 = vmatpush1.msra.mxu0 %v4492
    %8480 = vmatprep.subr.mxu0 0.0
    %8481 = vmatpush1.msra.mxu0 %v4493
    %8482 = vmatprep.subr.mxu0 0.0
    %8483 = vmatpush1.msra.mxu0 %v4494
    %8484 = vmatprep.subr.mxu0 0.0
    %8485 = vmatpush1.msra.mxu0 %v4495
    %8486 = vmatprep.subr.mxu0 0.0
    %8487 = vmatpush1.msra.mxu0 %v4496
    %8488 = vmatprep.subr.mxu0 0.0
    %8489 = vmatpush1.msra.mxu0 %v4497
    %8490 = vmatprep.subr.mxu0 0.0
    %8491 = vmatpush1.msra.mxu0 %v4498
    %8492 = vmatprep.subr.mxu0 0.0
    %8493 = vmatpush1.msra.mxu0 %v4499
    %8494 = vmatprep.subr.mxu0 0.0
    %8495 = vmatpush1.msra.mxu0 %v4500
    %8496 = vmatprep.subr.mxu0 0.0
    %8497 = vmatpush1.msra.mxu0 %v4501
    %8498 = vmatprep.subr.mxu0 0.0
    %8499 = vmatpush1.msra.mxu0 %v4502
    %8500 = vmatprep.subr.mxu0 0.0
    %8501 = vmatpush1.msra.mxu0 %v4503
    %8502 = vmatprep.subr.mxu0 0.0
    %8503 = vmatpush1.msra.mxu0 %v4504
    %8504 = vmatprep.subr.mxu0 0.0
    %8505 = vmatpush1.msra.mxu0 %v4505
    %8506 = vmatprep.subr.mxu0 0.0
    %8507 = vmatpush1.msra.mxu0 %v4506
    %8508 = vmatprep.subr.mxu0 0.0
    %8509 = vmatpush1.msra.mxu0 %v4507
    %8510 = vmatprep.subr.mxu0 0.0
    %8511 = vmatpush1.msra.mxu0 %v4508
    %8512 = vmatprep.subr.mxu0 0.0
    %8513 = vmatpush1.msra.mxu0 %v4509
    %8514 = vmatprep.subr.mxu0 0.0
    %8515 = vmatpush1.msra.mxu0 %v4510
    %8516 = vmatprep.subr.mxu0 0.0
    %8517 = vmatpush1.msra.mxu0 %v4511
    %8518 = vmatprep.subr.mxu0 0.0
    %8519 = vmatpush1.msra.mxu0 %v4512
    %8520 = vmatprep.mubr.f32.mxu0 %v5831
    %8521 = vmatmul.mubr.f32.gmra.mrb[0].mxu0 %v5823
    %v8522 = vpop.f32.mrb[0].mxu0
    %v8523 = vadd.f32 %v8453, %v8522
    %v8524 = vpop.f32.mrb[0].mxu0
    %8525 = vdwg.mxu0
    %8526 = vmatprep.subr.mxu0 0.0
    %8527 = vmatpush1.msra.mxu0 %v4513
    %8528 = vmatprep.subr.mxu0 0.0
    %8529 = vmatpush1.msra.mxu0 %v4514
    %8530 = vmatprep.subr.mxu0 0.0
    %8531 = vmatpush1.msra.mxu0 %v4515
    %8532 = vmatprep.subr.mxu0 0.0
    %8533 = vmatpush1.msra.mxu0 %v4516
    %8534 = vmatprep.subr.mxu0 0.0
    %8535 = vmatpush1.msra.mxu0 %v4517
    %8536 = vmatprep.subr.mxu0 0.0
    %8537 = vmatpush1.msra.mxu0 %v4518
    %8538 = vmatprep.subr.mxu0 0.0
    %8539 = vmatpush1.msra.mxu0 %v4519
    %8540 = vmatprep.subr.mxu0 0.0
    %8541 = vmatpush1.msra.mxu0 %v4520
    %8542 = vmatprep.subr.mxu0 0.0
    %8543 = vmatpush1.msra.mxu0 %v4521
    %8544 = vmatprep.subr.mxu0 0.0
    %8545 = vmatpush1.msra.mxu0 %v4522
    %8546 = vmatprep.subr.mxu0 0.0
    %8547 = vmatpush1.msra.mxu0 %v4523
    %8548 = vmatprep.subr.mxu0 0.0
    %8549 = vmatpush1.msra.mxu0 %v4524
    %8550 = vmatprep.subr.mxu0 0.0
    %8551 = vmatpush1.msra.mxu0 %v4525
    %8552 = vmatprep.subr.mxu0 0.0
    %8553 = vmatpush1.msra.mxu0 %v4526
    %8554 = vmatprep.subr.mxu0 0.0
    %8555 = vmatpush1.msra.mxu0 %v4527
    %8556 = vmatprep.subr.mxu0 0.0
    %8557 = vmatpush1.msra.mxu0 %v4528
    %8558 = vmatprep.subr.mxu0 0.0
    %8559 = vmatpush1.msra.mxu0 %v4529
    %8560 = vmatprep.subr.mxu0 0.0
    %8561 = vmatpush1.msra.mxu0 %v4530
    %8562 = vmatprep.subr.mxu0 0.0
    %8563 = vmatpush1.msra.mxu0 %v4531
    %8564 = vmatprep.subr.mxu0 0.0
    %8565 = vmatpush1.msra.mxu0 %v4532
    %8566 = vmatprep.subr.mxu0 0.0
    %8567 = vmatpush1.msra.mxu0 %v4533
    %8568 = vmatprep.subr.mxu0 0.0
    %8569 = vmatpush1.msra.mxu0 %v4534
    %8570 = vmatprep.subr.mxu0 0.0
    %8571 = vmatpush1.msra.mxu0 %v4535
    %8572 = vmatprep.subr.mxu0 0.0
    %8573 = vmatpush1.msra.mxu0 %v4536
    %8574 = vmatprep.subr.mxu0 0.0
    %8575 = vmatpush1.msra.mxu0 %v4537
    %8576 = vmatprep.subr.mxu0 0.0
    %8577 = vmatpush1.msra.mxu0 %v4538
    %8578 = vmatprep.subr.mxu0 0.0
    %8579 = vmatpush1.msra.mxu0 %v4539
    %8580 = vmatprep.subr.mxu0 0.0
    %8581 = vmatpush1.msra.mxu0 %v4540
    %8582 = vmatprep.subr.mxu0 0.0
    %8583 = vmatpush1.msra.mxu0 %v4541
    %8584 = vmatprep.subr.mxu0 0.0
    %8585 = vmatpush1.msra.mxu0 %v4542
    %8586 = vmatprep.subr.mxu0 0.0
    %8587 = vmatpush1.msra.mxu0 %v4543
    %8588 = vmatprep.subr.mxu0 0.0
    %8589 = vmatpush1.msra.mxu0 %v4544
    %8590 = vmatprep.mubr.f32.mxu0 %v5832
    %8591 = vmatmul.mubr.f32.gmra.mrb[0].mxu0 %v5830
    %v8592 = vpop.f32.mrb[0].mxu0
    %v8593 = vadd.f32 %v8523, %v8592
    %v8594 = vpop.f32.mrb[0].mxu0
    %8595 = vdwg.mxu0
    %8596 = vmatprep.subr.mxu0 0.0
    %8597 = vmatpush1.msra.mxu0 %v4545
    %8598 = vmatprep.subr.mxu0 0.0
    %8599 = vmatpush1.msra.mxu0 %v4546
    %8600 = vmatprep.subr.mxu0 0.0
    %8601 = vmatpush1.msra.mxu0 %v4547
    %8602 = vmatprep.subr.mxu0 0.0
    %8603 = vmatpush1.msra.mxu0 %v4548
    %8604 = vmatprep.subr.mxu0 0.0
    %8605 = vmatpush1.msra.mxu0 %v4549
    %8606 = vmatprep.subr.mxu0 0.0
    %8607 = vmatpush1.msra.mxu0 %v4550
    %8608 = vmatprep.subr.mxu0 0.0
    %8609 = vmatpush1.msra.mxu0 %v4551
    %8610 = vmatprep.subr.mxu0 0.0
    %8611 = vmatpush1.msra.mxu0 %v4552
    %8612 = vmatprep.subr.mxu0 0.0
    %8613 = vmatpush1.msra.mxu0 %v4553
    %8614 = vmatprep.subr.mxu0 0.0
    %8615 = vmatpush1.msra.mxu0 %v4554
    %8616 = vmatprep.subr.mxu0 0.0
    %8617 = vmatpush1.msra.mxu0 %v4555
    %8618 = vmatprep.subr.mxu0 0.0
    %8619 = vmatpush1.msra.mxu0 %v4556
    %8620 = vmatprep.subr.mxu0 0.0
    %8621 = vmatpush1.msra.mxu0 %v4557
    %8622 = vmatprep.subr.mxu0 0.0
    %8623 = vmatpush1.msra.mxu0 %v4558
    %8624 = vmatprep.subr.mxu0 0.0
    %8625 = vmatpush1.msra.mxu0 %v4559
    %8626 = vmatprep.subr.mxu0 0.0
    %8627 = vmatpush1.msra.mxu0 %v4560
    %8628 = vmatprep.subr.mxu0 0.0
    %8629 = vmatpush1.msra.mxu0 %v4561
    %8630 = vmatprep.subr.mxu0 0.0
    %8631 = vmatpush1.msra.mxu0 %v4562
    %8632 = vmatprep.subr.mxu0 0.0
    %8633 = vmatpush1.msra.mxu0 %v4563
    %8634 = vmatprep.subr.mxu0 0.0
    %8635 = vmatpush1.msra.mxu0 %v4564
    %8636 = vmatprep.subr.mxu0 0.0
    %8637 = vmatpush1.msra.mxu0 %v4565
    %8638 = vmatprep.subr.mxu0 0.0
    %8639 = vmatpush1.msra.mxu0 %v4566
    %8640 = vmatprep.subr.mxu0 0.0
    %8641 = vmatpush1.msra.mxu0 %v4567
    %8642 = vmatprep.subr.mxu0 0.0
    %8643 = vmatpush1.msra.mxu0 %v4568
    %8644 = vmatprep.subr.mxu0 0.0
    %8645 = vmatpush1.msra.mxu0 %v4569
    %8646 = vmatprep.subr.mxu0 0.0
    %8647 = vmatpush1.msra.mxu0 %v4570
    %8648 = vmatprep.subr.mxu0 0.0
    %8649 = vmatpush1.msra.mxu0 %v4571
    %8650 = vmatprep.subr.mxu0 0.0
    %8651 = vmatpush1.msra.mxu0 %v4572
    %8652 = vmatprep.subr.mxu0 0.0
    %8653 = vmatpush1.msra.mxu0 %v4573
    %8654 = vmatprep.subr.mxu0 0.0
    %8655 = vmatpush1.msra.mxu0 %v4574
    %8656 = vmatprep.subr.mxu0 0.0
    %8657 = vmatpush1.msra.mxu0 %v4575
    %8658 = vmatprep.subr.mxu0 0.0
    %8659 = vmatpush1.msra.mxu0 %v4576
    %8660 = vmatprep.mubr.f32.mxu0 %v5848
    %8661 = vmatmul.mubr.f32.gmra.mrb[0].mxu0 %v5840
    %v8662 = vpop.f32.mrb[0].mxu0
    %v8663 = vadd.f32 %v8593, %v8662
    %v8664 = vpop.f32.mrb[0].mxu0
    %8665 = vdwg.mxu0
    %8666 = vmatprep.subr.mxu0 0.0
    %8667 = vmatpush1.msra.mxu0 %v4577
    %8668 = vmatprep.subr.mxu0 0.0
    %8669 = vmatpush1.msra.mxu0 %v4578
    %8670 = vmatprep.subr.mxu0 0.0
    %8671 = vmatpush1.msra.mxu0 %v4579
    %8672 = vmatprep.subr.mxu0 0.0
    %8673 = vmatpush1.msra.mxu0 %v4580
    %8674 = vmatprep.subr.mxu0 0.0
    %8675 = vmatpush1.msra.mxu0 %v4581
    %8676 = vmatprep.subr.mxu0 0.0
    %8677 = vmatpush1.msra.mxu0 %v4582
    %8678 = vmatprep.subr.mxu0 0.0
    %8679 = vmatpush1.msra.mxu0 %v4583
    %8680 = vmatprep.subr.mxu0 0.0
    %8681 = vmatpush1.msra.mxu0 %v4584
    %8682 = vmatprep.subr.mxu0 0.0
    %8683 = vmatpush1.msra.mxu0 %v4585
    %8684 = vmatprep.subr.mxu0 0.0
    %8685 = vmatpush1.msra.mxu0 %v4586
    %8686 = vmatprep.subr.mxu0 0.0
    %8687 = vmatpush1.msra.mxu0 %v4587
    %8688 = vmatprep.subr.mxu0 0.0
    %8689 = vmatpush1.msra.mxu0 %v4588
    %8690 = vmatprep.subr.mxu0 0.0
    %8691 = vmatpush1.msra.mxu0 %v4589
    %8692 = vmatprep.subr.mxu0 0.0
    %8693 = vmatpush1.msra.mxu0 %v4590
    %8694 = vmatprep.subr.mxu0 0.0
    %8695 = vmatpush1.msra.mxu0 %v4591
    %8696 = vmatprep.subr.mxu0 0.0
    %8697 = vmatpush1.msra.mxu0 %v4592
    %8698 = vmatprep.subr.mxu0 0.0
    %8699 = vmatpush1.msra.mxu0 %v4593
    %8700 = vmatprep.subr.mxu0 0.0
    %8701 = vmatpush1.msra.mxu0 %v4594
    %8702 = vmatprep.subr.mxu0 0.0
    %8703 = vmatpush1.msra.mxu0 %v4595
    %8704 = vmatprep.subr.mxu0 0.0
    %8705 = vmatpush1.msra.mxu0 %v4596
    %8706 = vmatprep.subr.mxu0 0.0
    %8707 = vmatpush1.msra.mxu0 %v4597
    %8708 = vmatprep.subr.mxu0 0.0
    %8709 = vmatpush1.msra.mxu0 %v4598
    %8710 = vmatprep.subr.mxu0 0.0
    %8711 = vmatpush1.msra.mxu0 %v4599
    %8712 = vmatprep.subr.mxu0 0.0
    %8713 = vmatpush1.msra.mxu0 %v4600
    %8714 = vmatprep.subr.mxu0 0.0
    %8715 = vmatpush1.msra.mxu0 %v4601
    %8716 = vmatprep.subr.mxu0 0.0
    %8717 = vmatpush1.msra.mxu0 %v4602
    %8718 = vmatprep.subr.mxu0 0.0
    %8719 = vmatpush1.msra.mxu0 %v4603
    %8720 = vmatprep.subr.mxu0 0.0
    %8721 = vmatpush1.msra.mxu0 %v4604
    %8722 = vmatprep.subr.mxu0 0.0
    %8723 = vmatpush1.msra.mxu0 %v4605
    %8724 = vmatprep.subr.mxu0 0.0
    %8725 = vmatpush1.msra.mxu0 %v4606
    %8726 = vmatprep.subr.mxu0 0.0
    %8727 = vmatpush1.msra.mxu0 %v4607
    %8728 = vmatprep.subr.mxu0 0.0
    %8729 = vmatpush1.msra.mxu0 %v4608
    %8730 = vmatprep.mubr.f32.mxu0 %v5849
    %8731 = vmatmul.mubr.f32.gmra.mrb[0].mxu0 %v5847
    %v8732 = vpop.f32.mrb[0].mxu0
    %v8733 = vadd.f32 %v8663, %v8732
    %v8734 = vpop.f32.mrb[0].mxu0
    %8735 = vdwg.mxu0
    %8736 = vmatprep.subr.mxu0 0.0
    %8737 = vmatpush1.msra.mxu0 %v4609
    %8738 = vmatprep.subr.mxu0 0.0
    %8739 = vmatpush1.msra.mxu0 %v4610
    %8740 = vmatprep.subr.mxu0 0.0
    %8741 = vmatpush1.msra.mxu0 %v4611
    %8742 = vmatprep.subr.mxu0 0.0
    %8743 = vmatpush1.msra.mxu0 %v4612
    %8744 = vmatprep.subr.mxu0 0.0
    %8745 = vmatpush1.msra.mxu0 %v4613
    %8746 = vmatprep.subr.mxu0 0.0
    %8747 = vmatpush1.msra.mxu0 %v4614
    %8748 = vmatprep.subr.mxu0 0.0
    %8749 = vmatpush1.msra.mxu0 %v4615
    %8750 = vmatprep.subr.mxu0 0.0
    %8751 = vmatpush1.msra.mxu0 %v4616
    %8752 = vmatprep.subr.mxu0 0.0
    %8753 = vmatpush1.msra.mxu0 %v4617
    %8754 = vmatprep.subr.mxu0 0.0
    %8755 = vmatpush1.msra.mxu0 %v4618
    %8756 = vmatprep.subr.mxu0 0.0
    %8757 = vmatpush1.msra.mxu0 %v4619
    %8758 = vmatprep.subr.mxu0 0.0
    %8759 = vmatpush1.msra.mxu0 %v4620
    %8760 = vmatprep.subr.mxu0 0.0
    %8761 = vmatpush1.msra.mxu0 %v4621
    %8762 = vmatprep.subr.mxu0 0.0
    %8763 = vmatpush1.msra.mxu0 %v4622
    %8764 = vmatprep.subr.mxu0 0.0
    %8765 = vmatpush1.msra.mxu0 %v4623
    %8766 = vmatprep.subr.mxu0 0.0
    %8767 = vmatpush1.msra.mxu0 %v4624
    %8768 = vmatprep.subr.mxu0 0.0
    %8769 = vmatpush1.msra.mxu0 %v4625
    %8770 = vmatprep.subr.mxu0 0.0
    %8771 = vmatpush1.msra.mxu0 %v4626
    %8772 = vmatprep.subr.mxu0 0.0
    %8773 = vmatpush1.msra.mxu0 %v4627
    %8774 = vmatprep.subr.mxu0 0.0
    %8775 = vmatpush1.msra.mxu0 %v4628
    %8776 = vmatprep.subr.mxu0 0.0
    %8777 = vmatpush1.msra.mxu0 %v4629
    %8778 = vmatprep.subr.mxu0 0.0
    %8779 = vmatpush1.msra.mxu0 %v4630
    %8780 = vmatprep.subr.mxu0 0.0
    %8781 = vmatpush1.msra.mxu0 %v4631
    %8782 = vmatprep.subr.mxu0 0.0
    %8783 = vmatpush1.msra.mxu0 %v4632
    %8784 = vmatprep.subr.mxu0 0.0
    %8785 = vmatpush1.msra.mxu0 %v4633
    %8786 = vmatprep.subr.mxu0 0.0
    %8787 = vmatpush1.msra.mxu0 %v4634
    %8788 = vmatprep.subr.mxu0 0.0
    %8789 = vmatpush1.msra.mxu0 %v4635
    %8790 = vmatprep.subr.mxu0 0.0
    %8791 = vmatpush1.msra.mxu0 %v4636
    %8792 = vmatprep.subr.mxu0 0.0
    %8793 = vmatpush1.msra.mxu0 %v4637
    %8794 = vmatprep.subr.mxu0 0.0
    %8795 = vmatpush1.msra.mxu0 %v4638
    %8796 = vmatprep.subr.mxu0 0.0
    %8797 = vmatpush1.msra.mxu0 %v4639
    %8798 = vmatprep.subr.mxu0 0.0
    %8799 = vmatpush1.msra.mxu0 %v4640
    %8800 = vmatprep.mubr.f32.mxu0 %v5865
    %8801 = vmatmul.mubr.f32.gmra.mrb[0].mxu0 %v5857
    %v8802 = vpop.f32.mrb[0].mxu0
    %v8803 = vadd.f32 %v8733, %v8802
    %v8804 = vpop.f32.mrb[0].mxu0
    %8805 = vdwg.mxu0
    %8806 = vmatprep.subr.mxu0 0.0
    %8807 = vmatpush1.msra.mxu0 %v4641
    %8808 = vmatprep.subr.mxu0 0.0
    %8809 = vmatpush1.msra.mxu0 %v4642
    %8810 = vmatprep.subr.mxu0 0.0
    %8811 = vmatpush1.msra.mxu0 %v4643
    %8812 = vmatprep.subr.mxu0 0.0
    %8813 = vmatpush1.msra.mxu0 %v4644
    %8814 = vmatprep.subr.mxu0 0.0
    %8815 = vmatpush1.msra.mxu0 %v4645
    %8816 = vmatprep.subr.mxu0 0.0
    %8817 = vmatpush1.msra.mxu0 %v4646
    %8818 = vmatprep.subr.mxu0 0.0
    %8819 = vmatpush1.msra.mxu0 %v4647
    %8820 = vmatprep.subr.mxu0 0.0
    %8821 = vmatpush1.msra.mxu0 %v4648
    %8822 = vmatprep.subr.mxu0 0.0
    %8823 = vmatpush1.msra.mxu0 %v4649
    %8824 = vmatprep.subr.mxu0 0.0
    %8825 = vmatpush1.msra.mxu0 %v4650
    %8826 = vmatprep.subr.mxu0 0.0
    %8827 = vmatpush1.msra.mxu0 %v4651
    %8828 = vmatprep.subr.mxu0 0.0
    %8829 = vmatpush1.msra.mxu0 %v4652
    %8830 = vmatprep.subr.mxu0 0.0
    %8831 = vmatpush1.msra.mxu0 %v4653
    %8832 = vmatprep.subr.mxu0 0.0
    %8833 = vmatpush1.msra.mxu0 %v4654
    %8834 = vmatprep.subr.mxu0 0.0
    %8835 = vmatpush1.msra.mxu0 %v4655
    %8836 = vmatprep.subr.mxu0 0.0
    %8837 = vmatpush1.msra.mxu0 %v4656
    %8838 = vmatprep.subr.mxu0 0.0
    %8839 = vmatpush1.msra.mxu0 %v4657
    %8840 = vmatprep.subr.mxu0 0.0
    %8841 = vmatpush1.msra.mxu0 %v4658
    %8842 = vmatprep.subr.mxu0 0.0
    %8843 = vmatpush1.msra.mxu0 %v4659
    %8844 = vmatprep.subr.mxu0 0.0
    %8845 = vmatpush1.msra.mxu0 %v4660
    %8846 = vmatprep.subr.mxu0 0.0
    %8847 = vmatpush1.msra.mxu0 %v4661
    %8848 = vmatprep.subr.mxu0 0.0
    %8849 = vmatpush1.msra.mxu0 %v4662
    %8850 = vmatprep.subr.mxu0 0.0
    %8851 = vmatpush1.msra.mxu0 %v4663
    %8852 = vmatprep.subr.mxu0 0.0
    %8853 = vmatpush1.msra.mxu0 %v4664
    %8854 = vmatprep.subr.mxu0 0.0
    %8855 = vmatpush1.msra.mxu0 %v4665
    %8856 = vmatprep.subr.mxu0 0.0
    %8857 = vmatpush1.msra.mxu0 %v4666
    %8858 = vmatprep.subr.mxu0 0.0
    %8859 = vmatpush1.msra.mxu0 %v4667
    %8860 = vmatprep.subr.mxu0 0.0
    %8861 = vmatpush1.msra.mxu0 %v4668
    %8862 = vmatprep.subr.mxu0 0.0
    %8863 = vmatpush1.msra.mxu0 %v4669
    %8864 = vmatprep.subr.mxu0 0.0
    %8865 = vmatpush1.msra.mxu0 %v4670
    %8866 = vmatprep.subr.mxu0 0.0
    %8867 = vmatpush1.msra.mxu0 %v4671
    %8868 = vmatprep.subr.mxu0 0.0
    %8869 = vmatpush1.msra.mxu0 %v4672
    %8870 = vmatprep.mubr.f32.mxu0 %v5866
    %8871 = vmatmul.mubr.f32.gmra.mrb[0].mxu0 %v5864
    %v8872 = vpop.f32.mrb[0].mxu0
    %v8873 = vadd.f32 %v8803, %v8872
    %v8874 = vpop.f32.mrb[0].mxu0
    %8875 = vdwg.mxu0
    %8876 = vmatprep.subr.mxu0 0.0
    %8877 = vmatpush1.msra.mxu0 %v4673
    %8878 = vmatprep.subr.mxu0 0.0
    %8879 = vmatpush1.msra.mxu0 %v4674
    %8880 = vmatprep.subr.mxu0 0.0
    %8881 = vmatpush1.msra.mxu0 %v4675
    %8882 = vmatprep.subr.mxu0 0.0
    %8883 = vmatpush1.msra.mxu0 %v4676
    %8884 = vmatprep.subr.mxu0 0.0
    %8885 = vmatpush1.msra.mxu0 %v4677
    %8886 = vmatprep.subr.mxu0 0.0
    %8887 = vmatpush1.msra.mxu0 %v4678
    %8888 = vmatprep.subr.mxu0 0.0
    %8889 = vmatpush1.msra.mxu0 %v4679
    %8890 = vmatprep.subr.mxu0 0.0
    %8891 = vmatpush1.msra.mxu0 %v4680
    %8892 = vmatprep.subr.mxu0 0.0
    %8893 = vmatpush1.msra.mxu0 %v4681
    %8894 = vmatprep.subr.mxu0 0.0
    %8895 = vmatpush1.msra.mxu0 %v4682
    %8896 = vmatprep.subr.mxu0 0.0
    %8897 = vmatpush1.msra.mxu0 %v4683
    %8898 = vmatprep.subr.mxu0 0.0
    %8899 = vmatpush1.msra.mxu0 %v4684
    %8900 = vmatprep.subr.mxu0 0.0
    %8901 = vmatpush1.msra.mxu0 %v4685
    %8902 = vmatprep.subr.mxu0 0.0
    %8903 = vmatpush1.msra.mxu0 %v4686
    %8904 = vmatprep.subr.mxu0 0.0
    %8905 = vmatpush1.msra.mxu0 %v4687
    %8906 = vmatprep.subr.mxu0 0.0
    %8907 = vmatpush1.msra.mxu0 %v4688
    %8908 = vmatprep.subr.mxu0 0.0
    %8909 = vmatpush1.msra.mxu0 %v4689
    %8910 = vmatprep.subr.mxu0 0.0
    %8911 = vmatpush1.msra.mxu0 %v4690
    %8912 = vmatprep.subr.mxu0 0.0
    %8913 = vmatpush1.msra.mxu0 %v4691
    %8914 = vmatprep.subr.mxu0 0.0
    %8915 = vmatpush1.msra.mxu0 %v4692
    %8916 = vmatprep.subr.mxu0 0.0
    %8917 = vmatpush1.msra.mxu0 %v4693
    %8918 = vmatprep.subr.mxu0 0.0
    %8919 = vmatpush1.msra.mxu0 %v4694
    %8920 = vmatprep.subr.mxu0 0.0
    %8921 = vmatpush1.msra.mxu0 %v4695
    %8922 = vmatprep.subr.mxu0 0.0
    %8923 = vmatpush1.msra.mxu0 %v4696
    %8924 = vmatprep.subr.mxu0 0.0
    %8925 = vmatpush1.msra.mxu0 %v4697
    %8926 = vmatprep.subr.mxu0 0.0
    %8927 = vmatpush1.msra.mxu0 %v4698
    %8928 = vmatprep.subr.mxu0 0.0
    %8929 = vmatpush1.msra.mxu0 %v4699
    %8930 = vmatprep.subr.mxu0 0.0
    %8931 = vmatpush1.msra.mxu0 %v4700
    %8932 = vmatprep.subr.mxu0 0.0
    %8933 = vmatpush1.msra.mxu0 %v4701
    %8934 = vmatprep.subr.mxu0 0.0
    %8935 = vmatpush1.msra.mxu0 %v4702
    %8936 = vmatprep.subr.mxu0 0.0
    %8937 = vmatpush1.msra.mxu0 %v4703
    %8938 = vmatprep.subr.mxu0 0.0
    %8939 = vmatpush1.msra.mxu0 %v4704
    %8940 = vmatprep.mubr.f32.mxu0 %v5882
    %8941 = vmatmul.mubr.f32.gmra.mrb[0].mxu0 %v5874
    %v8942 = vpop.f32.mrb[0].mxu0
    %v8943 = vadd.f32 %v8873, %v8942
    %v8944 = vpop.f32.mrb[0].mxu0
    %8945 = vdwg.mxu0
    %8946 = vmatprep.subr.mxu0 0.0
    %8947 = vmatpush1.msra.mxu0 %v4705
    %8948 = vmatprep.subr.mxu0 0.0
    %8949 = vmatpush1.msra.mxu0 %v4706
    %8950 = vmatprep.subr.mxu0 0.0
    %8951 = vmatpush1.msra.mxu0 %v4707
    %8952 = vmatprep.subr.mxu0 0.0
    %8953 = vmatpush1.msra.mxu0 %v4708
    %8954 = vmatprep.subr.mxu0 0.0
    %8955 = vmatpush1.msra.mxu0 %v4709
    %8956 = vmatprep.subr.mxu0 0.0
    %8957 = vmatpush1.msra.mxu0 %v4710
    %8958 = vmatprep.subr.mxu0 0.0
    %8959 = vmatpush1.msra.mxu0 %v4711
    %8960 = vmatprep.subr.mxu0 0.0
    %8961 = vmatpush1.msra.mxu0 %v4712
    %8962 = vmatprep.subr.mxu0 0.0
    %8963 = vmatpush1.msra.mxu0 %v4713
    %8964 = vmatprep.subr.mxu0 0.0
    %8965 = vmatpush1.msra.mxu0 %v4714
    %8966 = vmatprep.subr.mxu0 0.0
    %8967 = vmatpush1.msra.mxu0 %v4715
    %8968 = vmatprep.subr.mxu0 0.0
    %8969 = vmatpush1.msra.mxu0 %v4716
    %8970 = vmatprep.subr.mxu0 0.0
    %8971 = vmatpush1.msra.mxu0 %v4717
    %8972 = vmatprep.subr.mxu0 0.0
    %8973 = vmatpush1.msra.mxu0 %v4718
    %8974 = vmatprep.subr.mxu0 0.0
    %8975 = vmatpush1.msra.mxu0 %v4719
    %8976 = vmatprep.subr.mxu0 0.0
    %8977 = vmatpush1.msra.mxu0 %v4720
    %8978 = vmatprep.subr.mxu0 0.0
    %8979 = vmatpush1.msra.mxu0 %v4721
    %8980 = vmatprep.subr.mxu0 0.0
    %8981 = vmatpush1.msra.mxu0 %v4722
    %8982 = vmatprep.subr.mxu0 0.0
    %8983 = vmatpush1.msra.mxu0 %v4723
    %8984 = vmatprep.subr.mxu0 0.0
    %8985 = vmatpush1.msra.mxu0 %v4724
    %8986 = vmatprep.subr.mxu0 0.0
    %8987 = vmatpush1.msra.mxu0 %v4725
    %8988 = vmatprep.subr.mxu0 0.0
    %8989 = vmatpush1.msra.mxu0 %v4726
    %8990 = vmatprep.subr.mxu0 0.0
    %8991 = vmatpush1.msra.mxu0 %v4727
    %8992 = vmatprep.subr.mxu0 0.0
    %8993 = vmatpush1.msra.mxu0 %v4728
    %8994 = vmatprep.subr.mxu0 0.0
    %8995 = vmatpush1.msra.mxu0 %v4729
    %8996 = vmatprep.subr.mxu0 0.0
    %8997 = vmatpush1.msra.mxu0 %v4730
    %8998 = vmatprep.subr.mxu0 0.0
    %8999 = vmatpush1.msra.mxu0 %v4731
    %9000 = vmatprep.subr.mxu0 0.0
    %9001 = vmatpush1.msra.mxu0 %v4732
    %9002 = vmatprep.subr.mxu0 0.0
    %9003 = vmatpush1.msra.mxu0 %v4733
    %9004 = vmatprep.subr.mxu0 0.0
    %9005 = vmatpush1.msra.mxu0 %v4734
    %9006 = vmatprep.subr.mxu0 0.0
    %9007 = vmatpush1.msra.mxu0 %v4735
    %9008 = vmatprep.subr.mxu0 0.0
    %9009 = vmatpush1.msra.mxu0 %v4736
    %9010 = vmatprep.mubr.f32.mxu0 %v5883
    %9011 = vmatmul.mubr.f32.gmra.mrb[0].mxu0 %v5881
    %v9012 = vpop.f32.mrb[0].mxu0
    %v9013 = vadd.f32 %v8943, %v9012
    %v9014 = vpop.f32.mrb[0].mxu0
    %9015 = vdwg.mxu0
    %9016 = vmatprep.subr.mxu0 0.0
    %9017 = vmatpush1.msra.mxu0 %v4737
    %9018 = vmatprep.subr.mxu0 0.0
    %9019 = vmatpush1.msra.mxu0 %v4738
    %9020 = vmatprep.subr.mxu0 0.0
    %9021 = vmatpush1.msra.mxu0 %v4739
    %9022 = vmatprep.subr.mxu0 0.0
    %9023 = vmatpush1.msra.mxu0 %v4740
    %9024 = vmatprep.subr.mxu0 0.0
    %9025 = vmatpush1.msra.mxu0 %v4741
    %9026 = vmatprep.subr.mxu0 0.0
    %9027 = vmatpush1.msra.mxu0 %v4742
    %9028 = vmatprep.subr.mxu0 0.0
    %9029 = vmatpush1.msra.mxu0 %v4743
    %9030 = vmatprep.subr.mxu0 0.0
    %9031 = vmatpush1.msra.mxu0 %v4744
    %9032 = vmatprep.subr.mxu0 0.0
    %9033 = vmatpush1.msra.mxu0 %v4745
    %9034 = vmatprep.subr.mxu0 0.0
    %9035 = vmatpush1.msra.mxu0 %v4746
    %9036 = vmatprep.subr.mxu0 0.0
    %9037 = vmatpush1.msra.mxu0 %v4747
    %9038 = vmatprep.subr.mxu0 0.0
    %9039 = vmatpush1.msra.mxu0 %v4748
    %9040 = vmatprep.subr.mxu0 0.0
    %9041 = vmatpush1.msra.mxu0 %v4749
    %9042 = vmatprep.subr.mxu0 0.0
    %9043 = vmatpush1.msra.mxu0 %v4750
    %9044 = vmatprep.subr.mxu0 0.0
    %9045 = vmatpush1.msra.mxu0 %v4751
    %9046 = vmatprep.subr.mxu0 0.0
    %9047 = vmatpush1.msra.mxu0 %v4752
    %9048 = vmatprep.subr.mxu0 0.0
    %9049 = vmatpush1.msra.mxu0 %v4753
    %9050 = vmatprep.subr.mxu0 0.0
    %9051 = vmatpush1.msra.mxu0 %v4754
    %9052 = vmatprep.subr.mxu0 0.0
    %9053 = vmatpush1.msra.mxu0 %v4755
    %9054 = vmatprep.subr.mxu0 0.0
    %9055 = vmatpush1.msra.mxu0 %v4756
    %9056 = vmatprep.subr.mxu0 0.0
    %9057 = vmatpush1.msra.mxu0 %v4757
    %9058 = vmatprep.subr.mxu0 0.0
    %9059 = vmatpush1.msra.mxu0 %v4758
    %9060 = vmatprep.subr.mxu0 0.0
    %9061 = vmatpush1.msra.mxu0 %v4759
    %9062 = vmatprep.subr.mxu0 0.0
    %9063 = vmatpush1.msra.mxu0 %v4760
    %9064 = vmatprep.subr.mxu0 0.0
    %9065 = vmatpush1.msra.mxu0 %v4761
    %9066 = vmatprep.subr.mxu0 0.0
    %9067 = vmatpush1.msra.mxu0 %v4762
    %9068 = vmatprep.subr.mxu0 0.0
    %9069 = vmatpush1.msra.mxu0 %v4763
    %9070 = vmatprep.subr.mxu0 0.0
    %9071 = vmatpush1.msra.mxu0 %v4764
    %9072 = vmatprep.subr.mxu0 0.0
    %9073 = vmatpush1.msra.mxu0 %v4765
    %9074 = vmatprep.subr.mxu0 0.0
    %9075 = vmatpush1.msra.mxu0 %v4766
    %9076 = vmatprep.subr.mxu0 0.0
    %9077 = vmatpush1.msra.mxu0 %v4767
    %9078 = vmatprep.subr.mxu0 0.0
    %9079 = vmatpush1.msra.mxu0 %v4768
    %9080 = vmatprep.mubr.f32.mxu0 %v5899
    %9081 = vmatmul.mubr.f32.gmra.mrb[0].mxu0 %v5891
    %v9082 = vpop.f32.mrb[0].mxu0
    %v9083 = vadd.f32 %v9013, %v9082
    %v9084 = vpop.f32.mrb[0].mxu0
    %9085 = vdwg.mxu0
    %9086 = vmatprep.subr.mxu0 0.0
    %9087 = vmatpush1.msra.mxu0 %v4769
    %9088 = vmatprep.subr.mxu0 0.0
    %9089 = vmatpush1.msra.mxu0 %v4770
    %9090 = vmatprep.subr.mxu0 0.0
    %9091 = vmatpush1.msra.mxu0 %v4771
    %9092 = vmatprep.subr.mxu0 0.0
    %9093 = vmatpush1.msra.mxu0 %v4772
    %9094 = vmatprep.subr.mxu0 0.0
    %9095 = vmatpush1.msra.mxu0 %v4773
    %9096 = vmatprep.subr.mxu0 0.0
    %9097 = vmatpush1.msra.mxu0 %v4774
    %9098 = vmatprep.subr.mxu0 0.0
    %9099 = vmatpush1.msra.mxu0 %v4775
    %9100 = vmatprep.subr.mxu0 0.0
    %9101 = vmatpush1.msra.mxu0 %v4776
    %9102 = vmatprep.subr.mxu0 0.0
    %9103 = vmatpush1.msra.mxu0 %v4777
    %9104 = vmatprep.subr.mxu0 0.0
    %9105 = vmatpush1.msra.mxu0 %v4778
    %9106 = vmatprep.subr.mxu0 0.0
    %9107 = vmatpush1.msra.mxu0 %v4779
    %9108 = vmatprep.subr.mxu0 0.0
    %9109 = vmatpush1.msra.mxu0 %v4780
    %9110 = vmatprep.subr.mxu0 0.0
    %9111 = vmatpush1.msra.mxu0 %v4781
    %9112 = vmatprep.subr.mxu0 0.0
    %9113 = vmatpush1.msra.mxu0 %v4782
    %9114 = vmatprep.subr.mxu0 0.0
    %9115 = vmatpush1.msra.mxu0 %v4783
    %9116 = vmatprep.subr.mxu0 0.0
    %9117 = vmatpush1.msra.mxu0 %v4784
    %9118 = vmatprep.subr.mxu0 0.0
    %9119 = vmatpush1.msra.mxu0 %v4785
    %9120 = vmatprep.subr.mxu0 0.0
    %9121 = vmatpush1.msra.mxu0 %v4786
    %9122 = vmatprep.subr.mxu0 0.0
    %9123 = vmatpush1.msra.mxu0 %v4787
    %9124 = vmatprep.subr.mxu0 0.0
    %9125 = vmatpush1.msra.mxu0 %v4788
    %9126 = vmatprep.subr.mxu0 0.0
    %9127 = vmatpush1.msra.mxu0 %v4789
    %9128 = vmatprep.subr.mxu0 0.0
    %9129 = vmatpush1.msra.mxu0 %v4790
    %9130 = vmatprep.subr.mxu0 0.0
    %9131 = vmatpush1.msra.mxu0 %v4791
    %9132 = vmatprep.subr.mxu0 0.0
    %9133 = vmatpush1.msra.mxu0 %v4792
    %9134 = vmatprep.subr.mxu0 0.0
    %9135 = vmatpush1.msra.mxu0 %v4793
    %9136 = vmatprep.subr.mxu0 0.0
    %9137 = vmatpush1.msra.mxu0 %v4794
    %9138 = vmatprep.subr.mxu0 0.0
    %9139 = vmatpush1.msra.mxu0 %v4795
    %9140 = vmatprep.subr.mxu0 0.0
    %9141 = vmatpush1.msra.mxu0 %v4796
    %9142 = vmatprep.subr.mxu0 0.0
    %9143 = vmatpush1.msra.mxu0 %v4797
    %9144 = vmatprep.subr.mxu0 0.0
    %9145 = vmatpush1.msra.mxu0 %v4798
    %9146 = vmatprep.subr.mxu0 0.0
    %9147 = vmatpush1.msra.mxu0 %v4799
    %9148 = vmatprep.subr.mxu0 0.0
    %9149 = vmatpush1.msra.mxu0 %v4800
    %9150 = vmatprep.mubr.f32.mxu0 %v5900
    %9151 = vmatmul.mubr.f32.gmra.mrb[0].mxu0 %v5898
    %v9152 = vpop.f32.mrb[0].mxu0
    %v9153 = vadd.f32 %v9083, %v9152
    %v9154 = vpop.f32.mrb[0].mxu0
    %9155 = vdwg.mxu0
    %9156 = vmatprep.subr.mxu0 0.0
    %9157 = vmatpush1.msra.mxu0 %v4801
    %9158 = vmatprep.subr.mxu0 0.0
    %9159 = vmatpush1.msra.mxu0 %v4802
    %9160 = vmatprep.subr.mxu0 0.0
    %9161 = vmatpush1.msra.mxu0 %v4803
    %9162 = vmatprep.subr.mxu0 0.0
    %9163 = vmatpush1.msra.mxu0 %v4804
    %9164 = vmatprep.subr.mxu0 0.0
    %9165 = vmatpush1.msra.mxu0 %v4805
    %9166 = vmatprep.subr.mxu0 0.0
    %9167 = vmatpush1.msra.mxu0 %v4806
    %9168 = vmatprep.subr.mxu0 0.0
    %9169 = vmatpush1.msra.mxu0 %v4807
    %9170 = vmatprep.subr.mxu0 0.0
    %9171 = vmatpush1.msra.mxu0 %v4808
    %9172 = vmatprep.subr.mxu0 0.0
    %9173 = vmatpush1.msra.mxu0 %v4809
    %9174 = vmatprep.subr.mxu0 0.0
    %9175 = vmatpush1.msra.mxu0 %v4810
    %9176 = vmatprep.subr.mxu0 0.0
    %9177 = vmatpush1.msra.mxu0 %v4811
    %9178 = vmatprep.subr.mxu0 0.0
    %9179 = vmatpush1.msra.mxu0 %v4812
    %9180 = vmatprep.subr.mxu0 0.0
    %9181 = vmatpush1.msra.mxu0 %v4813
    %9182 = vmatprep.subr.mxu0 0.0
    %9183 = vmatpush1.msra.mxu0 %v4814
    %9184 = vmatprep.subr.mxu0 0.0
    %9185 = vmatpush1.msra.mxu0 %v4815
    %9186 = vmatprep.subr.mxu0 0.0
    %9187 = vmatpush1.msra.mxu0 %v4816
    %9188 = vmatprep.subr.mxu0 0.0
    %9189 = vmatpush1.msra.mxu0 %v4817
    %9190 = vmatprep.subr.mxu0 0.0
    %9191 = vmatpush1.msra.mxu0 %v4818
    %9192 = vmatprep.subr.mxu0 0.0
    %9193 = vmatpush1.msra.mxu0 %v4819
    %9194 = vmatprep.subr.mxu0 0.0
    %9195 = vmatpush1.msra.mxu0 %v4820
    %9196 = vmatprep.subr.mxu0 0.0
    %9197 = vmatpush1.msra.mxu0 %v4821
    %9198 = vmatprep.subr.mxu0 0.0
    %9199 = vmatpush1.msra.mxu0 %v4822
    %9200 = vmatprep.subr.mxu0 0.0
    %9201 = vmatpush1.msra.mxu0 %v4823
    %9202 = vmatprep.subr.mxu0 0.0
    %9203 = vmatpush1.msra.mxu0 %v4824
    %9204 = vmatprep.subr.mxu0 0.0
    %9205 = vmatpush1.msra.mxu0 %v4825
    %9206 = vmatprep.subr.mxu0 0.0
    %9207 = vmatpush1.msra.mxu0 %v4826
    %9208 = vmatprep.subr.mxu0 0.0
    %9209 = vmatpush1.msra.mxu0 %v4827
    %9210 = vmatprep.subr.mxu0 0.0
    %9211 = vmatpush1.msra.mxu0 %v4828
    %9212 = vmatprep.subr.mxu0 0.0
    %9213 = vmatpush1.msra.mxu0 %v4829
    %9214 = vmatprep.subr.mxu0 0.0
    %9215 = vmatpush1.msra.mxu0 %v4830
    %9216 = vmatprep.subr.mxu0 0.0
    %9217 = vmatpush1.msra.mxu0 %v4831
    %9218 = vmatprep.subr.mxu0 0.0
    %9219 = vmatpush1.msra.mxu0 %v4832
    %9220 = vmatprep.mubr.f32.mxu0 %v5916
    %9221 = vmatmul.mubr.f32.gmra.mrb[0].mxu0 %v5908
    %v9222 = vpop.f32.mrb[0].mxu0
    %v9223 = vadd.f32 %v9153, %v9222
    %v9224 = vpop.f32.mrb[0].mxu0
    %9225 = vdwg.mxu0
    %9226 = vmatprep.subr.mxu0 0.0
    %9227 = vmatpush1.msra.mxu0 %v4833
    %9228 = vmatprep.subr.mxu0 0.0
    %9229 = vmatpush1.msra.mxu0 %v4834
    %9230 = vmatprep.subr.mxu0 0.0
    %9231 = vmatpush1.msra.mxu0 %v4835
    %9232 = vmatprep.subr.mxu0 0.0
    %9233 = vmatpush1.msra.mxu0 %v4836
    %9234 = vmatprep.subr.mxu0 0.0
    %9235 = vmatpush1.msra.mxu0 %v4837
    %9236 = vmatprep.subr.mxu0 0.0
    %9237 = vmatpush1.msra.mxu0 %v4838
    %9238 = vmatprep.subr.mxu0 0.0
    %9239 = vmatpush1.msra.mxu0 %v4839
    %9240 = vmatprep.subr.mxu0 0.0
    %9241 = vmatpush1.msra.mxu0 %v4840
    %9242 = vmatprep.subr.mxu0 0.0
    %9243 = vmatpush1.msra.mxu0 %v4841
    %9244 = vmatprep.subr.mxu0 0.0
    %9245 = vmatpush1.msra.mxu0 %v4842
    %9246 = vmatprep.subr.mxu0 0.0
    %9247 = vmatpush1.msra.mxu0 %v4843
    %9248 = vmatprep.subr.mxu0 0.0
    %9249 = vmatpush1.msra.mxu0 %v4844
    %9250 = vmatprep.subr.mxu0 0.0
    %9251 = vmatpush1.msra.mxu0 %v4845
    %9252 = vmatprep.subr.mxu0 0.0
    %9253 = vmatpush1.msra.mxu0 %v4846
    %9254 = vmatprep.subr.mxu0 0.0
    %9255 = vmatpush1.msra.mxu0 %v4847
    %9256 = vmatprep.subr.mxu0 0.0
    %9257 = vmatpush1.msra.mxu0 %v4848
    %9258 = vmatprep.subr.mxu0 0.0
    %9259 = vmatpush1.msra.mxu0 %v4849
    %9260 = vmatprep.subr.mxu0 0.0
    %9261 = vmatpush1.msra.mxu0 %v4850
    %9262 = vmatprep.subr.mxu0 0.0
    %9263 = vmatpush1.msra.mxu0 %v4851
    %9264 = vmatprep.subr.mxu0 0.0
    %9265 = vmatpush1.msra.mxu0 %v4852
    %9266 = vmatprep.subr.mxu0 0.0
    %9267 = vmatpush1.msra.mxu0 %v4853
    %9268 = vmatprep.subr.mxu0 0.0
    %9269 = vmatpush1.msra.mxu0 %v4854
    %9270 = vmatprep.subr.mxu0 0.0
    %9271 = vmatpush1.msra.mxu0 %v4855
    %9272 = vmatprep.subr.mxu0 0.0
    %9273 = vmatpush1.msra.mxu0 %v4856
    %9274 = vmatprep.subr.mxu0 0.0
    %9275 = vmatpush1.msra.mxu0 %v4857
    %9276 = vmatprep.subr.mxu0 0.0
    %9277 = vmatpush1.msra.mxu0 %v4858
    %9278 = vmatprep.subr.mxu0 0.0
    %9279 = vmatpush1.msra.mxu0 %v4859
    %9280 = vmatprep.subr.mxu0 0.0
    %9281 = vmatpush1.msra.mxu0 %v4860
    %9282 = vmatprep.subr.mxu0 0.0
    %9283 = vmatpush1.msra.mxu0 %v4861
    %9284 = vmatprep.subr.mxu0 0.0
    %9285 = vmatpush1.msra.mxu0 %v4862
    %9286 = vmatprep.subr.mxu0 0.0
    %9287 = vmatpush1.msra.mxu0 %v4863
    %9288 = vmatprep.subr.mxu0 0.0
    %9289 = vmatpush1.msra.mxu0 %v4864
    %9290 = vmatprep.mubr.f32.mxu0 %v5917
    %9291 = vmatmul.mubr.f32.gmra.mrb[0].mxu0 %v5915
    %v9292 = vpop.f32.mrb[0].mxu0
    %v9293 = vadd.f32 %v9223, %v9292
    %v9294 = vpop.f32.mrb[0].mxu0
    %9295 = vdwg.mxu0
    %9296 = vmatprep.subr.mxu0 0.0
    %9297 = vmatpush1.msra.mxu0 %v4865
    %9298 = vmatprep.subr.mxu0 0.0
    %9299 = vmatpush1.msra.mxu0 %v4866
    %9300 = vmatprep.subr.mxu0 0.0
    %9301 = vmatpush1.msra.mxu0 %v4867
    %9302 = vmatprep.subr.mxu0 0.0
    %9303 = vmatpush1.msra.mxu0 %v4868
    %9304 = vmatprep.subr.mxu0 0.0
    %9305 = vmatpush1.msra.mxu0 %v4869
    %9306 = vmatprep.subr.mxu0 0.0
    %9307 = vmatpush1.msra.mxu0 %v4870
    %9308 = vmatprep.subr.mxu0 0.0
    %9309 = vmatpush1.msra.mxu0 %v4871
    %9310 = vmatprep.subr.mxu0 0.0
    %9311 = vmatpush1.msra.mxu0 %v4872
    %9312 = vmatprep.subr.mxu0 0.0
    %9313 = vmatpush1.msra.mxu0 %v4873
    %9314 = vmatprep.subr.mxu0 0.0
    %9315 = vmatpush1.msra.mxu0 %v4874
    %9316 = vmatprep.subr.mxu0 0.0
    %9317 = vmatpush1.msra.mxu0 %v4875
    %9318 = vmatprep.subr.mxu0 0.0
    %9319 = vmatpush1.msra.mxu0 %v4876
    %9320 = vmatprep.subr.mxu0 0.0
    %9321 = vmatpush1.msra.mxu0 %v4877
    %9322 = vmatprep.subr.mxu0 0.0
    %9323 = vmatpush1.msra.mxu0 %v4878
    %9324 = vmatprep.subr.mxu0 0.0
    %9325 = vmatpush1.msra.mxu0 %v4879
    %9326 = vmatprep.subr.mxu0 0.0
    %9327 = vmatpush1.msra.mxu0 %v4880
    %9328 = vmatprep.subr.mxu0 0.0
    %9329 = vmatpush1.msra.mxu0 %v4881
    %9330 = vmatprep.subr.mxu0 0.0
    %9331 = vmatpush1.msra.mxu0 %v4882
    %9332 = vmatprep.subr.mxu0 0.0
    %9333 = vmatpush1.msra.mxu0 %v4883
    %9334 = vmatprep.subr.mxu0 0.0
    %9335 = vmatpush1.msra.mxu0 %v4884
    %9336 = vmatprep.subr.mxu0 0.0
    %9337 = vmatpush1.msra.mxu0 %v4885
    %9338 = vmatprep.subr.mxu0 0.0
    %9339 = vmatpush1.msra.mxu0 %v4886
    %9340 = vmatprep.subr.mxu0 0.0
    %9341 = vmatpush1.msra.mxu0 %v4887
    %9342 = vmatprep.subr.mxu0 0.0
    %9343 = vmatpush1.msra.mxu0 %v4888
    %9344 = vmatprep.subr.mxu0 0.0
    %9345 = vmatpush1.msra.mxu0 %v4889
    %9346 = vmatprep.subr.mxu0 0.0
    %9347 = vmatpush1.msra.mxu0 %v4890
    %9348 = vmatprep.subr.mxu0 0.0
    %9349 = vmatpush1.msra.mxu0 %v4891
    %9350 = vmatprep.subr.mxu0 0.0
    %9351 = vmatpush1.msra.mxu0 %v4892
    %9352 = vmatprep.subr.mxu0 0.0
    %9353 = vmatpush1.msra.mxu0 %v4893
    %9354 = vmatprep.subr.mxu0 0.0
    %9355 = vmatpush1.msra.mxu0 %v4894
    %9356 = vmatprep.subr.mxu0 0.0
    %9357 = vmatpush1.msra.mxu0 %v4895
    %9358 = vmatprep.subr.mxu0 0.0
    %9359 = vmatpush1.msra.mxu0 %v4896
    %9360 = vmatprep.mubr.f32.mxu0 %v5933
    %9361 = vmatmul.mubr.f32.gmra.mrb[0].mxu0 %v5925
    %v9362 = vpop.f32.mrb[0].mxu0
    %v9363 = vadd.f32 %v9293, %v9362
    %v9364 = vpop.f32.mrb[0].mxu0
    %9365 = vdwg.mxu0
    %9366 = vmatprep.subr.mxu0 0.0
    %9367 = vmatpush1.msra.mxu0 %v4897
    %9368 = vmatprep.subr.mxu0 0.0
    %9369 = vmatpush1.msra.mxu0 %v4898
    %9370 = vmatprep.subr.mxu0 0.0
    %9371 = vmatpush1.msra.mxu0 %v4899
    %9372 = vmatprep.subr.mxu0 0.0
    %9373 = vmatpush1.msra.mxu0 %v4900
    %9374 = vmatprep.subr.mxu0 0.0
    %9375 = vmatpush1.msra.mxu0 %v4901
    %9376 = vmatprep.subr.mxu0 0.0
    %9377 = vmatpush1.msra.mxu0 %v4902
    %9378 = vmatprep.subr.mxu0 0.0
    %9379 = vmatpush1.msra.mxu0 %v4903
    %9380 = vmatprep.subr.mxu0 0.0
    %9381 = vmatpush1.msra.mxu0 %v4904
    %9382 = vmatprep.subr.mxu0 0.0
    %9383 = vmatpush1.msra.mxu0 %v4905
    %9384 = vmatprep.subr.mxu0 0.0
    %9385 = vmatpush1.msra.mxu0 %v4906
    %9386 = vmatprep.subr.mxu0 0.0
    %9387 = vmatpush1.msra.mxu0 %v4907
    %9388 = vmatprep.subr.mxu0 0.0
    %9389 = vmatpush1.msra.mxu0 %v4908
    %9390 = vmatprep.subr.mxu0 0.0
    %9391 = vmatpush1.msra.mxu0 %v4909
    %9392 = vmatprep.subr.mxu0 0.0
    %9393 = vmatpush1.msra.mxu0 %v4910
    %9394 = vmatprep.subr.mxu0 0.0
    %9395 = vmatpush1.msra.mxu0 %v4911
    %9396 = vmatprep.subr.mxu0 0.0
    %9397 = vmatpush1.msra.mxu0 %v4912
    %9398 = vmatprep.subr.mxu0 0.0
    %9399 = vmatpush1.msra.mxu0 %v4913
    %9400 = vmatprep.subr.mxu0 0.0
    %9401 = vmatpush1.msra.mxu0 %v4914
    %9402 = vmatprep.subr.mxu0 0.0
    %9403 = vmatpush1.msra.mxu0 %v4915
    %9404 = vmatprep.subr.mxu0 0.0
    %9405 = vmatpush1.msra.mxu0 %v4916
    %9406 = vmatprep.subr.mxu0 0.0
    %9407 = vmatpush1.msra.mxu0 %v4917
    %9408 = vmatprep.subr.mxu0 0.0
    %9409 = vmatpush1.msra.mxu0 %v4918
    %9410 = vmatprep.subr.mxu0 0.0
    %9411 = vmatpush1.msra.mxu0 %v4919
    %9412 = vmatprep.subr.mxu0 0.0
    %9413 = vmatpush1.msra.mxu0 %v4920
    %9414 = vmatprep.subr.mxu0 0.0
    %9415 = vmatpush1.msra.mxu0 %v4921
    %9416 = vmatprep.subr.mxu0 0.0
    %9417 = vmatpush1.msra.mxu0 %v4922
    %9418 = vmatprep.subr.mxu0 0.0
    %9419 = vmatpush1.msra.mxu0 %v4923
    %9420 = vmatprep.subr.mxu0 0.0
    %9421 = vmatpush1.msra.mxu0 %v4924
    %9422 = vmatprep.subr.mxu0 0.0
    %9423 = vmatpush1.msra.mxu0 %v4925
    %9424 = vmatprep.subr.mxu0 0.0
    %9425 = vmatpush1.msra.mxu0 %v4926
    %9426 = vmatprep.subr.mxu0 0.0
    %9427 = vmatpush1.msra.mxu0 %v4927
    %9428 = vmatprep.subr.mxu0 0.0
    %9429 = vmatpush1.msra.mxu0 %v4928
    %9430 = vmatprep.mubr.f32.mxu0 %v5934
    %9431 = vmatmul.mubr.f32.gmra.mrb[0].mxu0 %v5932
    %v9432 = vpop.f32.mrb[0].mxu0
    %v9433 = vadd.f32 %v9363, %v9432
    %v9434 = vpop.f32.mrb[0].mxu0
    %9435 = vdwg.mxu0
    %9436 = vmatprep.subr.mxu0 0.0
    %9437 = vmatpush1.msra.mxu0 %v4929
    %9438 = vmatprep.subr.mxu0 0.0
    %9439 = vmatpush1.msra.mxu0 %v4930
    %9440 = vmatprep.subr.mxu0 0.0
    %9441 = vmatpush1.msra.mxu0 %v4931
    %9442 = vmatprep.subr.mxu0 0.0
    %9443 = vmatpush1.msra.mxu0 %v4932
    %9444 = vmatprep.subr.mxu0 0.0
    %9445 = vmatpush1.msra.mxu0 %v4933
    %9446 = vmatprep.subr.mxu0 0.0
    %9447 = vmatpush1.msra.mxu0 %v4934
    %9448 = vmatprep.subr.mxu0 0.0
    %9449 = vmatpush1.msra.mxu0 %v4935
    %9450 = vmatprep.subr.mxu0 0.0
    %9451 = vmatpush1.msra.mxu0 %v4936
    %9452 = vmatprep.subr.mxu0 0.0
    %9453 = vmatpush1.msra.mxu0 %v4937
    %9454 = vmatprep.subr.mxu0 0.0
    %9455 = vmatpush1.msra.mxu0 %v4938
    %9456 = vmatprep.subr.mxu0 0.0
    %9457 = vmatpush1.msra.mxu0 %v4939
    %9458 = vmatprep.subr.mxu0 0.0
    %9459 = vmatpush1.msra.mxu0 %v4940
    %9460 = vmatprep.subr.mxu0 0.0
    %9461 = vmatpush1.msra.mxu0 %v4941
    %9462 = vmatprep.subr.mxu0 0.0
    %9463 = vmatpush1.msra.mxu0 %v4942
    %9464 = vmatprep.subr.mxu0 0.0
    %9465 = vmatpush1.msra.mxu0 %v4943
    %9466 = vmatprep.subr.mxu0 0.0
    %9467 = vmatpush1.msra.mxu0 %v4944
    %9468 = vmatprep.subr.mxu0 0.0
    %9469 = vmatpush1.msra.mxu0 %v4945
    %9470 = vmatprep.subr.mxu0 0.0
    %9471 = vmatpush1.msra.mxu0 %v4946
    %9472 = vmatprep.subr.mxu0 0.0
    %9473 = vmatpush1.msra.mxu0 %v4947
    %9474 = vmatprep.subr.mxu0 0.0
    %9475 = vmatpush1.msra.mxu0 %v4948
    %9476 = vmatprep.subr.mxu0 0.0
    %9477 = vmatpush1.msra.mxu0 %v4949
    %9478 = vmatprep.subr.mxu0 0.0
    %9479 = vmatpush1.msra.mxu0 %v4950
    %9480 = vmatprep.subr.mxu0 0.0
    %9481 = vmatpush1.msra.mxu0 %v4951
    %9482 = vmatprep.subr.mxu0 0.0
    %9483 = vmatpush1.msra.mxu0 %v4952
    %9484 = vmatprep.subr.mxu0 0.0
    %9485 = vmatpush1.msra.mxu0 %v4953
    %9486 = vmatprep.subr.mxu0 0.0
    %9487 = vmatpush1.msra.mxu0 %v4954
    %9488 = vmatprep.subr.mxu0 0.0
    %9489 = vmatpush1.msra.mxu0 %v4955
    %9490 = vmatprep.subr.mxu0 0.0
    %9491 = vmatpush1.msra.mxu0 %v4956
    %9492 = vmatprep.subr.mxu0 0.0
    %9493 = vmatpush1.msra.mxu0 %v4957
    %9494 = vmatprep.subr.mxu0 0.0
    %9495 = vmatpush1.msra.mxu0 %v4958
    %9496 = vmatprep.subr.mxu0 0.0
    %9497 = vmatpush1.msra.mxu0 %v4959
    %9498 = vmatprep.subr.mxu0 0.0
    %9499 = vmatpush1.msra.mxu0 %v4960
    %9500 = vmatprep.mubr.f32.mxu0 %v5950
    %9501 = vmatmul.mubr.f32.gmra.mrb[0].mxu0 %v5942
    %v9502 = vpop.f32.mrb[0].mxu0
    %v9503 = vadd.f32 %v9433, %v9502
    %v9504 = vpop.f32.mrb[0].mxu0
    %9505 = vdwg.mxu0
    %9506 = vmatprep.subr.mxu0 0.0
    %9507 = vmatpush1.msra.mxu0 %v4961
    %9508 = vmatprep.subr.mxu0 0.0
    %9509 = vmatpush1.msra.mxu0 %v4962
    %9510 = vmatprep.subr.mxu0 0.0
    %9511 = vmatpush1.msra.mxu0 %v4963
    %9512 = vmatprep.subr.mxu0 0.0
    %9513 = vmatpush1.msra.mxu0 %v4964
    %9514 = vmatprep.subr.mxu0 0.0
    %9515 = vmatpush1.msra.mxu0 %v4965
    %9516 = vmatprep.subr.mxu0 0.0
    %9517 = vmatpush1.msra.mxu0 %v4966
    %9518 = vmatprep.subr.mxu0 0.0
    %9519 = vmatpush1.msra.mxu0 %v4967
    %9520 = vmatprep.subr.mxu0 0.0
    %9521 = vmatpush1.msra.mxu0 %v4968
    %9522 = vmatprep.subr.mxu0 0.0
    %9523 = vmatpush1.msra.mxu0 %v4969
    %9524 = vmatprep.subr.mxu0 0.0
    %9525 = vmatpush1.msra.mxu0 %v4970
    %9526 = vmatprep.subr.mxu0 0.0
    %9527 = vmatpush1.msra.mxu0 %v4971
    %9528 = vmatprep.subr.mxu0 0.0
    %9529 = vmatpush1.msra.mxu0 %v4972
    %9530 = vmatprep.subr.mxu0 0.0
    %9531 = vmatpush1.msra.mxu0 %v4973
    %9532 = vmatprep.subr.mxu0 0.0
    %9533 = vmatpush1.msra.mxu0 %v4974
    %9534 = vmatprep.subr.mxu0 0.0
    %9535 = vmatpush1.msra.mxu0 %v4975
    %9536 = vmatprep.subr.mxu0 0.0
    %9537 = vmatpush1.msra.mxu0 %v4976
    %9538 = vmatprep.subr.mxu0 0.0
    %9539 = vmatpush1.msra.mxu0 %v4977
    %9540 = vmatprep.subr.mxu0 0.0
    %9541 = vmatpush1.msra.mxu0 %v4978
    %9542 = vmatprep.subr.mxu0 0.0
    %9543 = vmatpush1.msra.mxu0 %v4979
    %9544 = vmatprep.subr.mxu0 0.0
    %9545 = vmatpush1.msra.mxu0 %v4980
    %9546 = vmatprep.subr.mxu0 0.0
    %9547 = vmatpush1.msra.mxu0 %v4981
    %9548 = vmatprep.subr.mxu0 0.0
    %9549 = vmatpush1.msra.mxu0 %v4982
    %9550 = vmatprep.subr.mxu0 0.0
    %9551 = vmatpush1.msra.mxu0 %v4983
    %9552 = vmatprep.subr.mxu0 0.0
    %9553 = vmatpush1.msra.mxu0 %v4984
    %9554 = vmatprep.subr.mxu0 0.0
    %9555 = vmatpush1.msra.mxu0 %v4985
    %9556 = vmatprep.subr.mxu0 0.0
    %9557 = vmatpush1.msra.mxu0 %v4986
    %9558 = vmatprep.subr.mxu0 0.0
    %9559 = vmatpush1.msra.mxu0 %v4987
    %9560 = vmatprep.subr.mxu0 0.0
    %9561 = vmatpush1.msra.mxu0 %v4988
    %9562 = vmatprep.subr.mxu0 0.0
    %9563 = vmatpush1.msra.mxu0 %v4989
    %9564 = vmatprep.subr.mxu0 0.0
    %9565 = vmatpush1.msra.mxu0 %v4990
    %9566 = vmatprep.subr.mxu0 0.0
    %9567 = vmatpush1.msra.mxu0 %v4991
    %9568 = vmatprep.subr.mxu0 0.0
    %9569 = vmatpush1.msra.mxu0 %v4992
    %9570 = vmatprep.mubr.f32.mxu0 %v5951
    %9571 = vmatmul.mubr.f32.gmra.mrb[0].mxu0 %v5949
    %v9572 = vpop.f32.mrb[0].mxu0
    %v9573 = vadd.f32 %v9503, %v9572
    %v9574 = vpop.f32.mrb[0].mxu0
    %9575 = vdwg.mxu0
    %9576 = vmatprep.subr.mxu0 0.0
    %9577 = vmatpush1.msra.mxu0 %v4993
    %9578 = vmatprep.subr.mxu0 0.0
    %9579 = vmatpush1.msra.mxu0 %v4994
    %9580 = vmatprep.subr.mxu0 0.0
    %9581 = vmatpush1.msra.mxu0 %v4995
    %9582 = vmatprep.subr.mxu0 0.0
    %9583 = vmatpush1.msra.mxu0 %v4996
    %9584 = vmatprep.subr.mxu0 0.0
    %9585 = vmatpush1.msra.mxu0 %v4997
    %9586 = vmatprep.subr.mxu0 0.0
    %9587 = vmatpush1.msra.mxu0 %v4998
    %9588 = vmatprep.subr.mxu0 0.0
    %9589 = vmatpush1.msra.mxu0 %v4999
    %9590 = vmatprep.subr.mxu0 0.0
    %9591 = vmatpush1.msra.mxu0 %v5000
    %9592 = vmatprep.subr.mxu0 0.0
    %9593 = vmatpush1.msra.mxu0 %v5001
    %9594 = vmatprep.subr.mxu0 0.0
    %9595 = vmatpush1.msra.mxu0 %v5002
    %9596 = vmatprep.subr.mxu0 0.0
    %9597 = vmatpush1.msra.mxu0 %v5003
    %9598 = vmatprep.subr.mxu0 0.0
    %9599 = vmatpush1.msra.mxu0 %v5004
    %9600 = vmatprep.subr.mxu0 0.0
    %9601 = vmatpush1.msra.mxu0 %v5005
    %9602 = vmatprep.subr.mxu0 0.0
    %9603 = vmatpush1.msra.mxu0 %v5006
    %9604 = vmatprep.subr.mxu0 0.0
    %9605 = vmatpush1.msra.mxu0 %v5007
    %9606 = vmatprep.subr.mxu0 0.0
    %9607 = vmatpush1.msra.mxu0 %v5008
    %9608 = vmatprep.subr.mxu0 0.0
    %9609 = vmatpush1.msra.mxu0 %v5009
    %9610 = vmatprep.subr.mxu0 0.0
    %9611 = vmatpush1.msra.mxu0 %v5010
    %9612 = vmatprep.subr.mxu0 0.0
    %9613 = vmatpush1.msra.mxu0 %v5011
    %9614 = vmatprep.subr.mxu0 0.0
    %9615 = vmatpush1.msra.mxu0 %v5012
    %9616 = vmatprep.subr.mxu0 0.0
    %9617 = vmatpush1.msra.mxu0 %v5013
    %9618 = vmatprep.subr.mxu0 0.0
    %9619 = vmatpush1.msra.mxu0 %v5014
    %9620 = vmatprep.subr.mxu0 0.0
    %9621 = vmatpush1.msra.mxu0 %v5015
    %9622 = vmatprep.subr.mxu0 0.0
    %9623 = vmatpush1.msra.mxu0 %v5016
    %9624 = vmatprep.subr.mxu0 0.0
    %9625 = vmatpush1.msra.mxu0 %v5017
    %9626 = vmatprep.subr.mxu0 0.0
    %9627 = vmatpush1.msra.mxu0 %v5018
    %9628 = vmatprep.subr.mxu0 0.0
    %9629 = vmatpush1.msra.mxu0 %v5019
    %9630 = vmatprep.subr.mxu0 0.0
    %9631 = vmatpush1.msra.mxu0 %v5020
    %9632 = vmatprep.subr.mxu0 0.0
    %9633 = vmatpush1.msra.mxu0 %v5021
    %9634 = vmatprep.subr.mxu0 0.0
    %9635 = vmatpush1.msra.mxu0 %v5022
    %9636 = vmatprep.subr.mxu0 0.0
    %9637 = vmatpush1.msra.mxu0 %v5023
    %9638 = vmatprep.subr.mxu0 0.0
    %9639 = vmatpush1.msra.mxu0 %v5024
    %9640 = vmatprep.mubr.f32.mxu0 %v5967
    %9641 = vmatmul.mubr.f32.gmra.mrb[0].mxu0 %v5959
    %v9642 = vpop.f32.mrb[0].mxu0
    %v9643 = vadd.f32 %v9573, %v9642
    %v9644 = vpop.f32.mrb[0].mxu0
    %9645 = vdwg.mxu0
    %9646 = vmatprep.subr.mxu0 0.0
    %9647 = vmatpush1.msra.mxu0 %v5025
    %9648 = vmatprep.subr.mxu0 0.0
    %9649 = vmatpush1.msra.mxu0 %v5026
    %9650 = vmatprep.subr.mxu0 0.0
    %9651 = vmatpush1.msra.mxu0 %v5027
    %9652 = vmatprep.subr.mxu0 0.0
    %9653 = vmatpush1.msra.mxu0 %v5028
    %9654 = vmatprep.subr.mxu0 0.0
    %9655 = vmatpush1.msra.mxu0 %v5029
    %9656 = vmatprep.subr.mxu0 0.0
    %9657 = vmatpush1.msra.mxu0 %v5030
    %9658 = vmatprep.subr.mxu0 0.0
    %9659 = vmatpush1.msra.mxu0 %v5031
    %9660 = vmatprep.subr.mxu0 0.0
    %9661 = vmatpush1.msra.mxu0 %v5032
    %9662 = vmatprep.subr.mxu0 0.0
    %9663 = vmatpush1.msra.mxu0 %v5033
    %9664 = vmatprep.subr.mxu0 0.0
    %9665 = vmatpush1.msra.mxu0 %v5034
    %9666 = vmatprep.subr.mxu0 0.0
    %9667 = vmatpush1.msra.mxu0 %v5035
    %9668 = vmatprep.subr.mxu0 0.0
    %9669 = vmatpush1.msra.mxu0 %v5036
    %9670 = vmatprep.subr.mxu0 0.0
    %9671 = vmatpush1.msra.mxu0 %v5037
    %9672 = vmatprep.subr.mxu0 0.0
    %9673 = vmatpush1.msra.mxu0 %v5038
    %9674 = vmatprep.subr.mxu0 0.0
    %9675 = vmatpush1.msra.mxu0 %v5039
    %9676 = vmatprep.subr.mxu0 0.0
    %9677 = vmatpush1.msra.mxu0 %v5040
    %9678 = vmatprep.subr.mxu0 0.0
    %9679 = vmatpush1.msra.mxu0 %v5041
    %9680 = vmatprep.subr.mxu0 0.0
    %9681 = vmatpush1.msra.mxu0 %v5042
    %9682 = vmatprep.subr.mxu0 0.0
    %9683 = vmatpush1.msra.mxu0 %v5043
    %9684 = vmatprep.subr.mxu0 0.0
    %9685 = vmatpush1.msra.mxu0 %v5044
    %9686 = vmatprep.subr.mxu0 0.0
    %9687 = vmatpush1.msra.mxu0 %v5045
    %9688 = vmatprep.subr.mxu0 0.0
    %9689 = vmatpush1.msra.mxu0 %v5046
    %9690 = vmatprep.subr.mxu0 0.0
    %9691 = vmatpush1.msra.mxu0 %v5047
    %9692 = vmatprep.subr.mxu0 0.0
    %9693 = vmatpush1.msra.mxu0 %v5048
    %9694 = vmatprep.subr.mxu0 0.0
    %9695 = vmatpush1.msra.mxu0 %v5049
    %9696 = vmatprep.subr.mxu0 0.0
    %9697 = vmatpush1.msra.mxu0 %v5050
    %9698 = vmatprep.subr.mxu0 0.0
    %9699 = vmatpush1.msra.mxu0 %v5051
    %9700 = vmatprep.subr.mxu0 0.0
    %9701 = vmatpush1.msra.mxu0 %v5052
    %9702 = vmatprep.subr.mxu0 0.0
    %9703 = vmatpush1.msra.mxu0 %v5053
    %9704 = vmatprep.subr.mxu0 0.0
    %9705 = vmatpush1.msra.mxu0 %v5054
    %9706 = vmatprep.subr.mxu0 0.0
    %9707 = vmatpush1.msra.mxu0 %v5055
    %9708 = vmatprep.subr.mxu0 0.0
    %9709 = vmatpush1.msra.mxu0 %v5056
    %9710 = vmatprep.mubr.f32.mxu0 %v5968
    %9711 = vmatmul.mubr.f32.gmra.mrb[0].mxu0 %v5966
    %v9712 = vpop.f32.mrb[0].mxu0
    %v9713 = vadd.f32 %v9643, %v9712
    %v9714 = vpop.f32.mrb[0].mxu0
    %9715 = vdwg.mxu0
    %9716 = vmatprep.subr.mxu0 0.0
    %9717 = vmatpush1.msra.mxu0 %v5057
    %9718 = vmatprep.subr.mxu0 0.0
    %9719 = vmatpush1.msra.mxu0 %v5058
    %9720 = vmatprep.subr.mxu0 0.0
    %9721 = vmatpush1.msra.mxu0 %v5059
    %9722 = vmatprep.subr.mxu0 0.0
    %9723 = vmatpush1.msra.mxu0 %v5060
    %9724 = vmatprep.subr.mxu0 0.0
    %9725 = vmatpush1.msra.mxu0 %v5061
    %9726 = vmatprep.subr.mxu0 0.0
    %9727 = vmatpush1.msra.mxu0 %v5062
    %9728 = vmatprep.subr.mxu0 0.0
    %9729 = vmatpush1.msra.mxu0 %v5063
    %9730 = vmatprep.subr.mxu0 0.0
    %9731 = vmatpush1.msra.mxu0 %v5064
    %9732 = vmatprep.subr.mxu0 0.0
    %9733 = vmatpush1.msra.mxu0 %v5065
    %9734 = vmatprep.subr.mxu0 0.0
    %9735 = vmatpush1.msra.mxu0 %v5066
    %9736 = vmatprep.subr.mxu0 0.0
    %9737 = vmatpush1.msra.mxu0 %v5067
    %9738 = vmatprep.subr.mxu0 0.0
    %9739 = vmatpush1.msra.mxu0 %v5068
    %9740 = vmatprep.subr.mxu0 0.0
    %9741 = vmatpush1.msra.mxu0 %v5069
    %9742 = vmatprep.subr.mxu0 0.0
    %9743 = vmatpush1.msra.mxu0 %v5070
    %9744 = vmatprep.subr.mxu0 0.0
    %9745 = vmatpush1.msra.mxu0 %v5071
    %9746 = vmatprep.subr.mxu0 0.0
    %9747 = vmatpush1.msra.mxu0 %v5072
    %9748 = vmatprep.subr.mxu0 0.0
    %9749 = vmatpush1.msra.mxu0 %v5073
    %9750 = vmatprep.subr.mxu0 0.0
    %9751 = vmatpush1.msra.mxu0 %v5074
    %9752 = vmatprep.subr.mxu0 0.0
    %9753 = vmatpush1.msra.mxu0 %v5075
    %9754 = vmatprep.subr.mxu0 0.0
    %9755 = vmatpush1.msra.mxu0 %v5076
    %9756 = vmatprep.subr.mxu0 0.0
    %9757 = vmatpush1.msra.mxu0 %v5077
    %9758 = vmatprep.subr.mxu0 0.0
    %9759 = vmatpush1.msra.mxu0 %v5078
    %9760 = vmatprep.subr.mxu0 0.0
    %9761 = vmatpush1.msra.mxu0 %v5079
    %9762 = vmatprep.subr.mxu0 0.0
    %9763 = vmatpush1.msra.mxu0 %v5080
    %9764 = vmatprep.subr.mxu0 0.0
    %9765 = vmatpush1.msra.mxu0 %v5081
    %9766 = vmatprep.subr.mxu0 0.0
    %9767 = vmatpush1.msra.mxu0 %v5082
    %9768 = vmatprep.subr.mxu0 0.0
    %9769 = vmatpush1.msra.mxu0 %v5083
    %9770 = vmatprep.subr.mxu0 0.0
    %9771 = vmatpush1.msra.mxu0 %v5084
    %9772 = vmatprep.subr.mxu0 0.0
    %9773 = vmatpush1.msra.mxu0 %v5085
    %9774 = vmatprep.subr.mxu0 0.0
    %9775 = vmatpush1.msra.mxu0 %v5086
    %9776 = vmatprep.subr.mxu0 0.0
    %9777 = vmatpush1.msra.mxu0 %v5087
    %9778 = vmatprep.subr.mxu0 0.0
    %9779 = vmatpush1.msra.mxu0 %v5088
    %9780 = vmatprep.mubr.f32.mxu0 %v5984
    %9781 = vmatmul.mubr.f32.gmra.mrb[0].mxu0 %v5976
    %v9782 = vpop.f32.mrb[0].mxu0
    %v9783 = vadd.f32 %v9713, %v9782
    %v9784 = vpop.f32.mrb[0].mxu0
    %9785 = vdwg.mxu0
    %9786 = vmatprep.subr.mxu0 0.0
    %9787 = vmatpush1.msra.mxu0 %v5089
    %9788 = vmatprep.subr.mxu0 0.0
    %9789 = vmatpush1.msra.mxu0 %v5090
    %9790 = vmatprep.subr.mxu0 0.0
    %9791 = vmatpush1.msra.mxu0 %v5091
    %9792 = vmatprep.subr.mxu0 0.0
    %9793 = vmatpush1.msra.mxu0 %v5092
    %9794 = vmatprep.subr.mxu0 0.0
    %9795 = vmatpush1.msra.mxu0 %v5093
    %9796 = vmatprep.subr.mxu0 0.0
    %9797 = vmatpush1.msra.mxu0 %v5094
    %9798 = vmatprep.subr.mxu0 0.0
    %9799 = vmatpush1.msra.mxu0 %v5095
    %9800 = vmatprep.subr.mxu0 0.0
    %9801 = vmatpush1.msra.mxu0 %v5096
    %9802 = vmatprep.subr.mxu0 0.0
    %9803 = vmatpush1.msra.mxu0 %v5097
    %9804 = vmatprep.subr.mxu0 0.0
    %9805 = vmatpush1.msra.mxu0 %v5098
    %9806 = vmatprep.subr.mxu0 0.0
    %9807 = vmatpush1.msra.mxu0 %v5099
    %9808 = vmatprep.subr.mxu0 0.0
    %9809 = vmatpush1.msra.mxu0 %v5100
    %9810 = vmatprep.subr.mxu0 0.0
    %9811 = vmatpush1.msra.mxu0 %v5101
    %9812 = vmatprep.subr.mxu0 0.0
    %9813 = vmatpush1.msra.mxu0 %v5102
    %9814 = vmatprep.subr.mxu0 0.0
    %9815 = vmatpush1.msra.mxu0 %v5103
    %9816 = vmatprep.subr.mxu0 0.0
    %9817 = vmatpush1.msra.mxu0 %v5104
    %9818 = vmatprep.subr.mxu0 0.0
    %9819 = vmatpush1.msra.mxu0 %v5105
    %9820 = vmatprep.subr.mxu0 0.0
    %9821 = vmatpush1.msra.mxu0 %v5106
    %9822 = vmatprep.subr.mxu0 0.0
    %9823 = vmatpush1.msra.mxu0 %v5107
    %9824 = vmatprep.subr.mxu0 0.0
    %9825 = vmatpush1.msra.mxu0 %v5108
    %9826 = vmatprep.subr.mxu0 0.0
    %9827 = vmatpush1.msra.mxu0 %v5109
    %9828 = vmatprep.subr.mxu0 0.0
    %9829 = vmatpush1.msra.mxu0 %v5110
    %9830 = vmatprep.subr.mxu0 0.0
    %9831 = vmatpush1.msra.mxu0 %v5111
    %9832 = vmatprep.subr.mxu0 0.0
    %9833 = vmatpush1.msra.mxu0 %v5112
    %9834 = vmatprep.subr.mxu0 0.0
    %9835 = vmatpush1.msra.mxu0 %v5113
    %9836 = vmatprep.subr.mxu0 0.0
    %9837 = vmatpush1.msra.mxu0 %v5114
    %9838 = vmatprep.subr.mxu0 0.0
    %9839 = vmatpush1.msra.mxu0 %v5115
    %9840 = vmatprep.subr.mxu0 0.0
    %9841 = vmatpush1.msra.mxu0 %v5116
    %9842 = vmatprep.subr.mxu0 0.0
    %9843 = vmatpush1.msra.mxu0 %v5117
    %9844 = vmatprep.subr.mxu0 0.0
    %9845 = vmatpush1.msra.mxu0 %v5118
    %9846 = vmatprep.subr.mxu0 0.0
    %9847 = vmatpush1.msra.mxu0 %v5119
    %9848 = vmatprep.subr.mxu0 0.0
    %9849 = vmatpush1.msra.mxu0 %v5120
    %9850 = vmatprep.mubr.f32.mxu0 %v5985
    %9851 = vmatmul.mubr.f32.gmra.mrb[0].mxu0 %v5983
    %v9852 = vpop.f32.mrb[0].mxu0
    %v9853 = vadd.f32 %v9783, %v9852
    %v9854 = vpop.f32.mrb[0].mxu0
    %9855 = vdwg.mxu0
    %9856 = vmatprep.subr.mxu0 0.0
    %9857 = vmatpush1.msra.mxu0 %v5121
    %9858 = vmatprep.subr.mxu0 0.0
    %9859 = vmatpush1.msra.mxu0 %v5122
    %9860 = vmatprep.subr.mxu0 0.0
    %9861 = vmatpush1.msra.mxu0 %v5123
    %9862 = vmatprep.subr.mxu0 0.0
    %9863 = vmatpush1.msra.mxu0 %v5124
    %9864 = vmatprep.subr.mxu0 0.0
    %9865 = vmatpush1.msra.mxu0 %v5125
    %9866 = vmatprep.subr.mxu0 0.0
    %9867 = vmatpush1.msra.mxu0 %v5126
    %9868 = vmatprep.subr.mxu0 0.0
    %9869 = vmatpush1.msra.mxu0 %v5127
    %9870 = vmatprep.subr.mxu0 0.0
    %9871 = vmatpush1.msra.mxu0 %v5128
    %9872 = vmatprep.subr.mxu0 0.0
    %9873 = vmatpush1.msra.mxu0 %v5129
    %9874 = vmatprep.subr.mxu0 0.0
    %9875 = vmatpush1.msra.mxu0 %v5130
    %9876 = vmatprep.subr.mxu0 0.0
    %9877 = vmatpush1.msra.mxu0 %v5131
    %9878 = vmatprep.subr.mxu0 0.0
    %9879 = vmatpush1.msra.mxu0 %v5132
    %9880 = vmatprep.subr.mxu0 0.0
    %9881 = vmatpush1.msra.mxu0 %v5133
    %9882 = vmatprep.subr.mxu0 0.0
    %9883 = vmatpush1.msra.mxu0 %v5134
    %9884 = vmatprep.subr.mxu0 0.0
    %9885 = vmatpush1.msra.mxu0 %v5135
    %9886 = vmatprep.subr.mxu0 0.0
    %9887 = vmatpush1.msra.mxu0 %v5136
    %9888 = vmatprep.subr.mxu0 0.0
    %9889 = vmatpush1.msra.mxu0 %v5137
    %9890 = vmatprep.subr.mxu0 0.0
    %9891 = vmatpush1.msra.mxu0 %v5138
    %9892 = vmatprep.subr.mxu0 0.0
    %9893 = vmatpush1.msra.mxu0 %v5139
    %9894 = vmatprep.subr.mxu0 0.0
    %9895 = vmatpush1.msra.mxu0 %v5140
    %9896 = vmatprep.subr.mxu0 0.0
    %9897 = vmatpush1.msra.mxu0 %v5141
    %9898 = vmatprep.subr.mxu0 0.0
    %9899 = vmatpush1.msra.mxu0 %v5142
    %9900 = vmatprep.subr.mxu0 0.0
    %9901 = vmatpush1.msra.mxu0 %v5143
    %9902 = vmatprep.subr.mxu0 0.0
    %9903 = vmatpush1.msra.mxu0 %v5144
    %9904 = vmatprep.subr.mxu0 0.0
    %9905 = vmatpush1.msra.mxu0 %v5145
    %9906 = vmatprep.subr.mxu0 0.0
    %9907 = vmatpush1.msra.mxu0 %v5146
    %9908 = vmatprep.subr.mxu0 0.0
    %9909 = vmatpush1.msra.mxu0 %v5147
    %9910 = vmatprep.subr.mxu0 0.0
    %9911 = vmatpush1.msra.mxu0 %v5148
    %9912 = vmatprep.subr.mxu0 0.0
    %9913 = vmatpush1.msra.mxu0 %v5149
    %9914 = vmatprep.subr.mxu0 0.0
    %9915 = vmatpush1.msra.mxu0 %v5150
    %9916 = vmatprep.subr.mxu0 0.0
    %9917 = vmatpush1.msra.mxu0 %v5151
    %9918 = vmatprep.subr.mxu0 0.0
    %9919 = vmatpush1.msra.mxu0 %v5152
    %9920 = vmatprep.mubr.f32.mxu0 %v6001
    %9921 = vmatmul.mubr.f32.gmra.mrb[0].mxu0 %v5993
    %v9922 = vpop.f32.mrb[0].mxu0
    %v9923 = vadd.f32 %v9853, %v9922
    %v9924 = vpop.f32.mrb[0].mxu0
    %9925 = vdwg.mxu0
    %9926 = vmatprep.subr.mxu0 0.0
    %9927 = vmatpush1.msra.mxu0 %v5153
    %9928 = vmatprep.subr.mxu0 0.0
    %9929 = vmatpush1.msra.mxu0 %v5154
    %9930 = vmatprep.subr.mxu0 0.0
    %9931 = vmatpush1.msra.mxu0 %v5155
    %9932 = vmatprep.subr.mxu0 0.0
    %9933 = vmatpush1.msra.mxu0 %v5156
    %9934 = vmatprep.subr.mxu0 0.0
    %9935 = vmatpush1.msra.mxu0 %v5157
    %9936 = vmatprep.subr.mxu0 0.0
    %9937 = vmatpush1.msra.mxu0 %v5158
    %9938 = vmatprep.subr.mxu0 0.0
    %9939 = vmatpush1.msra.mxu0 %v5159
    %9940 = vmatprep.subr.mxu0 0.0
    %9941 = vmatpush1.msra.mxu0 %v5160
    %9942 = vmatprep.subr.mxu0 0.0
    %9943 = vmatpush1.msra.mxu0 %v5161
    %9944 = vmatprep.subr.mxu0 0.0
    %9945 = vmatpush1.msra.mxu0 %v5162
    %9946 = vmatprep.subr.mxu0 0.0
    %9947 = vmatpush1.msra.mxu0 %v5163
    %9948 = vmatprep.subr.mxu0 0.0
    %9949 = vmatpush1.msra.mxu0 %v5164
    %9950 = vmatprep.subr.mxu0 0.0
    %9951 = vmatpush1.msra.mxu0 %v5165
    %9952 = vmatprep.subr.mxu0 0.0
    %9953 = vmatpush1.msra.mxu0 %v5166
    %9954 = vmatprep.subr.mxu0 0.0
    %9955 = vmatpush1.msra.mxu0 %v5167
    %9956 = vmatprep.subr.mxu0 0.0
    %9957 = vmatpush1.msra.mxu0 %v5168
    %9958 = vmatprep.subr.mxu0 0.0
    %9959 = vmatpush1.msra.mxu0 %v5169
    %9960 = vmatprep.subr.mxu0 0.0
    %9961 = vmatpush1.msra.mxu0 %v5170
    %9962 = vmatprep.subr.mxu0 0.0
    %9963 = vmatpush1.msra.mxu0 %v5171
    %9964 = vmatprep.subr.mxu0 0.0
    %9965 = vmatpush1.msra.mxu0 %v5172
    %9966 = vmatprep.subr.mxu0 0.0
    %9967 = vmatpush1.msra.mxu0 %v5173
    %9968 = vmatprep.subr.mxu0 0.0
    %9969 = vmatpush1.msra.mxu0 %v5174
    %9970 = vmatprep.subr.mxu0 0.0
    %9971 = vmatpush1.msra.mxu0 %v5175
    %9972 = vmatprep.subr.mxu0 0.0
    %9973 = vmatpush1.msra.mxu0 %v5176
    %9974 = vmatprep.subr.mxu0 0.0
    %9975 = vmatpush1.msra.mxu0 %v5177
    %9976 = vmatprep.subr.mxu0 0.0
    %9977 = vmatpush1.msra.mxu0 %v5178
    %9978 = vmatprep.subr.mxu0 0.0
    %9979 = vmatpush1.msra.mxu0 %v5179
    %9980 = vmatprep.subr.mxu0 0.0
    %9981 = vmatpush1.msra.mxu0 %v5180
    %9982 = vmatprep.subr.mxu0 0.0
    %9983 = vmatpush1.msra.mxu0 %v5181
    %9984 = vmatprep.subr.mxu0 0.0
    %9985 = vmatpush1.msra.mxu0 %v5182
    %9986 = vmatprep.subr.mxu0 0.0
    %9987 = vmatpush1.msra.mxu0 %v5183
    %9988 = vmatprep.subr.mxu0 0.0
    %9989 = vmatpush1.msra.mxu0 %v5184
    %9990 = vmatprep.mubr.f32.mxu0 %v6002
    %9991 = vmatmul.mubr.f32.gmra.mrb[0].mxu0 %v6000
    %v9992 = vpop.f32.mrb[0].mxu0
    %v9993 = vadd.f32 %v9923, %v9992
    %v9994 = vpop.f32.mrb[0].mxu0
    %9995 = vdwg.mxu0
    %9996 = vmatprep.subr.mxu0 0.0
    %9997 = vmatpush1.msra.mxu0 %v5185
    %9998 = vmatprep.subr.mxu0 0.0
    %9999 = vmatpush1.msra.mxu0 %v5186
    %10000 = vmatprep.subr.mxu0 0.0
    %10001 = vmatpush1.msra.mxu0 %v5187
    %10002 = vmatprep.subr.mxu0 0.0
    %10003 = vmatpush1.msra.mxu0 %v5188
    %10004 = vmatprep.subr.mxu0 0.0
    %10005 = vmatpush1.msra.mxu0 %v5189
    %10006 = vmatprep.subr.mxu0 0.0
    %10007 = vmatpush1.msra.mxu0 %v5190
    %10008 = vmatprep.subr.mxu0 0.0
    %10009 = vmatpush1.msra.mxu0 %v5191
    %10010 = vmatprep.subr.mxu0 0.0
    %10011 = vmatpush1.msra.mxu0 %v5192
    %10012 = vmatprep.subr.mxu0 0.0
    %10013 = vmatpush1.msra.mxu0 %v5193
    %10014 = vmatprep.subr.mxu0 0.0
    %10015 = vmatpush1.msra.mxu0 %v5194
    %10016 = vmatprep.subr.mxu0 0.0
    %10017 = vmatpush1.msra.mxu0 %v5195
    %10018 = vmatprep.subr.mxu0 0.0
    %10019 = vmatpush1.msra.mxu0 %v5196
    %10020 = vmatprep.subr.mxu0 0.0
    %10021 = vmatpush1.msra.mxu0 %v5197
    %10022 = vmatprep.subr.mxu0 0.0
    %10023 = vmatpush1.msra.mxu0 %v5198
    %10024 = vmatprep.subr.mxu0 0.0
    %10025 = vmatpush1.msra.mxu0 %v5199
    %10026 = vmatprep.subr.mxu0 0.0
    %10027 = vmatpush1.msra.mxu0 %v5200
    %10028 = vmatprep.subr.mxu0 0.0
    %10029 = vmatpush1.msra.mxu0 %v5201
    %10030 = vmatprep.subr.mxu0 0.0
    %10031 = vmatpush1.msra.mxu0 %v5202
    %10032 = vmatprep.subr.mxu0 0.0
    %10033 = vmatpush1.msra.mxu0 %v5203
    %10034 = vmatprep.subr.mxu0 0.0
    %10035 = vmatpush1.msra.mxu0 %v5204
    %10036 = vmatprep.subr.mxu0 0.0
    %10037 = vmatpush1.msra.mxu0 %v5205
    %10038 = vmatprep.subr.mxu0 0.0
    %10039 = vmatpush1.msra.mxu0 %v5206
    %10040 = vmatprep.subr.mxu0 0.0
    %10041 = vmatpush1.msra.mxu0 %v5207
    %10042 = vmatprep.subr.mxu0 0.0
    %10043 = vmatpush1.msra.mxu0 %v5208
    %10044 = vmatprep.subr.mxu0 0.0
    %10045 = vmatpush1.msra.mxu0 %v5209
    %10046 = vmatprep.subr.mxu0 0.0
    %10047 = vmatpush1.msra.mxu0 %v5210
    %10048 = vmatprep.subr.mxu0 0.0
    %10049 = vmatpush1.msra.mxu0 %v5211
    %10050 = vmatprep.subr.mxu0 0.0
    %10051 = vmatpush1.msra.mxu0 %v5212
    %10052 = vmatprep.subr.mxu0 0.0
    %10053 = vmatpush1.msra.mxu0 %v5213
    %10054 = vmatprep.subr.mxu0 0.0
    %10055 = vmatpush1.msra.mxu0 %v5214
    %10056 = vmatprep.subr.mxu0 0.0
    %10057 = vmatpush1.msra.mxu0 %v5215
    %10058 = vmatprep.subr.mxu0 0.0
    %10059 = vmatpush1.msra.mxu0 %v5216
    %10060 = vmatprep.mubr.f32.mxu0 %v6018
    %10061 = vmatmul.mubr.f32.gmra.mrb[0].mxu0 %v6010
    %v10062 = vpop.f32.mrb[0].mxu0
    %v10063 = vadd.f32 %v9993, %v10062
    %v10064 = vpop.f32.mrb[0].mxu0
    %10065 = vdwg.mxu0
    %10066 = vmatprep.subr.mxu0 0.0
    %10067 = vmatpush1.msra.mxu0 %v5217
    %10068 = vmatprep.subr.mxu0 0.0
    %10069 = vmatpush1.msra.mxu0 %v5218
    %10070 = vmatprep.subr.mxu0 0.0
    %10071 = vmatpush1.msra.mxu0 %v5219
    %10072 = vmatprep.subr.mxu0 0.0
    %10073 = vmatpush1.msra.mxu0 %v5220
    %10074 = vmatprep.subr.mxu0 0.0
    %10075 = vmatpush1.msra.mxu0 %v5221
    %10076 = vmatprep.subr.mxu0 0.0
    %10077 = vmatpush1.msra.mxu0 %v5222
    %10078 = vmatprep.subr.mxu0 0.0
    %10079 = vmatpush1.msra.mxu0 %v5223
    %10080 = vmatprep.subr.mxu0 0.0
    %10081 = vmatpush1.msra.mxu0 %v5224
    %10082 = vmatprep.subr.mxu0 0.0
    %10083 = vmatpush1.msra.mxu0 %v5225
    %10084 = vmatprep.subr.mxu0 0.0
    %10085 = vmatpush1.msra.mxu0 %v5226
    %10086 = vmatprep.subr.mxu0 0.0
    %10087 = vmatpush1.msra.mxu0 %v5227
    %10088 = vmatprep.subr.mxu0 0.0
    %10089 = vmatpush1.msra.mxu0 %v5228
    %10090 = vmatprep.subr.mxu0 0.0
    %10091 = vmatpush1.msra.mxu0 %v5229
    %10092 = vmatprep.subr.mxu0 0.0
    %10093 = vmatpush1.msra.mxu0 %v5230
    %10094 = vmatprep.subr.mxu0 0.0
    %10095 = vmatpush1.msra.mxu0 %v5231
    %10096 = vmatprep.subr.mxu0 0.0
    %10097 = vmatpush1.msra.mxu0 %v5232
    %10098 = vmatprep.subr.mxu0 0.0
    %10099 = vmatpush1.msra.mxu0 %v5233
    %10100 = vmatprep.subr.mxu0 0.0
    %10101 = vmatpush1.msra.mxu0 %v5234
    %10102 = vmatprep.subr.mxu0 0.0
    %10103 = vmatpush1.msra.mxu0 %v5235
    %10104 = vmatprep.subr.mxu0 0.0
    %10105 = vmatpush1.msra.mxu0 %v5236
    %10106 = vmatprep.subr.mxu0 0.0
    %10107 = vmatpush1.msra.mxu0 %v5237
    %10108 = vmatprep.subr.mxu0 0.0
    %10109 = vmatpush1.msra.mxu0 %v5238
    %10110 = vmatprep.subr.mxu0 0.0
    %10111 = vmatpush1.msra.mxu0 %v5239
    %10112 = vmatprep.subr.mxu0 0.0
    %10113 = vmatpush1.msra.mxu0 %v5240
    %10114 = vmatprep.subr.mxu0 0.0
    %10115 = vmatpush1.msra.mxu0 %v5241
    %10116 = vmatprep.subr.mxu0 0.0
    %10117 = vmatpush1.msra.mxu0 %v5242
    %10118 = vmatprep.subr.mxu0 0.0
    %10119 = vmatpush1.msra.mxu0 %v5243
    %10120 = vmatprep.subr.mxu0 0.0
    %10121 = vmatpush1.msra.mxu0 %v5244
    %10122 = vmatprep.subr.mxu0 0.0
    %10123 = vmatpush1.msra.mxu0 %v5245
    %10124 = vmatprep.subr.mxu0 0.0
    %10125 = vmatpush1.msra.mxu0 %v5246
    %10126 = vmatprep.subr.mxu0 0.0
    %10127 = vmatpush1.msra.mxu0 %v5247
    %10128 = vmatprep.subr.mxu0 0.0
    %10129 = vmatpush1.msra.mxu0 %v5248
    %10130 = vmatprep.mubr.f32.mxu0 %v6019
    %10131 = vmatmul.mubr.f32.gmra.mrb[0].mxu0 %v6017
    %v10132 = vpop.f32.mrb[0].mxu0
    %v10133 = vadd.f32 %v10063, %v10132
    %v10134 = vpop.f32.mrb[0].mxu0
    %10135 = vdwg.mxu0
    %10136 = vmatprep.subr.mxu0 0.0
    %10137 = vmatpush1.msra.mxu0 %v5249
    %10138 = vmatprep.subr.mxu0 0.0
    %10139 = vmatpush1.msra.mxu0 %v5250
    %10140 = vmatprep.subr.mxu0 0.0
    %10141 = vmatpush1.msra.mxu0 %v5251
    %10142 = vmatprep.subr.mxu0 0.0
    %10143 = vmatpush1.msra.mxu0 %v5252
    %10144 = vmatprep.subr.mxu0 0.0
    %10145 = vmatpush1.msra.mxu0 %v5253
    %10146 = vmatprep.subr.mxu0 0.0
    %10147 = vmatpush1.msra.mxu0 %v5254
    %10148 = vmatprep.subr.mxu0 0.0
    %10149 = vmatpush1.msra.mxu0 %v5255
    %10150 = vmatprep.subr.mxu0 0.0
    %10151 = vmatpush1.msra.mxu0 %v5256
    %10152 = vmatprep.subr.mxu0 0.0
    %10153 = vmatpush1.msra.mxu0 %v5257
    %10154 = vmatprep.subr.mxu0 0.0
    %10155 = vmatpush1.msra.mxu0 %v5258
    %10156 = vmatprep.subr.mxu0 0.0
    %10157 = vmatpush1.msra.mxu0 %v5259
    %10158 = vmatprep.subr.mxu0 0.0
    %10159 = vmatpush1.msra.mxu0 %v5260
    %10160 = vmatprep.subr.mxu0 0.0
    %10161 = vmatpush1.msra.mxu0 %v5261
    %10162 = vmatprep.subr.mxu0 0.0
    %10163 = vmatpush1.msra.mxu0 %v5262
    %10164 = vmatprep.subr.mxu0 0.0
    %10165 = vmatpush1.msra.mxu0 %v5263
    %10166 = vmatprep.subr.mxu0 0.0
    %10167 = vmatpush1.msra.mxu0 %v5264
    %10168 = vmatprep.subr.mxu0 0.0
    %10169 = vmatpush1.msra.mxu0 %v5265
    %10170 = vmatprep.subr.mxu0 0.0
    %10171 = vmatpush1.msra.mxu0 %v5266
    %10172 = vmatprep.subr.mxu0 0.0
    %10173 = vmatpush1.msra.mxu0 %v5267
    %10174 = vmatprep.subr.mxu0 0.0
    %10175 = vmatpush1.msra.mxu0 %v5268
    %10176 = vmatprep.subr.mxu0 0.0
    %10177 = vmatpush1.msra.mxu0 %v5269
    %10178 = vmatprep.subr.mxu0 0.0
    %10179 = vmatpush1.msra.mxu0 %v5270
    %10180 = vmatprep.subr.mxu0 0.0
    %10181 = vmatpush1.msra.mxu0 %v5271
    %10182 = vmatprep.subr.mxu0 0.0
    %10183 = vmatpush1.msra.mxu0 %v5272
    %10184 = vmatprep.subr.mxu0 0.0
    %10185 = vmatpush1.msra.mxu0 %v5273
    %10186 = vmatprep.subr.mxu0 0.0
    %10187 = vmatpush1.msra.mxu0 %v5274
    %10188 = vmatprep.subr.mxu0 0.0
    %10189 = vmatpush1.msra.mxu0 %v5275
    %10190 = vmatprep.subr.mxu0 0.0
    %10191 = vmatpush1.msra.mxu0 %v5276
    %10192 = vmatprep.subr.mxu0 0.0
    %10193 = vmatpush1.msra.mxu0 %v5277
    %10194 = vmatprep.subr.mxu0 0.0
    %10195 = vmatpush1.msra.mxu0 %v5278
    %10196 = vmatprep.subr.mxu0 0.0
    %10197 = vmatpush1.msra.mxu0 %v5279
    %10198 = vmatprep.subr.mxu0 0.0
    %10199 = vmatpush1.msra.mxu0 %v5280
    %10200 = vmatprep.mubr.f32.mxu0 %v6035
    %10201 = vmatmul.mubr.f32.gmra.mrb[0].mxu0 %v6027
    %v10202 = vpop.f32.mrb[0].mxu0
    %v10203 = vadd.f32 %v10133, %v10202
    %v10204 = vpop.f32.mrb[0].mxu0
    %10205 = vdwg.mxu0
    %10206 = vmatprep.subr.mxu0 0.0
    %10207 = vmatpush1.msra.mxu0 %v5281
    %10208 = vmatprep.subr.mxu0 0.0
    %10209 = vmatpush1.msra.mxu0 %v5282
    %10210 = vmatprep.subr.mxu0 0.0
    %10211 = vmatpush1.msra.mxu0 %v5283
    %10212 = vmatprep.subr.mxu0 0.0
    %10213 = vmatpush1.msra.mxu0 %v5284
    %10214 = vmatprep.subr.mxu0 0.0
    %10215 = vmatpush1.msra.mxu0 %v5285
    %10216 = vmatprep.subr.mxu0 0.0
    %10217 = vmatpush1.msra.mxu0 %v5286
    %10218 = vmatprep.subr.mxu0 0.0
    %10219 = vmatpush1.msra.mxu0 %v5287
    %10220 = vmatprep.subr.mxu0 0.0
    %10221 = vmatpush1.msra.mxu0 %v5288
    %10222 = vmatprep.subr.mxu0 0.0
    %10223 = vmatpush1.msra.mxu0 %v5289
    %10224 = vmatprep.subr.mxu0 0.0
    %10225 = vmatpush1.msra.mxu0 %v5290
    %10226 = vmatprep.subr.mxu0 0.0
    %10227 = vmatpush1.msra.mxu0 %v5291
    %10228 = vmatprep.subr.mxu0 0.0
    %10229 = vmatpush1.msra.mxu0 %v5292
    %10230 = vmatprep.subr.mxu0 0.0
    %10231 = vmatpush1.msra.mxu0 %v5293
    %10232 = vmatprep.subr.mxu0 0.0
    %10233 = vmatpush1.msra.mxu0 %v5294
    %10234 = vmatprep.subr.mxu0 0.0
    %10235 = vmatpush1.msra.mxu0 %v5295
    %10236 = vmatprep.subr.mxu0 0.0
    %10237 = vmatpush1.msra.mxu0 %v5296
    %10238 = vmatprep.subr.mxu0 0.0
    %10239 = vmatpush1.msra.mxu0 %v5297
    %10240 = vmatprep.subr.mxu0 0.0
    %10241 = vmatpush1.msra.mxu0 %v5298
    %10242 = vmatprep.subr.mxu0 0.0
    %10243 = vmatpush1.msra.mxu0 %v5299
    %10244 = vmatprep.subr.mxu0 0.0
    %10245 = vmatpush1.msra.mxu0 %v5300
    %10246 = vmatprep.subr.mxu0 0.0
    %10247 = vmatpush1.msra.mxu0 %v5301
    %10248 = vmatprep.subr.mxu0 0.0
    %10249 = vmatpush1.msra.mxu0 %v5302
    %10250 = vmatprep.subr.mxu0 0.0
    %10251 = vmatpush1.msra.mxu0 %v5303
    %10252 = vmatprep.subr.mxu0 0.0
    %10253 = vmatpush1.msra.mxu0 %v5304
    %10254 = vmatprep.subr.mxu0 0.0
    %10255 = vmatpush1.msra.mxu0 %v5305
    %10256 = vmatprep.subr.mxu0 0.0
    %10257 = vmatpush1.msra.mxu0 %v5306
    %10258 = vmatprep.subr.mxu0 0.0
    %10259 = vmatpush1.msra.mxu0 %v5307
    %10260 = vmatprep.subr.mxu0 0.0
    %10261 = vmatpush1.msra.mxu0 %v5308
    %10262 = vmatprep.subr.mxu0 0.0
    %10263 = vmatpush1.msra.mxu0 %v5309
    %10264 = vmatprep.subr.mxu0 0.0
    %10265 = vmatpush1.msra.mxu0 %v5310
    %10266 = vmatprep.subr.mxu0 0.0
    %10267 = vmatpush1.msra.mxu0 %v5311
    %10268 = vmatprep.subr.mxu0 0.0
    %10269 = vmatpush1.msra.mxu0 %v5312
    %10270 = vmatprep.mubr.f32.mxu0 %v6036
    %10271 = vmatmul.mubr.f32.gmra.mrb[0].mxu0 %v6034
    %v10272 = vpop.f32.mrb[0].mxu0
    %v10273 = vadd.f32 %v10203, %v10272
    %v10274 = vpop.f32.mrb[0].mxu0
    %10275 = vdwg.mxu0
    %10276 = vmatprep.subr.mxu0 0.0
    %10277 = vmatpush1.msra.mxu0 %v5313
    %10278 = vmatprep.subr.mxu0 0.0
    %10279 = vmatpush1.msra.mxu0 %v5314
    %10280 = vmatprep.subr.mxu0 0.0
    %10281 = vmatpush1.msra.mxu0 %v5315
    %10282 = vmatprep.subr.mxu0 0.0
    %10283 = vmatpush1.msra.mxu0 %v5316
    %10284 = vmatprep.subr.mxu0 0.0
    %10285 = vmatpush1.msra.mxu0 %v5317
    %10286 = vmatprep.subr.mxu0 0.0
    %10287 = vmatpush1.msra.mxu0 %v5318
    %10288 = vmatprep.subr.mxu0 0.0
    %10289 = vmatpush1.msra.mxu0 %v5319
    %10290 = vmatprep.subr.mxu0 0.0
    %10291 = vmatpush1.msra.mxu0 %v5320
    %10292 = vmatprep.subr.mxu0 0.0
    %10293 = vmatpush1.msra.mxu0 %v5321
    %10294 = vmatprep.subr.mxu0 0.0
    %10295 = vmatpush1.msra.mxu0 %v5322
    %10296 = vmatprep.subr.mxu0 0.0
    %10297 = vmatpush1.msra.mxu0 %v5323
    %10298 = vmatprep.subr.mxu0 0.0
    %10299 = vmatpush1.msra.mxu0 %v5324
    %10300 = vmatprep.subr.mxu0 0.0
    %10301 = vmatpush1.msra.mxu0 %v5325
    %10302 = vmatprep.subr.mxu0 0.0
    %10303 = vmatpush1.msra.mxu0 %v5326
    %10304 = vmatprep.subr.mxu0 0.0
    %10305 = vmatpush1.msra.mxu0 %v5327
    %10306 = vmatprep.subr.mxu0 0.0
    %10307 = vmatpush1.msra.mxu0 %v5328
    %10308 = vmatprep.subr.mxu0 0.0
    %10309 = vmatpush1.msra.mxu0 %v5329
    %10310 = vmatprep.subr.mxu0 0.0
    %10311 = vmatpush1.msra.mxu0 %v5330
    %10312 = vmatprep.subr.mxu0 0.0
    %10313 = vmatpush1.msra.mxu0 %v5331
    %10314 = vmatprep.subr.mxu0 0.0
    %10315 = vmatpush1.msra.mxu0 %v5332
    %10316 = vmatprep.subr.mxu0 0.0
    %10317 = vmatpush1.msra.mxu0 %v5333
    %10318 = vmatprep.subr.mxu0 0.0
    %10319 = vmatpush1.msra.mxu0 %v5334
    %10320 = vmatprep.subr.mxu0 0.0
    %10321 = vmatpush1.msra.mxu0 %v5335
    %10322 = vmatprep.subr.mxu0 0.0
    %10323 = vmatpush1.msra.mxu0 %v5336
    %10324 = vmatprep.subr.mxu0 0.0
    %10325 = vmatpush1.msra.mxu0 %v5337
    %10326 = vmatprep.subr.mxu0 0.0
    %10327 = vmatpush1.msra.mxu0 %v5338
    %10328 = vmatprep.subr.mxu0 0.0
    %10329 = vmatpush1.msra.mxu0 %v5339
    %10330 = vmatprep.subr.mxu0 0.0
    %10331 = vmatpush1.msra.mxu0 %v5340
    %10332 = vmatprep.subr.mxu0 0.0
    %10333 = vmatpush1.msra.mxu0 %v5341
    %10334 = vmatprep.subr.mxu0 0.0
    %10335 = vmatpush1.msra.mxu0 %v5342
    %10336 = vmatprep.subr.mxu0 0.0
    %10337 = vmatpush1.msra.mxu0 %v5343
    %10338 = vmatprep.subr.mxu0 0.0
    %10339 = vmatpush1.msra.mxu0 %v5344
    %10340 = vmatprep.mubr.f32.mxu0 %v6052
    %10341 = vmatmul.mubr.f32.gmra.mrb[0].mxu0 %v6044
    %v10342 = vpop.f32.mrb[0].mxu0
    %v10343 = vadd.f32 %v10273, %v10342
    %v10344 = vpop.f32.mrb[0].mxu0
    %10345 = vdwg.mxu0
    %10346 = vmatprep.subr.mxu0 0.0
    %10347 = vmatpush1.msra.mxu0 %v5345
    %10348 = vmatprep.subr.mxu0 0.0
    %10349 = vmatpush1.msra.mxu0 %v5346
    %10350 = vmatprep.subr.mxu0 0.0
    %10351 = vmatpush1.msra.mxu0 %v5347
    %10352 = vmatprep.subr.mxu0 0.0
    %10353 = vmatpush1.msra.mxu0 %v5348
    %10354 = vmatprep.subr.mxu0 0.0
    %10355 = vmatpush1.msra.mxu0 %v5349
    %10356 = vmatprep.subr.mxu0 0.0
    %10357 = vmatpush1.msra.mxu0 %v5350
    %10358 = vmatprep.subr.mxu0 0.0
    %10359 = vmatpush1.msra.mxu0 %v5351
    %10360 = vmatprep.subr.mxu0 0.0
    %10361 = vmatpush1.msra.mxu0 %v5352
    %10362 = vmatprep.subr.mxu0 0.0
    %10363 = vmatpush1.msra.mxu0 %v5353
    %10364 = vmatprep.subr.mxu0 0.0
    %10365 = vmatpush1.msra.mxu0 %v5354
    %10366 = vmatprep.subr.mxu0 0.0
    %10367 = vmatpush1.msra.mxu0 %v5355
    %10368 = vmatprep.subr.mxu0 0.0
    %10369 = vmatpush1.msra.mxu0 %v5356
    %10370 = vmatprep.subr.mxu0 0.0
    %10371 = vmatpush1.msra.mxu0 %v5357
    %10372 = vmatprep.subr.mxu0 0.0
    %10373 = vmatpush1.msra.mxu0 %v5358
    %10374 = vmatprep.subr.mxu0 0.0
    %10375 = vmatpush1.msra.mxu0 %v5359
    %10376 = vmatprep.subr.mxu0 0.0
    %10377 = vmatpush1.msra.mxu0 %v5360
    %10378 = vmatprep.subr.mxu0 0.0
    %10379 = vmatpush1.msra.mxu0 %v5361
    %10380 = vmatprep.subr.mxu0 0.0
    %10381 = vmatpush1.msra.mxu0 %v5362
    %10382 = vmatprep.subr.mxu0 0.0
    %10383 = vmatpush1.msra.mxu0 %v5363
    %10384 = vmatprep.subr.mxu0 0.0
    %10385 = vmatpush1.msra.mxu0 %v5364
    %10386 = vmatprep.subr.mxu0 0.0
    %10387 = vmatpush1.msra.mxu0 %v5365
    %10388 = vmatprep.subr.mxu0 0.0
    %10389 = vmatpush1.msra.mxu0 %v5366
    %10390 = vmatprep.subr.mxu0 0.0
    %10391 = vmatpush1.msra.mxu0 %v5367
    %10392 = vmatprep.subr.mxu0 0.0
    %10393 = vmatpush1.msra.mxu0 %v5368
    %10394 = vmatprep.subr.mxu0 0.0
    %10395 = vmatpush1.msra.mxu0 %v5369
    %10396 = vmatprep.subr.mxu0 0.0
    %10397 = vmatpush1.msra.mxu0 %v5370
    %10398 = vmatprep.subr.mxu0 0.0
    %10399 = vmatpush1.msra.mxu0 %v5371
    %10400 = vmatprep.subr.mxu0 0.0
    %10401 = vmatpush1.msra.mxu0 %v5372
    %10402 = vmatprep.subr.mxu0 0.0
    %10403 = vmatpush1.msra.mxu0 %v5373
    %10404 = vmatprep.subr.mxu0 0.0
    %10405 = vmatpush1.msra.mxu0 %v5374
    %10406 = vmatprep.subr.mxu0 0.0
    %10407 = vmatpush1.msra.mxu0 %v5375
    %10408 = vmatprep.subr.mxu0 0.0
    %10409 = vmatpush1.msra.mxu0 %v5376
    %10410 = vmatprep.mubr.f32.mxu0 %v6053
    %10411 = vmatmul.mubr.f32.gmra.mrb[0].mxu0 %v6051
    %v10412 = vpop.f32.mrb[0].mxu0
    %v10413 = vadd.f32 %v10343, %v10412
    %v10414 = vpop.f32.mrb[0].mxu0
    %10415 = vdwg.mxu0
    %10416 = vmatprep.subr.mxu0 0.0
    %10417 = vmatpush1.msra.mxu0 %v5377
    %10418 = vmatprep.subr.mxu0 0.0
    %10419 = vmatpush1.msra.mxu0 %v5378
    %10420 = vmatprep.subr.mxu0 0.0
    %10421 = vmatpush1.msra.mxu0 %v5379
    %10422 = vmatprep.subr.mxu0 0.0
    %10423 = vmatpush1.msra.mxu0 %v5380
    %10424 = vmatprep.subr.mxu0 0.0
    %10425 = vmatpush1.msra.mxu0 %v5381
    %10426 = vmatprep.subr.mxu0 0.0
    %10427 = vmatpush1.msra.mxu0 %v5382
    %10428 = vmatprep.subr.mxu0 0.0
    %10429 = vmatpush1.msra.mxu0 %v5383
    %10430 = vmatprep.subr.mxu0 0.0
    %10431 = vmatpush1.msra.mxu0 %v5384
    %10432 = vmatprep.subr.mxu0 0.0
    %10433 = vmatpush1.msra.mxu0 %v5385
    %10434 = vmatprep.subr.mxu0 0.0
    %10435 = vmatpush1.msra.mxu0 %v5386
    %10436 = vmatprep.subr.mxu0 0.0
    %10437 = vmatpush1.msra.mxu0 %v5387
    %10438 = vmatprep.subr.mxu0 0.0
    %10439 = vmatpush1.msra.mxu0 %v5388
    %10440 = vmatprep.subr.mxu0 0.0
    %10441 = vmatpush1.msra.mxu0 %v5389
    %10442 = vmatprep.subr.mxu0 0.0
    %10443 = vmatpush1.msra.mxu0 %v5390
    %10444 = vmatprep.subr.mxu0 0.0
    %10445 = vmatpush1.msra.mxu0 %v5391
    %10446 = vmatprep.subr.mxu0 0.0
    %10447 = vmatpush1.msra.mxu0 %v5392
    %10448 = vmatprep.subr.mxu0 0.0
    %10449 = vmatpush1.msra.mxu0 %v5393
    %10450 = vmatprep.subr.mxu0 0.0
    %10451 = vmatpush1.msra.mxu0 %v5394
    %10452 = vmatprep.subr.mxu0 0.0
    %10453 = vmatpush1.msra.mxu0 %v5395
    %10454 = vmatprep.subr.mxu0 0.0
    %10455 = vmatpush1.msra.mxu0 %v5396
    %10456 = vmatprep.subr.mxu0 0.0
    %10457 = vmatpush1.msra.mxu0 %v5397
    %10458 = vmatprep.subr.mxu0 0.0
    %10459 = vmatpush1.msra.mxu0 %v5398
    %10460 = vmatprep.subr.mxu0 0.0
    %10461 = vmatpush1.msra.mxu0 %v5399
    %10462 = vmatprep.subr.mxu0 0.0
    %10463 = vmatpush1.msra.mxu0 %v5400
    %10464 = vmatprep.subr.mxu0 0.0
    %10465 = vmatpush1.msra.mxu0 %v5401
    %10466 = vmatprep.subr.mxu0 0.0
    %10467 = vmatpush1.msra.mxu0 %v5402
    %10468 = vmatprep.subr.mxu0 0.0
    %10469 = vmatpush1.msra.mxu0 %v5403
    %10470 = vmatprep.subr.mxu0 0.0
    %10471 = vmatpush1.msra.mxu0 %v5404
    %10472 = vmatprep.subr.mxu0 0.0
    %10473 = vmatpush1.msra.mxu0 %v5405
    %10474 = vmatprep.subr.mxu0 0.0
    %10475 = vmatpush1.msra.mxu0 %v5406
    %10476 = vmatprep.subr.mxu0 0.0
    %10477 = vmatpush1.msra.mxu0 %v5407
    %10478 = vmatprep.subr.mxu0 0.0
    %10479 = vmatpush1.msra.mxu0 %v5408
    %10480 = vmatprep.mubr.f32.mxu0 %v6069
    %10481 = vmatmul.mubr.f32.gmra.mrb[0].mxu0 %v6061
    %v10482 = vpop.f32.mrb[0].mxu0
    %v10483 = vadd.f32 %v10413, %v10482
    %v10484 = vpop.f32.mrb[0].mxu0
    %10485 = vdwg.mxu0
    %10486 = vmatprep.subr.mxu0 0.0
    %10487 = vmatpush1.msra.mxu0 %v5409
    %10488 = vmatprep.subr.mxu0 0.0
    %10489 = vmatpush1.msra.mxu0 %v5410
    %10490 = vmatprep.subr.mxu0 0.0
    %10491 = vmatpush1.msra.mxu0 %v5411
    %10492 = vmatprep.subr.mxu0 0.0
    %10493 = vmatpush1.msra.mxu0 %v5412
    %10494 = vmatprep.subr.mxu0 0.0
    %10495 = vmatpush1.msra.mxu0 %v5413
    %10496 = vmatprep.subr.mxu0 0.0
    %10497 = vmatpush1.msra.mxu0 %v5414
    %10498 = vmatprep.subr.mxu0 0.0
    %10499 = vmatpush1.msra.mxu0 %v5415
    %10500 = vmatprep.subr.mxu0 0.0
    %10501 = vmatpush1.msra.mxu0 %v5416
    %10502 = vmatprep.subr.mxu0 0.0
    %10503 = vmatpush1.msra.mxu0 %v5417
    %10504 = vmatprep.subr.mxu0 0.0
    %10505 = vmatpush1.msra.mxu0 %v5418
    %10506 = vmatprep.subr.mxu0 0.0
    %10507 = vmatpush1.msra.mxu0 %v5419
    %10508 = vmatprep.subr.mxu0 0.0
    %10509 = vmatpush1.msra.mxu0 %v5420
    %10510 = vmatprep.subr.mxu0 0.0
    %10511 = vmatpush1.msra.mxu0 %v5421
    %10512 = vmatprep.subr.mxu0 0.0
    %10513 = vmatpush1.msra.mxu0 %v5422
    %10514 = vmatprep.subr.mxu0 0.0
    %10515 = vmatpush1.msra.mxu0 %v5423
    %10516 = vmatprep.subr.mxu0 0.0
    %10517 = vmatpush1.msra.mxu0 %v5424
    %10518 = vmatprep.subr.mxu0 0.0
    %10519 = vmatpush1.msra.mxu0 %v5425
    %10520 = vmatprep.subr.mxu0 0.0
    %10521 = vmatpush1.msra.mxu0 %v5426
    %10522 = vmatprep.subr.mxu0 0.0
    %10523 = vmatpush1.msra.mxu0 %v5427
    %10524 = vmatprep.subr.mxu0 0.0
    %10525 = vmatpush1.msra.mxu0 %v5428
    %10526 = vmatprep.subr.mxu0 0.0
    %10527 = vmatpush1.msra.mxu0 %v5429
    %10528 = vmatprep.subr.mxu0 0.0
    %10529 = vmatpush1.msra.mxu0 %v5430
    %10530 = vmatprep.subr.mxu0 0.0
    %10531 = vmatpush1.msra.mxu0 %v5431
    %10532 = vmatprep.subr.mxu0 0.0
    %10533 = vmatpush1.msra.mxu0 %v5432
    %10534 = vmatprep.subr.mxu0 0.0
    %10535 = vmatpush1.msra.mxu0 %v5433
    %10536 = vmatprep.subr.mxu0 0.0
    %10537 = vmatpush1.msra.mxu0 %v5434
    %10538 = vmatprep.subr.mxu0 0.0
    %10539 = vmatpush1.msra.mxu0 %v5435
    %10540 = vmatprep.subr.mxu0 0.0
    %10541 = vmatpush1.msra.mxu0 %v5436
    %10542 = vmatprep.subr.mxu0 0.0
    %10543 = vmatpush1.msra.mxu0 %v5437
    %10544 = vmatprep.subr.mxu0 0.0
    %10545 = vmatpush1.msra.mxu0 %v5438
    %10546 = vmatprep.subr.mxu0 0.0
    %10547 = vmatpush1.msra.mxu0 %v5439
    %10548 = vmatprep.subr.mxu0 0.0
    %10549 = vmatpush1.msra.mxu0 %v5440
    %10550 = vmatprep.mubr.f32.mxu0 %v6070
    %10551 = vmatmul.mubr.f32.gmra.mrb[0].mxu0 %v6068
    %v10552 = vpop.f32.mrb[0].mxu0
    %v10553 = vadd.f32 %v10483, %v10552
    %v10554 = vpop.f32.mrb[0].mxu0
    %10555 = vdwg.mxu0
    %10556 = vmatprep.subr.mxu0 0.0
    %10557 = vmatpush1.msra.mxu0 %v5441
    %10558 = vmatprep.subr.mxu0 0.0
    %10559 = vmatpush1.msra.mxu0 %v5442
    %10560 = vmatprep.subr.mxu0 0.0
    %10561 = vmatpush1.msra.mxu0 %v5443
    %10562 = vmatprep.subr.mxu0 0.0
    %10563 = vmatpush1.msra.mxu0 %v5444
    %10564 = vmatprep.subr.mxu0 0.0
    %10565 = vmatpush1.msra.mxu0 %v5445
    %10566 = vmatprep.subr.mxu0 0.0
    %10567 = vmatpush1.msra.mxu0 %v5446
    %10568 = vmatprep.subr.mxu0 0.0
    %10569 = vmatpush1.msra.mxu0 %v5447
    %10570 = vmatprep.subr.mxu0 0.0
    %10571 = vmatpush1.msra.mxu0 %v5448
    %10572 = vmatprep.subr.mxu0 0.0
    %10573 = vmatpush1.msra.mxu0 %v5449
    %10574 = vmatprep.subr.mxu0 0.0
    %10575 = vmatpush1.msra.mxu0 %v5450
    %10576 = vmatprep.subr.mxu0 0.0
    %10577 = vmatpush1.msra.mxu0 %v5451
    %10578 = vmatprep.subr.mxu0 0.0
    %10579 = vmatpush1.msra.mxu0 %v5452
    %10580 = vmatprep.subr.mxu0 0.0
    %10581 = vmatpush1.msra.mxu0 %v5453
    %10582 = vmatprep.subr.mxu0 0.0
    %10583 = vmatpush1.msra.mxu0 %v5454
    %10584 = vmatprep.subr.mxu0 0.0
    %10585 = vmatpush1.msra.mxu0 %v5455
    %10586 = vmatprep.subr.mxu0 0.0
    %10587 = vmatpush1.msra.mxu0 %v5456
    %10588 = vmatprep.subr.mxu0 0.0
    %10589 = vmatpush1.msra.mxu0 %v5457
    %10590 = vmatprep.subr.mxu0 0.0
    %10591 = vmatpush1.msra.mxu0 %v5458
    %10592 = vmatprep.subr.mxu0 0.0
    %10593 = vmatpush1.msra.mxu0 %v5459
    %10594 = vmatprep.subr.mxu0 0.0
    %10595 = vmatpush1.msra.mxu0 %v5460
    %10596 = vmatprep.subr.mxu0 0.0
    %10597 = vmatpush1.msra.mxu0 %v5461
    %10598 = vmatprep.subr.mxu0 0.0
    %10599 = vmatpush1.msra.mxu0 %v5462
    %10600 = vmatprep.subr.mxu0 0.0
    %10601 = vmatpush1.msra.mxu0 %v5463
    %10602 = vmatprep.subr.mxu0 0.0
    %10603 = vmatpush1.msra.mxu0 %v5464
    %10604 = vmatprep.subr.mxu0 0.0
    %10605 = vmatpush1.msra.mxu0 %v5465
    %10606 = vmatprep.subr.mxu0 0.0
    %10607 = vmatpush1.msra.mxu0 %v5466
    %10608 = vmatprep.subr.mxu0 0.0
    %10609 = vmatpush1.msra.mxu0 %v5467
    %10610 = vmatprep.subr.mxu0 0.0
    %10611 = vmatpush1.msra.mxu0 %v5468
    %10612 = vmatprep.subr.mxu0 0.0
    %10613 = vmatpush1.msra.mxu0 %v5469
    %10614 = vmatprep.subr.mxu0 0.0
    %10615 = vmatpush1.msra.mxu0 %v5470
    %10616 = vmatprep.subr.mxu0 0.0
    %10617 = vmatpush1.msra.mxu0 %v5471
    %10618 = vmatprep.subr.mxu0 0.0
    %10619 = vmatpush1.msra.mxu0 %v5472
    %10620 = vmatprep.mubr.f32.mxu0 %v6086
    %10621 = vmatmul.mubr.f32.gmra.mrb[0].mxu0 %v6078
    %v10622 = vpop.f32.mrb[0].mxu0
    %v10623 = vadd.f32 %v10553, %v10622
    %v10624 = vpop.f32.mrb[0].mxu0
    %10625 = vdwg.mxu0
    %10626 = vmatprep.subr.mxu0 0.0
    %10627 = vmatpush1.msra.mxu0 %v5473
    %10628 = vmatprep.subr.mxu0 0.0
    %10629 = vmatpush1.msra.mxu0 %v5474
    %10630 = vmatprep.subr.mxu0 0.0
    %10631 = vmatpush1.msra.mxu0 %v5475
    %10632 = vmatprep.subr.mxu0 0.0
    %10633 = vmatpush1.msra.mxu0 %v5476
    %10634 = vmatprep.subr.mxu0 0.0
    %10635 = vmatpush1.msra.mxu0 %v5477
    %10636 = vmatprep.subr.mxu0 0.0
    %10637 = vmatpush1.msra.mxu0 %v5478
    %10638 = vmatprep.subr.mxu0 0.0
    %10639 = vmatpush1.msra.mxu0 %v5479
    %10640 = vmatprep.subr.mxu0 0.0
    %10641 = vmatpush1.msra.mxu0 %v5480
    %10642 = vmatprep.subr.mxu0 0.0
    %10643 = vmatpush1.msra.mxu0 %v5481
    %10644 = vmatprep.subr.mxu0 0.0
    %10645 = vmatpush1.msra.mxu0 %v5482
    %10646 = vmatprep.subr.mxu0 0.0
    %10647 = vmatpush1.msra.mxu0 %v5483
    %10648 = vmatprep.subr.mxu0 0.0
    %10649 = vmatpush1.msra.mxu0 %v5484
    %10650 = vmatprep.subr.mxu0 0.0
    %10651 = vmatpush1.msra.mxu0 %v5485
    %10652 = vmatprep.subr.mxu0 0.0
    %10653 = vmatpush1.msra.mxu0 %v5486
    %10654 = vmatprep.subr.mxu0 0.0
    %10655 = vmatpush1.msra.mxu0 %v5487
    %10656 = vmatprep.subr.mxu0 0.0
    %10657 = vmatpush1.msra.mxu0 %v5488
    %10658 = vmatprep.subr.mxu0 0.0
    %10659 = vmatpush1.msra.mxu0 %v5489
    %10660 = vmatprep.subr.mxu0 0.0
    %10661 = vmatpush1.msra.mxu0 %v5490
    %10662 = vmatprep.subr.mxu0 0.0
    %10663 = vmatpush1.msra.mxu0 %v5491
    %10664 = vmatprep.subr.mxu0 0.0
    %10665 = vmatpush1.msra.mxu0 %v5492
    %10666 = vmatprep.subr.mxu0 0.0
    %10667 = vmatpush1.msra.mxu0 %v5493
    %10668 = vmatprep.subr.mxu0 0.0
    %10669 = vmatpush1.msra.mxu0 %v5494
    %10670 = vmatprep.subr.mxu0 0.0
    %10671 = vmatpush1.msra.mxu0 %v5495
    %10672 = vmatprep.subr.mxu0 0.0
    %10673 = vmatpush1.msra.mxu0 %v5496
    %10674 = vmatprep.subr.mxu0 0.0
    %10675 = vmatpush1.msra.mxu0 %v5497
    %10676 = vmatprep.subr.mxu0 0.0
    %10677 = vmatpush1.msra.mxu0 %v5498
    %10678 = vmatprep.subr.mxu0 0.0
    %10679 = vmatpush1.msra.mxu0 %v5499
    %10680 = vmatprep.subr.mxu0 0.0
    %10681 = vmatpush1.msra.mxu0 %v5500
    %10682 = vmatprep.subr.mxu0 0.0
    %10683 = vmatpush1.msra.mxu0 %v5501
    %10684 = vmatprep.subr.mxu0 0.0
    %10685 = vmatpush1.msra.mxu0 %v5502
    %10686 = vmatprep.subr.mxu0 0.0
    %10687 = vmatpush1.msra.mxu0 %v5503
    %10688 = vmatprep.subr.mxu0 0.0
    %10689 = vmatpush1.msra.mxu0 %v5504
    %10690 = vmatprep.mubr.f32.mxu0 %v6087
    %10691 = vmatmul.mubr.f32.gmra.mrb[0].mxu0 %v6085
    %v10692 = vpop.f32.mrb[0].mxu0
    %v10693 = vadd.f32 %v10623, %v10692
    %v10694 = vpop.f32.mrb[0].mxu0
    %10695 = vdwg.mxu0
    %vm10696 = vcmask 74752
    %10697 = vst.msk [vmem:[#allocation9] sm:$0x3] %vm10696, %v10693
    // Predicated region
    $region30: #{conv_mlp_forward.1} parent=1 // pred_check
      _
    $region31: #{conv_mlp_forward.1} parent=1 // pred_check_branch
      %10699 = sbr.rel (0) target = $region33
    $region32: #{conv_mlp_forward.1} parent=1 // pred_region
      %s10701 = ssub.s32 32, 32
      %10702 = vsyncadd [#allocation5], %s10701
      %s10704 = sshll.u32 [#allocation9], 4
      %s10705 = int_to_ptr.vmem [resolvable:$true] %s10704
      %10707 = dma.vmem_to_hbm [thread:$0]  %s10705, 32, %s5, [#allocation5]
    $region33: #{conv_mlp_forward.1} parent=1 // pred_fallthru
      _
    // Predicated region
    $region34: #{conv_mlp_forward.1} parent=1 // pred_check
      _
    $region35: #{conv_mlp_forward.1} parent=1 // pred_check_branch
      %10709 = sbr.rel (0) target = $region37
    $region36: #{conv_mlp_forward.1} parent=1 // pred_region
      %10710 = dma.done [#allocation5], 32
    $region37: #{conv_mlp_forward.1} parent=1 // pred_fallthru
      _
    %10711 = vsyncpa [#allocation5], 1
    %10712 = vsyncpa [#allocation6], 1
    %10713 = vsyncpa [#allocation8], 1

</llo_original>
